<compile_context>
chip_gen: v7x
topology: tpu7x:2x2x1
jax: 0.10.0
libtpu: 0.0.40
codegen_flags: <defaults>
</compile_context>

<pallas_src>
import jax
import jax.numpy as jnp
from jax import lax
from jax.experimental import pallas as pl
from jax.experimental.pallas import tpu as pltpu

# ---------------- model hyper-params ------------------------------------------
D_MODEL = 32
N_HEAD = 4
HEAD_DIM = D_MODEL // N_HEAD
DIM_FF = 64
NUM_LAYERS = 2
LN_EPS = 1e-5
_SCALE = 1.0 / (HEAD_DIM ** 0.5)

# Order in which stacked per-layer params are passed to the kernel.
PARAM_ORDER = (
    "sa_wqk", "sa_bqk", "sa_wv", "sa_bv", "sa_wo", "sa_bo",
    "ca_wq", "ca_bq", "ca_wk", "ca_bk", "ca_wv", "ca_bv", "ca_wo", "ca_bo",
    "w1", "b1", "w2", "b2", "ln_g", "ln_b",
)


# ---------------- in-kernel helpers -------------------------------------------
def _layer_norm(x, g, b):
    mu = jnp.mean(x, axis=-1, keepdims=True)
    var = jnp.mean(jnp.square(x - mu), axis=-1, keepdims=True)
    return (x - mu) * lax.rsqrt(var + LN_EPS) * g + b


def _mha_core(q2, k2, v2, wo, bo):
    """Scaled-dot-product attention on lane-packed heads (all operands 2-D).

    q2: (T, H*Hd) already scaled; k2, v2: (S, H*Hd); wo: (H*Hd, D); bo: (1, D).
    Per-head score/context matmuls are H small 2-D MXU ops (same count a batched
    3-D einsum would unroll to) — no activation broadcasts, no 3-D relayouts.
    """
    ctx = []
    for h in range(N_HEAD):                      # H is tiny and static
        sl = slice(h * HEAD_DIM, (h + 1) * HEAD_DIM)   # static lane slice
        qh, kh, vh = q2[:, sl], k2[:, sl], v2[:, sl]
        # q @ k^T without materializing a transpose: contract last dims of both.
        s = lax.dot_general(qh, kh, (((1,), (1,)), ((), ())),
                            preferred_element_type=jnp.float32)        # (T, S)
        s = s - jnp.max(s, axis=-1, keepdims=True)
        p = jnp.exp(s)
        p = p * pl.reciprocal(jnp.sum(p, axis=-1, keepdims=True), approx=True)
        ctx.append(jnp.dot(p, vh, preferred_element_type=jnp.float32))  # (T, Hd)
    ctx = jnp.concatenate(ctx, axis=-1)                                 # (T, H*Hd)
    # Single wide output projection (K = H*Hd) instead of H matmuls + reduce.
    return jnp.dot(ctx, wo, preferred_element_type=jnp.float32) + bo


# ---------------- fused Pallas kernel ------------------------------------------
def fused_decoder_kernel(
        tgt_ref, mem_ref, qpos_ref, pos_ref,
        sa_wqk_ref, sa_bqk_ref, sa_wv_ref, sa_bv_ref, sa_wo_ref, sa_bo_ref,
        ca_wq_ref, ca_bq_ref, ca_wk_ref, ca_bk_ref, ca_wv_ref, ca_bv_ref,
        ca_wo_ref, ca_bo_ref,
        w1_ref, b1_ref, w2_ref, b2_ref, ln_g_ref, ln_b_ref,
        fn_g_ref, fn_b_ref,
        out_ref):
    nb = tgt_ref.shape[0]            # batch elements handled by this grid step
    num_layers = w1_ref.shape[0]
    fn_g = fn_g_ref[...]
    fn_b = fn_b_ref[...]

    for bi in range(nb):             # static: 1 (per-core grid) or B (collapsed grid)
        tgt = tgt_ref[bi]            # (T, D)
        qpos = qpos_ref[bi]          # (T, D)
        mem = mem_ref[bi]            # (S, D)
        memk = mem + pos_ref[bi]     # cross-attn key operand: layer-invariant, hoisted

        # NOTE: static unroll is fine for NUM_LAYERS=2; switch to lax.fori_loop over
        # the stacked leading axis if the layer count grows.
        for l in range(num_layers):
            ln_g = ln_g_ref[l]       # (3, 1, D) : norm1 / norm2 / norm3 gammas
            ln_b = ln_b_ref[l]

            # --- self-attention: q = k = tgt + query_pos, v = tgt ---
            qk_in = tgt + qpos
            qk = jnp.dot(qk_in, sa_wqk_ref[l],
                         preferred_element_type=jnp.float32) + sa_bqk_ref[l]  # (T, 2D)
            q2 = qk[:, :D_MODEL] * _SCALE      # scale q post-bias (PyTorch semantics)
            k2 = qk[:, D_MODEL:]
            v2 = jnp.dot(tgt, sa_wv_ref[l],
                         preferred_element_type=jnp.float32) + sa_bv_ref[l]
            sa = _mha_core(q2, k2, v2, sa_wo_ref[l], sa_bo_ref[l])
            tgt = _layer_norm(tgt + sa, ln_g[0], ln_b[0])

            # --- cross-attention: q = tgt + query_pos, k = memory + pos, v = memory ---
            q2 = (jnp.dot(tgt + qpos, ca_wq_ref[l],
                          preferred_element_type=jnp.float32) + ca_bq_ref[l]) * _SCALE
            k2 = jnp.dot(memk, ca_wk_ref[l],
                         preferred_element_type=jnp.float32) + ca_bk_ref[l]
            v2 = jnp.dot(mem, ca_wv_ref[l],
                         preferred_element_type=jnp.float32) + ca_bv_ref[l]
            ca = _mha_core(q2, k2, v2, ca_wo_ref[l], ca_bo_ref[l])
            tgt = _layer_norm(tgt + ca, ln_g[1], ln_b[1])

            # --- feed-forward (ReLU) ---
            hid = jnp.maximum(
                jnp.dot(tgt, w1_ref[l], preferred_element_type=jnp.float32) + b1_ref[l],
                0.0)
            ff = jnp.dot(hid, w2_ref[l], preferred_element_type=jnp.float32) + b2_ref[l]
            tgt = _layer_norm(tgt + ff, ln_g[2], ln_b[2])

        # --- final decoder LayerNorm (fused) ---
        out_ref[bi] = _layer_norm(tgt, fn_g, fn_b)


# ---------------- wrapper -------------------------------------------------------
def _weight_spec(shape):
    n = len(shape)
    return pl.BlockSpec(shape, lambda i, _n=n: (0,) * _n)


def _multi_tensorcore():
    """True on chips whose grid is shared by >1 TensorCore (v4/v5p megacore, v7x)."""
    try:
        kind = jax.devices()[0].device_kind.lower()
    except Exception:
        return False
    return any(t in kind for t in ("v4", "v5p", "v7", "7x"))


@jax.jit
def transformer_decoder(tgt_tbd, memory_sbd, query_pos_tbd, pos_sbd,
                        layer_params, final_norm_params):
    """Mirrors TransformerDecoder.forward (return_intermediate=False, masks=None).
    Inputs in PyTorch layout (seq, batch, d_model); returns (1, T, B, D)."""
    T, B, D = tgt_tbd.shape
    S = memory_sbd.shape[0]

    # Batch-major host-side layout -> BlockSpec batch slicing (no in-kernel selects).
    acts = (jnp.transpose(tgt_tbd, (1, 0, 2)),
            jnp.transpose(memory_sbd, (1, 0, 2)),
            jnp.transpose(query_pos_tbd, (1, 0, 2)),
            jnp.transpose(pos_sbd, (1, 0, 2)))

    # Collapse the grid on single-TC chips (or B==1); one batch per core otherwise.
    nb = 1 if (_multi_tensorcore() and B > 1) else B
    grid = (B // nb,)

    act_specs = [
        pl.BlockSpec((nb, T, D), lambda i: (i, 0, 0)),
        pl.BlockSpec((nb, S, D), lambda i: (i, 0, 0)),
        pl.BlockSpec((nb, T, D), lambda i: (i, 0, 0)),
        pl.BlockSpec((nb, S, D), lambda i: (i, 0, 0)),
    ]
    weights = tuple(layer_params[k] for k in PARAM_ORDER) + (
        final_norm_params["g"], final_norm_params["b"])
    in_specs = act_specs + [_weight_spec(w.shape) for w in weights]

    out_btd = pl.pallas_call(
        fused_decoder_kernel,
        out_shape=jax.ShapeDtypeStruct((B, T, D), jnp.float32),
        grid_spec=pltpu.PrefetchScalarGridSpec(
            num_scalar_prefetch=0,
            grid=grid,
            in_specs=in_specs,
            out_specs=pl.BlockSpec((nb, T, D), lambda i: (i, 0, 0))),
        compiler_params=pltpu.CompilerParams(
            dimension_semantics=("parallel",)),
    )(*acts, *weights)

    # Back to PyTorch layout and unsqueeze(0): (1, T, B, D)
    return jnp.transpose(out_btd, (1, 0, 2))[None]


# ---------------- deterministic parameter init ----------------------------------
def init_layer_params(key):
    ks = jax.random.split(key, 10)
    f32 = jnp.float32
    sd = 1.0 / (D_MODEL ** 0.5)
    sf = 1.0 / (DIM_FF ** 0.5)

    def proj(k):   # "x @ W" convention; heads packed head-major along output columns
        return jax.random.normal(k, (D_MODEL, D_MODEL), f32) * sd

    zb = jnp.zeros((1, D_MODEL), f32)
    return {
        # self-attn: Q and K share their input -> fuse weights into one (D, 2D) matmul
        "sa_wqk": jnp.concatenate([proj(ks[0]), proj(ks[1])], axis=1),
        "sa_bqk": jnp.zeros((1, 2 * D_MODEL), f32),
        "sa_wv": proj(ks[2]), "sa_bv": zb,
        "sa_wo": proj(ks[3]), "sa_bo": zb,
        "ca_wq": proj(ks[4]), "ca_bq": zb,
        "ca_wk": proj(ks[5]), "ca_bk": zb,
        "ca_wv": proj(ks[6]), "ca_bv": zb,
        "ca_wo": proj(ks[7]), "ca_bo": zb,
        "w1": jax.random.normal(ks[8], (D_MODEL, DIM_FF), f32) * sd,
        "b1": jnp.zeros((1, DIM_FF), f32),
        "w2": jax.random.normal(ks[9], (DIM_FF, D_MODEL), f32) * sf,
        "b2": zb,
        "ln_g": jnp.ones((3, 1, D_MODEL), f32),    # norm1 / norm2 / norm3 gammas
        "ln_b": jnp.zeros((3, 1, D_MODEL), f32),   # norm1 / norm2 / norm3 betas
    }


def stack_layer_params(per_layer):
    """List of per-layer dicts -> one dict of arrays with a leading L axis."""
    return jax.tree_util.tree_map(lambda *xs: jnp.stack(xs, axis=0), *per_layer)


if __name__ == "__main__":
    B, T, S = 2, 8, 16     # batch, num queries (tgt len), memory len

    key = jax.random.PRNGKey(0)
    k_tgt, k_mem, k_qp, k_pos, k_params = jax.random.split(key, 5)

    # PyTorch layout: (seq, batch, d_model)
    tgt = jax.random.normal(k_tgt, (T, B, D_MODEL), jnp.float32)
    memory = jax.random.normal(k_mem, (S, B, D_MODEL), jnp.float32)
    query_pos = jax.random.normal(k_qp, (T, B, D_MODEL), jnp.float32)
    pos = jax.random.normal(k_pos, (S, B, D_MODEL), jnp.float32)

    layer_keys = jax.random.split(k_params, NUM_LAYERS)
    layer_params = stack_layer_params([init_layer_params(k) for k in layer_keys])
    final_norm_params = {"g": jnp.ones((1, D_MODEL), jnp.float32),
                         "b": jnp.zeros((1, D_MODEL), jnp.float32)}

    out = transformer_decoder(tgt, memory, query_pos, pos,
                              layer_params, final_norm_params)
    out = jax.block_until_ready(out)
    assert out.shape == (1, T, B, D_MODEL), out.shape
    assert bool(jnp.all(jnp.isfinite(out)))
    print("KERNEL_OK")
</pallas_src>

<mosaic_0001>
module attributes {stable_mosaic.version = 11 : i64} {
  func.func @fused_decoder_kernel(%arg0: i32, %arg1: memref<2x8x32xf32, #tpu.memory_space<vmem>>, %arg2: memref<2x16x32xf32, #tpu.memory_space<vmem>>, %arg3: memref<2x8x32xf32, #tpu.memory_space<vmem>>, %arg4: memref<2x16x32xf32, #tpu.memory_space<vmem>>, %arg5: memref<2x32x64xf32, #tpu.memory_space<vmem>>, %arg6: memref<2x1x64xf32, #tpu.memory_space<vmem>>, %arg7: memref<2x32x32xf32, #tpu.memory_space<vmem>>, %arg8: memref<2x1x32xf32, #tpu.memory_space<vmem>>, %arg9: memref<2x32x32xf32, #tpu.memory_space<vmem>>, %arg10: memref<2x1x32xf32, #tpu.memory_space<vmem>>, %arg11: memref<2x32x32xf32, #tpu.memory_space<vmem>>, %arg12: memref<2x1x32xf32, #tpu.memory_space<vmem>>, %arg13: memref<2x32x32xf32, #tpu.memory_space<vmem>>, %arg14: memref<2x1x32xf32, #tpu.memory_space<vmem>>, %arg15: memref<2x32x32xf32, #tpu.memory_space<vmem>>, %arg16: memref<2x1x32xf32, #tpu.memory_space<vmem>>, %arg17: memref<2x32x32xf32, #tpu.memory_space<vmem>>, %arg18: memref<2x1x32xf32, #tpu.memory_space<vmem>>, %arg19: memref<2x32x64xf32, #tpu.memory_space<vmem>>, %arg20: memref<2x1x64xf32, #tpu.memory_space<vmem>>, %arg21: memref<2x64x32xf32, #tpu.memory_space<vmem>>, %arg22: memref<2x1x32xf32, #tpu.memory_space<vmem>>, %arg23: memref<2x3x1x32xf32, #tpu.memory_space<vmem>>, %arg24: memref<2x3x1x32xf32, #tpu.memory_space<vmem>>, %arg25: memref<1x32xf32, #tpu.memory_space<vmem>>, %arg26: memref<1x32xf32, #tpu.memory_space<vmem>>, %arg27: memref<2x8x32xf32, #tpu.memory_space<vmem>>) attributes {dimension_semantics = [#tpu.dimension_semantics<parallel>], iteration_bounds = array<i64: 1>, scalar_prefetch = 0 : i64, scratch_operands = 0 : i64, tpu.core_type = #tpu.core_type<tc>, window_params = [{transform_indices = @transform_0, window_bounds = array<i64: 2, 8, 32>}, {transform_indices = @transform_1, window_bounds = array<i64: 2, 16, 32>}, {transform_indices = @transform_2, window_bounds = array<i64: 2, 8, 32>}, {transform_indices = @transform_3, window_bounds = array<i64: 2, 16, 32>}, {pipeline_mode = #tpu.pipeline_mode<synchronous>, transform_indices = @transform_4, window_bounds = array<i64: 2, 32, 64>}, {pipeline_mode = #tpu.pipeline_mode<synchronous>, transform_indices = @transform_5, window_bounds = array<i64: 2, 1, 64>}, {pipeline_mode = #tpu.pipeline_mode<synchronous>, transform_indices = @transform_6, window_bounds = array<i64: 2, 32, 32>}, {pipeline_mode = #tpu.pipeline_mode<synchronous>, transform_indices = @transform_7, window_bounds = array<i64: 2, 1, 32>}, {pipeline_mode = #tpu.pipeline_mode<synchronous>, transform_indices = @transform_8, window_bounds = array<i64: 2, 32, 32>}, {pipeline_mode = #tpu.pipeline_mode<synchronous>, transform_indices = @transform_9, window_bounds = array<i64: 2, 1, 32>}, {pipeline_mode = #tpu.pipeline_mode<synchronous>, transform_indices = @transform_10, window_bounds = array<i64: 2, 32, 32>}, {pipeline_mode = #tpu.pipeline_mode<synchronous>, transform_indices = @transform_11, window_bounds = array<i64: 2, 1, 32>}, {pipeline_mode = #tpu.pipeline_mode<synchronous>, transform_indices = @transform_12, window_bounds = array<i64: 2, 32, 32>}, {pipeline_mode = #tpu.pipeline_mode<synchronous>, transform_indices = @transform_13, window_bounds = array<i64: 2, 1, 32>}, {pipeline_mode = #tpu.pipeline_mode<synchronous>, transform_indices = @transform_14, window_bounds = array<i64: 2, 32, 32>}, {pipeline_mode = #tpu.pipeline_mode<synchronous>, transform_indices = @transform_15, window_bounds = array<i64: 2, 1, 32>}, {pipeline_mode = #tpu.pipeline_mode<synchronous>, transform_indices = @transform_16, window_bounds = array<i64: 2, 32, 32>}, {pipeline_mode = #tpu.pipeline_mode<synchronous>, transform_indices = @transform_17, window_bounds = array<i64: 2, 1, 32>}, {pipeline_mode = #tpu.pipeline_mode<synchronous>, transform_indices = @transform_18, window_bounds = array<i64: 2, 32, 64>}, {pipeline_mode = #tpu.pipeline_mode<synchronous>, transform_indices = @transform_19, window_bounds = array<i64: 2, 1, 64>}, {pipeline_mode = #tpu.pipeline_mode<synchronous>, transform_indices = @transform_20, window_bounds = array<i64: 2, 64, 32>}, {pipeline_mode = #tpu.pipeline_mode<synchronous>, transform_indices = @transform_21, window_bounds = array<i64: 2, 1, 32>}, {pipeline_mode = #tpu.pipeline_mode<synchronous>, transform_indices = @transform_22, window_bounds = array<i64: 2, 3, 1, 32>}, {pipeline_mode = #tpu.pipeline_mode<synchronous>, transform_indices = @transform_23, window_bounds = array<i64: 2, 3, 1, 32>}, {pipeline_mode = #tpu.pipeline_mode<synchronous>, transform_indices = @transform_24, window_bounds = array<i64: 1, 32>}, {pipeline_mode = #tpu.pipeline_mode<synchronous>, transform_indices = @transform_25, window_bounds = array<i64: 1, 32>}, {transform_indices = @transform_26, window_bounds = array<i64: 2, 8, 32>}]} {
    %c0 = arith.constant 0 : index
    %c0_0 = arith.constant 0 : index
    %0 = vector.load %arg25[%c0, %c0_0] : memref<1x32xf32, #tpu.memory_space<vmem>>, vector<1x32xf32>
    %c0_1 = arith.constant 0 : index
    %c0_2 = arith.constant 0 : index
    %1 = vector.load %arg26[%c0_1, %c0_2] : memref<1x32xf32, #tpu.memory_space<vmem>>, vector<1x32xf32>
    %c0_3 = arith.constant 0 : index
    %c0_4 = arith.constant 0 : index
    %c0_5 = arith.constant 0 : index
    %2 = vector.load %arg1[%c0_3, %c0_4, %c0_5] : memref<2x8x32xf32, #tpu.memory_space<vmem>>, vector<1x8x32xf32>
    %3 = vector.shape_cast %2 : vector<1x8x32xf32> to vector<8x32xf32>
    %c0_6 = arith.constant 0 : index
    %c0_7 = arith.constant 0 : index
    %c0_8 = arith.constant 0 : index
    %4 = vector.load %arg3[%c0_6, %c0_7, %c0_8] : memref<2x8x32xf32, #tpu.memory_space<vmem>>, vector<1x8x32xf32>
    %5 = vector.shape_cast %4 : vector<1x8x32xf32> to vector<8x32xf32>
    %c0_9 = arith.constant 0 : index
    %c0_10 = arith.constant 0 : index
    %c0_11 = arith.constant 0 : index
    %6 = vector.load %arg2[%c0_9, %c0_10, %c0_11] : memref<2x16x32xf32, #tpu.memory_space<vmem>>, vector<1x16x32xf32>
    %7 = vector.shape_cast %6 : vector<1x16x32xf32> to vector<16x32xf32>
    %c0_12 = arith.constant 0 : index
    %c0_13 = arith.constant 0 : index
    %c0_14 = arith.constant 0 : index
    %8 = vector.load %arg4[%c0_12, %c0_13, %c0_14] : memref<2x16x32xf32, #tpu.memory_space<vmem>>, vector<1x16x32xf32>
    %9 = vector.shape_cast %8 : vector<1x16x32xf32> to vector<16x32xf32>
    %10 = arith.addf %7, %9 : vector<16x32xf32>
    %c0_15 = arith.constant 0 : index
    %c0_16 = arith.constant 0 : index
    %c0_17 = arith.constant 0 : index
    %c0_18 = arith.constant 0 : index
    %11 = vector.load %arg23[%c0_15, %c0_16, %c0_17, %c0_18] : memref<2x3x1x32xf32, #tpu.memory_space<vmem>>, vector<1x3x1x32xf32>
    %12 = vector.shape_cast %11 : vector<1x3x1x32xf32> to vector<3x1x32xf32>
    %c0_19 = arith.constant 0 : index
    %c0_20 = arith.constant 0 : index
    %c0_21 = arith.constant 0 : index
    %c0_22 = arith.constant 0 : index
    %13 = vector.load %arg24[%c0_19, %c0_20, %c0_21, %c0_22] : memref<2x3x1x32xf32, #tpu.memory_space<vmem>>, vector<1x3x1x32xf32>
    %14 = vector.shape_cast %13 : vector<1x3x1x32xf32> to vector<3x1x32xf32>
    %15 = arith.addf %3, %5 : vector<8x32xf32>
    %c0_23 = arith.constant 0 : index
    %c0_24 = arith.constant 0 : index
    %c0_25 = arith.constant 0 : index
    %16 = vector.load %arg5[%c0_23, %c0_24, %c0_25] : memref<2x32x64xf32, #tpu.memory_space<vmem>>, vector<1x32x64xf32>
    %17 = vector.shape_cast %16 : vector<1x32x64xf32> to vector<32x64xf32>
    %cst = arith.constant dense<0.000000e+00> : vector<8x64xf32>
    %18 = tpu.matmul %15, %17, %cst {dimension_numbers = #tpu.dot_dimension_numbers<[1], [0], [0], [1], [0, 0, 1, 1], [], []>} : vector<8x32xf32>, vector<32x64xf32>, vector<8x64xf32> -> vector<8x64xf32>
    %c0_26 = arith.constant 0 : index
    %c0_27 = arith.constant 0 : index
    %c0_28 = arith.constant 0 : index
    %19 = vector.load %arg6[%c0_26, %c0_27, %c0_28] : memref<2x1x64xf32, #tpu.memory_space<vmem>>, vector<1x1x64xf32>
    %20 = vector.shape_cast %19 : vector<1x1x64xf32> to vector<1x64xf32>
    %21 = vector.broadcast %20 : vector<1x64xf32> to vector<8x64xf32>
    %22 = arith.addf %18, %21 : vector<8x64xf32>
    %23 = vector.extract_strided_slice %22 {offsets = [0, 0], sizes = [8, 32], strides = [1, 1]} : vector<8x64xf32> to vector<8x32xf32>
    %cst_29 = arith.constant 0.353553385 : f32
    %24 = vector.broadcast %cst_29 : f32 to vector<8x32xf32>
    %25 = arith.mulf %23, %24 : vector<8x32xf32>
    %26 = vector.extract_strided_slice %22 {offsets = [0, 32], sizes = [8, 32], strides = [1, 1]} : vector<8x64xf32> to vector<8x32xf32>
    %c0_30 = arith.constant 0 : index
    %c0_31 = arith.constant 0 : index
    %c0_32 = arith.constant 0 : index
    %27 = vector.load %arg7[%c0_30, %c0_31, %c0_32] : memref<2x32x32xf32, #tpu.memory_space<vmem>>, vector<1x32x32xf32>
    %28 = vector.shape_cast %27 : vector<1x32x32xf32> to vector<32x32xf32>
    %cst_33 = arith.constant dense<0.000000e+00> : vector<8x32xf32>
    %29 = tpu.matmul %3, %28, %cst_33 {dimension_numbers = #tpu.dot_dimension_numbers<[1], [0], [0], [1], [0, 0, 1, 1], [], []>} : vector<8x32xf32>, vector<32x32xf32>, vector<8x32xf32> -> vector<8x32xf32>
    %c0_34 = arith.constant 0 : index
    %c0_35 = arith.constant 0 : index
    %c0_36 = arith.constant 0 : index
    %30 = vector.load %arg8[%c0_34, %c0_35, %c0_36] : memref<2x1x32xf32, #tpu.memory_space<vmem>>, vector<1x1x32xf32>
    %31 = vector.shape_cast %30 : vector<1x1x32xf32> to vector<1x32xf32>
    %32 = vector.broadcast %31 : vector<1x32xf32> to vector<8x32xf32>
    %33 = arith.addf %29, %32 : vector<8x32xf32>
    %c0_37 = arith.constant 0 : index
    %c0_38 = arith.constant 0 : index
    %c0_39 = arith.constant 0 : index
    %34 = vector.load %arg9[%c0_37, %c0_38, %c0_39] : memref<2x32x32xf32, #tpu.memory_space<vmem>>, vector<1x32x32xf32>
    %35 = vector.shape_cast %34 : vector<1x32x32xf32> to vector<32x32xf32>
    %c0_40 = arith.constant 0 : index
    %c0_41 = arith.constant 0 : index
    %c0_42 = arith.constant 0 : index
    %36 = vector.load %arg10[%c0_40, %c0_41, %c0_42] : memref<2x1x32xf32, #tpu.memory_space<vmem>>, vector<1x1x32xf32>
    %37 = vector.shape_cast %36 : vector<1x1x32xf32> to vector<1x32xf32>
    %38 = vector.extract_strided_slice %25 {offsets = [0, 0], sizes = [8, 8], strides = [1, 1]} : vector<8x32xf32> to vector<8x8xf32>
    %39 = vector.extract_strided_slice %26 {offsets = [0, 0], sizes = [8, 8], strides = [1, 1]} : vector<8x32xf32> to vector<8x8xf32>
    %40 = vector.extract_strided_slice %33 {offsets = [0, 0], sizes = [8, 8], strides = [1, 1]} : vector<8x32xf32> to vector<8x8xf32>
    %cst_43 = arith.constant dense<0.000000e+00> : vector<8x8xf32>
    %41 = tpu.matmul %38, %39, %cst_43 {dimension_numbers = #tpu.dot_dimension_numbers<[1], [1], [0], [0], [0, 0, 1, 0], [], []>} : vector<8x8xf32>, vector<8x8xf32>, vector<8x8xf32> -> vector<8x8xf32>
    %cst_44 = arith.constant dense<0xFF800000> : vector<8xf32>
    %42 = vector.multi_reduction <maximumf>, %41, %cst_44 [1] : vector<8x8xf32> to vector<8xf32>
    %43 = vector.shape_cast %42 : vector<8xf32> to vector<8x1xf32>
    %44 = vector.broadcast %43 : vector<8x1xf32> to vector<8x8xf32>
    %45 = arith.subf %41, %44 : vector<8x8xf32>
    %46 = math.exp %45 : vector<8x8xf32>
    %cst_45 = arith.constant dense<0.000000e+00> : vector<8xf32>
    %47 = vector.multi_reduction <add>, %46, %cst_45 [1] : vector<8x8xf32> to vector<8xf32>
    %48 = vector.shape_cast %47 : vector<8xf32> to vector<8x1xf32>
    %49 = tpu.reciprocal %48 {approx = true} : vector<8x1xf32> -> vector<8x1xf32>
    %50 = vector.broadcast %49 : vector<8x1xf32> to vector<8x8xf32>
    %51 = arith.mulf %46, %50 : vector<8x8xf32>
    %cst_46 = arith.constant dense<0.000000e+00> : vector<8x8xf32>
    %52 = tpu.matmul %51, %40, %cst_46 {dimension_numbers = #tpu.dot_dimension_numbers<[1], [0], [0], [1], [0, 0, 1, 1], [], []>} : vector<8x8xf32>, vector<8x8xf32>, vector<8x8xf32> -> vector<8x8xf32>
    %53 = vector.extract_strided_slice %25 {offsets = [0, 8], sizes = [8, 8], strides = [1, 1]} : vector<8x32xf32> to vector<8x8xf32>
    %54 = vector.extract_strided_slice %26 {offsets = [0, 8], sizes = [8, 8], strides = [1, 1]} : vector<8x32xf32> to vector<8x8xf32>
    %55 = vector.extract_strided_slice %33 {offsets = [0, 8], sizes = [8, 8], strides = [1, 1]} : vector<8x32xf32> to vector<8x8xf32>
    %cst_47 = arith.constant dense<0.000000e+00> : vector<8x8xf32>
    %56 = tpu.matmul %53, %54, %cst_47 {dimension_numbers = #tpu.dot_dimension_numbers<[1], [1], [0], [0], [0, 0, 1, 0], [], []>} : vector<8x8xf32>, vector<8x8xf32>, vector<8x8xf32> -> vector<8x8xf32>
    %cst_48 = arith.constant dense<0xFF800000> : vector<8xf32>
    %57 = vector.multi_reduction <maximumf>, %56, %cst_48 [1] : vector<8x8xf32> to vector<8xf32>
    %58 = vector.shape_cast %57 : vector<8xf32> to vector<8x1xf32>
    %59 = vector.broadcast %58 : vector<8x1xf32> to vector<8x8xf32>
    %60 = arith.subf %56, %59 : vector<8x8xf32>
    %61 = math.exp %60 : vector<8x8xf32>
    %cst_49 = arith.constant dense<0.000000e+00> : vector<8xf32>
    %62 = vector.multi_reduction <add>, %61, %cst_49 [1] : vector<8x8xf32> to vector<8xf32>
    %63 = vector.shape_cast %62 : vector<8xf32> to vector<8x1xf32>
    %64 = tpu.reciprocal %63 {approx = true} : vector<8x1xf32> -> vector<8x1xf32>
    %65 = vector.broadcast %64 : vector<8x1xf32> to vector<8x8xf32>
    %66 = arith.mulf %61, %65 : vector<8x8xf32>
    %cst_50 = arith.constant dense<0.000000e+00> : vector<8x8xf32>
    %67 = tpu.matmul %66, %55, %cst_50 {dimension_numbers = #tpu.dot_dimension_numbers<[1], [0], [0], [1], [0, 0, 1, 1], [], []>} : vector<8x8xf32>, vector<8x8xf32>, vector<8x8xf32> -> vector<8x8xf32>
    %68 = vector.extract_strided_slice %25 {offsets = [0, 16], sizes = [8, 8], strides = [1, 1]} : vector<8x32xf32> to vector<8x8xf32>
    %69 = vector.extract_strided_slice %26 {offsets = [0, 16], sizes = [8, 8], strides = [1, 1]} : vector<8x32xf32> to vector<8x8xf32>
    %70 = vector.extract_strided_slice %33 {offsets = [0, 16], sizes = [8, 8], strides = [1, 1]} : vector<8x32xf32> to vector<8x8xf32>
    %cst_51 = arith.constant dense<0.000000e+00> : vector<8x8xf32>
    %71 = tpu.matmul %68, %69, %cst_51 {dimension_numbers = #tpu.dot_dimension_numbers<[1], [1], [0], [0], [0, 0, 1, 0], [], []>} : vector<8x8xf32>, vector<8x8xf32>, vector<8x8xf32> -> vector<8x8xf32>
    %cst_52 = arith.constant dense<0xFF800000> : vector<8xf32>
    %72 = vector.multi_reduction <maximumf>, %71, %cst_52 [1] : vector<8x8xf32> to vector<8xf32>
    %73 = vector.shape_cast %72 : vector<8xf32> to vector<8x1xf32>
    %74 = vector.broadcast %73 : vector<8x1xf32> to vector<8x8xf32>
    %75 = arith.subf %71, %74 : vector<8x8xf32>
    %76 = math.exp %75 : vector<8x8xf32>
    %cst_53 = arith.constant dense<0.000000e+00> : vector<8xf32>
    %77 = vector.multi_reduction <add>, %76, %cst_53 [1] : vector<8x8xf32> to vector<8xf32>
    %78 = vector.shape_cast %77 : vector<8xf32> to vector<8x1xf32>
    %79 = tpu.reciprocal %78 {approx = true} : vector<8x1xf32> -> vector<8x1xf32>
    %80 = vector.broadcast %79 : vector<8x1xf32> to vector<8x8xf32>
    %81 = arith.mulf %76, %80 : vector<8x8xf32>
    %cst_54 = arith.constant dense<0.000000e+00> : vector<8x8xf32>
    %82 = tpu.matmul %81, %70, %cst_54 {dimension_numbers = #tpu.dot_dimension_numbers<[1], [0], [0], [1], [0, 0, 1, 1], [], []>} : vector<8x8xf32>, vector<8x8xf32>, vector<8x8xf32> -> vector<8x8xf32>
    %83 = vector.extract_strided_slice %25 {offsets = [0, 24], sizes = [8, 8], strides = [1, 1]} : vector<8x32xf32> to vector<8x8xf32>
    %84 = vector.extract_strided_slice %26 {offsets = [0, 24], sizes = [8, 8], strides = [1, 1]} : vector<8x32xf32> to vector<8x8xf32>
    %85 = vector.extract_strided_slice %33 {offsets = [0, 24], sizes = [8, 8], strides = [1, 1]} : vector<8x32xf32> to vector<8x8xf32>
    %cst_55 = arith.constant dense<0.000000e+00> : vector<8x8xf32>
    %86 = tpu.matmul %83, %84, %cst_55 {dimension_numbers = #tpu.dot_dimension_numbers<[1], [1], [0], [0], [0, 0, 1, 0], [], []>} : vector<8x8xf32>, vector<8x8xf32>, vector<8x8xf32> -> vector<8x8xf32>
    %cst_56 = arith.constant dense<0xFF800000> : vector<8xf32>
    %87 = vector.multi_reduction <maximumf>, %86, %cst_56 [1] : vector<8x8xf32> to vector<8xf32>
    %88 = vector.shape_cast %87 : vector<8xf32> to vector<8x1xf32>
    %89 = vector.broadcast %88 : vector<8x1xf32> to vector<8x8xf32>
    %90 = arith.subf %86, %89 : vector<8x8xf32>
    %91 = math.exp %90 : vector<8x8xf32>
    %cst_57 = arith.constant dense<0.000000e+00> : vector<8xf32>
    %92 = vector.multi_reduction <add>, %91, %cst_57 [1] : vector<8x8xf32> to vector<8xf32>
    %93 = vector.shape_cast %92 : vector<8xf32> to vector<8x1xf32>
    %94 = tpu.reciprocal %93 {approx = true} : vector<8x1xf32> -> vector<8x1xf32>
    %95 = vector.broadcast %94 : vector<8x1xf32> to vector<8x8xf32>
    %96 = arith.mulf %91, %95 : vector<8x8xf32>
    %cst_58 = arith.constant dense<0.000000e+00> : vector<8x8xf32>
    %97 = tpu.matmul %96, %85, %cst_58 {dimension_numbers = #tpu.dot_dimension_numbers<[1], [0], [0], [1], [0, 0, 1, 1], [], []>} : vector<8x8xf32>, vector<8x8xf32>, vector<8x8xf32> -> vector<8x8xf32>
    %98 = tpu.concatenate %52, %67, %82, %97 in 1 : vector<8x8xf32>, vector<8x8xf32>, vector<8x8xf32>, vector<8x8xf32> -> vector<8x32xf32>
    %cst_59 = arith.constant dense<0.000000e+00> : vector<8x32xf32>
    %99 = tpu.matmul %98, %35, %cst_59 {dimension_numbers = #tpu.dot_dimension_numbers<[1], [0], [0], [1], [0, 0, 1, 1], [], []>} : vector<8x32xf32>, vector<32x32xf32>, vector<8x32xf32> -> vector<8x32xf32>
    %100 = vector.broadcast %37 : vector<1x32xf32> to vector<8x32xf32>
    %101 = arith.addf %99, %100 : vector<8x32xf32>
    %102 = arith.addf %3, %101 : vector<8x32xf32>
    %103 = vector.extract_strided_slice %12 {offsets = [0, 0, 0], sizes = [1, 1, 32], strides = [1, 1, 1]} : vector<3x1x32xf32> to vector<1x1x32xf32>
    %104 = vector.shape_cast %103 : vector<1x1x32xf32> to vector<1x32xf32>
    %105 = vector.extract_strided_slice %14 {offsets = [0, 0, 0], sizes = [1, 1, 32], strides = [1, 1, 1]} : vector<3x1x32xf32> to vector<1x1x32xf32>
    %106 = vector.shape_cast %105 : vector<1x1x32xf32> to vector<1x32xf32>
    %cst_60 = arith.constant dense<0.000000e+00> : vector<8xf32>
    %107 = vector.multi_reduction <add>, %102, %cst_60 [1] : vector<8x32xf32> to vector<8xf32>
    %108 = vector.shape_cast %107 : vector<8xf32> to vector<8x1xf32>
    %cst_61 = arith.constant 3.200000e+01 : f32
    %109 = vector.broadcast %cst_61 : f32 to vector<8x1xf32>
    %110 = arith.divf %108, %109 : vector<8x1xf32>
    %111 = vector.broadcast %110 : vector<8x1xf32> to vector<8x32xf32>
    %112 = arith.subf %102, %111 : vector<8x32xf32>
    %113 = arith.mulf %112, %112 : vector<8x32xf32>
    %cst_62 = arith.constant dense<0.000000e+00> : vector<8xf32>
    %114 = vector.multi_reduction <add>, %113, %cst_62 [1] : vector<8x32xf32> to vector<8xf32>
    %115 = vector.shape_cast %114 : vector<8xf32> to vector<8x1xf32>
    %cst_63 = arith.constant 3.200000e+01 : f32
    %116 = vector.broadcast %cst_63 : f32 to vector<8x1xf32>
    %117 = arith.divf %115, %116 : vector<8x1xf32>
    %118 = vector.broadcast %110 : vector<8x1xf32> to vector<8x32xf32>
    %119 = arith.subf %102, %118 : vector<8x32xf32>
    %cst_64 = arith.constant 9.99999974E-6 : f32
    %120 = vector.broadcast %cst_64 : f32 to vector<8x1xf32>
    %121 = arith.addf %117, %120 : vector<8x1xf32>
    %122 = math.rsqrt %121 : vector<8x1xf32>
    %123 = vector.broadcast %122 : vector<8x1xf32> to vector<8x32xf32>
    %124 = arith.mulf %119, %123 : vector<8x32xf32>
    %125 = vector.broadcast %104 : vector<1x32xf32> to vector<8x32xf32>
    %126 = arith.mulf %124, %125 : vector<8x32xf32>
    %127 = vector.broadcast %106 : vector<1x32xf32> to vector<8x32xf32>
    %128 = arith.addf %126, %127 : vector<8x32xf32>
    %129 = arith.addf %128, %5 : vector<8x32xf32>
    %c0_65 = arith.constant 0 : index
    %c0_66 = arith.constant 0 : index
    %c0_67 = arith.constant 0 : index
    %130 = vector.load %arg11[%c0_65, %c0_66, %c0_67] : memref<2x32x32xf32, #tpu.memory_space<vmem>>, vector<1x32x32xf32>
    %131 = vector.shape_cast %130 : vector<1x32x32xf32> to vector<32x32xf32>
    %cst_68 = arith.constant dense<0.000000e+00> : vector<8x32xf32>
    %132 = tpu.matmul %129, %131, %cst_68 {dimension_numbers = #tpu.dot_dimension_numbers<[1], [0], [0], [1], [0, 0, 1, 1], [], []>} : vector<8x32xf32>, vector<32x32xf32>, vector<8x32xf32> -> vector<8x32xf32>
    %c0_69 = arith.constant 0 : index
    %c0_70 = arith.constant 0 : index
    %c0_71 = arith.constant 0 : index
    %133 = vector.load %arg12[%c0_69, %c0_70, %c0_71] : memref<2x1x32xf32, #tpu.memory_space<vmem>>, vector<1x1x32xf32>
    %134 = vector.shape_cast %133 : vector<1x1x32xf32> to vector<1x32xf32>
    %135 = vector.broadcast %134 : vector<1x32xf32> to vector<8x32xf32>
    %136 = arith.addf %132, %135 : vector<8x32xf32>
    %cst_72 = arith.constant 0.353553385 : f32
    %137 = vector.broadcast %cst_72 : f32 to vector<8x32xf32>
    %138 = arith.mulf %136, %137 : vector<8x32xf32>
    %c0_73 = arith.constant 0 : index
    %c0_74 = arith.constant 0 : index
    %c0_75 = arith.constant 0 : index
    %139 = vector.load %arg13[%c0_73, %c0_74, %c0_75] : memref<2x32x32xf32, #tpu.memory_space<vmem>>, vector<1x32x32xf32>
    %140 = vector.shape_cast %139 : vector<1x32x32xf32> to vector<32x32xf32>
    %cst_76 = arith.constant dense<0.000000e+00> : vector<16x32xf32>
    %141 = tpu.matmul %10, %140, %cst_76 {dimension_numbers = #tpu.dot_dimension_numbers<[1], [0], [0], [1], [0, 0, 1, 1], [], []>} : vector<16x32xf32>, vector<32x32xf32>, vector<16x32xf32> -> vector<16x32xf32>
    %c0_77 = arith.constant 0 : index
    %c0_78 = arith.constant 0 : index
    %c0_79 = arith.constant 0 : index
    %142 = vector.load %arg14[%c0_77, %c0_78, %c0_79] : memref<2x1x32xf32, #tpu.memory_space<vmem>>, vector<1x1x32xf32>
    %143 = vector.shape_cast %142 : vector<1x1x32xf32> to vector<1x32xf32>
    %144 = vector.broadcast %143 : vector<1x32xf32> to vector<16x32xf32>
    %145 = arith.addf %141, %144 : vector<16x32xf32>
    %c0_80 = arith.constant 0 : index
    %c0_81 = arith.constant 0 : index
    %c0_82 = arith.constant 0 : index
    %146 = vector.load %arg15[%c0_80, %c0_81, %c0_82] : memref<2x32x32xf32, #tpu.memory_space<vmem>>, vector<1x32x32xf32>
    %147 = vector.shape_cast %146 : vector<1x32x32xf32> to vector<32x32xf32>
    %cst_83 = arith.constant dense<0.000000e+00> : vector<16x32xf32>
    %148 = tpu.matmul %7, %147, %cst_83 {dimension_numbers = #tpu.dot_dimension_numbers<[1], [0], [0], [1], [0, 0, 1, 1], [], []>} : vector<16x32xf32>, vector<32x32xf32>, vector<16x32xf32> -> vector<16x32xf32>
    %c0_84 = arith.constant 0 : index
    %c0_85 = arith.constant 0 : index
    %c0_86 = arith.constant 0 : index
    %149 = vector.load %arg16[%c0_84, %c0_85, %c0_86] : memref<2x1x32xf32, #tpu.memory_space<vmem>>, vector<1x1x32xf32>
    %150 = vector.shape_cast %149 : vector<1x1x32xf32> to vector<1x32xf32>
    %151 = vector.broadcast %150 : vector<1x32xf32> to vector<16x32xf32>
    %152 = arith.addf %148, %151 : vector<16x32xf32>
    %c0_87 = arith.constant 0 : index
    %c0_88 = arith.constant 0 : index
    %c0_89 = arith.constant 0 : index
    %153 = vector.load %arg17[%c0_87, %c0_88, %c0_89] : memref<2x32x32xf32, #tpu.memory_space<vmem>>, vector<1x32x32xf32>
    %154 = vector.shape_cast %153 : vector<1x32x32xf32> to vector<32x32xf32>
    %c0_90 = arith.constant 0 : index
    %c0_91 = arith.constant 0 : index
    %c0_92 = arith.constant 0 : index
    %155 = vector.load %arg18[%c0_90, %c0_91, %c0_92] : memref<2x1x32xf32, #tpu.memory_space<vmem>>, vector<1x1x32xf32>
    %156 = vector.shape_cast %155 : vector<1x1x32xf32> to vector<1x32xf32>
    %157 = vector.extract_strided_slice %138 {offsets = [0, 0], sizes = [8, 8], strides = [1, 1]} : vector<8x32xf32> to vector<8x8xf32>
    %158 = vector.extract_strided_slice %145 {offsets = [0, 0], sizes = [16, 8], strides = [1, 1]} : vector<16x32xf32> to vector<16x8xf32>
    %159 = vector.extract_strided_slice %152 {offsets = [0, 0], sizes = [16, 8], strides = [1, 1]} : vector<16x32xf32> to vector<16x8xf32>
    %cst_93 = arith.constant dense<0.000000e+00> : vector<8x16xf32>
    %160 = tpu.matmul %157, %158, %cst_93 {dimension_numbers = #tpu.dot_dimension_numbers<[1], [1], [0], [0], [0, 0, 1, 0], [], []>} : vector<8x8xf32>, vector<16x8xf32>, vector<8x16xf32> -> vector<8x16xf32>
    %cst_94 = arith.constant dense<0xFF800000> : vector<8xf32>
    %161 = vector.multi_reduction <maximumf>, %160, %cst_94 [1] : vector<8x16xf32> to vector<8xf32>
    %162 = vector.shape_cast %161 : vector<8xf32> to vector<8x1xf32>
    %163 = vector.broadcast %162 : vector<8x1xf32> to vector<8x16xf32>
    %164 = arith.subf %160, %163 : vector<8x16xf32>
    %165 = math.exp %164 : vector<8x16xf32>
    %cst_95 = arith.constant dense<0.000000e+00> : vector<8xf32>
    %166 = vector.multi_reduction <add>, %165, %cst_95 [1] : vector<8x16xf32> to vector<8xf32>
    %167 = vector.shape_cast %166 : vector<8xf32> to vector<8x1xf32>
    %168 = tpu.reciprocal %167 {approx = true} : vector<8x1xf32> -> vector<8x1xf32>
    %169 = vector.broadcast %168 : vector<8x1xf32> to vector<8x16xf32>
    %170 = arith.mulf %165, %169 : vector<8x16xf32>
    %cst_96 = arith.constant dense<0.000000e+00> : vector<8x8xf32>
    %171 = tpu.matmul %170, %159, %cst_96 {dimension_numbers = #tpu.dot_dimension_numbers<[1], [0], [0], [1], [0, 0, 1, 1], [], []>} : vector<8x16xf32>, vector<16x8xf32>, vector<8x8xf32> -> vector<8x8xf32>
    %172 = vector.extract_strided_slice %138 {offsets = [0, 8], sizes = [8, 8], strides = [1, 1]} : vector<8x32xf32> to vector<8x8xf32>
    %173 = vector.extract_strided_slice %145 {offsets = [0, 8], sizes = [16, 8], strides = [1, 1]} : vector<16x32xf32> to vector<16x8xf32>
    %174 = vector.extract_strided_slice %152 {offsets = [0, 8], sizes = [16, 8], strides = [1, 1]} : vector<16x32xf32> to vector<16x8xf32>
    %cst_97 = arith.constant dense<0.000000e+00> : vector<8x16xf32>
    %175 = tpu.matmul %172, %173, %cst_97 {dimension_numbers = #tpu.dot_dimension_numbers<[1], [1], [0], [0], [0, 0, 1, 0], [], []>} : vector<8x8xf32>, vector<16x8xf32>, vector<8x16xf32> -> vector<8x16xf32>
    %cst_98 = arith.constant dense<0xFF800000> : vector<8xf32>
    %176 = vector.multi_reduction <maximumf>, %175, %cst_98 [1] : vector<8x16xf32> to vector<8xf32>
    %177 = vector.shape_cast %176 : vector<8xf32> to vector<8x1xf32>
    %178 = vector.broadcast %177 : vector<8x1xf32> to vector<8x16xf32>
    %179 = arith.subf %175, %178 : vector<8x16xf32>
    %180 = math.exp %179 : vector<8x16xf32>
    %cst_99 = arith.constant dense<0.000000e+00> : vector<8xf32>
    %181 = vector.multi_reduction <add>, %180, %cst_99 [1] : vector<8x16xf32> to vector<8xf32>
    %182 = vector.shape_cast %181 : vector<8xf32> to vector<8x1xf32>
    %183 = tpu.reciprocal %182 {approx = true} : vector<8x1xf32> -> vector<8x1xf32>
    %184 = vector.broadcast %183 : vector<8x1xf32> to vector<8x16xf32>
    %185 = arith.mulf %180, %184 : vector<8x16xf32>
    %cst_100 = arith.constant dense<0.000000e+00> : vector<8x8xf32>
    %186 = tpu.matmul %185, %174, %cst_100 {dimension_numbers = #tpu.dot_dimension_numbers<[1], [0], [0], [1], [0, 0, 1, 1], [], []>} : vector<8x16xf32>, vector<16x8xf32>, vector<8x8xf32> -> vector<8x8xf32>
    %187 = vector.extract_strided_slice %138 {offsets = [0, 16], sizes = [8, 8], strides = [1, 1]} : vector<8x32xf32> to vector<8x8xf32>
    %188 = vector.extract_strided_slice %145 {offsets = [0, 16], sizes = [16, 8], strides = [1, 1]} : vector<16x32xf32> to vector<16x8xf32>
    %189 = vector.extract_strided_slice %152 {offsets = [0, 16], sizes = [16, 8], strides = [1, 1]} : vector<16x32xf32> to vector<16x8xf32>
    %cst_101 = arith.constant dense<0.000000e+00> : vector<8x16xf32>
    %190 = tpu.matmul %187, %188, %cst_101 {dimension_numbers = #tpu.dot_dimension_numbers<[1], [1], [0], [0], [0, 0, 1, 0], [], []>} : vector<8x8xf32>, vector<16x8xf32>, vector<8x16xf32> -> vector<8x16xf32>
    %cst_102 = arith.constant dense<0xFF800000> : vector<8xf32>
    %191 = vector.multi_reduction <maximumf>, %190, %cst_102 [1] : vector<8x16xf32> to vector<8xf32>
    %192 = vector.shape_cast %191 : vector<8xf32> to vector<8x1xf32>
    %193 = vector.broadcast %192 : vector<8x1xf32> to vector<8x16xf32>
    %194 = arith.subf %190, %193 : vector<8x16xf32>
    %195 = math.exp %194 : vector<8x16xf32>
    %cst_103 = arith.constant dense<0.000000e+00> : vector<8xf32>
    %196 = vector.multi_reduction <add>, %195, %cst_103 [1] : vector<8x16xf32> to vector<8xf32>
    %197 = vector.shape_cast %196 : vector<8xf32> to vector<8x1xf32>
    %198 = tpu.reciprocal %197 {approx = true} : vector<8x1xf32> -> vector<8x1xf32>
    %199 = vector.broadcast %198 : vector<8x1xf32> to vector<8x16xf32>
    %200 = arith.mulf %195, %199 : vector<8x16xf32>
    %cst_104 = arith.constant dense<0.000000e+00> : vector<8x8xf32>
    %201 = tpu.matmul %200, %189, %cst_104 {dimension_numbers = #tpu.dot_dimension_numbers<[1], [0], [0], [1], [0, 0, 1, 1], [], []>} : vector<8x16xf32>, vector<16x8xf32>, vector<8x8xf32> -> vector<8x8xf32>
    %202 = vector.extract_strided_slice %138 {offsets = [0, 24], sizes = [8, 8], strides = [1, 1]} : vector<8x32xf32> to vector<8x8xf32>
    %203 = vector.extract_strided_slice %145 {offsets = [0, 24], sizes = [16, 8], strides = [1, 1]} : vector<16x32xf32> to vector<16x8xf32>
    %204 = vector.extract_strided_slice %152 {offsets = [0, 24], sizes = [16, 8], strides = [1, 1]} : vector<16x32xf32> to vector<16x8xf32>
    %cst_105 = arith.constant dense<0.000000e+00> : vector<8x16xf32>
    %205 = tpu.matmul %202, %203, %cst_105 {dimension_numbers = #tpu.dot_dimension_numbers<[1], [1], [0], [0], [0, 0, 1, 0], [], []>} : vector<8x8xf32>, vector<16x8xf32>, vector<8x16xf32> -> vector<8x16xf32>
    %cst_106 = arith.constant dense<0xFF800000> : vector<8xf32>
    %206 = vector.multi_reduction <maximumf>, %205, %cst_106 [1] : vector<8x16xf32> to vector<8xf32>
    %207 = vector.shape_cast %206 : vector<8xf32> to vector<8x1xf32>
    %208 = vector.broadcast %207 : vector<8x1xf32> to vector<8x16xf32>
    %209 = arith.subf %205, %208 : vector<8x16xf32>
    %210 = math.exp %209 : vector<8x16xf32>
    %cst_107 = arith.constant dense<0.000000e+00> : vector<8xf32>
    %211 = vector.multi_reduction <add>, %210, %cst_107 [1] : vector<8x16xf32> to vector<8xf32>
    %212 = vector.shape_cast %211 : vector<8xf32> to vector<8x1xf32>
    %213 = tpu.reciprocal %212 {approx = true} : vector<8x1xf32> -> vector<8x1xf32>
    %214 = vector.broadcast %213 : vector<8x1xf32> to vector<8x16xf32>
    %215 = arith.mulf %210, %214 : vector<8x16xf32>
    %cst_108 = arith.constant dense<0.000000e+00> : vector<8x8xf32>
    %216 = tpu.matmul %215, %204, %cst_108 {dimension_numbers = #tpu.dot_dimension_numbers<[1], [0], [0], [1], [0, 0, 1, 1], [], []>} : vector<8x16xf32>, vector<16x8xf32>, vector<8x8xf32> -> vector<8x8xf32>
    %217 = tpu.concatenate %171, %186, %201, %216 in 1 : vector<8x8xf32>, vector<8x8xf32>, vector<8x8xf32>, vector<8x8xf32> -> vector<8x32xf32>
    %cst_109 = arith.constant dense<0.000000e+00> : vector<8x32xf32>
    %218 = tpu.matmul %217, %154, %cst_109 {dimension_numbers = #tpu.dot_dimension_numbers<[1], [0], [0], [1], [0, 0, 1, 1], [], []>} : vector<8x32xf32>, vector<32x32xf32>, vector<8x32xf32> -> vector<8x32xf32>
    %219 = vector.broadcast %156 : vector<1x32xf32> to vector<8x32xf32>
    %220 = arith.addf %218, %219 : vector<8x32xf32>
    %221 = arith.addf %128, %220 : vector<8x32xf32>
    %222 = vector.extract_strided_slice %12 {offsets = [1, 0, 0], sizes = [1, 1, 32], strides = [1, 1, 1]} : vector<3x1x32xf32> to vector<1x1x32xf32>
    %223 = vector.shape_cast %222 : vector<1x1x32xf32> to vector<1x32xf32>
    %224 = vector.extract_strided_slice %14 {offsets = [1, 0, 0], sizes = [1, 1, 32], strides = [1, 1, 1]} : vector<3x1x32xf32> to vector<1x1x32xf32>
    %225 = vector.shape_cast %224 : vector<1x1x32xf32> to vector<1x32xf32>
    %cst_110 = arith.constant dense<0.000000e+00> : vector<8xf32>
    %226 = vector.multi_reduction <add>, %221, %cst_110 [1] : vector<8x32xf32> to vector<8xf32>
    %227 = vector.shape_cast %226 : vector<8xf32> to vector<8x1xf32>
    %cst_111 = arith.constant 3.200000e+01 : f32
    %228 = vector.broadcast %cst_111 : f32 to vector<8x1xf32>
    %229 = arith.divf %227, %228 : vector<8x1xf32>
    %230 = vector.broadcast %229 : vector<8x1xf32> to vector<8x32xf32>
    %231 = arith.subf %221, %230 : vector<8x32xf32>
    %232 = arith.mulf %231, %231 : vector<8x32xf32>
    %cst_112 = arith.constant dense<0.000000e+00> : vector<8xf32>
    %233 = vector.multi_reduction <add>, %232, %cst_112 [1] : vector<8x32xf32> to vector<8xf32>
    %234 = vector.shape_cast %233 : vector<8xf32> to vector<8x1xf32>
    %cst_113 = arith.constant 3.200000e+01 : f32
    %235 = vector.broadcast %cst_113 : f32 to vector<8x1xf32>
    %236 = arith.divf %234, %235 : vector<8x1xf32>
    %237 = vector.broadcast %229 : vector<8x1xf32> to vector<8x32xf32>
    %238 = arith.subf %221, %237 : vector<8x32xf32>
    %cst_114 = arith.constant 9.99999974E-6 : f32
    %239 = vector.broadcast %cst_114 : f32 to vector<8x1xf32>
    %240 = arith.addf %236, %239 : vector<8x1xf32>
    %241 = math.rsqrt %240 : vector<8x1xf32>
    %242 = vector.broadcast %241 : vector<8x1xf32> to vector<8x32xf32>
    %243 = arith.mulf %238, %242 : vector<8x32xf32>
    %244 = vector.broadcast %223 : vector<1x32xf32> to vector<8x32xf32>
    %245 = arith.mulf %243, %244 : vector<8x32xf32>
    %246 = vector.broadcast %225 : vector<1x32xf32> to vector<8x32xf32>
    %247 = arith.addf %245, %246 : vector<8x32xf32>
    %c0_115 = arith.constant 0 : index
    %c0_116 = arith.constant 0 : index
    %c0_117 = arith.constant 0 : index
    %248 = vector.load %arg19[%c0_115, %c0_116, %c0_117] : memref<2x32x64xf32, #tpu.memory_space<vmem>>, vector<1x32x64xf32>
    %249 = vector.shape_cast %248 : vector<1x32x64xf32> to vector<32x64xf32>
    %cst_118 = arith.constant dense<0.000000e+00> : vector<8x64xf32>
    %250 = tpu.matmul %247, %249, %cst_118 {dimension_numbers = #tpu.dot_dimension_numbers<[1], [0], [0], [1], [0, 0, 1, 1], [], []>} : vector<8x32xf32>, vector<32x64xf32>, vector<8x64xf32> -> vector<8x64xf32>
    %c0_119 = arith.constant 0 : index
    %c0_120 = arith.constant 0 : index
    %c0_121 = arith.constant 0 : index
    %251 = vector.load %arg20[%c0_119, %c0_120, %c0_121] : memref<2x1x64xf32, #tpu.memory_space<vmem>>, vector<1x1x64xf32>
    %252 = vector.shape_cast %251 : vector<1x1x64xf32> to vector<1x64xf32>
    %253 = vector.broadcast %252 : vector<1x64xf32> to vector<8x64xf32>
    %254 = arith.addf %250, %253 : vector<8x64xf32>
    %cst_122 = arith.constant 0.000000e+00 : f32
    %255 = vector.broadcast %cst_122 : f32 to vector<8x64xf32>
    %256 = arith.maximumf %254, %255 : vector<8x64xf32>
    %c0_123 = arith.constant 0 : index
    %c0_124 = arith.constant 0 : index
    %c0_125 = arith.constant 0 : index
    %257 = vector.load %arg21[%c0_123, %c0_124, %c0_125] : memref<2x64x32xf32, #tpu.memory_space<vmem>>, vector<1x64x32xf32>
    %258 = vector.shape_cast %257 : vector<1x64x32xf32> to vector<64x32xf32>
    %cst_126 = arith.constant dense<0.000000e+00> : vector<8x32xf32>
    %259 = tpu.matmul %256, %258, %cst_126 {dimension_numbers = #tpu.dot_dimension_numbers<[1], [0], [0], [1], [0, 0, 1, 1], [], []>} : vector<8x64xf32>, vector<64x32xf32>, vector<8x32xf32> -> vector<8x32xf32>
    %c0_127 = arith.constant 0 : index
    %c0_128 = arith.constant 0 : index
    %c0_129 = arith.constant 0 : index
    %260 = vector.load %arg22[%c0_127, %c0_128, %c0_129] : memref<2x1x32xf32, #tpu.memory_space<vmem>>, vector<1x1x32xf32>
    %261 = vector.shape_cast %260 : vector<1x1x32xf32> to vector<1x32xf32>
    %262 = vector.broadcast %261 : vector<1x32xf32> to vector<8x32xf32>
    %263 = arith.addf %259, %262 : vector<8x32xf32>
    %264 = arith.addf %247, %263 : vector<8x32xf32>
    %265 = vector.extract_strided_slice %12 {offsets = [2, 0, 0], sizes = [1, 1, 32], strides = [1, 1, 1]} : vector<3x1x32xf32> to vector<1x1x32xf32>
    %266 = vector.shape_cast %265 : vector<1x1x32xf32> to vector<1x32xf32>
    %267 = vector.extract_strided_slice %14 {offsets = [2, 0, 0], sizes = [1, 1, 32], strides = [1, 1, 1]} : vector<3x1x32xf32> to vector<1x1x32xf32>
    %268 = vector.shape_cast %267 : vector<1x1x32xf32> to vector<1x32xf32>
    %cst_130 = arith.constant dense<0.000000e+00> : vector<8xf32>
    %269 = vector.multi_reduction <add>, %264, %cst_130 [1] : vector<8x32xf32> to vector<8xf32>
    %270 = vector.shape_cast %269 : vector<8xf32> to vector<8x1xf32>
    %cst_131 = arith.constant 3.200000e+01 : f32
    %271 = vector.broadcast %cst_131 : f32 to vector<8x1xf32>
    %272 = arith.divf %270, %271 : vector<8x1xf32>
    %273 = vector.broadcast %272 : vector<8x1xf32> to vector<8x32xf32>
    %274 = arith.subf %264, %273 : vector<8x32xf32>
    %275 = arith.mulf %274, %274 : vector<8x32xf32>
    %cst_132 = arith.constant dense<0.000000e+00> : vector<8xf32>
    %276 = vector.multi_reduction <add>, %275, %cst_132 [1] : vector<8x32xf32> to vector<8xf32>
    %277 = vector.shape_cast %276 : vector<8xf32> to vector<8x1xf32>
    %cst_133 = arith.constant 3.200000e+01 : f32
    %278 = vector.broadcast %cst_133 : f32 to vector<8x1xf32>
    %279 = arith.divf %277, %278 : vector<8x1xf32>
    %280 = vector.broadcast %272 : vector<8x1xf32> to vector<8x32xf32>
    %281 = arith.subf %264, %280 : vector<8x32xf32>
    %cst_134 = arith.constant 9.99999974E-6 : f32
    %282 = vector.broadcast %cst_134 : f32 to vector<8x1xf32>
    %283 = arith.addf %279, %282 : vector<8x1xf32>
    %284 = math.rsqrt %283 : vector<8x1xf32>
    %285 = vector.broadcast %284 : vector<8x1xf32> to vector<8x32xf32>
    %286 = arith.mulf %281, %285 : vector<8x32xf32>
    %287 = vector.broadcast %266 : vector<1x32xf32> to vector<8x32xf32>
    %288 = arith.mulf %286, %287 : vector<8x32xf32>
    %289 = vector.broadcast %268 : vector<1x32xf32> to vector<8x32xf32>
    %290 = arith.addf %288, %289 : vector<8x32xf32>
    %c1 = arith.constant 1 : index
    %c0_135 = arith.constant 0 : index
    %c0_136 = arith.constant 0 : index
    %c0_137 = arith.constant 0 : index
    %291 = vector.load %arg23[%c1, %c0_135, %c0_136, %c0_137] : memref<2x3x1x32xf32, #tpu.memory_space<vmem>>, vector<1x3x1x32xf32>
    %292 = vector.shape_cast %291 : vector<1x3x1x32xf32> to vector<3x1x32xf32>
    %c1_138 = arith.constant 1 : index
    %c0_139 = arith.constant 0 : index
    %c0_140 = arith.constant 0 : index
    %c0_141 = arith.constant 0 : index
    %293 = vector.load %arg24[%c1_138, %c0_139, %c0_140, %c0_141] : memref<2x3x1x32xf32, #tpu.memory_space<vmem>>, vector<1x3x1x32xf32>
    %294 = vector.shape_cast %293 : vector<1x3x1x32xf32> to vector<3x1x32xf32>
    %295 = arith.addf %290, %5 : vector<8x32xf32>
    %c1_142 = arith.constant 1 : index
    %c0_143 = arith.constant 0 : index
    %c0_144 = arith.constant 0 : index
    %296 = vector.load %arg5[%c1_142, %c0_143, %c0_144] : memref<2x32x64xf32, #tpu.memory_space<vmem>>, vector<1x32x64xf32>
    %297 = vector.shape_cast %296 : vector<1x32x64xf32> to vector<32x64xf32>
    %cst_145 = arith.constant dense<0.000000e+00> : vector<8x64xf32>
    %298 = tpu.matmul %295, %297, %cst_145 {dimension_numbers = #tpu.dot_dimension_numbers<[1], [0], [0], [1], [0, 0, 1, 1], [], []>} : vector<8x32xf32>, vector<32x64xf32>, vector<8x64xf32> -> vector<8x64xf32>
    %c1_146 = arith.constant 1 : index
    %c0_147 = arith.constant 0 : index
    %c0_148 = arith.constant 0 : index
    %299 = vector.load %arg6[%c1_146, %c0_147, %c0_148] : memref<2x1x64xf32, #tpu.memory_space<vmem>>, vector<1x1x64xf32>
    %300 = vector.shape_cast %299 : vector<1x1x64xf32> to vector<1x64xf32>
    %301 = vector.broadcast %300 : vector<1x64xf32> to vector<8x64xf32>
    %302 = arith.addf %298, %301 : vector<8x64xf32>
    %303 = vector.extract_strided_slice %302 {offsets = [0, 0], sizes = [8, 32], strides = [1, 1]} : vector<8x64xf32> to vector<8x32xf32>
    %cst_149 = arith.constant 0.353553385 : f32
    %304 = vector.broadcast %cst_149 : f32 to vector<8x32xf32>
    %305 = arith.mulf %303, %304 : vector<8x32xf32>
    %306 = vector.extract_strided_slice %302 {offsets = [0, 32], sizes = [8, 32], strides = [1, 1]} : vector<8x64xf32> to vector<8x32xf32>
    %c1_150 = arith.constant 1 : index
    %c0_151 = arith.constant 0 : index
    %c0_152 = arith.constant 0 : index
    %307 = vector.load %arg7[%c1_150, %c0_151, %c0_152] : memref<2x32x32xf32, #tpu.memory_space<vmem>>, vector<1x32x32xf32>
    %308 = vector.shape_cast %307 : vector<1x32x32xf32> to vector<32x32xf32>
    %cst_153 = arith.constant dense<0.000000e+00> : vector<8x32xf32>
    %309 = tpu.matmul %290, %308, %cst_153 {dimension_numbers = #tpu.dot_dimension_numbers<[1], [0], [0], [1], [0, 0, 1, 1], [], []>} : vector<8x32xf32>, vector<32x32xf32>, vector<8x32xf32> -> vector<8x32xf32>
    %c1_154 = arith.constant 1 : index
    %c0_155 = arith.constant 0 : index
    %c0_156 = arith.constant 0 : index
    %310 = vector.load %arg8[%c1_154, %c0_155, %c0_156] : memref<2x1x32xf32, #tpu.memory_space<vmem>>, vector<1x1x32xf32>
    %311 = vector.shape_cast %310 : vector<1x1x32xf32> to vector<1x32xf32>
    %312 = vector.broadcast %311 : vector<1x32xf32> to vector<8x32xf32>
    %313 = arith.addf %309, %312 : vector<8x32xf32>
    %c1_157 = arith.constant 1 : index
    %c0_158 = arith.constant 0 : index
    %c0_159 = arith.constant 0 : index
    %314 = vector.load %arg9[%c1_157, %c0_158, %c0_159] : memref<2x32x32xf32, #tpu.memory_space<vmem>>, vector<1x32x32xf32>
    %315 = vector.shape_cast %314 : vector<1x32x32xf32> to vector<32x32xf32>
    %c1_160 = arith.constant 1 : index
    %c0_161 = arith.constant 0 : index
    %c0_162 = arith.constant 0 : index
    %316 = vector.load %arg10[%c1_160, %c0_161, %c0_162] : memref<2x1x32xf32, #tpu.memory_space<vmem>>, vector<1x1x32xf32>
    %317 = vector.shape_cast %316 : vector<1x1x32xf32> to vector<1x32xf32>
    %318 = vector.extract_strided_slice %305 {offsets = [0, 0], sizes = [8, 8], strides = [1, 1]} : vector<8x32xf32> to vector<8x8xf32>
    %319 = vector.extract_strided_slice %306 {offsets = [0, 0], sizes = [8, 8], strides = [1, 1]} : vector<8x32xf32> to vector<8x8xf32>
    %320 = vector.extract_strided_slice %313 {offsets = [0, 0], sizes = [8, 8], strides = [1, 1]} : vector<8x32xf32> to vector<8x8xf32>
    %cst_163 = arith.constant dense<0.000000e+00> : vector<8x8xf32>
    %321 = tpu.matmul %318, %319, %cst_163 {dimension_numbers = #tpu.dot_dimension_numbers<[1], [1], [0], [0], [0, 0, 1, 0], [], []>} : vector<8x8xf32>, vector<8x8xf32>, vector<8x8xf32> -> vector<8x8xf32>
    %cst_164 = arith.constant dense<0xFF800000> : vector<8xf32>
    %322 = vector.multi_reduction <maximumf>, %321, %cst_164 [1] : vector<8x8xf32> to vector<8xf32>
    %323 = vector.shape_cast %322 : vector<8xf32> to vector<8x1xf32>
    %324 = vector.broadcast %323 : vector<8x1xf32> to vector<8x8xf32>
    %325 = arith.subf %321, %324 : vector<8x8xf32>
    %326 = math.exp %325 : vector<8x8xf32>
    %cst_165 = arith.constant dense<0.000000e+00> : vector<8xf32>
    %327 = vector.multi_reduction <add>, %326, %cst_165 [1] : vector<8x8xf32> to vector<8xf32>
    %328 = vector.shape_cast %327 : vector<8xf32> to vector<8x1xf32>
    %329 = tpu.reciprocal %328 {approx = true} : vector<8x1xf32> -> vector<8x1xf32>
    %330 = vector.broadcast %329 : vector<8x1xf32> to vector<8x8xf32>
    %331 = arith.mulf %326, %330 : vector<8x8xf32>
    %cst_166 = arith.constant dense<0.000000e+00> : vector<8x8xf32>
    %332 = tpu.matmul %331, %320, %cst_166 {dimension_numbers = #tpu.dot_dimension_numbers<[1], [0], [0], [1], [0, 0, 1, 1], [], []>} : vector<8x8xf32>, vector<8x8xf32>, vector<8x8xf32> -> vector<8x8xf32>
    %333 = vector.extract_strided_slice %305 {offsets = [0, 8], sizes = [8, 8], strides = [1, 1]} : vector<8x32xf32> to vector<8x8xf32>
    %334 = vector.extract_strided_slice %306 {offsets = [0, 8], sizes = [8, 8], strides = [1, 1]} : vector<8x32xf32> to vector<8x8xf32>
    %335 = vector.extract_strided_slice %313 {offsets = [0, 8], sizes = [8, 8], strides = [1, 1]} : vector<8x32xf32> to vector<8x8xf32>
    %cst_167 = arith.constant dense<0.000000e+00> : vector<8x8xf32>
    %336 = tpu.matmul %333, %334, %cst_167 {dimension_numbers = #tpu.dot_dimension_numbers<[1], [1], [0], [0], [0, 0, 1, 0], [], []>} : vector<8x8xf32>, vector<8x8xf32>, vector<8x8xf32> -> vector<8x8xf32>
    %cst_168 = arith.constant dense<0xFF800000> : vector<8xf32>
    %337 = vector.multi_reduction <maximumf>, %336, %cst_168 [1] : vector<8x8xf32> to vector<8xf32>
    %338 = vector.shape_cast %337 : vector<8xf32> to vector<8x1xf32>
    %339 = vector.broadcast %338 : vector<8x1xf32> to vector<8x8xf32>
    %340 = arith.subf %336, %339 : vector<8x8xf32>
    %341 = math.exp %340 : vector<8x8xf32>
    %cst_169 = arith.constant dense<0.000000e+00> : vector<8xf32>
    %342 = vector.multi_reduction <add>, %341, %cst_169 [1] : vector<8x8xf32> to vector<8xf32>
    %343 = vector.shape_cast %342 : vector<8xf32> to vector<8x1xf32>
    %344 = tpu.reciprocal %343 {approx = true} : vector<8x1xf32> -> vector<8x1xf32>
    %345 = vector.broadcast %344 : vector<8x1xf32> to vector<8x8xf32>
    %346 = arith.mulf %341, %345 : vector<8x8xf32>
    %cst_170 = arith.constant dense<0.000000e+00> : vector<8x8xf32>
    %347 = tpu.matmul %346, %335, %cst_170 {dimension_numbers = #tpu.dot_dimension_numbers<[1], [0], [0], [1], [0, 0, 1, 1], [], []>} : vector<8x8xf32>, vector<8x8xf32>, vector<8x8xf32> -> vector<8x8xf32>
    %348 = vector.extract_strided_slice %305 {offsets = [0, 16], sizes = [8, 8], strides = [1, 1]} : vector<8x32xf32> to vector<8x8xf32>
    %349 = vector.extract_strided_slice %306 {offsets = [0, 16], sizes = [8, 8], strides = [1, 1]} : vector<8x32xf32> to vector<8x8xf32>
    %350 = vector.extract_strided_slice %313 {offsets = [0, 16], sizes = [8, 8], strides = [1, 1]} : vector<8x32xf32> to vector<8x8xf32>
    %cst_171 = arith.constant dense<0.000000e+00> : vector<8x8xf32>
    %351 = tpu.matmul %348, %349, %cst_171 {dimension_numbers = #tpu.dot_dimension_numbers<[1], [1], [0], [0], [0, 0, 1, 0], [], []>} : vector<8x8xf32>, vector<8x8xf32>, vector<8x8xf32> -> vector<8x8xf32>
    %cst_172 = arith.constant dense<0xFF800000> : vector<8xf32>
    %352 = vector.multi_reduction <maximumf>, %351, %cst_172 [1] : vector<8x8xf32> to vector<8xf32>
    %353 = vector.shape_cast %352 : vector<8xf32> to vector<8x1xf32>
    %354 = vector.broadcast %353 : vector<8x1xf32> to vector<8x8xf32>
    %355 = arith.subf %351, %354 : vector<8x8xf32>
    %356 = math.exp %355 : vector<8x8xf32>
    %cst_173 = arith.constant dense<0.000000e+00> : vector<8xf32>
    %357 = vector.multi_reduction <add>, %356, %cst_173 [1] : vector<8x8xf32> to vector<8xf32>
    %358 = vector.shape_cast %357 : vector<8xf32> to vector<8x1xf32>
    %359 = tpu.reciprocal %358 {approx = true} : vector<8x1xf32> -> vector<8x1xf32>
    %360 = vector.broadcast %359 : vector<8x1xf32> to vector<8x8xf32>
    %361 = arith.mulf %356, %360 : vector<8x8xf32>
    %cst_174 = arith.constant dense<0.000000e+00> : vector<8x8xf32>
    %362 = tpu.matmul %361, %350, %cst_174 {dimension_numbers = #tpu.dot_dimension_numbers<[1], [0], [0], [1], [0, 0, 1, 1], [], []>} : vector<8x8xf32>, vector<8x8xf32>, vector<8x8xf32> -> vector<8x8xf32>
    %363 = vector.extract_strided_slice %305 {offsets = [0, 24], sizes = [8, 8], strides = [1, 1]} : vector<8x32xf32> to vector<8x8xf32>
    %364 = vector.extract_strided_slice %306 {offsets = [0, 24], sizes = [8, 8], strides = [1, 1]} : vector<8x32xf32> to vector<8x8xf32>
    %365 = vector.extract_strided_slice %313 {offsets = [0, 24], sizes = [8, 8], strides = [1, 1]} : vector<8x32xf32> to vector<8x8xf32>
    %cst_175 = arith.constant dense<0.000000e+00> : vector<8x8xf32>
    %366 = tpu.matmul %363, %364, %cst_175 {dimension_numbers = #tpu.dot_dimension_numbers<[1], [1], [0], [0], [0, 0, 1, 0], [], []>} : vector<8x8xf32>, vector<8x8xf32>, vector<8x8xf32> -> vector<8x8xf32>
    %cst_176 = arith.constant dense<0xFF800000> : vector<8xf32>
    %367 = vector.multi_reduction <maximumf>, %366, %cst_176 [1] : vector<8x8xf32> to vector<8xf32>
    %368 = vector.shape_cast %367 : vector<8xf32> to vector<8x1xf32>
    %369 = vector.broadcast %368 : vector<8x1xf32> to vector<8x8xf32>
    %370 = arith.subf %366, %369 : vector<8x8xf32>
    %371 = math.exp %370 : vector<8x8xf32>
    %cst_177 = arith.constant dense<0.000000e+00> : vector<8xf32>
    %372 = vector.multi_reduction <add>, %371, %cst_177 [1] : vector<8x8xf32> to vector<8xf32>
    %373 = vector.shape_cast %372 : vector<8xf32> to vector<8x1xf32>
    %374 = tpu.reciprocal %373 {approx = true} : vector<8x1xf32> -> vector<8x1xf32>
    %375 = vector.broadcast %374 : vector<8x1xf32> to vector<8x8xf32>
    %376 = arith.mulf %371, %375 : vector<8x8xf32>
    %cst_178 = arith.constant dense<0.000000e+00> : vector<8x8xf32>
    %377 = tpu.matmul %376, %365, %cst_178 {dimension_numbers = #tpu.dot_dimension_numbers<[1], [0], [0], [1], [0, 0, 1, 1], [], []>} : vector<8x8xf32>, vector<8x8xf32>, vector<8x8xf32> -> vector<8x8xf32>
    %378 = tpu.concatenate %332, %347, %362, %377 in 1 : vector<8x8xf32>, vector<8x8xf32>, vector<8x8xf32>, vector<8x8xf32> -> vector<8x32xf32>
    %cst_179 = arith.constant dense<0.000000e+00> : vector<8x32xf32>
    %379 = tpu.matmul %378, %315, %cst_179 {dimension_numbers = #tpu.dot_dimension_numbers<[1], [0], [0], [1], [0, 0, 1, 1], [], []>} : vector<8x32xf32>, vector<32x32xf32>, vector<8x32xf32> -> vector<8x32xf32>
    %380 = vector.broadcast %317 : vector<1x32xf32> to vector<8x32xf32>
    %381 = arith.addf %379, %380 : vector<8x32xf32>
    %382 = arith.addf %290, %381 : vector<8x32xf32>
    %383 = vector.extract_strided_slice %292 {offsets = [0, 0, 0], sizes = [1, 1, 32], strides = [1, 1, 1]} : vector<3x1x32xf32> to vector<1x1x32xf32>
    %384 = vector.shape_cast %383 : vector<1x1x32xf32> to vector<1x32xf32>
    %385 = vector.extract_strided_slice %294 {offsets = [0, 0, 0], sizes = [1, 1, 32], strides = [1, 1, 1]} : vector<3x1x32xf32> to vector<1x1x32xf32>
    %386 = vector.shape_cast %385 : vector<1x1x32xf32> to vector<1x32xf32>
    %cst_180 = arith.constant dense<0.000000e+00> : vector<8xf32>
    %387 = vector.multi_reduction <add>, %382, %cst_180 [1] : vector<8x32xf32> to vector<8xf32>
    %388 = vector.shape_cast %387 : vector<8xf32> to vector<8x1xf32>
    %cst_181 = arith.constant 3.200000e+01 : f32
    %389 = vector.broadcast %cst_181 : f32 to vector<8x1xf32>
    %390 = arith.divf %388, %389 : vector<8x1xf32>
    %391 = vector.broadcast %390 : vector<8x1xf32> to vector<8x32xf32>
    %392 = arith.subf %382, %391 : vector<8x32xf32>
    %393 = arith.mulf %392, %392 : vector<8x32xf32>
    %cst_182 = arith.constant dense<0.000000e+00> : vector<8xf32>
    %394 = vector.multi_reduction <add>, %393, %cst_182 [1] : vector<8x32xf32> to vector<8xf32>
    %395 = vector.shape_cast %394 : vector<8xf32> to vector<8x1xf32>
    %cst_183 = arith.constant 3.200000e+01 : f32
    %396 = vector.broadcast %cst_183 : f32 to vector<8x1xf32>
    %397 = arith.divf %395, %396 : vector<8x1xf32>
    %398 = vector.broadcast %390 : vector<8x1xf32> to vector<8x32xf32>
    %399 = arith.subf %382, %398 : vector<8x32xf32>
    %cst_184 = arith.constant 9.99999974E-6 : f32
    %400 = vector.broadcast %cst_184 : f32 to vector<8x1xf32>
    %401 = arith.addf %397, %400 : vector<8x1xf32>
    %402 = math.rsqrt %401 : vector<8x1xf32>
    %403 = vector.broadcast %402 : vector<8x1xf32> to vector<8x32xf32>
    %404 = arith.mulf %399, %403 : vector<8x32xf32>
    %405 = vector.broadcast %384 : vector<1x32xf32> to vector<8x32xf32>
    %406 = arith.mulf %404, %405 : vector<8x32xf32>
    %407 = vector.broadcast %386 : vector<1x32xf32> to vector<8x32xf32>
    %408 = arith.addf %406, %407 : vector<8x32xf32>
    %409 = arith.addf %408, %5 : vector<8x32xf32>
    %c1_185 = arith.constant 1 : index
    %c0_186 = arith.constant 0 : index
    %c0_187 = arith.constant 0 : index
    %410 = vector.load %arg11[%c1_185, %c0_186, %c0_187] : memref<2x32x32xf32, #tpu.memory_space<vmem>>, vector<1x32x32xf32>
    %411 = vector.shape_cast %410 : vector<1x32x32xf32> to vector<32x32xf32>
    %cst_188 = arith.constant dense<0.000000e+00> : vector<8x32xf32>
    %412 = tpu.matmul %409, %411, %cst_188 {dimension_numbers = #tpu.dot_dimension_numbers<[1], [0], [0], [1], [0, 0, 1, 1], [], []>} : vector<8x32xf32>, vector<32x32xf32>, vector<8x32xf32> -> vector<8x32xf32>
    %c1_189 = arith.constant 1 : index
    %c0_190 = arith.constant 0 : index
    %c0_191 = arith.constant 0 : index
    %413 = vector.load %arg12[%c1_189, %c0_190, %c0_191] : memref<2x1x32xf32, #tpu.memory_space<vmem>>, vector<1x1x32xf32>
    %414 = vector.shape_cast %413 : vector<1x1x32xf32> to vector<1x32xf32>
    %415 = vector.broadcast %414 : vector<1x32xf32> to vector<8x32xf32>
    %416 = arith.addf %412, %415 : vector<8x32xf32>
    %cst_192 = arith.constant 0.353553385 : f32
    %417 = vector.broadcast %cst_192 : f32 to vector<8x32xf32>
    %418 = arith.mulf %416, %417 : vector<8x32xf32>
    %c1_193 = arith.constant 1 : index
    %c0_194 = arith.constant 0 : index
    %c0_195 = arith.constant 0 : index
    %419 = vector.load %arg13[%c1_193, %c0_194, %c0_195] : memref<2x32x32xf32, #tpu.memory_space<vmem>>, vector<1x32x32xf32>
    %420 = vector.shape_cast %419 : vector<1x32x32xf32> to vector<32x32xf32>
    %cst_196 = arith.constant dense<0.000000e+00> : vector<16x32xf32>
    %421 = tpu.matmul %10, %420, %cst_196 {dimension_numbers = #tpu.dot_dimension_numbers<[1], [0], [0], [1], [0, 0, 1, 1], [], []>} : vector<16x32xf32>, vector<32x32xf32>, vector<16x32xf32> -> vector<16x32xf32>
    %c1_197 = arith.constant 1 : index
    %c0_198 = arith.constant 0 : index
    %c0_199 = arith.constant 0 : index
    %422 = vector.load %arg14[%c1_197, %c0_198, %c0_199] : memref<2x1x32xf32, #tpu.memory_space<vmem>>, vector<1x1x32xf32>
    %423 = vector.shape_cast %422 : vector<1x1x32xf32> to vector<1x32xf32>
    %424 = vector.broadcast %423 : vector<1x32xf32> to vector<16x32xf32>
    %425 = arith.addf %421, %424 : vector<16x32xf32>
    %c1_200 = arith.constant 1 : index
    %c0_201 = arith.constant 0 : index
    %c0_202 = arith.constant 0 : index
    %426 = vector.load %arg15[%c1_200, %c0_201, %c0_202] : memref<2x32x32xf32, #tpu.memory_space<vmem>>, vector<1x32x32xf32>
    %427 = vector.shape_cast %426 : vector<1x32x32xf32> to vector<32x32xf32>
    %cst_203 = arith.constant dense<0.000000e+00> : vector<16x32xf32>
    %428 = tpu.matmul %7, %427, %cst_203 {dimension_numbers = #tpu.dot_dimension_numbers<[1], [0], [0], [1], [0, 0, 1, 1], [], []>} : vector<16x32xf32>, vector<32x32xf32>, vector<16x32xf32> -> vector<16x32xf32>
    %c1_204 = arith.constant 1 : index
    %c0_205 = arith.constant 0 : index
    %c0_206 = arith.constant 0 : index
    %429 = vector.load %arg16[%c1_204, %c0_205, %c0_206] : memref<2x1x32xf32, #tpu.memory_space<vmem>>, vector<1x1x32xf32>
    %430 = vector.shape_cast %429 : vector<1x1x32xf32> to vector<1x32xf32>
    %431 = vector.broadcast %430 : vector<1x32xf32> to vector<16x32xf32>
    %432 = arith.addf %428, %431 : vector<16x32xf32>
    %c1_207 = arith.constant 1 : index
    %c0_208 = arith.constant 0 : index
    %c0_209 = arith.constant 0 : index
    %433 = vector.load %arg17[%c1_207, %c0_208, %c0_209] : memref<2x32x32xf32, #tpu.memory_space<vmem>>, vector<1x32x32xf32>
    %434 = vector.shape_cast %433 : vector<1x32x32xf32> to vector<32x32xf32>
    %c1_210 = arith.constant 1 : index
    %c0_211 = arith.constant 0 : index
    %c0_212 = arith.constant 0 : index
    %435 = vector.load %arg18[%c1_210, %c0_211, %c0_212] : memref<2x1x32xf32, #tpu.memory_space<vmem>>, vector<1x1x32xf32>
    %436 = vector.shape_cast %435 : vector<1x1x32xf32> to vector<1x32xf32>
    %437 = vector.extract_strided_slice %418 {offsets = [0, 0], sizes = [8, 8], strides = [1, 1]} : vector<8x32xf32> to vector<8x8xf32>
    %438 = vector.extract_strided_slice %425 {offsets = [0, 0], sizes = [16, 8], strides = [1, 1]} : vector<16x32xf32> to vector<16x8xf32>
    %439 = vector.extract_strided_slice %432 {offsets = [0, 0], sizes = [16, 8], strides = [1, 1]} : vector<16x32xf32> to vector<16x8xf32>
    %cst_213 = arith.constant dense<0.000000e+00> : vector<8x16xf32>
    %440 = tpu.matmul %437, %438, %cst_213 {dimension_numbers = #tpu.dot_dimension_numbers<[1], [1], [0], [0], [0, 0, 1, 0], [], []>} : vector<8x8xf32>, vector<16x8xf32>, vector<8x16xf32> -> vector<8x16xf32>
    %cst_214 = arith.constant dense<0xFF800000> : vector<8xf32>
    %441 = vector.multi_reduction <maximumf>, %440, %cst_214 [1] : vector<8x16xf32> to vector<8xf32>
    %442 = vector.shape_cast %441 : vector<8xf32> to vector<8x1xf32>
    %443 = vector.broadcast %442 : vector<8x1xf32> to vector<8x16xf32>
    %444 = arith.subf %440, %443 : vector<8x16xf32>
    %445 = math.exp %444 : vector<8x16xf32>
    %cst_215 = arith.constant dense<0.000000e+00> : vector<8xf32>
    %446 = vector.multi_reduction <add>, %445, %cst_215 [1] : vector<8x16xf32> to vector<8xf32>
    %447 = vector.shape_cast %446 : vector<8xf32> to vector<8x1xf32>
    %448 = tpu.reciprocal %447 {approx = true} : vector<8x1xf32> -> vector<8x1xf32>
    %449 = vector.broadcast %448 : vector<8x1xf32> to vector<8x16xf32>
    %450 = arith.mulf %445, %449 : vector<8x16xf32>
    %cst_216 = arith.constant dense<0.000000e+00> : vector<8x8xf32>
    %451 = tpu.matmul %450, %439, %cst_216 {dimension_numbers = #tpu.dot_dimension_numbers<[1], [0], [0], [1], [0, 0, 1, 1], [], []>} : vector<8x16xf32>, vector<16x8xf32>, vector<8x8xf32> -> vector<8x8xf32>
    %452 = vector.extract_strided_slice %418 {offsets = [0, 8], sizes = [8, 8], strides = [1, 1]} : vector<8x32xf32> to vector<8x8xf32>
    %453 = vector.extract_strided_slice %425 {offsets = [0, 8], sizes = [16, 8], strides = [1, 1]} : vector<16x32xf32> to vector<16x8xf32>
    %454 = vector.extract_strided_slice %432 {offsets = [0, 8], sizes = [16, 8], strides = [1, 1]} : vector<16x32xf32> to vector<16x8xf32>
    %cst_217 = arith.constant dense<0.000000e+00> : vector<8x16xf32>
    %455 = tpu.matmul %452, %453, %cst_217 {dimension_numbers = #tpu.dot_dimension_numbers<[1], [1], [0], [0], [0, 0, 1, 0], [], []>} : vector<8x8xf32>, vector<16x8xf32>, vector<8x16xf32> -> vector<8x16xf32>
    %cst_218 = arith.constant dense<0xFF800000> : vector<8xf32>
    %456 = vector.multi_reduction <maximumf>, %455, %cst_218 [1] : vector<8x16xf32> to vector<8xf32>
    %457 = vector.shape_cast %456 : vector<8xf32> to vector<8x1xf32>
    %458 = vector.broadcast %457 : vector<8x1xf32> to vector<8x16xf32>
    %459 = arith.subf %455, %458 : vector<8x16xf32>
    %460 = math.exp %459 : vector<8x16xf32>
    %cst_219 = arith.constant dense<0.000000e+00> : vector<8xf32>
    %461 = vector.multi_reduction <add>, %460, %cst_219 [1] : vector<8x16xf32> to vector<8xf32>
    %462 = vector.shape_cast %461 : vector<8xf32> to vector<8x1xf32>
    %463 = tpu.reciprocal %462 {approx = true} : vector<8x1xf32> -> vector<8x1xf32>
    %464 = vector.broadcast %463 : vector<8x1xf32> to vector<8x16xf32>
    %465 = arith.mulf %460, %464 : vector<8x16xf32>
    %cst_220 = arith.constant dense<0.000000e+00> : vector<8x8xf32>
    %466 = tpu.matmul %465, %454, %cst_220 {dimension_numbers = #tpu.dot_dimension_numbers<[1], [0], [0], [1], [0, 0, 1, 1], [], []>} : vector<8x16xf32>, vector<16x8xf32>, vector<8x8xf32> -> vector<8x8xf32>
    %467 = vector.extract_strided_slice %418 {offsets = [0, 16], sizes = [8, 8], strides = [1, 1]} : vector<8x32xf32> to vector<8x8xf32>
    %468 = vector.extract_strided_slice %425 {offsets = [0, 16], sizes = [16, 8], strides = [1, 1]} : vector<16x32xf32> to vector<16x8xf32>
    %469 = vector.extract_strided_slice %432 {offsets = [0, 16], sizes = [16, 8], strides = [1, 1]} : vector<16x32xf32> to vector<16x8xf32>
    %cst_221 = arith.constant dense<0.000000e+00> : vector<8x16xf32>
    %470 = tpu.matmul %467, %468, %cst_221 {dimension_numbers = #tpu.dot_dimension_numbers<[1], [1], [0], [0], [0, 0, 1, 0], [], []>} : vector<8x8xf32>, vector<16x8xf32>, vector<8x16xf32> -> vector<8x16xf32>
    %cst_222 = arith.constant dense<0xFF800000> : vector<8xf32>
    %471 = vector.multi_reduction <maximumf>, %470, %cst_222 [1] : vector<8x16xf32> to vector<8xf32>
    %472 = vector.shape_cast %471 : vector<8xf32> to vector<8x1xf32>
    %473 = vector.broadcast %472 : vector<8x1xf32> to vector<8x16xf32>
    %474 = arith.subf %470, %473 : vector<8x16xf32>
    %475 = math.exp %474 : vector<8x16xf32>
    %cst_223 = arith.constant dense<0.000000e+00> : vector<8xf32>
    %476 = vector.multi_reduction <add>, %475, %cst_223 [1] : vector<8x16xf32> to vector<8xf32>
    %477 = vector.shape_cast %476 : vector<8xf32> to vector<8x1xf32>
    %478 = tpu.reciprocal %477 {approx = true} : vector<8x1xf32> -> vector<8x1xf32>
    %479 = vector.broadcast %478 : vector<8x1xf32> to vector<8x16xf32>
    %480 = arith.mulf %475, %479 : vector<8x16xf32>
    %cst_224 = arith.constant dense<0.000000e+00> : vector<8x8xf32>
    %481 = tpu.matmul %480, %469, %cst_224 {dimension_numbers = #tpu.dot_dimension_numbers<[1], [0], [0], [1], [0, 0, 1, 1], [], []>} : vector<8x16xf32>, vector<16x8xf32>, vector<8x8xf32> -> vector<8x8xf32>
    %482 = vector.extract_strided_slice %418 {offsets = [0, 24], sizes = [8, 8], strides = [1, 1]} : vector<8x32xf32> to vector<8x8xf32>
    %483 = vector.extract_strided_slice %425 {offsets = [0, 24], sizes = [16, 8], strides = [1, 1]} : vector<16x32xf32> to vector<16x8xf32>
    %484 = vector.extract_strided_slice %432 {offsets = [0, 24], sizes = [16, 8], strides = [1, 1]} : vector<16x32xf32> to vector<16x8xf32>
    %cst_225 = arith.constant dense<0.000000e+00> : vector<8x16xf32>
    %485 = tpu.matmul %482, %483, %cst_225 {dimension_numbers = #tpu.dot_dimension_numbers<[1], [1], [0], [0], [0, 0, 1, 0], [], []>} : vector<8x8xf32>, vector<16x8xf32>, vector<8x16xf32> -> vector<8x16xf32>
    %cst_226 = arith.constant dense<0xFF800000> : vector<8xf32>
    %486 = vector.multi_reduction <maximumf>, %485, %cst_226 [1] : vector<8x16xf32> to vector<8xf32>
    %487 = vector.shape_cast %486 : vector<8xf32> to vector<8x1xf32>
    %488 = vector.broadcast %487 : vector<8x1xf32> to vector<8x16xf32>
    %489 = arith.subf %485, %488 : vector<8x16xf32>
    %490 = math.exp %489 : vector<8x16xf32>
    %cst_227 = arith.constant dense<0.000000e+00> : vector<8xf32>
    %491 = vector.multi_reduction <add>, %490, %cst_227 [1] : vector<8x16xf32> to vector<8xf32>
    %492 = vector.shape_cast %491 : vector<8xf32> to vector<8x1xf32>
    %493 = tpu.reciprocal %492 {approx = true} : vector<8x1xf32> -> vector<8x1xf32>
    %494 = vector.broadcast %493 : vector<8x1xf32> to vector<8x16xf32>
    %495 = arith.mulf %490, %494 : vector<8x16xf32>
    %cst_228 = arith.constant dense<0.000000e+00> : vector<8x8xf32>
    %496 = tpu.matmul %495, %484, %cst_228 {dimension_numbers = #tpu.dot_dimension_numbers<[1], [0], [0], [1], [0, 0, 1, 1], [], []>} : vector<8x16xf32>, vector<16x8xf32>, vector<8x8xf32> -> vector<8x8xf32>
    %497 = tpu.concatenate %451, %466, %481, %496 in 1 : vector<8x8xf32>, vector<8x8xf32>, vector<8x8xf32>, vector<8x8xf32> -> vector<8x32xf32>
    %cst_229 = arith.constant dense<0.000000e+00> : vector<8x32xf32>
    %498 = tpu.matmul %497, %434, %cst_229 {dimension_numbers = #tpu.dot_dimension_numbers<[1], [0], [0], [1], [0, 0, 1, 1], [], []>} : vector<8x32xf32>, vector<32x32xf32>, vector<8x32xf32> -> vector<8x32xf32>
    %499 = vector.broadcast %436 : vector<1x32xf32> to vector<8x32xf32>
    %500 = arith.addf %498, %499 : vector<8x32xf32>
    %501 = arith.addf %408, %500 : vector<8x32xf32>
    %502 = vector.extract_strided_slice %292 {offsets = [1, 0, 0], sizes = [1, 1, 32], strides = [1, 1, 1]} : vector<3x1x32xf32> to vector<1x1x32xf32>
    %503 = vector.shape_cast %502 : vector<1x1x32xf32> to vector<1x32xf32>
    %504 = vector.extract_strided_slice %294 {offsets = [1, 0, 0], sizes = [1, 1, 32], strides = [1, 1, 1]} : vector<3x1x32xf32> to vector<1x1x32xf32>
    %505 = vector.shape_cast %504 : vector<1x1x32xf32> to vector<1x32xf32>
    %cst_230 = arith.constant dense<0.000000e+00> : vector<8xf32>
    %506 = vector.multi_reduction <add>, %501, %cst_230 [1] : vector<8x32xf32> to vector<8xf32>
    %507 = vector.shape_cast %506 : vector<8xf32> to vector<8x1xf32>
    %cst_231 = arith.constant 3.200000e+01 : f32
    %508 = vector.broadcast %cst_231 : f32 to vector<8x1xf32>
    %509 = arith.divf %507, %508 : vector<8x1xf32>
    %510 = vector.broadcast %509 : vector<8x1xf32> to vector<8x32xf32>
    %511 = arith.subf %501, %510 : vector<8x32xf32>
    %512 = arith.mulf %511, %511 : vector<8x32xf32>
    %cst_232 = arith.constant dense<0.000000e+00> : vector<8xf32>
    %513 = vector.multi_reduction <add>, %512, %cst_232 [1] : vector<8x32xf32> to vector<8xf32>
    %514 = vector.shape_cast %513 : vector<8xf32> to vector<8x1xf32>
    %cst_233 = arith.constant 3.200000e+01 : f32
    %515 = vector.broadcast %cst_233 : f32 to vector<8x1xf32>
    %516 = arith.divf %514, %515 : vector<8x1xf32>
    %517 = vector.broadcast %509 : vector<8x1xf32> to vector<8x32xf32>
    %518 = arith.subf %501, %517 : vector<8x32xf32>
    %cst_234 = arith.constant 9.99999974E-6 : f32
    %519 = vector.broadcast %cst_234 : f32 to vector<8x1xf32>
    %520 = arith.addf %516, %519 : vector<8x1xf32>
    %521 = math.rsqrt %520 : vector<8x1xf32>
    %522 = vector.broadcast %521 : vector<8x1xf32> to vector<8x32xf32>
    %523 = arith.mulf %518, %522 : vector<8x32xf32>
    %524 = vector.broadcast %503 : vector<1x32xf32> to vector<8x32xf32>
    %525 = arith.mulf %523, %524 : vector<8x32xf32>
    %526 = vector.broadcast %505 : vector<1x32xf32> to vector<8x32xf32>
    %527 = arith.addf %525, %526 : vector<8x32xf32>
    %c1_235 = arith.constant 1 : index
    %c0_236 = arith.constant 0 : index
    %c0_237 = arith.constant 0 : index
    %528 = vector.load %arg19[%c1_235, %c0_236, %c0_237] : memref<2x32x64xf32, #tpu.memory_space<vmem>>, vector<1x32x64xf32>
    %529 = vector.shape_cast %528 : vector<1x32x64xf32> to vector<32x64xf32>
    %cst_238 = arith.constant dense<0.000000e+00> : vector<8x64xf32>
    %530 = tpu.matmul %527, %529, %cst_238 {dimension_numbers = #tpu.dot_dimension_numbers<[1], [0], [0], [1], [0, 0, 1, 1], [], []>} : vector<8x32xf32>, vector<32x64xf32>, vector<8x64xf32> -> vector<8x64xf32>
    %c1_239 = arith.constant 1 : index
    %c0_240 = arith.constant 0 : index
    %c0_241 = arith.constant 0 : index
    %531 = vector.load %arg20[%c1_239, %c0_240, %c0_241] : memref<2x1x64xf32, #tpu.memory_space<vmem>>, vector<1x1x64xf32>
    %532 = vector.shape_cast %531 : vector<1x1x64xf32> to vector<1x64xf32>
    %533 = vector.broadcast %532 : vector<1x64xf32> to vector<8x64xf32>
    %534 = arith.addf %530, %533 : vector<8x64xf32>
    %cst_242 = arith.constant 0.000000e+00 : f32
    %535 = vector.broadcast %cst_242 : f32 to vector<8x64xf32>
    %536 = arith.maximumf %534, %535 : vector<8x64xf32>
    %c1_243 = arith.constant 1 : index
    %c0_244 = arith.constant 0 : index
    %c0_245 = arith.constant 0 : index
    %537 = vector.load %arg21[%c1_243, %c0_244, %c0_245] : memref<2x64x32xf32, #tpu.memory_space<vmem>>, vector<1x64x32xf32>
    %538 = vector.shape_cast %537 : vector<1x64x32xf32> to vector<64x32xf32>
    %cst_246 = arith.constant dense<0.000000e+00> : vector<8x32xf32>
    %539 = tpu.matmul %536, %538, %cst_246 {dimension_numbers = #tpu.dot_dimension_numbers<[1], [0], [0], [1], [0, 0, 1, 1], [], []>} : vector<8x64xf32>, vector<64x32xf32>, vector<8x32xf32> -> vector<8x32xf32>
    %c1_247 = arith.constant 1 : index
    %c0_248 = arith.constant 0 : index
    %c0_249 = arith.constant 0 : index
    %540 = vector.load %arg22[%c1_247, %c0_248, %c0_249] : memref<2x1x32xf32, #tpu.memory_space<vmem>>, vector<1x1x32xf32>
    %541 = vector.shape_cast %540 : vector<1x1x32xf32> to vector<1x32xf32>
    %542 = vector.broadcast %541 : vector<1x32xf32> to vector<8x32xf32>
    %543 = arith.addf %539, %542 : vector<8x32xf32>
    %544 = arith.addf %527, %543 : vector<8x32xf32>
    %545 = vector.extract_strided_slice %292 {offsets = [2, 0, 0], sizes = [1, 1, 32], strides = [1, 1, 1]} : vector<3x1x32xf32> to vector<1x1x32xf32>
    %546 = vector.shape_cast %545 : vector<1x1x32xf32> to vector<1x32xf32>
    %547 = vector.extract_strided_slice %294 {offsets = [2, 0, 0], sizes = [1, 1, 32], strides = [1, 1, 1]} : vector<3x1x32xf32> to vector<1x1x32xf32>
    %548 = vector.shape_cast %547 : vector<1x1x32xf32> to vector<1x32xf32>
    %cst_250 = arith.constant dense<0.000000e+00> : vector<8xf32>
    %549 = vector.multi_reduction <add>, %544, %cst_250 [1] : vector<8x32xf32> to vector<8xf32>
    %550 = vector.shape_cast %549 : vector<8xf32> to vector<8x1xf32>
    %cst_251 = arith.constant 3.200000e+01 : f32
    %551 = vector.broadcast %cst_251 : f32 to vector<8x1xf32>
    %552 = arith.divf %550, %551 : vector<8x1xf32>
    %553 = vector.broadcast %552 : vector<8x1xf32> to vector<8x32xf32>
    %554 = arith.subf %544, %553 : vector<8x32xf32>
    %555 = arith.mulf %554, %554 : vector<8x32xf32>
    %cst_252 = arith.constant dense<0.000000e+00> : vector<8xf32>
    %556 = vector.multi_reduction <add>, %555, %cst_252 [1] : vector<8x32xf32> to vector<8xf32>
    %557 = vector.shape_cast %556 : vector<8xf32> to vector<8x1xf32>
    %cst_253 = arith.constant 3.200000e+01 : f32
    %558 = vector.broadcast %cst_253 : f32 to vector<8x1xf32>
    %559 = arith.divf %557, %558 : vector<8x1xf32>
    %560 = vector.broadcast %552 : vector<8x1xf32> to vector<8x32xf32>
    %561 = arith.subf %544, %560 : vector<8x32xf32>
    %cst_254 = arith.constant 9.99999974E-6 : f32
    %562 = vector.broadcast %cst_254 : f32 to vector<8x1xf32>
    %563 = arith.addf %559, %562 : vector<8x1xf32>
    %564 = math.rsqrt %563 : vector<8x1xf32>
    %565 = vector.broadcast %564 : vector<8x1xf32> to vector<8x32xf32>
    %566 = arith.mulf %561, %565 : vector<8x32xf32>
    %567 = vector.broadcast %546 : vector<1x32xf32> to vector<8x32xf32>
    %568 = arith.mulf %566, %567 : vector<8x32xf32>
    %569 = vector.broadcast %548 : vector<1x32xf32> to vector<8x32xf32>
    %570 = arith.addf %568, %569 : vector<8x32xf32>
    %cst_255 = arith.constant dense<0.000000e+00> : vector<8xf32>
    %571 = vector.multi_reduction <add>, %570, %cst_255 [1] : vector<8x32xf32> to vector<8xf32>
    %572 = vector.shape_cast %571 : vector<8xf32> to vector<8x1xf32>
    %cst_256 = arith.constant 3.200000e+01 : f32
    %573 = vector.broadcast %cst_256 : f32 to vector<8x1xf32>
    %574 = arith.divf %572, %573 : vector<8x1xf32>
    %575 = vector.broadcast %574 : vector<8x1xf32> to vector<8x32xf32>
    %576 = arith.subf %570, %575 : vector<8x32xf32>
    %577 = arith.mulf %576, %576 : vector<8x32xf32>
    %cst_257 = arith.constant dense<0.000000e+00> : vector<8xf32>
    %578 = vector.multi_reduction <add>, %577, %cst_257 [1] : vector<8x32xf32> to vector<8xf32>
    %579 = vector.shape_cast %578 : vector<8xf32> to vector<8x1xf32>
    %cst_258 = arith.constant 3.200000e+01 : f32
    %580 = vector.broadcast %cst_258 : f32 to vector<8x1xf32>
    %581 = arith.divf %579, %580 : vector<8x1xf32>
    %582 = vector.broadcast %574 : vector<8x1xf32> to vector<8x32xf32>
    %583 = arith.subf %570, %582 : vector<8x32xf32>
    %cst_259 = arith.constant 9.99999974E-6 : f32
    %584 = vector.broadcast %cst_259 : f32 to vector<8x1xf32>
    %585 = arith.addf %581, %584 : vector<8x1xf32>
    %586 = math.rsqrt %585 : vector<8x1xf32>
    %587 = vector.broadcast %586 : vector<8x1xf32> to vector<8x32xf32>
    %588 = arith.mulf %583, %587 : vector<8x32xf32>
    %589 = vector.broadcast %0 : vector<1x32xf32> to vector<8x32xf32>
    %590 = arith.mulf %588, %589 : vector<8x32xf32>
    %591 = vector.broadcast %1 : vector<1x32xf32> to vector<8x32xf32>
    %592 = arith.addf %590, %591 : vector<8x32xf32>
    %c0_260 = arith.constant 0 : index
    %c0_261 = arith.constant 0 : index
    %c0_262 = arith.constant 0 : index
    %593 = vector.load %arg27[%c0_260, %c0_261, %c0_262] : memref<2x8x32xf32, #tpu.memory_space<vmem>>, vector<1x8x32xf32>
    %594 = vector.shape_cast %593 : vector<1x8x32xf32> to vector<8x32xf32>
    %595 = vector.shape_cast %592 : vector<8x32xf32> to vector<1x8x32xf32>
    tpu.vector_store %arg27[%c0_260, %c0_261, %c0_262], %595 {strides = array<i32>} : memref<2x8x32xf32, #tpu.memory_space<vmem>>, vector<1x8x32xf32>,
    %c1_263 = arith.constant 1 : index
    %c0_264 = arith.constant 0 : index
    %c0_265 = arith.constant 0 : index
    %596 = vector.load %arg1[%c1_263, %c0_264, %c0_265] : memref<2x8x32xf32, #tpu.memory_space<vmem>>, vector<1x8x32xf32>
    %597 = vector.shape_cast %596 : vector<1x8x32xf32> to vector<8x32xf32>
    %c1_266 = arith.constant 1 : index
    %c0_267 = arith.constant 0 : index
    %c0_268 = arith.constant 0 : index
    %598 = vector.load %arg3[%c1_266, %c0_267, %c0_268] : memref<2x8x32xf32, #tpu.memory_space<vmem>>, vector<1x8x32xf32>
    %599 = vector.shape_cast %598 : vector<1x8x32xf32> to vector<8x32xf32>
    %c1_269 = arith.constant 1 : index
    %c0_270 = arith.constant 0 : index
    %c0_271 = arith.constant 0 : index
    %600 = vector.load %arg2[%c1_269, %c0_270, %c0_271] : memref<2x16x32xf32, #tpu.memory_space<vmem>>, vector<1x16x32xf32>
    %601 = vector.shape_cast %600 : vector<1x16x32xf32> to vector<16x32xf32>
    %c1_272 = arith.constant 1 : index
    %c0_273 = arith.constant 0 : index
    %c0_274 = arith.constant 0 : index
    %602 = vector.load %arg4[%c1_272, %c0_273, %c0_274] : memref<2x16x32xf32, #tpu.memory_space<vmem>>, vector<1x16x32xf32>
    %603 = vector.shape_cast %602 : vector<1x16x32xf32> to vector<16x32xf32>
    %604 = arith.addf %601, %603 : vector<16x32xf32>
    %c0_275 = arith.constant 0 : index
    %c0_276 = arith.constant 0 : index
    %c0_277 = arith.constant 0 : index
    %c0_278 = arith.constant 0 : index
    %605 = vector.load %arg23[%c0_275, %c0_276, %c0_277, %c0_278] : memref<2x3x1x32xf32, #tpu.memory_space<vmem>>, vector<1x3x1x32xf32>
    %606 = vector.shape_cast %605 : vector<1x3x1x32xf32> to vector<3x1x32xf32>
    %c0_279 = arith.constant 0 : index
    %c0_280 = arith.constant 0 : index
    %c0_281 = arith.constant 0 : index
    %c0_282 = arith.constant 0 : index
    %607 = vector.load %arg24[%c0_279, %c0_280, %c0_281, %c0_282] : memref<2x3x1x32xf32, #tpu.memory_space<vmem>>, vector<1x3x1x32xf32>
    %608 = vector.shape_cast %607 : vector<1x3x1x32xf32> to vector<3x1x32xf32>
    %609 = arith.addf %597, %599 : vector<8x32xf32>
    %c0_283 = arith.constant 0 : index
    %c0_284 = arith.constant 0 : index
    %c0_285 = arith.constant 0 : index
    %610 = vector.load %arg5[%c0_283, %c0_284, %c0_285] : memref<2x32x64xf32, #tpu.memory_space<vmem>>, vector<1x32x64xf32>
    %611 = vector.shape_cast %610 : vector<1x32x64xf32> to vector<32x64xf32>
    %cst_286 = arith.constant dense<0.000000e+00> : vector<8x64xf32>
    %612 = tpu.matmul %609, %611, %cst_286 {dimension_numbers = #tpu.dot_dimension_numbers<[1], [0], [0], [1], [0, 0, 1, 1], [], []>} : vector<8x32xf32>, vector<32x64xf32>, vector<8x64xf32> -> vector<8x64xf32>
    %c0_287 = arith.constant 0 : index
    %c0_288 = arith.constant 0 : index
    %c0_289 = arith.constant 0 : index
    %613 = vector.load %arg6[%c0_287, %c0_288, %c0_289] : memref<2x1x64xf32, #tpu.memory_space<vmem>>, vector<1x1x64xf32>
    %614 = vector.shape_cast %613 : vector<1x1x64xf32> to vector<1x64xf32>
    %615 = vector.broadcast %614 : vector<1x64xf32> to vector<8x64xf32>
    %616 = arith.addf %612, %615 : vector<8x64xf32>
    %617 = vector.extract_strided_slice %616 {offsets = [0, 0], sizes = [8, 32], strides = [1, 1]} : vector<8x64xf32> to vector<8x32xf32>
    %cst_290 = arith.constant 0.353553385 : f32
    %618 = vector.broadcast %cst_290 : f32 to vector<8x32xf32>
    %619 = arith.mulf %617, %618 : vector<8x32xf32>
    %620 = vector.extract_strided_slice %616 {offsets = [0, 32], sizes = [8, 32], strides = [1, 1]} : vector<8x64xf32> to vector<8x32xf32>
    %c0_291 = arith.constant 0 : index
    %c0_292 = arith.constant 0 : index
    %c0_293 = arith.constant 0 : index
    %621 = vector.load %arg7[%c0_291, %c0_292, %c0_293] : memref<2x32x32xf32, #tpu.memory_space<vmem>>, vector<1x32x32xf32>
    %622 = vector.shape_cast %621 : vector<1x32x32xf32> to vector<32x32xf32>
    %cst_294 = arith.constant dense<0.000000e+00> : vector<8x32xf32>
    %623 = tpu.matmul %597, %622, %cst_294 {dimension_numbers = #tpu.dot_dimension_numbers<[1], [0], [0], [1], [0, 0, 1, 1], [], []>} : vector<8x32xf32>, vector<32x32xf32>, vector<8x32xf32> -> vector<8x32xf32>
    %c0_295 = arith.constant 0 : index
    %c0_296 = arith.constant 0 : index
    %c0_297 = arith.constant 0 : index
    %624 = vector.load %arg8[%c0_295, %c0_296, %c0_297] : memref<2x1x32xf32, #tpu.memory_space<vmem>>, vector<1x1x32xf32>
    %625 = vector.shape_cast %624 : vector<1x1x32xf32> to vector<1x32xf32>
    %626 = vector.broadcast %625 : vector<1x32xf32> to vector<8x32xf32>
    %627 = arith.addf %623, %626 : vector<8x32xf32>
    %c0_298 = arith.constant 0 : index
    %c0_299 = arith.constant 0 : index
    %c0_300 = arith.constant 0 : index
    %628 = vector.load %arg9[%c0_298, %c0_299, %c0_300] : memref<2x32x32xf32, #tpu.memory_space<vmem>>, vector<1x32x32xf32>
    %629 = vector.shape_cast %628 : vector<1x32x32xf32> to vector<32x32xf32>
    %c0_301 = arith.constant 0 : index
    %c0_302 = arith.constant 0 : index
    %c0_303 = arith.constant 0 : index
    %630 = vector.load %arg10[%c0_301, %c0_302, %c0_303] : memref<2x1x32xf32, #tpu.memory_space<vmem>>, vector<1x1x32xf32>
    %631 = vector.shape_cast %630 : vector<1x1x32xf32> to vector<1x32xf32>
    %632 = vector.extract_strided_slice %619 {offsets = [0, 0], sizes = [8, 8], strides = [1, 1]} : vector<8x32xf32> to vector<8x8xf32>
    %633 = vector.extract_strided_slice %620 {offsets = [0, 0], sizes = [8, 8], strides = [1, 1]} : vector<8x32xf32> to vector<8x8xf32>
    %634 = vector.extract_strided_slice %627 {offsets = [0, 0], sizes = [8, 8], strides = [1, 1]} : vector<8x32xf32> to vector<8x8xf32>
    %cst_304 = arith.constant dense<0.000000e+00> : vector<8x8xf32>
    %635 = tpu.matmul %632, %633, %cst_304 {dimension_numbers = #tpu.dot_dimension_numbers<[1], [1], [0], [0], [0, 0, 1, 0], [], []>} : vector<8x8xf32>, vector<8x8xf32>, vector<8x8xf32> -> vector<8x8xf32>
    %cst_305 = arith.constant dense<0xFF800000> : vector<8xf32>
    %636 = vector.multi_reduction <maximumf>, %635, %cst_305 [1] : vector<8x8xf32> to vector<8xf32>
    %637 = vector.shape_cast %636 : vector<8xf32> to vector<8x1xf32>
    %638 = vector.broadcast %637 : vector<8x1xf32> to vector<8x8xf32>
    %639 = arith.subf %635, %638 : vector<8x8xf32>
    %640 = math.exp %639 : vector<8x8xf32>
    %cst_306 = arith.constant dense<0.000000e+00> : vector<8xf32>
    %641 = vector.multi_reduction <add>, %640, %cst_306 [1] : vector<8x8xf32> to vector<8xf32>
    %642 = vector.shape_cast %641 : vector<8xf32> to vector<8x1xf32>
    %643 = tpu.reciprocal %642 {approx = true} : vector<8x1xf32> -> vector<8x1xf32>
    %644 = vector.broadcast %643 : vector<8x1xf32> to vector<8x8xf32>
    %645 = arith.mulf %640, %644 : vector<8x8xf32>
    %cst_307 = arith.constant dense<0.000000e+00> : vector<8x8xf32>
    %646 = tpu.matmul %645, %634, %cst_307 {dimension_numbers = #tpu.dot_dimension_numbers<[1], [0], [0], [1], [0, 0, 1, 1], [], []>} : vector<8x8xf32>, vector<8x8xf32>, vector<8x8xf32> -> vector<8x8xf32>
    %647 = vector.extract_strided_slice %619 {offsets = [0, 8], sizes = [8, 8], strides = [1, 1]} : vector<8x32xf32> to vector<8x8xf32>
    %648 = vector.extract_strided_slice %620 {offsets = [0, 8], sizes = [8, 8], strides = [1, 1]} : vector<8x32xf32> to vector<8x8xf32>
    %649 = vector.extract_strided_slice %627 {offsets = [0, 8], sizes = [8, 8], strides = [1, 1]} : vector<8x32xf32> to vector<8x8xf32>
    %cst_308 = arith.constant dense<0.000000e+00> : vector<8x8xf32>
    %650 = tpu.matmul %647, %648, %cst_308 {dimension_numbers = #tpu.dot_dimension_numbers<[1], [1], [0], [0], [0, 0, 1, 0], [], []>} : vector<8x8xf32>, vector<8x8xf32>, vector<8x8xf32> -> vector<8x8xf32>
    %cst_309 = arith.constant dense<0xFF800000> : vector<8xf32>
    %651 = vector.multi_reduction <maximumf>, %650, %cst_309 [1] : vector<8x8xf32> to vector<8xf32>
    %652 = vector.shape_cast %651 : vector<8xf32> to vector<8x1xf32>
    %653 = vector.broadcast %652 : vector<8x1xf32> to vector<8x8xf32>
    %654 = arith.subf %650, %653 : vector<8x8xf32>
    %655 = math.exp %654 : vector<8x8xf32>
    %cst_310 = arith.constant dense<0.000000e+00> : vector<8xf32>
    %656 = vector.multi_reduction <add>, %655, %cst_310 [1] : vector<8x8xf32> to vector<8xf32>
    %657 = vector.shape_cast %656 : vector<8xf32> to vector<8x1xf32>
    %658 = tpu.reciprocal %657 {approx = true} : vector<8x1xf32> -> vector<8x1xf32>
    %659 = vector.broadcast %658 : vector<8x1xf32> to vector<8x8xf32>
    %660 = arith.mulf %655, %659 : vector<8x8xf32>
    %cst_311 = arith.constant dense<0.000000e+00> : vector<8x8xf32>
    %661 = tpu.matmul %660, %649, %cst_311 {dimension_numbers = #tpu.dot_dimension_numbers<[1], [0], [0], [1], [0, 0, 1, 1], [], []>} : vector<8x8xf32>, vector<8x8xf32>, vector<8x8xf32> -> vector<8x8xf32>
    %662 = vector.extract_strided_slice %619 {offsets = [0, 16], sizes = [8, 8], strides = [1, 1]} : vector<8x32xf32> to vector<8x8xf32>
    %663 = vector.extract_strided_slice %620 {offsets = [0, 16], sizes = [8, 8], strides = [1, 1]} : vector<8x32xf32> to vector<8x8xf32>
    %664 = vector.extract_strided_slice %627 {offsets = [0, 16], sizes = [8, 8], strides = [1, 1]} : vector<8x32xf32> to vector<8x8xf32>
    %cst_312 = arith.constant dense<0.000000e+00> : vector<8x8xf32>
    %665 = tpu.matmul %662, %663, %cst_312 {dimension_numbers = #tpu.dot_dimension_numbers<[1], [1], [0], [0], [0, 0, 1, 0], [], []>} : vector<8x8xf32>, vector<8x8xf32>, vector<8x8xf32> -> vector<8x8xf32>
    %cst_313 = arith.constant dense<0xFF800000> : vector<8xf32>
    %666 = vector.multi_reduction <maximumf>, %665, %cst_313 [1] : vector<8x8xf32> to vector<8xf32>
    %667 = vector.shape_cast %666 : vector<8xf32> to vector<8x1xf32>
    %668 = vector.broadcast %667 : vector<8x1xf32> to vector<8x8xf32>
    %669 = arith.subf %665, %668 : vector<8x8xf32>
    %670 = math.exp %669 : vector<8x8xf32>
    %cst_314 = arith.constant dense<0.000000e+00> : vector<8xf32>
    %671 = vector.multi_reduction <add>, %670, %cst_314 [1] : vector<8x8xf32> to vector<8xf32>
    %672 = vector.shape_cast %671 : vector<8xf32> to vector<8x1xf32>
    %673 = tpu.reciprocal %672 {approx = true} : vector<8x1xf32> -> vector<8x1xf32>
    %674 = vector.broadcast %673 : vector<8x1xf32> to vector<8x8xf32>
    %675 = arith.mulf %670, %674 : vector<8x8xf32>
    %cst_315 = arith.constant dense<0.000000e+00> : vector<8x8xf32>
    %676 = tpu.matmul %675, %664, %cst_315 {dimension_numbers = #tpu.dot_dimension_numbers<[1], [0], [0], [1], [0, 0, 1, 1], [], []>} : vector<8x8xf32>, vector<8x8xf32>, vector<8x8xf32> -> vector<8x8xf32>
    %677 = vector.extract_strided_slice %619 {offsets = [0, 24], sizes = [8, 8], strides = [1, 1]} : vector<8x32xf32> to vector<8x8xf32>
    %678 = vector.extract_strided_slice %620 {offsets = [0, 24], sizes = [8, 8], strides = [1, 1]} : vector<8x32xf32> to vector<8x8xf32>
    %679 = vector.extract_strided_slice %627 {offsets = [0, 24], sizes = [8, 8], strides = [1, 1]} : vector<8x32xf32> to vector<8x8xf32>
    %cst_316 = arith.constant dense<0.000000e+00> : vector<8x8xf32>
    %680 = tpu.matmul %677, %678, %cst_316 {dimension_numbers = #tpu.dot_dimension_numbers<[1], [1], [0], [0], [0, 0, 1, 0], [], []>} : vector<8x8xf32>, vector<8x8xf32>, vector<8x8xf32> -> vector<8x8xf32>
    %cst_317 = arith.constant dense<0xFF800000> : vector<8xf32>
    %681 = vector.multi_reduction <maximumf>, %680, %cst_317 [1] : vector<8x8xf32> to vector<8xf32>
    %682 = vector.shape_cast %681 : vector<8xf32> to vector<8x1xf32>
    %683 = vector.broadcast %682 : vector<8x1xf32> to vector<8x8xf32>
    %684 = arith.subf %680, %683 : vector<8x8xf32>
    %685 = math.exp %684 : vector<8x8xf32>
    %cst_318 = arith.constant dense<0.000000e+00> : vector<8xf32>
    %686 = vector.multi_reduction <add>, %685, %cst_318 [1] : vector<8x8xf32> to vector<8xf32>
    %687 = vector.shape_cast %686 : vector<8xf32> to vector<8x1xf32>
    %688 = tpu.reciprocal %687 {approx = true} : vector<8x1xf32> -> vector<8x1xf32>
    %689 = vector.broadcast %688 : vector<8x1xf32> to vector<8x8xf32>
    %690 = arith.mulf %685, %689 : vector<8x8xf32>
    %cst_319 = arith.constant dense<0.000000e+00> : vector<8x8xf32>
    %691 = tpu.matmul %690, %679, %cst_319 {dimension_numbers = #tpu.dot_dimension_numbers<[1], [0], [0], [1], [0, 0, 1, 1], [], []>} : vector<8x8xf32>, vector<8x8xf32>, vector<8x8xf32> -> vector<8x8xf32>
    %692 = tpu.concatenate %646, %661, %676, %691 in 1 : vector<8x8xf32>, vector<8x8xf32>, vector<8x8xf32>, vector<8x8xf32> -> vector<8x32xf32>
    %cst_320 = arith.constant dense<0.000000e+00> : vector<8x32xf32>
    %693 = tpu.matmul %692, %629, %cst_320 {dimension_numbers = #tpu.dot_dimension_numbers<[1], [0], [0], [1], [0, 0, 1, 1], [], []>} : vector<8x32xf32>, vector<32x32xf32>, vector<8x32xf32> -> vector<8x32xf32>
    %694 = vector.broadcast %631 : vector<1x32xf32> to vector<8x32xf32>
    %695 = arith.addf %693, %694 : vector<8x32xf32>
    %696 = arith.addf %597, %695 : vector<8x32xf32>
    %697 = vector.extract_strided_slice %606 {offsets = [0, 0, 0], sizes = [1, 1, 32], strides = [1, 1, 1]} : vector<3x1x32xf32> to vector<1x1x32xf32>
    %698 = vector.shape_cast %697 : vector<1x1x32xf32> to vector<1x32xf32>
    %699 = vector.extract_strided_slice %608 {offsets = [0, 0, 0], sizes = [1, 1, 32], strides = [1, 1, 1]} : vector<3x1x32xf32> to vector<1x1x32xf32>
    %700 = vector.shape_cast %699 : vector<1x1x32xf32> to vector<1x32xf32>
    %cst_321 = arith.constant dense<0.000000e+00> : vector<8xf32>
    %701 = vector.multi_reduction <add>, %696, %cst_321 [1] : vector<8x32xf32> to vector<8xf32>
    %702 = vector.shape_cast %701 : vector<8xf32> to vector<8x1xf32>
    %cst_322 = arith.constant 3.200000e+01 : f32
    %703 = vector.broadcast %cst_322 : f32 to vector<8x1xf32>
    %704 = arith.divf %702, %703 : vector<8x1xf32>
    %705 = vector.broadcast %704 : vector<8x1xf32> to vector<8x32xf32>
    %706 = arith.subf %696, %705 : vector<8x32xf32>
    %707 = arith.mulf %706, %706 : vector<8x32xf32>
    %cst_323 = arith.constant dense<0.000000e+00> : vector<8xf32>
    %708 = vector.multi_reduction <add>, %707, %cst_323 [1] : vector<8x32xf32> to vector<8xf32>
    %709 = vector.shape_cast %708 : vector<8xf32> to vector<8x1xf32>
    %cst_324 = arith.constant 3.200000e+01 : f32
    %710 = vector.broadcast %cst_324 : f32 to vector<8x1xf32>
    %711 = arith.divf %709, %710 : vector<8x1xf32>
    %712 = vector.broadcast %704 : vector<8x1xf32> to vector<8x32xf32>
    %713 = arith.subf %696, %712 : vector<8x32xf32>
    %cst_325 = arith.constant 9.99999974E-6 : f32
    %714 = vector.broadcast %cst_325 : f32 to vector<8x1xf32>
    %715 = arith.addf %711, %714 : vector<8x1xf32>
    %716 = math.rsqrt %715 : vector<8x1xf32>
    %717 = vector.broadcast %716 : vector<8x1xf32> to vector<8x32xf32>
    %718 = arith.mulf %713, %717 : vector<8x32xf32>
    %719 = vector.broadcast %698 : vector<1x32xf32> to vector<8x32xf32>
    %720 = arith.mulf %718, %719 : vector<8x32xf32>
    %721 = vector.broadcast %700 : vector<1x32xf32> to vector<8x32xf32>
    %722 = arith.addf %720, %721 : vector<8x32xf32>
    %723 = arith.addf %722, %599 : vector<8x32xf32>
    %c0_326 = arith.constant 0 : index
    %c0_327 = arith.constant 0 : index
    %c0_328 = arith.constant 0 : index
    %724 = vector.load %arg11[%c0_326, %c0_327, %c0_328] : memref<2x32x32xf32, #tpu.memory_space<vmem>>, vector<1x32x32xf32>
    %725 = vector.shape_cast %724 : vector<1x32x32xf32> to vector<32x32xf32>
    %cst_329 = arith.constant dense<0.000000e+00> : vector<8x32xf32>
    %726 = tpu.matmul %723, %725, %cst_329 {dimension_numbers = #tpu.dot_dimension_numbers<[1], [0], [0], [1], [0, 0, 1, 1], [], []>} : vector<8x32xf32>, vector<32x32xf32>, vector<8x32xf32> -> vector<8x32xf32>
    %c0_330 = arith.constant 0 : index
    %c0_331 = arith.constant 0 : index
    %c0_332 = arith.constant 0 : index
    %727 = vector.load %arg12[%c0_330, %c0_331, %c0_332] : memref<2x1x32xf32, #tpu.memory_space<vmem>>, vector<1x1x32xf32>
    %728 = vector.shape_cast %727 : vector<1x1x32xf32> to vector<1x32xf32>
    %729 = vector.broadcast %728 : vector<1x32xf32> to vector<8x32xf32>
    %730 = arith.addf %726, %729 : vector<8x32xf32>
    %cst_333 = arith.constant 0.353553385 : f32
    %731 = vector.broadcast %cst_333 : f32 to vector<8x32xf32>
    %732 = arith.mulf %730, %731 : vector<8x32xf32>
    %c0_334 = arith.constant 0 : index
    %c0_335 = arith.constant 0 : index
    %c0_336 = arith.constant 0 : index
    %733 = vector.load %arg13[%c0_334, %c0_335, %c0_336] : memref<2x32x32xf32, #tpu.memory_space<vmem>>, vector<1x32x32xf32>
    %734 = vector.shape_cast %733 : vector<1x32x32xf32> to vector<32x32xf32>
    %cst_337 = arith.constant dense<0.000000e+00> : vector<16x32xf32>
    %735 = tpu.matmul %604, %734, %cst_337 {dimension_numbers = #tpu.dot_dimension_numbers<[1], [0], [0], [1], [0, 0, 1, 1], [], []>} : vector<16x32xf32>, vector<32x32xf32>, vector<16x32xf32> -> vector<16x32xf32>
    %c0_338 = arith.constant 0 : index
    %c0_339 = arith.constant 0 : index
    %c0_340 = arith.constant 0 : index
    %736 = vector.load %arg14[%c0_338, %c0_339, %c0_340] : memref<2x1x32xf32, #tpu.memory_space<vmem>>, vector<1x1x32xf32>
    %737 = vector.shape_cast %736 : vector<1x1x32xf32> to vector<1x32xf32>
    %738 = vector.broadcast %737 : vector<1x32xf32> to vector<16x32xf32>
    %739 = arith.addf %735, %738 : vector<16x32xf32>
    %c0_341 = arith.constant 0 : index
    %c0_342 = arith.constant 0 : index
    %c0_343 = arith.constant 0 : index
    %740 = vector.load %arg15[%c0_341, %c0_342, %c0_343] : memref<2x32x32xf32, #tpu.memory_space<vmem>>, vector<1x32x32xf32>
    %741 = vector.shape_cast %740 : vector<1x32x32xf32> to vector<32x32xf32>
    %cst_344 = arith.constant dense<0.000000e+00> : vector<16x32xf32>
    %742 = tpu.matmul %601, %741, %cst_344 {dimension_numbers = #tpu.dot_dimension_numbers<[1], [0], [0], [1], [0, 0, 1, 1], [], []>} : vector<16x32xf32>, vector<32x32xf32>, vector<16x32xf32> -> vector<16x32xf32>
    %c0_345 = arith.constant 0 : index
    %c0_346 = arith.constant 0 : index
    %c0_347 = arith.constant 0 : index
    %743 = vector.load %arg16[%c0_345, %c0_346, %c0_347] : memref<2x1x32xf32, #tpu.memory_space<vmem>>, vector<1x1x32xf32>
    %744 = vector.shape_cast %743 : vector<1x1x32xf32> to vector<1x32xf32>
    %745 = vector.broadcast %744 : vector<1x32xf32> to vector<16x32xf32>
    %746 = arith.addf %742, %745 : vector<16x32xf32>
    %c0_348 = arith.constant 0 : index
    %c0_349 = arith.constant 0 : index
    %c0_350 = arith.constant 0 : index
    %747 = vector.load %arg17[%c0_348, %c0_349, %c0_350] : memref<2x32x32xf32, #tpu.memory_space<vmem>>, vector<1x32x32xf32>
    %748 = vector.shape_cast %747 : vector<1x32x32xf32> to vector<32x32xf32>
    %c0_351 = arith.constant 0 : index
    %c0_352 = arith.constant 0 : index
    %c0_353 = arith.constant 0 : index
    %749 = vector.load %arg18[%c0_351, %c0_352, %c0_353] : memref<2x1x32xf32, #tpu.memory_space<vmem>>, vector<1x1x32xf32>
    %750 = vector.shape_cast %749 : vector<1x1x32xf32> to vector<1x32xf32>
    %751 = vector.extract_strided_slice %732 {offsets = [0, 0], sizes = [8, 8], strides = [1, 1]} : vector<8x32xf32> to vector<8x8xf32>
    %752 = vector.extract_strided_slice %739 {offsets = [0, 0], sizes = [16, 8], strides = [1, 1]} : vector<16x32xf32> to vector<16x8xf32>
    %753 = vector.extract_strided_slice %746 {offsets = [0, 0], sizes = [16, 8], strides = [1, 1]} : vector<16x32xf32> to vector<16x8xf32>
    %cst_354 = arith.constant dense<0.000000e+00> : vector<8x16xf32>
    %754 = tpu.matmul %751, %752, %cst_354 {dimension_numbers = #tpu.dot_dimension_numbers<[1], [1], [0], [0], [0, 0, 1, 0], [], []>} : vector<8x8xf32>, vector<16x8xf32>, vector<8x16xf32> -> vector<8x16xf32>
    %cst_355 = arith.constant dense<0xFF800000> : vector<8xf32>
    %755 = vector.multi_reduction <maximumf>, %754, %cst_355 [1] : vector<8x16xf32> to vector<8xf32>
    %756 = vector.shape_cast %755 : vector<8xf32> to vector<8x1xf32>
    %757 = vector.broadcast %756 : vector<8x1xf32> to vector<8x16xf32>
    %758 = arith.subf %754, %757 : vector<8x16xf32>
    %759 = math.exp %758 : vector<8x16xf32>
    %cst_356 = arith.constant dense<0.000000e+00> : vector<8xf32>
    %760 = vector.multi_reduction <add>, %759, %cst_356 [1] : vector<8x16xf32> to vector<8xf32>
    %761 = vector.shape_cast %760 : vector<8xf32> to vector<8x1xf32>
    %762 = tpu.reciprocal %761 {approx = true} : vector<8x1xf32> -> vector<8x1xf32>
    %763 = vector.broadcast %762 : vector<8x1xf32> to vector<8x16xf32>
    %764 = arith.mulf %759, %763 : vector<8x16xf32>
    %cst_357 = arith.constant dense<0.000000e+00> : vector<8x8xf32>
    %765 = tpu.matmul %764, %753, %cst_357 {dimension_numbers = #tpu.dot_dimension_numbers<[1], [0], [0], [1], [0, 0, 1, 1], [], []>} : vector<8x16xf32>, vector<16x8xf32>, vector<8x8xf32> -> vector<8x8xf32>
    %766 = vector.extract_strided_slice %732 {offsets = [0, 8], sizes = [8, 8], strides = [1, 1]} : vector<8x32xf32> to vector<8x8xf32>
    %767 = vector.extract_strided_slice %739 {offsets = [0, 8], sizes = [16, 8], strides = [1, 1]} : vector<16x32xf32> to vector<16x8xf32>
    %768 = vector.extract_strided_slice %746 {offsets = [0, 8], sizes = [16, 8], strides = [1, 1]} : vector<16x32xf32> to vector<16x8xf32>
    %cst_358 = arith.constant dense<0.000000e+00> : vector<8x16xf32>
    %769 = tpu.matmul %766, %767, %cst_358 {dimension_numbers = #tpu.dot_dimension_numbers<[1], [1], [0], [0], [0, 0, 1, 0], [], []>} : vector<8x8xf32>, vector<16x8xf32>, vector<8x16xf32> -> vector<8x16xf32>
    %cst_359 = arith.constant dense<0xFF800000> : vector<8xf32>
    %770 = vector.multi_reduction <maximumf>, %769, %cst_359 [1] : vector<8x16xf32> to vector<8xf32>
    %771 = vector.shape_cast %770 : vector<8xf32> to vector<8x1xf32>
    %772 = vector.broadcast %771 : vector<8x1xf32> to vector<8x16xf32>
    %773 = arith.subf %769, %772 : vector<8x16xf32>
    %774 = math.exp %773 : vector<8x16xf32>
    %cst_360 = arith.constant dense<0.000000e+00> : vector<8xf32>
    %775 = vector.multi_reduction <add>, %774, %cst_360 [1] : vector<8x16xf32> to vector<8xf32>
    %776 = vector.shape_cast %775 : vector<8xf32> to vector<8x1xf32>
    %777 = tpu.reciprocal %776 {approx = true} : vector<8x1xf32> -> vector<8x1xf32>
    %778 = vector.broadcast %777 : vector<8x1xf32> to vector<8x16xf32>
    %779 = arith.mulf %774, %778 : vector<8x16xf32>
    %cst_361 = arith.constant dense<0.000000e+00> : vector<8x8xf32>
    %780 = tpu.matmul %779, %768, %cst_361 {dimension_numbers = #tpu.dot_dimension_numbers<[1], [0], [0], [1], [0, 0, 1, 1], [], []>} : vector<8x16xf32>, vector<16x8xf32>, vector<8x8xf32> -> vector<8x8xf32>
    %781 = vector.extract_strided_slice %732 {offsets = [0, 16], sizes = [8, 8], strides = [1, 1]} : vector<8x32xf32> to vector<8x8xf32>
    %782 = vector.extract_strided_slice %739 {offsets = [0, 16], sizes = [16, 8], strides = [1, 1]} : vector<16x32xf32> to vector<16x8xf32>
    %783 = vector.extract_strided_slice %746 {offsets = [0, 16], sizes = [16, 8], strides = [1, 1]} : vector<16x32xf32> to vector<16x8xf32>
    %cst_362 = arith.constant dense<0.000000e+00> : vector<8x16xf32>
    %784 = tpu.matmul %781, %782, %cst_362 {dimension_numbers = #tpu.dot_dimension_numbers<[1], [1], [0], [0], [0, 0, 1, 0], [], []>} : vector<8x8xf32>, vector<16x8xf32>, vector<8x16xf32> -> vector<8x16xf32>
    %cst_363 = arith.constant dense<0xFF800000> : vector<8xf32>
    %785 = vector.multi_reduction <maximumf>, %784, %cst_363 [1] : vector<8x16xf32> to vector<8xf32>
    %786 = vector.shape_cast %785 : vector<8xf32> to vector<8x1xf32>
    %787 = vector.broadcast %786 : vector<8x1xf32> to vector<8x16xf32>
    %788 = arith.subf %784, %787 : vector<8x16xf32>
    %789 = math.exp %788 : vector<8x16xf32>
    %cst_364 = arith.constant dense<0.000000e+00> : vector<8xf32>
    %790 = vector.multi_reduction <add>, %789, %cst_364 [1] : vector<8x16xf32> to vector<8xf32>
    %791 = vector.shape_cast %790 : vector<8xf32> to vector<8x1xf32>
    %792 = tpu.reciprocal %791 {approx = true} : vector<8x1xf32> -> vector<8x1xf32>
    %793 = vector.broadcast %792 : vector<8x1xf32> to vector<8x16xf32>
    %794 = arith.mulf %789, %793 : vector<8x16xf32>
    %cst_365 = arith.constant dense<0.000000e+00> : vector<8x8xf32>
    %795 = tpu.matmul %794, %783, %cst_365 {dimension_numbers = #tpu.dot_dimension_numbers<[1], [0], [0], [1], [0, 0, 1, 1], [], []>} : vector<8x16xf32>, vector<16x8xf32>, vector<8x8xf32> -> vector<8x8xf32>
    %796 = vector.extract_strided_slice %732 {offsets = [0, 24], sizes = [8, 8], strides = [1, 1]} : vector<8x32xf32> to vector<8x8xf32>
    %797 = vector.extract_strided_slice %739 {offsets = [0, 24], sizes = [16, 8], strides = [1, 1]} : vector<16x32xf32> to vector<16x8xf32>
    %798 = vector.extract_strided_slice %746 {offsets = [0, 24], sizes = [16, 8], strides = [1, 1]} : vector<16x32xf32> to vector<16x8xf32>
    %cst_366 = arith.constant dense<0.000000e+00> : vector<8x16xf32>
    %799 = tpu.matmul %796, %797, %cst_366 {dimension_numbers = #tpu.dot_dimension_numbers<[1], [1], [0], [0], [0, 0, 1, 0], [], []>} : vector<8x8xf32>, vector<16x8xf32>, vector<8x16xf32> -> vector<8x16xf32>
    %cst_367 = arith.constant dense<0xFF800000> : vector<8xf32>
    %800 = vector.multi_reduction <maximumf>, %799, %cst_367 [1] : vector<8x16xf32> to vector<8xf32>
    %801 = vector.shape_cast %800 : vector<8xf32> to vector<8x1xf32>
    %802 = vector.broadcast %801 : vector<8x1xf32> to vector<8x16xf32>
    %803 = arith.subf %799, %802 : vector<8x16xf32>
    %804 = math.exp %803 : vector<8x16xf32>
    %cst_368 = arith.constant dense<0.000000e+00> : vector<8xf32>
    %805 = vector.multi_reduction <add>, %804, %cst_368 [1] : vector<8x16xf32> to vector<8xf32>
    %806 = vector.shape_cast %805 : vector<8xf32> to vector<8x1xf32>
    %807 = tpu.reciprocal %806 {approx = true} : vector<8x1xf32> -> vector<8x1xf32>
    %808 = vector.broadcast %807 : vector<8x1xf32> to vector<8x16xf32>
    %809 = arith.mulf %804, %808 : vector<8x16xf32>
    %cst_369 = arith.constant dense<0.000000e+00> : vector<8x8xf32>
    %810 = tpu.matmul %809, %798, %cst_369 {dimension_numbers = #tpu.dot_dimension_numbers<[1], [0], [0], [1], [0, 0, 1, 1], [], []>} : vector<8x16xf32>, vector<16x8xf32>, vector<8x8xf32> -> vector<8x8xf32>
    %811 = tpu.concatenate %765, %780, %795, %810 in 1 : vector<8x8xf32>, vector<8x8xf32>, vector<8x8xf32>, vector<8x8xf32> -> vector<8x32xf32>
    %cst_370 = arith.constant dense<0.000000e+00> : vector<8x32xf32>
    %812 = tpu.matmul %811, %748, %cst_370 {dimension_numbers = #tpu.dot_dimension_numbers<[1], [0], [0], [1], [0, 0, 1, 1], [], []>} : vector<8x32xf32>, vector<32x32xf32>, vector<8x32xf32> -> vector<8x32xf32>
    %813 = vector.broadcast %750 : vector<1x32xf32> to vector<8x32xf32>
    %814 = arith.addf %812, %813 : vector<8x32xf32>
    %815 = arith.addf %722, %814 : vector<8x32xf32>
    %816 = vector.extract_strided_slice %606 {offsets = [1, 0, 0], sizes = [1, 1, 32], strides = [1, 1, 1]} : vector<3x1x32xf32> to vector<1x1x32xf32>
    %817 = vector.shape_cast %816 : vector<1x1x32xf32> to vector<1x32xf32>
    %818 = vector.extract_strided_slice %608 {offsets = [1, 0, 0], sizes = [1, 1, 32], strides = [1, 1, 1]} : vector<3x1x32xf32> to vector<1x1x32xf32>
    %819 = vector.shape_cast %818 : vector<1x1x32xf32> to vector<1x32xf32>
    %cst_371 = arith.constant dense<0.000000e+00> : vector<8xf32>
    %820 = vector.multi_reduction <add>, %815, %cst_371 [1] : vector<8x32xf32> to vector<8xf32>
    %821 = vector.shape_cast %820 : vector<8xf32> to vector<8x1xf32>
    %cst_372 = arith.constant 3.200000e+01 : f32
    %822 = vector.broadcast %cst_372 : f32 to vector<8x1xf32>
    %823 = arith.divf %821, %822 : vector<8x1xf32>
    %824 = vector.broadcast %823 : vector<8x1xf32> to vector<8x32xf32>
    %825 = arith.subf %815, %824 : vector<8x32xf32>
    %826 = arith.mulf %825, %825 : vector<8x32xf32>
    %cst_373 = arith.constant dense<0.000000e+00> : vector<8xf32>
    %827 = vector.multi_reduction <add>, %826, %cst_373 [1] : vector<8x32xf32> to vector<8xf32>
    %828 = vector.shape_cast %827 : vector<8xf32> to vector<8x1xf32>
    %cst_374 = arith.constant 3.200000e+01 : f32
    %829 = vector.broadcast %cst_374 : f32 to vector<8x1xf32>
    %830 = arith.divf %828, %829 : vector<8x1xf32>
    %831 = vector.broadcast %823 : vector<8x1xf32> to vector<8x32xf32>
    %832 = arith.subf %815, %831 : vector<8x32xf32>
    %cst_375 = arith.constant 9.99999974E-6 : f32
    %833 = vector.broadcast %cst_375 : f32 to vector<8x1xf32>
    %834 = arith.addf %830, %833 : vector<8x1xf32>
    %835 = math.rsqrt %834 : vector<8x1xf32>
    %836 = vector.broadcast %835 : vector<8x1xf32> to vector<8x32xf32>
    %837 = arith.mulf %832, %836 : vector<8x32xf32>
    %838 = vector.broadcast %817 : vector<1x32xf32> to vector<8x32xf32>
    %839 = arith.mulf %837, %838 : vector<8x32xf32>
    %840 = vector.broadcast %819 : vector<1x32xf32> to vector<8x32xf32>
    %841 = arith.addf %839, %840 : vector<8x32xf32>
    %c0_376 = arith.constant 0 : index
    %c0_377 = arith.constant 0 : index
    %c0_378 = arith.constant 0 : index
    %842 = vector.load %arg19[%c0_376, %c0_377, %c0_378] : memref<2x32x64xf32, #tpu.memory_space<vmem>>, vector<1x32x64xf32>
    %843 = vector.shape_cast %842 : vector<1x32x64xf32> to vector<32x64xf32>
    %cst_379 = arith.constant dense<0.000000e+00> : vector<8x64xf32>
    %844 = tpu.matmul %841, %843, %cst_379 {dimension_numbers = #tpu.dot_dimension_numbers<[1], [0], [0], [1], [0, 0, 1, 1], [], []>} : vector<8x32xf32>, vector<32x64xf32>, vector<8x64xf32> -> vector<8x64xf32>
    %c0_380 = arith.constant 0 : index
    %c0_381 = arith.constant 0 : index
    %c0_382 = arith.constant 0 : index
    %845 = vector.load %arg20[%c0_380, %c0_381, %c0_382] : memref<2x1x64xf32, #tpu.memory_space<vmem>>, vector<1x1x64xf32>
    %846 = vector.shape_cast %845 : vector<1x1x64xf32> to vector<1x64xf32>
    %847 = vector.broadcast %846 : vector<1x64xf32> to vector<8x64xf32>
    %848 = arith.addf %844, %847 : vector<8x64xf32>
    %cst_383 = arith.constant 0.000000e+00 : f32
    %849 = vector.broadcast %cst_383 : f32 to vector<8x64xf32>
    %850 = arith.maximumf %848, %849 : vector<8x64xf32>
    %c0_384 = arith.constant 0 : index
    %c0_385 = arith.constant 0 : index
    %c0_386 = arith.constant 0 : index
    %851 = vector.load %arg21[%c0_384, %c0_385, %c0_386] : memref<2x64x32xf32, #tpu.memory_space<vmem>>, vector<1x64x32xf32>
    %852 = vector.shape_cast %851 : vector<1x64x32xf32> to vector<64x32xf32>
    %cst_387 = arith.constant dense<0.000000e+00> : vector<8x32xf32>
    %853 = tpu.matmul %850, %852, %cst_387 {dimension_numbers = #tpu.dot_dimension_numbers<[1], [0], [0], [1], [0, 0, 1, 1], [], []>} : vector<8x64xf32>, vector<64x32xf32>, vector<8x32xf32> -> vector<8x32xf32>
    %c0_388 = arith.constant 0 : index
    %c0_389 = arith.constant 0 : index
    %c0_390 = arith.constant 0 : index
    %854 = vector.load %arg22[%c0_388, %c0_389, %c0_390] : memref<2x1x32xf32, #tpu.memory_space<vmem>>, vector<1x1x32xf32>
    %855 = vector.shape_cast %854 : vector<1x1x32xf32> to vector<1x32xf32>
    %856 = vector.broadcast %855 : vector<1x32xf32> to vector<8x32xf32>
    %857 = arith.addf %853, %856 : vector<8x32xf32>
    %858 = arith.addf %841, %857 : vector<8x32xf32>
    %859 = vector.extract_strided_slice %606 {offsets = [2, 0, 0], sizes = [1, 1, 32], strides = [1, 1, 1]} : vector<3x1x32xf32> to vector<1x1x32xf32>
    %860 = vector.shape_cast %859 : vector<1x1x32xf32> to vector<1x32xf32>
    %861 = vector.extract_strided_slice %608 {offsets = [2, 0, 0], sizes = [1, 1, 32], strides = [1, 1, 1]} : vector<3x1x32xf32> to vector<1x1x32xf32>
    %862 = vector.shape_cast %861 : vector<1x1x32xf32> to vector<1x32xf32>
    %cst_391 = arith.constant dense<0.000000e+00> : vector<8xf32>
    %863 = vector.multi_reduction <add>, %858, %cst_391 [1] : vector<8x32xf32> to vector<8xf32>
    %864 = vector.shape_cast %863 : vector<8xf32> to vector<8x1xf32>
    %cst_392 = arith.constant 3.200000e+01 : f32
    %865 = vector.broadcast %cst_392 : f32 to vector<8x1xf32>
    %866 = arith.divf %864, %865 : vector<8x1xf32>
    %867 = vector.broadcast %866 : vector<8x1xf32> to vector<8x32xf32>
    %868 = arith.subf %858, %867 : vector<8x32xf32>
    %869 = arith.mulf %868, %868 : vector<8x32xf32>
    %cst_393 = arith.constant dense<0.000000e+00> : vector<8xf32>
    %870 = vector.multi_reduction <add>, %869, %cst_393 [1] : vector<8x32xf32> to vector<8xf32>
    %871 = vector.shape_cast %870 : vector<8xf32> to vector<8x1xf32>
    %cst_394 = arith.constant 3.200000e+01 : f32
    %872 = vector.broadcast %cst_394 : f32 to vector<8x1xf32>
    %873 = arith.divf %871, %872 : vector<8x1xf32>
    %874 = vector.broadcast %866 : vector<8x1xf32> to vector<8x32xf32>
    %875 = arith.subf %858, %874 : vector<8x32xf32>
    %cst_395 = arith.constant 9.99999974E-6 : f32
    %876 = vector.broadcast %cst_395 : f32 to vector<8x1xf32>
    %877 = arith.addf %873, %876 : vector<8x1xf32>
    %878 = math.rsqrt %877 : vector<8x1xf32>
    %879 = vector.broadcast %878 : vector<8x1xf32> to vector<8x32xf32>
    %880 = arith.mulf %875, %879 : vector<8x32xf32>
    %881 = vector.broadcast %860 : vector<1x32xf32> to vector<8x32xf32>
    %882 = arith.mulf %880, %881 : vector<8x32xf32>
    %883 = vector.broadcast %862 : vector<1x32xf32> to vector<8x32xf32>
    %884 = arith.addf %882, %883 : vector<8x32xf32>
    %c1_396 = arith.constant 1 : index
    %c0_397 = arith.constant 0 : index
    %c0_398 = arith.constant 0 : index
    %c0_399 = arith.constant 0 : index
    %885 = vector.load %arg23[%c1_396, %c0_397, %c0_398, %c0_399] : memref<2x3x1x32xf32, #tpu.memory_space<vmem>>, vector<1x3x1x32xf32>
    %886 = vector.shape_cast %885 : vector<1x3x1x32xf32> to vector<3x1x32xf32>
    %c1_400 = arith.constant 1 : index
    %c0_401 = arith.constant 0 : index
    %c0_402 = arith.constant 0 : index
    %c0_403 = arith.constant 0 : index
    %887 = vector.load %arg24[%c1_400, %c0_401, %c0_402, %c0_403] : memref<2x3x1x32xf32, #tpu.memory_space<vmem>>, vector<1x3x1x32xf32>
    %888 = vector.shape_cast %887 : vector<1x3x1x32xf32> to vector<3x1x32xf32>
    %889 = arith.addf %884, %599 : vector<8x32xf32>
    %c1_404 = arith.constant 1 : index
    %c0_405 = arith.constant 0 : index
    %c0_406 = arith.constant 0 : index
    %890 = vector.load %arg5[%c1_404, %c0_405, %c0_406] : memref<2x32x64xf32, #tpu.memory_space<vmem>>, vector<1x32x64xf32>
    %891 = vector.shape_cast %890 : vector<1x32x64xf32> to vector<32x64xf32>
    %cst_407 = arith.constant dense<0.000000e+00> : vector<8x64xf32>
    %892 = tpu.matmul %889, %891, %cst_407 {dimension_numbers = #tpu.dot_dimension_numbers<[1], [0], [0], [1], [0, 0, 1, 1], [], []>} : vector<8x32xf32>, vector<32x64xf32>, vector<8x64xf32> -> vector<8x64xf32>
    %c1_408 = arith.constant 1 : index
    %c0_409 = arith.constant 0 : index
    %c0_410 = arith.constant 0 : index
    %893 = vector.load %arg6[%c1_408, %c0_409, %c0_410] : memref<2x1x64xf32, #tpu.memory_space<vmem>>, vector<1x1x64xf32>
    %894 = vector.shape_cast %893 : vector<1x1x64xf32> to vector<1x64xf32>
    %895 = vector.broadcast %894 : vector<1x64xf32> to vector<8x64xf32>
    %896 = arith.addf %892, %895 : vector<8x64xf32>
    %897 = vector.extract_strided_slice %896 {offsets = [0, 0], sizes = [8, 32], strides = [1, 1]} : vector<8x64xf32> to vector<8x32xf32>
    %cst_411 = arith.constant 0.353553385 : f32
    %898 = vector.broadcast %cst_411 : f32 to vector<8x32xf32>
    %899 = arith.mulf %897, %898 : vector<8x32xf32>
    %900 = vector.extract_strided_slice %896 {offsets = [0, 32], sizes = [8, 32], strides = [1, 1]} : vector<8x64xf32> to vector<8x32xf32>
    %c1_412 = arith.constant 1 : index
    %c0_413 = arith.constant 0 : index
    %c0_414 = arith.constant 0 : index
    %901 = vector.load %arg7[%c1_412, %c0_413, %c0_414] : memref<2x32x32xf32, #tpu.memory_space<vmem>>, vector<1x32x32xf32>
    %902 = vector.shape_cast %901 : vector<1x32x32xf32> to vector<32x32xf32>
    %cst_415 = arith.constant dense<0.000000e+00> : vector<8x32xf32>
    %903 = tpu.matmul %884, %902, %cst_415 {dimension_numbers = #tpu.dot_dimension_numbers<[1], [0], [0], [1], [0, 0, 1, 1], [], []>} : vector<8x32xf32>, vector<32x32xf32>, vector<8x32xf32> -> vector<8x32xf32>
    %c1_416 = arith.constant 1 : index
    %c0_417 = arith.constant 0 : index
    %c0_418 = arith.constant 0 : index
    %904 = vector.load %arg8[%c1_416, %c0_417, %c0_418] : memref<2x1x32xf32, #tpu.memory_space<vmem>>, vector<1x1x32xf32>
    %905 = vector.shape_cast %904 : vector<1x1x32xf32> to vector<1x32xf32>
    %906 = vector.broadcast %905 : vector<1x32xf32> to vector<8x32xf32>
    %907 = arith.addf %903, %906 : vector<8x32xf32>
    %c1_419 = arith.constant 1 : index
    %c0_420 = arith.constant 0 : index
    %c0_421 = arith.constant 0 : index
    %908 = vector.load %arg9[%c1_419, %c0_420, %c0_421] : memref<2x32x32xf32, #tpu.memory_space<vmem>>, vector<1x32x32xf32>
    %909 = vector.shape_cast %908 : vector<1x32x32xf32> to vector<32x32xf32>
    %c1_422 = arith.constant 1 : index
    %c0_423 = arith.constant 0 : index
    %c0_424 = arith.constant 0 : index
    %910 = vector.load %arg10[%c1_422, %c0_423, %c0_424] : memref<2x1x32xf32, #tpu.memory_space<vmem>>, vector<1x1x32xf32>
    %911 = vector.shape_cast %910 : vector<1x1x32xf32> to vector<1x32xf32>
    %912 = vector.extract_strided_slice %899 {offsets = [0, 0], sizes = [8, 8], strides = [1, 1]} : vector<8x32xf32> to vector<8x8xf32>
    %913 = vector.extract_strided_slice %900 {offsets = [0, 0], sizes = [8, 8], strides = [1, 1]} : vector<8x32xf32> to vector<8x8xf32>
    %914 = vector.extract_strided_slice %907 {offsets = [0, 0], sizes = [8, 8], strides = [1, 1]} : vector<8x32xf32> to vector<8x8xf32>
    %cst_425 = arith.constant dense<0.000000e+00> : vector<8x8xf32>
    %915 = tpu.matmul %912, %913, %cst_425 {dimension_numbers = #tpu.dot_dimension_numbers<[1], [1], [0], [0], [0, 0, 1, 0], [], []>} : vector<8x8xf32>, vector<8x8xf32>, vector<8x8xf32> -> vector<8x8xf32>
    %cst_426 = arith.constant dense<0xFF800000> : vector<8xf32>
    %916 = vector.multi_reduction <maximumf>, %915, %cst_426 [1] : vector<8x8xf32> to vector<8xf32>
    %917 = vector.shape_cast %916 : vector<8xf32> to vector<8x1xf32>
    %918 = vector.broadcast %917 : vector<8x1xf32> to vector<8x8xf32>
    %919 = arith.subf %915, %918 : vector<8x8xf32>
    %920 = math.exp %919 : vector<8x8xf32>
    %cst_427 = arith.constant dense<0.000000e+00> : vector<8xf32>
    %921 = vector.multi_reduction <add>, %920, %cst_427 [1] : vector<8x8xf32> to vector<8xf32>
    %922 = vector.shape_cast %921 : vector<8xf32> to vector<8x1xf32>
    %923 = tpu.reciprocal %922 {approx = true} : vector<8x1xf32> -> vector<8x1xf32>
    %924 = vector.broadcast %923 : vector<8x1xf32> to vector<8x8xf32>
    %925 = arith.mulf %920, %924 : vector<8x8xf32>
    %cst_428 = arith.constant dense<0.000000e+00> : vector<8x8xf32>
    %926 = tpu.matmul %925, %914, %cst_428 {dimension_numbers = #tpu.dot_dimension_numbers<[1], [0], [0], [1], [0, 0, 1, 1], [], []>} : vector<8x8xf32>, vector<8x8xf32>, vector<8x8xf32> -> vector<8x8xf32>
    %927 = vector.extract_strided_slice %899 {offsets = [0, 8], sizes = [8, 8], strides = [1, 1]} : vector<8x32xf32> to vector<8x8xf32>
    %928 = vector.extract_strided_slice %900 {offsets = [0, 8], sizes = [8, 8], strides = [1, 1]} : vector<8x32xf32> to vector<8x8xf32>
    %929 = vector.extract_strided_slice %907 {offsets = [0, 8], sizes = [8, 8], strides = [1, 1]} : vector<8x32xf32> to vector<8x8xf32>
    %cst_429 = arith.constant dense<0.000000e+00> : vector<8x8xf32>
    %930 = tpu.matmul %927, %928, %cst_429 {dimension_numbers = #tpu.dot_dimension_numbers<[1], [1], [0], [0], [0, 0, 1, 0], [], []>} : vector<8x8xf32>, vector<8x8xf32>, vector<8x8xf32> -> vector<8x8xf32>
    %cst_430 = arith.constant dense<0xFF800000> : vector<8xf32>
    %931 = vector.multi_reduction <maximumf>, %930, %cst_430 [1] : vector<8x8xf32> to vector<8xf32>
    %932 = vector.shape_cast %931 : vector<8xf32> to vector<8x1xf32>
    %933 = vector.broadcast %932 : vector<8x1xf32> to vector<8x8xf32>
    %934 = arith.subf %930, %933 : vector<8x8xf32>
    %935 = math.exp %934 : vector<8x8xf32>
    %cst_431 = arith.constant dense<0.000000e+00> : vector<8xf32>
    %936 = vector.multi_reduction <add>, %935, %cst_431 [1] : vector<8x8xf32> to vector<8xf32>
    %937 = vector.shape_cast %936 : vector<8xf32> to vector<8x1xf32>
    %938 = tpu.reciprocal %937 {approx = true} : vector<8x1xf32> -> vector<8x1xf32>
    %939 = vector.broadcast %938 : vector<8x1xf32> to vector<8x8xf32>
    %940 = arith.mulf %935, %939 : vector<8x8xf32>
    %cst_432 = arith.constant dense<0.000000e+00> : vector<8x8xf32>
    %941 = tpu.matmul %940, %929, %cst_432 {dimension_numbers = #tpu.dot_dimension_numbers<[1], [0], [0], [1], [0, 0, 1, 1], [], []>} : vector<8x8xf32>, vector<8x8xf32>, vector<8x8xf32> -> vector<8x8xf32>
    %942 = vector.extract_strided_slice %899 {offsets = [0, 16], sizes = [8, 8], strides = [1, 1]} : vector<8x32xf32> to vector<8x8xf32>
    %943 = vector.extract_strided_slice %900 {offsets = [0, 16], sizes = [8, 8], strides = [1, 1]} : vector<8x32xf32> to vector<8x8xf32>
    %944 = vector.extract_strided_slice %907 {offsets = [0, 16], sizes = [8, 8], strides = [1, 1]} : vector<8x32xf32> to vector<8x8xf32>
    %cst_433 = arith.constant dense<0.000000e+00> : vector<8x8xf32>
    %945 = tpu.matmul %942, %943, %cst_433 {dimension_numbers = #tpu.dot_dimension_numbers<[1], [1], [0], [0], [0, 0, 1, 0], [], []>} : vector<8x8xf32>, vector<8x8xf32>, vector<8x8xf32> -> vector<8x8xf32>
    %cst_434 = arith.constant dense<0xFF800000> : vector<8xf32>
    %946 = vector.multi_reduction <maximumf>, %945, %cst_434 [1] : vector<8x8xf32> to vector<8xf32>
    %947 = vector.shape_cast %946 : vector<8xf32> to vector<8x1xf32>
    %948 = vector.broadcast %947 : vector<8x1xf32> to vector<8x8xf32>
    %949 = arith.subf %945, %948 : vector<8x8xf32>
    %950 = math.exp %949 : vector<8x8xf32>
    %cst_435 = arith.constant dense<0.000000e+00> : vector<8xf32>
    %951 = vector.multi_reduction <add>, %950, %cst_435 [1] : vector<8x8xf32> to vector<8xf32>
    %952 = vector.shape_cast %951 : vector<8xf32> to vector<8x1xf32>
    %953 = tpu.reciprocal %952 {approx = true} : vector<8x1xf32> -> vector<8x1xf32>
    %954 = vector.broadcast %953 : vector<8x1xf32> to vector<8x8xf32>
    %955 = arith.mulf %950, %954 : vector<8x8xf32>
    %cst_436 = arith.constant dense<0.000000e+00> : vector<8x8xf32>
    %956 = tpu.matmul %955, %944, %cst_436 {dimension_numbers = #tpu.dot_dimension_numbers<[1], [0], [0], [1], [0, 0, 1, 1], [], []>} : vector<8x8xf32>, vector<8x8xf32>, vector<8x8xf32> -> vector<8x8xf32>
    %957 = vector.extract_strided_slice %899 {offsets = [0, 24], sizes = [8, 8], strides = [1, 1]} : vector<8x32xf32> to vector<8x8xf32>
    %958 = vector.extract_strided_slice %900 {offsets = [0, 24], sizes = [8, 8], strides = [1, 1]} : vector<8x32xf32> to vector<8x8xf32>
    %959 = vector.extract_strided_slice %907 {offsets = [0, 24], sizes = [8, 8], strides = [1, 1]} : vector<8x32xf32> to vector<8x8xf32>
    %cst_437 = arith.constant dense<0.000000e+00> : vector<8x8xf32>
    %960 = tpu.matmul %957, %958, %cst_437 {dimension_numbers = #tpu.dot_dimension_numbers<[1], [1], [0], [0], [0, 0, 1, 0], [], []>} : vector<8x8xf32>, vector<8x8xf32>, vector<8x8xf32> -> vector<8x8xf32>
    %cst_438 = arith.constant dense<0xFF800000> : vector<8xf32>
    %961 = vector.multi_reduction <maximumf>, %960, %cst_438 [1] : vector<8x8xf32> to vector<8xf32>
    %962 = vector.shape_cast %961 : vector<8xf32> to vector<8x1xf32>
    %963 = vector.broadcast %962 : vector<8x1xf32> to vector<8x8xf32>
    %964 = arith.subf %960, %963 : vector<8x8xf32>
    %965 = math.exp %964 : vector<8x8xf32>
    %cst_439 = arith.constant dense<0.000000e+00> : vector<8xf32>
    %966 = vector.multi_reduction <add>, %965, %cst_439 [1] : vector<8x8xf32> to vector<8xf32>
    %967 = vector.shape_cast %966 : vector<8xf32> to vector<8x1xf32>
    %968 = tpu.reciprocal %967 {approx = true} : vector<8x1xf32> -> vector<8x1xf32>
    %969 = vector.broadcast %968 : vector<8x1xf32> to vector<8x8xf32>
    %970 = arith.mulf %965, %969 : vector<8x8xf32>
    %cst_440 = arith.constant dense<0.000000e+00> : vector<8x8xf32>
    %971 = tpu.matmul %970, %959, %cst_440 {dimension_numbers = #tpu.dot_dimension_numbers<[1], [0], [0], [1], [0, 0, 1, 1], [], []>} : vector<8x8xf32>, vector<8x8xf32>, vector<8x8xf32> -> vector<8x8xf32>
    %972 = tpu.concatenate %926, %941, %956, %971 in 1 : vector<8x8xf32>, vector<8x8xf32>, vector<8x8xf32>, vector<8x8xf32> -> vector<8x32xf32>
    %cst_441 = arith.constant dense<0.000000e+00> : vector<8x32xf32>
    %973 = tpu.matmul %972, %909, %cst_441 {dimension_numbers = #tpu.dot_dimension_numbers<[1], [0], [0], [1], [0, 0, 1, 1], [], []>} : vector<8x32xf32>, vector<32x32xf32>, vector<8x32xf32> -> vector<8x32xf32>
    %974 = vector.broadcast %911 : vector<1x32xf32> to vector<8x32xf32>
    %975 = arith.addf %973, %974 : vector<8x32xf32>
    %976 = arith.addf %884, %975 : vector<8x32xf32>
    %977 = vector.extract_strided_slice %886 {offsets = [0, 0, 0], sizes = [1, 1, 32], strides = [1, 1, 1]} : vector<3x1x32xf32> to vector<1x1x32xf32>
    %978 = vector.shape_cast %977 : vector<1x1x32xf32> to vector<1x32xf32>
    %979 = vector.extract_strided_slice %888 {offsets = [0, 0, 0], sizes = [1, 1, 32], strides = [1, 1, 1]} : vector<3x1x32xf32> to vector<1x1x32xf32>
    %980 = vector.shape_cast %979 : vector<1x1x32xf32> to vector<1x32xf32>
    %cst_442 = arith.constant dense<0.000000e+00> : vector<8xf32>
    %981 = vector.multi_reduction <add>, %976, %cst_442 [1] : vector<8x32xf32> to vector<8xf32>
    %982 = vector.shape_cast %981 : vector<8xf32> to vector<8x1xf32>
    %cst_443 = arith.constant 3.200000e+01 : f32
    %983 = vector.broadcast %cst_443 : f32 to vector<8x1xf32>
    %984 = arith.divf %982, %983 : vector<8x1xf32>
    %985 = vector.broadcast %984 : vector<8x1xf32> to vector<8x32xf32>
    %986 = arith.subf %976, %985 : vector<8x32xf32>
    %987 = arith.mulf %986, %986 : vector<8x32xf32>
    %cst_444 = arith.constant dense<0.000000e+00> : vector<8xf32>
    %988 = vector.multi_reduction <add>, %987, %cst_444 [1] : vector<8x32xf32> to vector<8xf32>
    %989 = vector.shape_cast %988 : vector<8xf32> to vector<8x1xf32>
    %cst_445 = arith.constant 3.200000e+01 : f32
    %990 = vector.broadcast %cst_445 : f32 to vector<8x1xf32>
    %991 = arith.divf %989, %990 : vector<8x1xf32>
    %992 = vector.broadcast %984 : vector<8x1xf32> to vector<8x32xf32>
    %993 = arith.subf %976, %992 : vector<8x32xf32>
    %cst_446 = arith.constant 9.99999974E-6 : f32
    %994 = vector.broadcast %cst_446 : f32 to vector<8x1xf32>
    %995 = arith.addf %991, %994 : vector<8x1xf32>
    %996 = math.rsqrt %995 : vector<8x1xf32>
    %997 = vector.broadcast %996 : vector<8x1xf32> to vector<8x32xf32>
    %998 = arith.mulf %993, %997 : vector<8x32xf32>
    %999 = vector.broadcast %978 : vector<1x32xf32> to vector<8x32xf32>
    %1000 = arith.mulf %998, %999 : vector<8x32xf32>
    %1001 = vector.broadcast %980 : vector<1x32xf32> to vector<8x32xf32>
    %1002 = arith.addf %1000, %1001 : vector<8x32xf32>
    %1003 = arith.addf %1002, %599 : vector<8x32xf32>
    %c1_447 = arith.constant 1 : index
    %c0_448 = arith.constant 0 : index
    %c0_449 = arith.constant 0 : index
    %1004 = vector.load %arg11[%c1_447, %c0_448, %c0_449] : memref<2x32x32xf32, #tpu.memory_space<vmem>>, vector<1x32x32xf32>
    %1005 = vector.shape_cast %1004 : vector<1x32x32xf32> to vector<32x32xf32>
    %cst_450 = arith.constant dense<0.000000e+00> : vector<8x32xf32>
    %1006 = tpu.matmul %1003, %1005, %cst_450 {dimension_numbers = #tpu.dot_dimension_numbers<[1], [0], [0], [1], [0, 0, 1, 1], [], []>} : vector<8x32xf32>, vector<32x32xf32>, vector<8x32xf32> -> vector<8x32xf32>
    %c1_451 = arith.constant 1 : index
    %c0_452 = arith.constant 0 : index
    %c0_453 = arith.constant 0 : index
    %1007 = vector.load %arg12[%c1_451, %c0_452, %c0_453] : memref<2x1x32xf32, #tpu.memory_space<vmem>>, vector<1x1x32xf32>
    %1008 = vector.shape_cast %1007 : vector<1x1x32xf32> to vector<1x32xf32>
    %1009 = vector.broadcast %1008 : vector<1x32xf32> to vector<8x32xf32>
    %1010 = arith.addf %1006, %1009 : vector<8x32xf32>
    %cst_454 = arith.constant 0.353553385 : f32
    %1011 = vector.broadcast %cst_454 : f32 to vector<8x32xf32>
    %1012 = arith.mulf %1010, %1011 : vector<8x32xf32>
    %c1_455 = arith.constant 1 : index
    %c0_456 = arith.constant 0 : index
    %c0_457 = arith.constant 0 : index
    %1013 = vector.load %arg13[%c1_455, %c0_456, %c0_457] : memref<2x32x32xf32, #tpu.memory_space<vmem>>, vector<1x32x32xf32>
    %1014 = vector.shape_cast %1013 : vector<1x32x32xf32> to vector<32x32xf32>
    %cst_458 = arith.constant dense<0.000000e+00> : vector<16x32xf32>
    %1015 = tpu.matmul %604, %1014, %cst_458 {dimension_numbers = #tpu.dot_dimension_numbers<[1], [0], [0], [1], [0, 0, 1, 1], [], []>} : vector<16x32xf32>, vector<32x32xf32>, vector<16x32xf32> -> vector<16x32xf32>
    %c1_459 = arith.constant 1 : index
    %c0_460 = arith.constant 0 : index
    %c0_461 = arith.constant 0 : index
    %1016 = vector.load %arg14[%c1_459, %c0_460, %c0_461] : memref<2x1x32xf32, #tpu.memory_space<vmem>>, vector<1x1x32xf32>
    %1017 = vector.shape_cast %1016 : vector<1x1x32xf32> to vector<1x32xf32>
    %1018 = vector.broadcast %1017 : vector<1x32xf32> to vector<16x32xf32>
    %1019 = arith.addf %1015, %1018 : vector<16x32xf32>
    %c1_462 = arith.constant 1 : index
    %c0_463 = arith.constant 0 : index
    %c0_464 = arith.constant 0 : index
    %1020 = vector.load %arg15[%c1_462, %c0_463, %c0_464] : memref<2x32x32xf32, #tpu.memory_space<vmem>>, vector<1x32x32xf32>
    %1021 = vector.shape_cast %1020 : vector<1x32x32xf32> to vector<32x32xf32>
    %cst_465 = arith.constant dense<0.000000e+00> : vector<16x32xf32>
    %1022 = tpu.matmul %601, %1021, %cst_465 {dimension_numbers = #tpu.dot_dimension_numbers<[1], [0], [0], [1], [0, 0, 1, 1], [], []>} : vector<16x32xf32>, vector<32x32xf32>, vector<16x32xf32> -> vector<16x32xf32>
    %c1_466 = arith.constant 1 : index
    %c0_467 = arith.constant 0 : index
    %c0_468 = arith.constant 0 : index
    %1023 = vector.load %arg16[%c1_466, %c0_467, %c0_468] : memref<2x1x32xf32, #tpu.memory_space<vmem>>, vector<1x1x32xf32>
    %1024 = vector.shape_cast %1023 : vector<1x1x32xf32> to vector<1x32xf32>
    %1025 = vector.broadcast %1024 : vector<1x32xf32> to vector<16x32xf32>
    %1026 = arith.addf %1022, %1025 : vector<16x32xf32>
    %c1_469 = arith.constant 1 : index
    %c0_470 = arith.constant 0 : index
    %c0_471 = arith.constant 0 : index
    %1027 = vector.load %arg17[%c1_469, %c0_470, %c0_471] : memref<2x32x32xf32, #tpu.memory_space<vmem>>, vector<1x32x32xf32>
    %1028 = vector.shape_cast %1027 : vector<1x32x32xf32> to vector<32x32xf32>
    %c1_472 = arith.constant 1 : index
    %c0_473 = arith.constant 0 : index
    %c0_474 = arith.constant 0 : index
    %1029 = vector.load %arg18[%c1_472, %c0_473, %c0_474] : memref<2x1x32xf32, #tpu.memory_space<vmem>>, vector<1x1x32xf32>
    %1030 = vector.shape_cast %1029 : vector<1x1x32xf32> to vector<1x32xf32>
    %1031 = vector.extract_strided_slice %1012 {offsets = [0, 0], sizes = [8, 8], strides = [1, 1]} : vector<8x32xf32> to vector<8x8xf32>
    %1032 = vector.extract_strided_slice %1019 {offsets = [0, 0], sizes = [16, 8], strides = [1, 1]} : vector<16x32xf32> to vector<16x8xf32>
    %1033 = vector.extract_strided_slice %1026 {offsets = [0, 0], sizes = [16, 8], strides = [1, 1]} : vector<16x32xf32> to vector<16x8xf32>
    %cst_475 = arith.constant dense<0.000000e+00> : vector<8x16xf32>
    %1034 = tpu.matmul %1031, %1032, %cst_475 {dimension_numbers = #tpu.dot_dimension_numbers<[1], [1], [0], [0], [0, 0, 1, 0], [], []>} : vector<8x8xf32>, vector<16x8xf32>, vector<8x16xf32> -> vector<8x16xf32>
    %cst_476 = arith.constant dense<0xFF800000> : vector<8xf32>
    %1035 = vector.multi_reduction <maximumf>, %1034, %cst_476 [1] : vector<8x16xf32> to vector<8xf32>
    %1036 = vector.shape_cast %1035 : vector<8xf32> to vector<8x1xf32>
    %1037 = vector.broadcast %1036 : vector<8x1xf32> to vector<8x16xf32>
    %1038 = arith.subf %1034, %1037 : vector<8x16xf32>
    %1039 = math.exp %1038 : vector<8x16xf32>
    %cst_477 = arith.constant dense<0.000000e+00> : vector<8xf32>
    %1040 = vector.multi_reduction <add>, %1039, %cst_477 [1] : vector<8x16xf32> to vector<8xf32>
    %1041 = vector.shape_cast %1040 : vector<8xf32> to vector<8x1xf32>
    %1042 = tpu.reciprocal %1041 {approx = true} : vector<8x1xf32> -> vector<8x1xf32>
    %1043 = vector.broadcast %1042 : vector<8x1xf32> to vector<8x16xf32>
    %1044 = arith.mulf %1039, %1043 : vector<8x16xf32>
    %cst_478 = arith.constant dense<0.000000e+00> : vector<8x8xf32>
    %1045 = tpu.matmul %1044, %1033, %cst_478 {dimension_numbers = #tpu.dot_dimension_numbers<[1], [0], [0], [1], [0, 0, 1, 1], [], []>} : vector<8x16xf32>, vector<16x8xf32>, vector<8x8xf32> -> vector<8x8xf32>
    %1046 = vector.extract_strided_slice %1012 {offsets = [0, 8], sizes = [8, 8], strides = [1, 1]} : vector<8x32xf32> to vector<8x8xf32>
    %1047 = vector.extract_strided_slice %1019 {offsets = [0, 8], sizes = [16, 8], strides = [1, 1]} : vector<16x32xf32> to vector<16x8xf32>
    %1048 = vector.extract_strided_slice %1026 {offsets = [0, 8], sizes = [16, 8], strides = [1, 1]} : vector<16x32xf32> to vector<16x8xf32>
    %cst_479 = arith.constant dense<0.000000e+00> : vector<8x16xf32>
    %1049 = tpu.matmul %1046, %1047, %cst_479 {dimension_numbers = #tpu.dot_dimension_numbers<[1], [1], [0], [0], [0, 0, 1, 0], [], []>} : vector<8x8xf32>, vector<16x8xf32>, vector<8x16xf32> -> vector<8x16xf32>
    %cst_480 = arith.constant dense<0xFF800000> : vector<8xf32>
    %1050 = vector.multi_reduction <maximumf>, %1049, %cst_480 [1] : vector<8x16xf32> to vector<8xf32>
    %1051 = vector.shape_cast %1050 : vector<8xf32> to vector<8x1xf32>
    %1052 = vector.broadcast %1051 : vector<8x1xf32> to vector<8x16xf32>
    %1053 = arith.subf %1049, %1052 : vector<8x16xf32>
    %1054 = math.exp %1053 : vector<8x16xf32>
    %cst_481 = arith.constant dense<0.000000e+00> : vector<8xf32>
    %1055 = vector.multi_reduction <add>, %1054, %cst_481 [1] : vector<8x16xf32> to vector<8xf32>
    %1056 = vector.shape_cast %1055 : vector<8xf32> to vector<8x1xf32>
    %1057 = tpu.reciprocal %1056 {approx = true} : vector<8x1xf32> -> vector<8x1xf32>
    %1058 = vector.broadcast %1057 : vector<8x1xf32> to vector<8x16xf32>
    %1059 = arith.mulf %1054, %1058 : vector<8x16xf32>
    %cst_482 = arith.constant dense<0.000000e+00> : vector<8x8xf32>
    %1060 = tpu.matmul %1059, %1048, %cst_482 {dimension_numbers = #tpu.dot_dimension_numbers<[1], [0], [0], [1], [0, 0, 1, 1], [], []>} : vector<8x16xf32>, vector<16x8xf32>, vector<8x8xf32> -> vector<8x8xf32>
    %1061 = vector.extract_strided_slice %1012 {offsets = [0, 16], sizes = [8, 8], strides = [1, 1]} : vector<8x32xf32> to vector<8x8xf32>
    %1062 = vector.extract_strided_slice %1019 {offsets = [0, 16], sizes = [16, 8], strides = [1, 1]} : vector<16x32xf32> to vector<16x8xf32>
    %1063 = vector.extract_strided_slice %1026 {offsets = [0, 16], sizes = [16, 8], strides = [1, 1]} : vector<16x32xf32> to vector<16x8xf32>
    %cst_483 = arith.constant dense<0.000000e+00> : vector<8x16xf32>
    %1064 = tpu.matmul %1061, %1062, %cst_483 {dimension_numbers = #tpu.dot_dimension_numbers<[1], [1], [0], [0], [0, 0, 1, 0], [], []>} : vector<8x8xf32>, vector<16x8xf32>, vector<8x16xf32> -> vector<8x16xf32>
    %cst_484 = arith.constant dense<0xFF800000> : vector<8xf32>
    %1065 = vector.multi_reduction <maximumf>, %1064, %cst_484 [1] : vector<8x16xf32> to vector<8xf32>
    %1066 = vector.shape_cast %1065 : vector<8xf32> to vector<8x1xf32>
    %1067 = vector.broadcast %1066 : vector<8x1xf32> to vector<8x16xf32>
    %1068 = arith.subf %1064, %1067 : vector<8x16xf32>
    %1069 = math.exp %1068 : vector<8x16xf32>
    %cst_485 = arith.constant dense<0.000000e+00> : vector<8xf32>
    %1070 = vector.multi_reduction <add>, %1069, %cst_485 [1] : vector<8x16xf32> to vector<8xf32>
    %1071 = vector.shape_cast %1070 : vector<8xf32> to vector<8x1xf32>
    %1072 = tpu.reciprocal %1071 {approx = true} : vector<8x1xf32> -> vector<8x1xf32>
    %1073 = vector.broadcast %1072 : vector<8x1xf32> to vector<8x16xf32>
    %1074 = arith.mulf %1069, %1073 : vector<8x16xf32>
    %cst_486 = arith.constant dense<0.000000e+00> : vector<8x8xf32>
    %1075 = tpu.matmul %1074, %1063, %cst_486 {dimension_numbers = #tpu.dot_dimension_numbers<[1], [0], [0], [1], [0, 0, 1, 1], [], []>} : vector<8x16xf32>, vector<16x8xf32>, vector<8x8xf32> -> vector<8x8xf32>
    %1076 = vector.extract_strided_slice %1012 {offsets = [0, 24], sizes = [8, 8], strides = [1, 1]} : vector<8x32xf32> to vector<8x8xf32>
    %1077 = vector.extract_strided_slice %1019 {offsets = [0, 24], sizes = [16, 8], strides = [1, 1]} : vector<16x32xf32> to vector<16x8xf32>
    %1078 = vector.extract_strided_slice %1026 {offsets = [0, 24], sizes = [16, 8], strides = [1, 1]} : vector<16x32xf32> to vector<16x8xf32>
    %cst_487 = arith.constant dense<0.000000e+00> : vector<8x16xf32>
    %1079 = tpu.matmul %1076, %1077, %cst_487 {dimension_numbers = #tpu.dot_dimension_numbers<[1], [1], [0], [0], [0, 0, 1, 0], [], []>} : vector<8x8xf32>, vector<16x8xf32>, vector<8x16xf32> -> vector<8x16xf32>
    %cst_488 = arith.constant dense<0xFF800000> : vector<8xf32>
    %1080 = vector.multi_reduction <maximumf>, %1079, %cst_488 [1] : vector<8x16xf32> to vector<8xf32>
    %1081 = vector.shape_cast %1080 : vector<8xf32> to vector<8x1xf32>
    %1082 = vector.broadcast %1081 : vector<8x1xf32> to vector<8x16xf32>
    %1083 = arith.subf %1079, %1082 : vector<8x16xf32>
    %1084 = math.exp %1083 : vector<8x16xf32>
    %cst_489 = arith.constant dense<0.000000e+00> : vector<8xf32>
    %1085 = vector.multi_reduction <add>, %1084, %cst_489 [1] : vector<8x16xf32> to vector<8xf32>
    %1086 = vector.shape_cast %1085 : vector<8xf32> to vector<8x1xf32>
    %1087 = tpu.reciprocal %1086 {approx = true} : vector<8x1xf32> -> vector<8x1xf32>
    %1088 = vector.broadcast %1087 : vector<8x1xf32> to vector<8x16xf32>
    %1089 = arith.mulf %1084, %1088 : vector<8x16xf32>
    %cst_490 = arith.constant dense<0.000000e+00> : vector<8x8xf32>
    %1090 = tpu.matmul %1089, %1078, %cst_490 {dimension_numbers = #tpu.dot_dimension_numbers<[1], [0], [0], [1], [0, 0, 1, 1], [], []>} : vector<8x16xf32>, vector<16x8xf32>, vector<8x8xf32> -> vector<8x8xf32>
    %1091 = tpu.concatenate %1045, %1060, %1075, %1090 in 1 : vector<8x8xf32>, vector<8x8xf32>, vector<8x8xf32>, vector<8x8xf32> -> vector<8x32xf32>
    %cst_491 = arith.constant dense<0.000000e+00> : vector<8x32xf32>
    %1092 = tpu.matmul %1091, %1028, %cst_491 {dimension_numbers = #tpu.dot_dimension_numbers<[1], [0], [0], [1], [0, 0, 1, 1], [], []>} : vector<8x32xf32>, vector<32x32xf32>, vector<8x32xf32> -> vector<8x32xf32>
    %1093 = vector.broadcast %1030 : vector<1x32xf32> to vector<8x32xf32>
    %1094 = arith.addf %1092, %1093 : vector<8x32xf32>
    %1095 = arith.addf %1002, %1094 : vector<8x32xf32>
    %1096 = vector.extract_strided_slice %886 {offsets = [1, 0, 0], sizes = [1, 1, 32], strides = [1, 1, 1]} : vector<3x1x32xf32> to vector<1x1x32xf32>
    %1097 = vector.shape_cast %1096 : vector<1x1x32xf32> to vector<1x32xf32>
    %1098 = vector.extract_strided_slice %888 {offsets = [1, 0, 0], sizes = [1, 1, 32], strides = [1, 1, 1]} : vector<3x1x32xf32> to vector<1x1x32xf32>
    %1099 = vector.shape_cast %1098 : vector<1x1x32xf32> to vector<1x32xf32>
    %cst_492 = arith.constant dense<0.000000e+00> : vector<8xf32>
    %1100 = vector.multi_reduction <add>, %1095, %cst_492 [1] : vector<8x32xf32> to vector<8xf32>
    %1101 = vector.shape_cast %1100 : vector<8xf32> to vector<8x1xf32>
    %cst_493 = arith.constant 3.200000e+01 : f32
    %1102 = vector.broadcast %cst_493 : f32 to vector<8x1xf32>
    %1103 = arith.divf %1101, %1102 : vector<8x1xf32>
    %1104 = vector.broadcast %1103 : vector<8x1xf32> to vector<8x32xf32>
    %1105 = arith.subf %1095, %1104 : vector<8x32xf32>
    %1106 = arith.mulf %1105, %1105 : vector<8x32xf32>
    %cst_494 = arith.constant dense<0.000000e+00> : vector<8xf32>
    %1107 = vector.multi_reduction <add>, %1106, %cst_494 [1] : vector<8x32xf32> to vector<8xf32>
    %1108 = vector.shape_cast %1107 : vector<8xf32> to vector<8x1xf32>
    %cst_495 = arith.constant 3.200000e+01 : f32
    %1109 = vector.broadcast %cst_495 : f32 to vector<8x1xf32>
    %1110 = arith.divf %1108, %1109 : vector<8x1xf32>
    %1111 = vector.broadcast %1103 : vector<8x1xf32> to vector<8x32xf32>
    %1112 = arith.subf %1095, %1111 : vector<8x32xf32>
    %cst_496 = arith.constant 9.99999974E-6 : f32
    %1113 = vector.broadcast %cst_496 : f32 to vector<8x1xf32>
    %1114 = arith.addf %1110, %1113 : vector<8x1xf32>
    %1115 = math.rsqrt %1114 : vector<8x1xf32>
    %1116 = vector.broadcast %1115 : vector<8x1xf32> to vector<8x32xf32>
    %1117 = arith.mulf %1112, %1116 : vector<8x32xf32>
    %1118 = vector.broadcast %1097 : vector<1x32xf32> to vector<8x32xf32>
    %1119 = arith.mulf %1117, %1118 : vector<8x32xf32>
    %1120 = vector.broadcast %1099 : vector<1x32xf32> to vector<8x32xf32>
    %1121 = arith.addf %1119, %1120 : vector<8x32xf32>
    %c1_497 = arith.constant 1 : index
    %c0_498 = arith.constant 0 : index
    %c0_499 = arith.constant 0 : index
    %1122 = vector.load %arg19[%c1_497, %c0_498, %c0_499] : memref<2x32x64xf32, #tpu.memory_space<vmem>>, vector<1x32x64xf32>
    %1123 = vector.shape_cast %1122 : vector<1x32x64xf32> to vector<32x64xf32>
    %cst_500 = arith.constant dense<0.000000e+00> : vector<8x64xf32>
    %1124 = tpu.matmul %1121, %1123, %cst_500 {dimension_numbers = #tpu.dot_dimension_numbers<[1], [0], [0], [1], [0, 0, 1, 1], [], []>} : vector<8x32xf32>, vector<32x64xf32>, vector<8x64xf32> -> vector<8x64xf32>
    %c1_501 = arith.constant 1 : index
    %c0_502 = arith.constant 0 : index
    %c0_503 = arith.constant 0 : index
    %1125 = vector.load %arg20[%c1_501, %c0_502, %c0_503] : memref<2x1x64xf32, #tpu.memory_space<vmem>>, vector<1x1x64xf32>
    %1126 = vector.shape_cast %1125 : vector<1x1x64xf32> to vector<1x64xf32>
    %1127 = vector.broadcast %1126 : vector<1x64xf32> to vector<8x64xf32>
    %1128 = arith.addf %1124, %1127 : vector<8x64xf32>
    %cst_504 = arith.constant 0.000000e+00 : f32
    %1129 = vector.broadcast %cst_504 : f32 to vector<8x64xf32>
    %1130 = arith.maximumf %1128, %1129 : vector<8x64xf32>
    %c1_505 = arith.constant 1 : index
    %c0_506 = arith.constant 0 : index
    %c0_507 = arith.constant 0 : index
    %1131 = vector.load %arg21[%c1_505, %c0_506, %c0_507] : memref<2x64x32xf32, #tpu.memory_space<vmem>>, vector<1x64x32xf32>
    %1132 = vector.shape_cast %1131 : vector<1x64x32xf32> to vector<64x32xf32>
    %cst_508 = arith.constant dense<0.000000e+00> : vector<8x32xf32>
    %1133 = tpu.matmul %1130, %1132, %cst_508 {dimension_numbers = #tpu.dot_dimension_numbers<[1], [0], [0], [1], [0, 0, 1, 1], [], []>} : vector<8x64xf32>, vector<64x32xf32>, vector<8x32xf32> -> vector<8x32xf32>
    %c1_509 = arith.constant 1 : index
    %c0_510 = arith.constant 0 : index
    %c0_511 = arith.constant 0 : index
    %1134 = vector.load %arg22[%c1_509, %c0_510, %c0_511] : memref<2x1x32xf32, #tpu.memory_space<vmem>>, vector<1x1x32xf32>
    %1135 = vector.shape_cast %1134 : vector<1x1x32xf32> to vector<1x32xf32>
    %1136 = vector.broadcast %1135 : vector<1x32xf32> to vector<8x32xf32>
    %1137 = arith.addf %1133, %1136 : vector<8x32xf32>
    %1138 = arith.addf %1121, %1137 : vector<8x32xf32>
    %1139 = vector.extract_strided_slice %886 {offsets = [2, 0, 0], sizes = [1, 1, 32], strides = [1, 1, 1]} : vector<3x1x32xf32> to vector<1x1x32xf32>
    %1140 = vector.shape_cast %1139 : vector<1x1x32xf32> to vector<1x32xf32>
    %1141 = vector.extract_strided_slice %888 {offsets = [2, 0, 0], sizes = [1, 1, 32], strides = [1, 1, 1]} : vector<3x1x32xf32> to vector<1x1x32xf32>
    %1142 = vector.shape_cast %1141 : vector<1x1x32xf32> to vector<1x32xf32>
    %cst_512 = arith.constant dense<0.000000e+00> : vector<8xf32>
    %1143 = vector.multi_reduction <add>, %1138, %cst_512 [1] : vector<8x32xf32> to vector<8xf32>
    %1144 = vector.shape_cast %1143 : vector<8xf32> to vector<8x1xf32>
    %cst_513 = arith.constant 3.200000e+01 : f32
    %1145 = vector.broadcast %cst_513 : f32 to vector<8x1xf32>
    %1146 = arith.divf %1144, %1145 : vector<8x1xf32>
    %1147 = vector.broadcast %1146 : vector<8x1xf32> to vector<8x32xf32>
    %1148 = arith.subf %1138, %1147 : vector<8x32xf32>
    %1149 = arith.mulf %1148, %1148 : vector<8x32xf32>
    %cst_514 = arith.constant dense<0.000000e+00> : vector<8xf32>
    %1150 = vector.multi_reduction <add>, %1149, %cst_514 [1] : vector<8x32xf32> to vector<8xf32>
    %1151 = vector.shape_cast %1150 : vector<8xf32> to vector<8x1xf32>
    %cst_515 = arith.constant 3.200000e+01 : f32
    %1152 = vector.broadcast %cst_515 : f32 to vector<8x1xf32>
    %1153 = arith.divf %1151, %1152 : vector<8x1xf32>
    %1154 = vector.broadcast %1146 : vector<8x1xf32> to vector<8x32xf32>
    %1155 = arith.subf %1138, %1154 : vector<8x32xf32>
    %cst_516 = arith.constant 9.99999974E-6 : f32
    %1156 = vector.broadcast %cst_516 : f32 to vector<8x1xf32>
    %1157 = arith.addf %1153, %1156 : vector<8x1xf32>
    %1158 = math.rsqrt %1157 : vector<8x1xf32>
    %1159 = vector.broadcast %1158 : vector<8x1xf32> to vector<8x32xf32>
    %1160 = arith.mulf %1155, %1159 : vector<8x32xf32>
    %1161 = vector.broadcast %1140 : vector<1x32xf32> to vector<8x32xf32>
    %1162 = arith.mulf %1160, %1161 : vector<8x32xf32>
    %1163 = vector.broadcast %1142 : vector<1x32xf32> to vector<8x32xf32>
    %1164 = arith.addf %1162, %1163 : vector<8x32xf32>
    %cst_517 = arith.constant dense<0.000000e+00> : vector<8xf32>
    %1165 = vector.multi_reduction <add>, %1164, %cst_517 [1] : vector<8x32xf32> to vector<8xf32>
    %1166 = vector.shape_cast %1165 : vector<8xf32> to vector<8x1xf32>
    %cst_518 = arith.constant 3.200000e+01 : f32
    %1167 = vector.broadcast %cst_518 : f32 to vector<8x1xf32>
    %1168 = arith.divf %1166, %1167 : vector<8x1xf32>
    %1169 = vector.broadcast %1168 : vector<8x1xf32> to vector<8x32xf32>
    %1170 = arith.subf %1164, %1169 : vector<8x32xf32>
    %1171 = arith.mulf %1170, %1170 : vector<8x32xf32>
    %cst_519 = arith.constant dense<0.000000e+00> : vector<8xf32>
    %1172 = vector.multi_reduction <add>, %1171, %cst_519 [1] : vector<8x32xf32> to vector<8xf32>
    %1173 = vector.shape_cast %1172 : vector<8xf32> to vector<8x1xf32>
    %cst_520 = arith.constant 3.200000e+01 : f32
    %1174 = vector.broadcast %cst_520 : f32 to vector<8x1xf32>
    %1175 = arith.divf %1173, %1174 : vector<8x1xf32>
    %1176 = vector.broadcast %1168 : vector<8x1xf32> to vector<8x32xf32>
    %1177 = arith.subf %1164, %1176 : vector<8x32xf32>
    %cst_521 = arith.constant 9.99999974E-6 : f32
    %1178 = vector.broadcast %cst_521 : f32 to vector<8x1xf32>
    %1179 = arith.addf %1175, %1178 : vector<8x1xf32>
    %1180 = math.rsqrt %1179 : vector<8x1xf32>
    %1181 = vector.broadcast %1180 : vector<8x1xf32> to vector<8x32xf32>
    %1182 = arith.mulf %1177, %1181 : vector<8x32xf32>
    %1183 = vector.broadcast %0 : vector<1x32xf32> to vector<8x32xf32>
    %1184 = arith.mulf %1182, %1183 : vector<8x32xf32>
    %1185 = vector.broadcast %1 : vector<1x32xf32> to vector<8x32xf32>
    %1186 = arith.addf %1184, %1185 : vector<8x32xf32>
    %c1_522 = arith.constant 1 : index
    %c0_523 = arith.constant 0 : index
    %c0_524 = arith.constant 0 : index
    %1187 = vector.load %arg27[%c1_522, %c0_523, %c0_524] : memref<2x8x32xf32, #tpu.memory_space<vmem>>, vector<1x8x32xf32>
    %1188 = vector.shape_cast %1187 : vector<1x8x32xf32> to vector<8x32xf32>
    %1189 = vector.shape_cast %1186 : vector<8x32xf32> to vector<1x8x32xf32>
    tpu.vector_store %arg27[%c1_522, %c0_523, %c0_524], %1189 {strides = array<i32>} : memref<2x8x32xf32, #tpu.memory_space<vmem>>, vector<1x8x32xf32>,
    return
  }
  func.func @transform_0(%arg0: i32) -> (i32, i32, i32) {
    %c0_i32 = arith.constant 0 : i32
    %c0_i32_0 = arith.constant 0 : i32
    %c0_i32_1 = arith.constant 0 : i32
    return %arg0, %c0_i32, %c0_i32_0 : i32, i32, i32
  }
  func.func @transform_1(%arg0: i32) -> (i32, i32, i32) {
    %c0_i32 = arith.constant 0 : i32
    %c0_i32_0 = arith.constant 0 : i32
    %c0_i32_1 = arith.constant 0 : i32
    return %arg0, %c0_i32, %c0_i32_0 : i32, i32, i32
  }
  func.func @transform_2(%arg0: i32) -> (i32, i32, i32) {
    %c0_i32 = arith.constant 0 : i32
    %c0_i32_0 = arith.constant 0 : i32
    %c0_i32_1 = arith.constant 0 : i32
    return %arg0, %c0_i32, %c0_i32_0 : i32, i32, i32
  }
  func.func @transform_3(%arg0: i32) -> (i32, i32, i32) {
    %c0_i32 = arith.constant 0 : i32
    %c0_i32_0 = arith.constant 0 : i32
    %c0_i32_1 = arith.constant 0 : i32
    return %arg0, %c0_i32, %c0_i32_0 : i32, i32, i32
  }
  func.func @transform_4(%arg0: i32) -> (i32, i32, i32) {
    %c0_i32 = arith.constant 0 : i32
    %c0_i32_0 = arith.constant 0 : i32
    %c0_i32_1 = arith.constant 0 : i32
    %c0_i32_2 = arith.constant 0 : i32
    return %c0_i32, %c0_i32_0, %c0_i32_1 : i32, i32, i32
  }
  func.func @transform_5(%arg0: i32) -> (i32, i32, i32) {
    %c0_i32 = arith.constant 0 : i32
    %c0_i32_0 = arith.constant 0 : i32
    %c0_i32_1 = arith.constant 0 : i32
    %c0_i32_2 = arith.constant 0 : i32
    return %c0_i32, %c0_i32_0, %c0_i32_1 : i32, i32, i32
  }
  func.func @transform_6(%arg0: i32) -> (i32, i32, i32) {
    %c0_i32 = arith.constant 0 : i32
    %c0_i32_0 = arith.constant 0 : i32
    %c0_i32_1 = arith.constant 0 : i32
    %c0_i32_2 = arith.constant 0 : i32
    return %c0_i32, %c0_i32_0, %c0_i32_1 : i32, i32, i32
  }
  func.func @transform_7(%arg0: i32) -> (i32, i32, i32) {
    %c0_i32 = arith.constant 0 : i32
    %c0_i32_0 = arith.constant 0 : i32
    %c0_i32_1 = arith.constant 0 : i32
    %c0_i32_2 = arith.constant 0 : i32
    return %c0_i32, %c0_i32_0, %c0_i32_1 : i32, i32, i32
  }
  func.func @transform_8(%arg0: i32) -> (i32, i32, i32) {
    %c0_i32 = arith.constant 0 : i32
    %c0_i32_0 = arith.constant 0 : i32
    %c0_i32_1 = arith.constant 0 : i32
    %c0_i32_2 = arith.constant 0 : i32
    return %c0_i32, %c0_i32_0, %c0_i32_1 : i32, i32, i32
  }
  func.func @transform_9(%arg0: i32) -> (i32, i32, i32) {
    %c0_i32 = arith.constant 0 : i32
    %c0_i32_0 = arith.constant 0 : i32
    %c0_i32_1 = arith.constant 0 : i32
    %c0_i32_2 = arith.constant 0 : i32
    return %c0_i32, %c0_i32_0, %c0_i32_1 : i32, i32, i32
  }
  func.func @transform_10(%arg0: i32) -> (i32, i32, i32) {
    %c0_i32 = arith.constant 0 : i32
    %c0_i32_0 = arith.constant 0 : i32
    %c0_i32_1 = arith.constant 0 : i32
    %c0_i32_2 = arith.constant 0 : i32
    return %c0_i32, %c0_i32_0, %c0_i32_1 : i32, i32, i32
  }
  func.func @transform_11(%arg0: i32) -> (i32, i32, i32) {
    %c0_i32 = arith.constant 0 : i32
    %c0_i32_0 = arith.constant 0 : i32
    %c0_i32_1 = arith.constant 0 : i32
    %c0_i32_2 = arith.constant 0 : i32
    return %c0_i32, %c0_i32_0, %c0_i32_1 : i32, i32, i32
  }
  func.func @transform_12(%arg0: i32) -> (i32, i32, i32) {
    %c0_i32 = arith.constant 0 : i32
    %c0_i32_0 = arith.constant 0 : i32
    %c0_i32_1 = arith.constant 0 : i32
    %c0_i32_2 = arith.constant 0 : i32
    return %c0_i32, %c0_i32_0, %c0_i32_1 : i32, i32, i32
  }
  func.func @transform_13(%arg0: i32) -> (i32, i32, i32) {
    %c0_i32 = arith.constant 0 : i32
    %c0_i32_0 = arith.constant 0 : i32
    %c0_i32_1 = arith.constant 0 : i32
    %c0_i32_2 = arith.constant 0 : i32
    return %c0_i32, %c0_i32_0, %c0_i32_1 : i32, i32, i32
  }
  func.func @transform_14(%arg0: i32) -> (i32, i32, i32) {
    %c0_i32 = arith.constant 0 : i32
    %c0_i32_0 = arith.constant 0 : i32
    %c0_i32_1 = arith.constant 0 : i32
    %c0_i32_2 = arith.constant 0 : i32
    return %c0_i32, %c0_i32_0, %c0_i32_1 : i32, i32, i32
  }
  func.func @transform_15(%arg0: i32) -> (i32, i32, i32) {
    %c0_i32 = arith.constant 0 : i32
    %c0_i32_0 = arith.constant 0 : i32
    %c0_i32_1 = arith.constant 0 : i32
    %c0_i32_2 = arith.constant 0 : i32
    return %c0_i32, %c0_i32_0, %c0_i32_1 : i32, i32, i32
  }
  func.func @transform_16(%arg0: i32) -> (i32, i32, i32) {
    %c0_i32 = arith.constant 0 : i32
    %c0_i32_0 = arith.constant 0 : i32
    %c0_i32_1 = arith.constant 0 : i32
    %c0_i32_2 = arith.constant 0 : i32
    return %c0_i32, %c0_i32_0, %c0_i32_1 : i32, i32, i32
  }
  func.func @transform_17(%arg0: i32) -> (i32, i32, i32) {
    %c0_i32 = arith.constant 0 : i32
    %c0_i32_0 = arith.constant 0 : i32
    %c0_i32_1 = arith.constant 0 : i32
    %c0_i32_2 = arith.constant 0 : i32
    return %c0_i32, %c0_i32_0, %c0_i32_1 : i32, i32, i32
  }
  func.func @transform_18(%arg0: i32) -> (i32, i32, i32) {
    %c0_i32 = arith.constant 0 : i32
    %c0_i32_0 = arith.constant 0 : i32
    %c0_i32_1 = arith.constant 0 : i32
    %c0_i32_2 = arith.constant 0 : i32
    return %c0_i32, %c0_i32_0, %c0_i32_1 : i32, i32, i32
  }
  func.func @transform_19(%arg0: i32) -> (i32, i32, i32) {
    %c0_i32 = arith.constant 0 : i32
    %c0_i32_0 = arith.constant 0 : i32
    %c0_i32_1 = arith.constant 0 : i32
    %c0_i32_2 = arith.constant 0 : i32
    return %c0_i32, %c0_i32_0, %c0_i32_1 : i32, i32, i32
  }
  func.func @transform_20(%arg0: i32) -> (i32, i32, i32) {
    %c0_i32 = arith.constant 0 : i32
    %c0_i32_0 = arith.constant 0 : i32
    %c0_i32_1 = arith.constant 0 : i32
    %c0_i32_2 = arith.constant 0 : i32
    return %c0_i32, %c0_i32_0, %c0_i32_1 : i32, i32, i32
  }
  func.func @transform_21(%arg0: i32) -> (i32, i32, i32) {
    %c0_i32 = arith.constant 0 : i32
    %c0_i32_0 = arith.constant 0 : i32
    %c0_i32_1 = arith.constant 0 : i32
    %c0_i32_2 = arith.constant 0 : i32
    return %c0_i32, %c0_i32_0, %c0_i32_1 : i32, i32, i32
  }
  func.func @transform_22(%arg0: i32) -> (i32, i32, i32, i32) {
    %c0_i32 = arith.constant 0 : i32
    %c0_i32_0 = arith.constant 0 : i32
    %c0_i32_1 = arith.constant 0 : i32
    %c0_i32_2 = arith.constant 0 : i32
    %c0_i32_3 = arith.constant 0 : i32
    return %c0_i32, %c0_i32_0, %c0_i32_1, %c0_i32_2 : i32, i32, i32, i32
  }
  func.func @transform_23(%arg0: i32) -> (i32, i32, i32, i32) {
    %c0_i32 = arith.constant 0 : i32
    %c0_i32_0 = arith.constant 0 : i32
    %c0_i32_1 = arith.constant 0 : i32
    %c0_i32_2 = arith.constant 0 : i32
    %c0_i32_3 = arith.constant 0 : i32
    return %c0_i32, %c0_i32_0, %c0_i32_1, %c0_i32_2 : i32, i32, i32, i32
  }
  func.func @transform_24(%arg0: i32) -> (i32, i32) {
    %c0_i32 = arith.constant 0 : i32
    %c0_i32_0 = arith.constant 0 : i32
    %c0_i32_1 = arith.constant 0 : i32
    return %c0_i32, %c0_i32_0 : i32, i32
  }
  func.func @transform_25(%arg0: i32) -> (i32, i32) {
    %c0_i32 = arith.constant 0 : i32
    %c0_i32_0 = arith.constant 0 : i32
    %c0_i32_1 = arith.constant 0 : i32
    return %c0_i32, %c0_i32_0 : i32, i32
  }
  func.func @transform_26(%arg0: i32) -> (i32, i32, i32) {
    %c0_i32 = arith.constant 0 : i32
    %c0_i32_0 = arith.constant 0 : i32
    %c0_i32_1 = arith.constant 0 : i32
    return %arg0, %c0_i32, %c0_i32_0 : i32, i32, i32
  }
}

</mosaic_0001>

<llo_original>
// kernel: transformer_decoder.1
$region0: #{transformer_decoder.1}
  #allocation0 [shape = 'u32[]', space=smem, size = 0x4, offset = 0x4, fixed_abs, tag = 'smem constant byte address 0x4 - core index']
  #allocation1 [shape = 'u32[144,128]{1,0:T(1,128)}', space=vmem, size = 0x12000, scoped, tag = 'internal scratch']
  %s0 = inlined_call_operand.vmem [shape: f32[2,8,32], index: 0, kind: input, shape index: {}]
  %s1 = inlined_call_operand.vmem [shape: f32[2,16,32], index: 1, kind: input, shape index: {}]
  %s2 = inlined_call_operand.vmem [shape: f32[2,8,32], index: 2, kind: input, shape index: {}]
  %s3 = inlined_call_operand.vmem [shape: f32[2,16,32], index: 3, kind: input, shape index: {}]
  %s4 = inlined_call_operand.vmem [shape: f32[2,32,64], index: 4, kind: input, shape index: {}]
  %s5 = inlined_call_operand.vmem [shape: f32[2,1,64], index: 5, kind: input, shape index: {}]
  %s6 = inlined_call_operand.vmem [shape: f32[2,32,32], index: 6, kind: input, shape index: {}]
  %s7 = inlined_call_operand.vmem [shape: f32[2,1,32], index: 7, kind: input, shape index: {}]
  %s8 = inlined_call_operand.vmem [shape: f32[2,32,32], index: 8, kind: input, shape index: {}]
  %s9 = inlined_call_operand.vmem [shape: f32[2,1,32], index: 9, kind: input, shape index: {}]
  %s10 = inlined_call_operand.vmem [shape: f32[2,32,32], index: 10, kind: input, shape index: {}]
  %s11 = inlined_call_operand.hbm [shape: f32[2,1,32], index: 11, kind: input, shape index: {}]
  %s12 = inlined_call_operand.vmem [shape: f32[2,32,32], index: 12, kind: input, shape index: {}]
  %s13 = inlined_call_operand.hbm [shape: f32[2,1,32], index: 13, kind: input, shape index: {}]
  %s14 = inlined_call_operand.hbm [shape: f32[2,32,32], index: 14, kind: input, shape index: {}]
  %s15 = inlined_call_operand.hbm [shape: f32[2,1,32], index: 15, kind: input, shape index: {}]
  %s16 = inlined_call_operand.hbm [shape: f32[2,32,32], index: 16, kind: input, shape index: {}]
  %s17 = inlined_call_operand.hbm [shape: f32[2,1,32], index: 17, kind: input, shape index: {}]
  %s18 = inlined_call_operand.vmem [shape: f32[2,32,64], index: 18, kind: input, shape index: {}]
  %s19 = inlined_call_operand.hbm [shape: f32[2,1,64], index: 19, kind: input, shape index: {}]
  %s20 = inlined_call_operand.vmem [shape: f32[2,64,32], index: 20, kind: input, shape index: {}]
  %s21 = inlined_call_operand.hbm [shape: f32[2,1,32], index: 21, kind: input, shape index: {}]
  %s22 = inlined_call_operand.hbm [shape: f32[2,3,1,32], index: 22, kind: input, shape index: {}]
  %s23 = inlined_call_operand.hbm [shape: f32[2,3,1,32], index: 23, kind: input, shape index: {}]
  %s24 = inlined_call_operand.vmem [shape: f32[1,32], index: 24, kind: input, shape index: {}]
  %s25 = inlined_call_operand.vmem [shape: f32[1,32], index: 25, kind: input, shape index: {}]
  %s26 = inlined_call_operand.vmem [shape: f32[2,8,32], index: 26, kind: output, shape index: {}]
  %s27 = sld [smem:[#allocation0]]
  $region154: #{transformer_decoder.1} parent=0
    _
  %s29 = ssub.s32 1, %s27
  %s30 = scalar_select 0, %s29, %s27
  $region1: #{transformer_decoder.1} parent=0
    #allocation2 [shape = 'u8[1024]{0}', space=vmem, size = 0x400, scoped, tag = 'input window, operand 11, single buffered']
    #allocation3 [shape = 's32[1]{0}', space=sflag, size = 0x4, scoped, tag = 'scoped memory for transformer_decoder.1']
    #allocation4 [shape = 'u8[1024]{0}', space=vmem, size = 0x400, scoped, tag = 'input window, operand 13, single buffered']
    #allocation5 [shape = 's32[1]{0}', space=sflag, size = 0x4, scoped, tag = 'scoped memory for transformer_decoder.1']
    #allocation6 [shape = 'u8[32768]{0}', space=vmem, size = 0x8000, scoped, tag = 'input window, operand 14, single buffered']
    #allocation7 [shape = 'u8[1024]{0}', space=vmem, size = 0x400, scoped, tag = 'input window, operand 15, single buffered']
    #allocation8 [shape = 's32[1]{0}', space=sflag, size = 0x4, scoped, tag = 'scoped memory for transformer_decoder.1']
    #allocation9 [shape = 'u8[32768]{0}', space=vmem, size = 0x8000, scoped, tag = 'input window, operand 16, single buffered']
    #allocation10 [shape = 'u8[1024]{0}', space=vmem, size = 0x400, scoped, tag = 'input window, operand 17, single buffered']
    #allocation11 [shape = 's32[1]{0}', space=sflag, size = 0x4, scoped, tag = 'scoped memory for transformer_decoder.1']
    #allocation12 [shape = 'u8[1024]{0}', space=vmem, size = 0x400, scoped, tag = 'input window, operand 19, single buffered']
    #allocation13 [shape = 'u8[1024]{0}', space=vmem, size = 0x400, scoped, tag = 'input window, operand 21, single buffered']
    #allocation14 [shape = 's32[1]{0}', space=sflag, size = 0x4, scoped, tag = 'scoped memory for transformer_decoder.1']
    #allocation15 [shape = 'u8[3072]{0}', space=vmem, size = 0xc00, scoped, tag = 'input window, operand 22, single buffered']
    #allocation16 [shape = 'u8[3072]{0}', space=vmem, size = 0xc00, scoped, tag = 'input window, operand 23, single buffered']
    #allocation17 [shape = 's32[1]{0}', space=sflag, size = 0x4, scoped, tag = 'scoped memory for transformer_decoder.1']
    %31 = vsyncpa [#allocation3], 0
    %32 = vsyncpa [#allocation5], 0
    %33 = vsyncpa [#allocation8], 0
    %34 = vsyncpa [#allocation11], 0
    %35 = vsyncpa [#allocation14], 0
    %36 = vsyncpa [#allocation17], 0
    // Predicated region
    $region2: #{transformer_decoder.1} parent=1 // pred_check
      _
    $region3: #{transformer_decoder.1} parent=1 // pred_check_branch
      %38 = sbr.rel (0) target = $region5
    $region4: #{transformer_decoder.1} parent=1 // pred_region
      _
    $region5: #{transformer_decoder.1} parent=1 // pred_fallthru
      _
    // Predicated region
    $region6: #{transformer_decoder.1} parent=1 // pred_check
      _
    $region7: #{transformer_decoder.1} parent=1 // pred_check_branch
      %40 = sbr.rel (0) target = $region9
    $region8: #{transformer_decoder.1} parent=1 // pred_region
      _
    $region9: #{transformer_decoder.1} parent=1 // pred_fallthru
      _
    // Predicated region
    $region10: #{transformer_decoder.1} parent=1 // pred_check
      _
    $region11: #{transformer_decoder.1} parent=1 // pred_check_branch
      %42 = sbr.rel (0) target = $region13
    $region12: #{transformer_decoder.1} parent=1 // pred_region
      _
    $region13: #{transformer_decoder.1} parent=1 // pred_fallthru
      _
    // Predicated region
    $region14: #{transformer_decoder.1} parent=1 // pred_check
      _
    $region15: #{transformer_decoder.1} parent=1 // pred_check_branch
      %44 = sbr.rel (0) target = $region17
    $region16: #{transformer_decoder.1} parent=1 // pred_region
      _
    $region17: #{transformer_decoder.1} parent=1 // pred_fallthru
      _
    // Predicated region
    $region18: #{transformer_decoder.1} parent=1 // pred_check
      _
    $region19: #{transformer_decoder.1} parent=1 // pred_check_branch
      %46 = sbr.rel (0) target = $region21
    $region20: #{transformer_decoder.1} parent=1 // pred_region
      _
    $region21: #{transformer_decoder.1} parent=1 // pred_fallthru
      _
    // Predicated region
    $region22: #{transformer_decoder.1} parent=1 // pred_check
      _
    $region23: #{transformer_decoder.1} parent=1 // pred_check_branch
      %48 = sbr.rel (0) target = $region25
    $region24: #{transformer_decoder.1} parent=1 // pred_region
      _
    $region25: #{transformer_decoder.1} parent=1 // pred_fallthru
      _
    // Predicated region
    $region26: #{transformer_decoder.1} parent=1 // pred_check
      _
    $region27: #{transformer_decoder.1} parent=1 // pred_check_branch
      %50 = sbr.rel (0) target = $region29
    $region28: #{transformer_decoder.1} parent=1 // pred_region
      _
    $region29: #{transformer_decoder.1} parent=1 // pred_fallthru
      _
    // Predicated region
    $region30: #{transformer_decoder.1} parent=1 // pred_check
      _
    $region31: #{transformer_decoder.1} parent=1 // pred_check_branch
      %52 = sbr.rel (0) target = $region33
    $region32: #{transformer_decoder.1} parent=1 // pred_region
      _
    $region33: #{transformer_decoder.1} parent=1 // pred_fallthru
      _
    // Predicated region
    $region34: #{transformer_decoder.1} parent=1 // pred_check
      _
    $region35: #{transformer_decoder.1} parent=1 // pred_check_branch
      %54 = sbr.rel (0) target = $region37
    $region36: #{transformer_decoder.1} parent=1 // pred_region
      _
    $region37: #{transformer_decoder.1} parent=1 // pred_fallthru
      _
    // Predicated region
    $region38: #{transformer_decoder.1} parent=1 // pred_check
      _
    $region39: #{transformer_decoder.1} parent=1 // pred_check_branch
      %56 = sbr.rel (0) target = $region41
    $region40: #{transformer_decoder.1} parent=1 // pred_region
      _
    $region41: #{transformer_decoder.1} parent=1 // pred_fallthru
      _
    // Predicated region
    $region42: #{transformer_decoder.1} parent=1 // pred_check
      _
    $region43: #{transformer_decoder.1} parent=1 // pred_check_branch
      %58 = sbr.rel (0) target = $region45
    $region44: #{transformer_decoder.1} parent=1 // pred_region
      _
    $region45: #{transformer_decoder.1} parent=1 // pred_fallthru
      _
    // Predicated region
    $region46: #{transformer_decoder.1} parent=1 // pred_check
      _
    $region47: #{transformer_decoder.1} parent=1 // pred_check_branch
      %60 = sbr.rel (0) target = $region49
    $region48: #{transformer_decoder.1} parent=1 // pred_region
      %s62 = ssub.s32 32, 32
      %63 = vsyncadd [#allocation3], %s62
      %s64 = sshll.u32 [#allocation2], 4
      %s65 = int_to_ptr.vmem [resolvable:$true] %s64
      %70 = dma.hbm_to_vmem [thread:$0]  %s11, 32, %s65, [#allocation3], 16, 16, 1
    $region49: #{transformer_decoder.1} parent=1 // pred_fallthru
      _
    // Predicated region
    $region50: #{transformer_decoder.1} parent=1 // pred_check
      _
    $region51: #{transformer_decoder.1} parent=1 // pred_check_branch
      %72 = sbr.rel (0) target = $region53
    $region52: #{transformer_decoder.1} parent=1 // pred_region
      _
    $region53: #{transformer_decoder.1} parent=1 // pred_fallthru
      _
    // Predicated region
    $region54: #{transformer_decoder.1} parent=1 // pred_check
      _
    $region55: #{transformer_decoder.1} parent=1 // pred_check_branch
      %74 = sbr.rel (0) target = $region57
    $region56: #{transformer_decoder.1} parent=1 // pred_region
      %s76 = ssub.s32 32, 32
      %77 = vsyncadd [#allocation5], %s76
      %s78 = sshll.u32 [#allocation4], 4
      %s79 = int_to_ptr.vmem [resolvable:$true] %s78
      %84 = dma.hbm_to_vmem [thread:$0]  %s13, 32, %s79, [#allocation5], 16, 16, 1
    $region57: #{transformer_decoder.1} parent=1 // pred_fallthru
      _
    // Predicated region
    $region58: #{transformer_decoder.1} parent=1 // pred_check
      _
    $region59: #{transformer_decoder.1} parent=1 // pred_check_branch
      %86 = sbr.rel (0) target = $region61
    $region60: #{transformer_decoder.1} parent=1 // pred_region
      %s88 = ssub.s32 1024, 1024
      %89 = vsyncadd [#allocation5], %s88
      %s90 = sshll.u32 [#allocation6], 4
      %s91 = int_to_ptr.vmem [resolvable:$true] %s90
      %96 = dma.hbm_to_vmem [thread:$0]  %s14, 1024, %s91, [#allocation5], 128, 128, 8
    $region61: #{transformer_decoder.1} parent=1 // pred_fallthru
      _
    // Predicated region
    $region62: #{transformer_decoder.1} parent=1 // pred_check
      _
    $region63: #{transformer_decoder.1} parent=1 // pred_check_branch
      %98 = sbr.rel (0) target = $region65
    $region64: #{transformer_decoder.1} parent=1 // pred_region
      %s100 = ssub.s32 32, 32
      %101 = vsyncadd [#allocation8], %s100
      %s102 = sshll.u32 [#allocation7], 4
      %s103 = int_to_ptr.vmem [resolvable:$true] %s102
      %108 = dma.hbm_to_vmem [thread:$0]  %s15, 32, %s103, [#allocation8], 16, 16, 1
    $region65: #{transformer_decoder.1} parent=1 // pred_fallthru
      _
    // Predicated region
    $region66: #{transformer_decoder.1} parent=1 // pred_check
      _
    $region67: #{transformer_decoder.1} parent=1 // pred_check_branch
      %110 = sbr.rel (0) target = $region69
    $region68: #{transformer_decoder.1} parent=1 // pred_region
      %s112 = ssub.s32 1024, 1024
      %113 = vsyncadd [#allocation8], %s112
      %s114 = sshll.u32 [#allocation9], 4
      %s115 = int_to_ptr.vmem [resolvable:$true] %s114
      %120 = dma.hbm_to_vmem [thread:$0]  %s16, 1024, %s115, [#allocation8], 128, 128, 8
    $region69: #{transformer_decoder.1} parent=1 // pred_fallthru
      _
    // Predicated region
    $region70: #{transformer_decoder.1} parent=1 // pred_check
      _
    $region71: #{transformer_decoder.1} parent=1 // pred_check_branch
      %122 = sbr.rel (0) target = $region73
    $region72: #{transformer_decoder.1} parent=1 // pred_region
      %s124 = ssub.s32 32, 32
      %125 = vsyncadd [#allocation11], %s124
      %s126 = sshll.u32 [#allocation10], 4
      %s127 = int_to_ptr.vmem [resolvable:$true] %s126
      %132 = dma.hbm_to_vmem [thread:$0]  %s17, 32, %s127, [#allocation11], 16, 16, 1
    $region73: #{transformer_decoder.1} parent=1 // pred_fallthru
      _
    // Predicated region
    $region74: #{transformer_decoder.1} parent=1 // pred_check
      _
    $region75: #{transformer_decoder.1} parent=1 // pred_check_branch
      %134 = sbr.rel (0) target = $region77
    $region76: #{transformer_decoder.1} parent=1 // pred_region
      _
    $region77: #{transformer_decoder.1} parent=1 // pred_fallthru
      _
    // Predicated region
    $region78: #{transformer_decoder.1} parent=1 // pred_check
      _
    $region79: #{transformer_decoder.1} parent=1 // pred_check_branch
      %136 = sbr.rel (0) target = $region81
    $region80: #{transformer_decoder.1} parent=1 // pred_region
      %s138 = ssub.s32 32, 32
      %139 = vsyncadd [#allocation11], %s138
      %s140 = sshll.u32 [#allocation12], 4
      %s141 = int_to_ptr.vmem [resolvable:$true] %s140
      %146 = dma.hbm_to_vmem [thread:$0]  %s19, 32, %s141, [#allocation11], 16, 16, 1
    $region81: #{transformer_decoder.1} parent=1 // pred_fallthru
      _
    // Predicated region
    $region82: #{transformer_decoder.1} parent=1 // pred_check
      _
    $region83: #{transformer_decoder.1} parent=1 // pred_check_branch
      %148 = sbr.rel (0) target = $region85
    $region84: #{transformer_decoder.1} parent=1 // pred_region
      _
    $region85: #{transformer_decoder.1} parent=1 // pred_fallthru
      _
    // Predicated region
    $region86: #{transformer_decoder.1} parent=1 // pred_check
      _
    $region87: #{transformer_decoder.1} parent=1 // pred_check_branch
      %150 = sbr.rel (0) target = $region89
    $region88: #{transformer_decoder.1} parent=1 // pred_region
      %s152 = ssub.s32 32, 32
      %153 = vsyncadd [#allocation14], %s152
      %s154 = sshll.u32 [#allocation13], 4
      %s155 = int_to_ptr.vmem [resolvable:$true] %s154
      %160 = dma.hbm_to_vmem [thread:$0]  %s21, 32, %s155, [#allocation14], 16, 16, 1
    $region89: #{transformer_decoder.1} parent=1 // pred_fallthru
      _
    // Predicated region
    $region90: #{transformer_decoder.1} parent=1 // pred_check
      _
    $region91: #{transformer_decoder.1} parent=1 // pred_check_branch
      %162 = sbr.rel (0) target = $region93
    $region92: #{transformer_decoder.1} parent=1 // pred_region
      %s164 = ssub.s32 96, 96
      %165 = vsyncadd [#allocation14], %s164
      %s166 = sshll.u32 [#allocation15], 4
      %s167 = int_to_ptr.vmem [resolvable:$true] %s166
      %172 = dma.hbm_to_vmem [thread:$0]  %s22, 96, %s167, [#allocation14], 16, 16, 1
    $region93: #{transformer_decoder.1} parent=1 // pred_fallthru
      _
    // Predicated region
    $region94: #{transformer_decoder.1} parent=1 // pred_check
      _
    $region95: #{transformer_decoder.1} parent=1 // pred_check_branch
      %174 = sbr.rel (0) target = $region97
    $region96: #{transformer_decoder.1} parent=1 // pred_region
      %s176 = ssub.s32 96, 96
      %177 = vsyncadd [#allocation17], %s176
      %s178 = sshll.u32 [#allocation16], 4
      %s179 = int_to_ptr.vmem [resolvable:$true] %s178
      %184 = dma.hbm_to_vmem [thread:$0]  %s23, 96, %s179, [#allocation17], 16, 16, 1
    $region97: #{transformer_decoder.1} parent=1 // pred_fallthru
      _
    // Predicated region
    $region98: #{transformer_decoder.1} parent=1 // pred_check
      _
    $region99: #{transformer_decoder.1} parent=1 // pred_check_branch
      %186 = sbr.rel (0) target = $region101
    $region100: #{transformer_decoder.1} parent=1 // pred_region
      _
    $region101: #{transformer_decoder.1} parent=1 // pred_fallthru
      _
    // Predicated region
    $region102: #{transformer_decoder.1} parent=1 // pred_check
      _
    $region103: #{transformer_decoder.1} parent=1 // pred_check_branch
      %188 = sbr.rel (0) target = $region105
    $region104: #{transformer_decoder.1} parent=1 // pred_region
      _
    $region105: #{transformer_decoder.1} parent=1 // pred_fallthru
      _
    // Predicated region
    $region106: #{transformer_decoder.1} parent=1 // pred_check
      _
    $region107: #{transformer_decoder.1} parent=1 // pred_check_branch
      %190 = sbr.rel (0) target = $region109
    $region108: #{transformer_decoder.1} parent=1 // pred_region
      %191 = dma.done [#allocation3], 32
    $region109: #{transformer_decoder.1} parent=1 // pred_fallthru
      _
    // Predicated region
    $region110: #{transformer_decoder.1} parent=1 // pred_check
      _
    $region111: #{transformer_decoder.1} parent=1 // pred_check_branch
      %193 = sbr.rel (0) target = $region113
    $region112: #{transformer_decoder.1} parent=1 // pred_region
      %194 = dma.done [#allocation5], 32
    $region113: #{transformer_decoder.1} parent=1 // pred_fallthru
      _
    // Predicated region
    $region114: #{transformer_decoder.1} parent=1 // pred_check
      _
    $region115: #{transformer_decoder.1} parent=1 // pred_check_branch
      %196 = sbr.rel (0) target = $region117
    $region116: #{transformer_decoder.1} parent=1 // pred_region
      %197 = dma.done [#allocation5], 1024
    $region117: #{transformer_decoder.1} parent=1 // pred_fallthru
      _
    // Predicated region
    $region118: #{transformer_decoder.1} parent=1 // pred_check
      _
    $region119: #{transformer_decoder.1} parent=1 // pred_check_branch
      %199 = sbr.rel (0) target = $region121
    $region120: #{transformer_decoder.1} parent=1 // pred_region
      %200 = dma.done [#allocation8], 32
    $region121: #{transformer_decoder.1} parent=1 // pred_fallthru
      _
    // Predicated region
    $region122: #{transformer_decoder.1} parent=1 // pred_check
      _
    $region123: #{transformer_decoder.1} parent=1 // pred_check_branch
      %202 = sbr.rel (0) target = $region125
    $region124: #{transformer_decoder.1} parent=1 // pred_region
      %203 = dma.done [#allocation8], 1024
    $region125: #{transformer_decoder.1} parent=1 // pred_fallthru
      _
    // Predicated region
    $region126: #{transformer_decoder.1} parent=1 // pred_check
      _
    $region127: #{transformer_decoder.1} parent=1 // pred_check_branch
      %205 = sbr.rel (0) target = $region129
    $region128: #{transformer_decoder.1} parent=1 // pred_region
      %206 = dma.done [#allocation11], 32
    $region129: #{transformer_decoder.1} parent=1 // pred_fallthru
      _
    // Predicated region
    $region130: #{transformer_decoder.1} parent=1 // pred_check
      _
    $region131: #{transformer_decoder.1} parent=1 // pred_check_branch
      %208 = sbr.rel (0) target = $region133
    $region132: #{transformer_decoder.1} parent=1 // pred_region
      %209 = dma.done [#allocation11], 32
    $region133: #{transformer_decoder.1} parent=1 // pred_fallthru
      _
    // Predicated region
    $region134: #{transformer_decoder.1} parent=1 // pred_check
      _
    $region135: #{transformer_decoder.1} parent=1 // pred_check_branch
      %211 = sbr.rel (0) target = $region137
    $region136: #{transformer_decoder.1} parent=1 // pred_region
      %212 = dma.done [#allocation14], 32
    $region137: #{transformer_decoder.1} parent=1 // pred_fallthru
      _
    // Predicated region
    $region138: #{transformer_decoder.1} parent=1 // pred_check
      _
    $region139: #{transformer_decoder.1} parent=1 // pred_check_branch
      %214 = sbr.rel (0) target = $region141
    $region140: #{transformer_decoder.1} parent=1 // pred_region
      %215 = dma.done [#allocation14], 96
    $region141: #{transformer_decoder.1} parent=1 // pred_fallthru
      _
    // Predicated region
    $region142: #{transformer_decoder.1} parent=1 // pred_check
      _
    $region143: #{transformer_decoder.1} parent=1 // pred_check_branch
      %217 = sbr.rel (0) target = $region145
    $region144: #{transformer_decoder.1} parent=1 // pred_region
      %218 = dma.done [#allocation17], 96
    $region145: #{transformer_decoder.1} parent=1 // pred_fallthru
      _
    %v219 = vld [vmem:[%s24] sm:$0x1]
    %v220 = vld [vmem:[%s25] sm:$0x1]
    %v221 = vld [vmem:[%s0] sm:$0xff]
    %v222 = vld [vmem:[%s2] sm:$0xff]
    %v223 = vld [vmem:[%s1] sm:$0xff]
    %v224 = vld [vmem:[%s1 + $0x8] sm:$0xff]
    %v225 = vld [vmem:[%s3] sm:$0xff]
    %v226 = vld [vmem:[%s3 + $0x8] sm:$0xff]
    %v227 = vadd.f32 %v223, %v225
    %v228 = vadd.f32 %v224, %v226
    %v229 = vld [vmem:[#allocation15] sm:$0x1]
    %v230 = vld [vmem:[#allocation15 + $0x1] sm:$0x1]
    %v231 = vld [vmem:[#allocation15 + $0x2] sm:$0x1]
    %v232 = vld [vmem:[#allocation16] sm:$0x1]
    %v233 = vld [vmem:[#allocation16 + $0x1] sm:$0x1]
    %v234 = vld [vmem:[#allocation16 + $0x2] sm:$0x1]
    %v235 = vadd.f32 %v221, %v222
    %v236 = vld [vmem:[%s4] sm:$0xff]
    %v237 = vld [vmem:[%s4 + $0x8] sm:$0xff]
    %v238 = vld [vmem:[%s4 + $0x10] sm:$0xff]
    %v239 = vld [vmem:[%s4 + $0x18] sm:$0xff]
    %v240 = vld [vmem:[%s5] sm:$0x1]
    %v242 = vlaneseq
    %v243 = vshrl.u32 %v242, 7
    %v244 = vsub.s32 0, %v243
    %v245 = vrot.slane %v240, %v244
    %vm247 = vcmask 261120
    %v249 = vsel %vm247, %v235, 0
    %251 = vmatprep.subr.mxu0 0.0
    %252 = vmatpush1.msra.mxu0 %v236
    %253 = vmatprep.subr.mxu0 0.0
    %254 = vmatpush1.msra.mxu0 %v237
    %255 = vmatprep.subr.mxu0 0.0
    %256 = vmatpush1.msra.mxu0 %v238
    %257 = vmatprep.subr.mxu0 0.0
    %258 = vmatpush1.msra.mxu0 %v239
    %259 = vmatprep.subr.mxu0 0.0
    %260 = vmatpush1.msra.mxu0 0.0
    %261 = vmatprep.subr.mxu0 0.0
    %262 = vmatpush1.msra.mxu0 0.0
    %263 = vmatprep.subr.mxu0 0.0
    %264 = vmatpush1.msra.mxu0 0.0
    %265 = vmatprep.subr.mxu0 0.0
    %266 = vmatpush1.msra.mxu0 0.0
    %267 = vmatprep.subr.mxu0 0.0
    %268 = vmatpush1.msra.mxu0 0.0
    %269 = vmatprep.subr.mxu0 0.0
    %270 = vmatpush1.msra.mxu0 0.0
    %271 = vmatprep.subr.mxu0 0.0
    %272 = vmatpush1.msra.mxu0 0.0
    %273 = vmatprep.subr.mxu0 0.0
    %274 = vmatpush1.msra.mxu0 0.0
    %275 = vmatprep.subr.mxu0 0.0
    %276 = vmatpush1.msra.mxu0 0.0
    %277 = vmatprep.subr.mxu0 0.0
    %278 = vmatpush1.msra.mxu0 0.0
    %279 = vmatprep.subr.mxu0 0.0
    %280 = vmatpush1.msra.mxu0 0.0
    %281 = vmatprep.subr.mxu0 0.0
    %282 = vmatpush1.msra.mxu0 0.0
    %283 = vmatprep.subr.mxu0 0.0
    %284 = vmatpush1.msra.mxu0 0.0
    %285 = vmatprep.subr.mxu0 0.0
    %286 = vmatpush1.msra.mxu0 0.0
    %287 = vmatprep.subr.mxu0 0.0
    %288 = vmatpush1.msra.mxu0 0.0
    %289 = vmatprep.subr.mxu0 0.0
    %290 = vmatpush1.msra.mxu0 0.0
    %291 = vmatprep.subr.mxu0 0.0
    %292 = vmatpush1.msra.mxu0 0.0
    %293 = vmatprep.subr.mxu0 0.0
    %294 = vmatpush1.msra.mxu0 0.0
    %295 = vmatprep.subr.mxu0 0.0
    %296 = vmatpush1.msra.mxu0 0.0
    %297 = vmatprep.subr.mxu0 0.0
    %298 = vmatpush1.msra.mxu0 0.0
    %299 = vmatprep.subr.mxu0 0.0
    %300 = vmatpush1.msra.mxu0 0.0
    %301 = vmatprep.subr.mxu0 0.0
    %302 = vmatpush1.msra.mxu0 0.0
    %303 = vmatprep.subr.mxu0 0.0
    %304 = vmatpush1.msra.mxu0 0.0
    %305 = vmatprep.subr.mxu0 0.0
    %306 = vmatpush1.msra.mxu0 0.0
    %307 = vmatprep.subr.mxu0 0.0
    %308 = vmatpush1.msra.mxu0 0.0
    %309 = vmatprep.subr.mxu0 0.0
    %310 = vmatpush1.msra.mxu0 0.0
    %311 = vmatprep.subr.mxu0 0.0
    %312 = vmatpush1.msra.mxu0 0.0
    %313 = vmatprep.subr.mxu0 0.0
    %314 = vmatpush1.msra.mxu0 0.0
    %315 = vmatprep.mubr.f32.mxu0 0.0
    %316 = vmatmul.mubr.f32.gmra.mrb[0].mxu0 %v249
    %v317 = vpop.f32.mrb[0].mxu0
    %v318 = vadd.f32 %v245, %v317
    %v319 = vpop.f32.mrb[0].mxu0
    %320 = vdwg.mxu0
    %v321 = vmul.f32 %v318, 0.35355338
    %v322 = vld [vmem:[%s6] sm:$0xff]
    %v323 = vld [vmem:[%s6 + $0x8] sm:$0xff]
    %v324 = vld [vmem:[%s6 + $0x10] sm:$0xff]
    %v325 = vld [vmem:[%s6 + $0x18] sm:$0xff]
    %v326 = vld [vmem:[%s7] sm:$0x1]
    %v328 = vlaneseq
    %v329 = vshrl.u32 %v328, 7
    %v330 = vsub.s32 0, %v329
    %v331 = vrot.slane %v326, %v330
    %v334 = vsel %vm247, %v221, 0
    %336 = vmatprep.subr.mxu0 0.0
    %337 = vmatpush1.msra.mxu0 %v322
    %338 = vmatprep.subr.mxu0 0.0
    %339 = vmatpush1.msra.mxu0 %v323
    %340 = vmatprep.subr.mxu0 0.0
    %341 = vmatpush1.msra.mxu0 %v324
    %342 = vmatprep.subr.mxu0 0.0
    %343 = vmatpush1.msra.mxu0 %v325
    %344 = vmatprep.subr.mxu0 0.0
    %345 = vmatpush1.msra.mxu0 0.0
    %346 = vmatprep.subr.mxu0 0.0
    %347 = vmatpush1.msra.mxu0 0.0
    %348 = vmatprep.subr.mxu0 0.0
    %349 = vmatpush1.msra.mxu0 0.0
    %350 = vmatprep.subr.mxu0 0.0
    %351 = vmatpush1.msra.mxu0 0.0
    %352 = vmatprep.subr.mxu0 0.0
    %353 = vmatpush1.msra.mxu0 0.0
    %354 = vmatprep.subr.mxu0 0.0
    %355 = vmatpush1.msra.mxu0 0.0
    %356 = vmatprep.subr.mxu0 0.0
    %357 = vmatpush1.msra.mxu0 0.0
    %358 = vmatprep.subr.mxu0 0.0
    %359 = vmatpush1.msra.mxu0 0.0
    %360 = vmatprep.subr.mxu0 0.0
    %361 = vmatpush1.msra.mxu0 0.0
    %362 = vmatprep.subr.mxu0 0.0
    %363 = vmatpush1.msra.mxu0 0.0
    %364 = vmatprep.subr.mxu0 0.0
    %365 = vmatpush1.msra.mxu0 0.0
    %366 = vmatprep.subr.mxu0 0.0
    %367 = vmatpush1.msra.mxu0 0.0
    %368 = vmatprep.subr.mxu0 0.0
    %369 = vmatpush1.msra.mxu0 0.0
    %370 = vmatprep.subr.mxu0 0.0
    %371 = vmatpush1.msra.mxu0 0.0
    %372 = vmatprep.subr.mxu0 0.0
    %373 = vmatpush1.msra.mxu0 0.0
    %374 = vmatprep.subr.mxu0 0.0
    %375 = vmatpush1.msra.mxu0 0.0
    %376 = vmatprep.subr.mxu0 0.0
    %377 = vmatpush1.msra.mxu0 0.0
    %378 = vmatprep.subr.mxu0 0.0
    %379 = vmatpush1.msra.mxu0 0.0
    %380 = vmatprep.subr.mxu0 0.0
    %381 = vmatpush1.msra.mxu0 0.0
    %382 = vmatprep.subr.mxu0 0.0
    %383 = vmatpush1.msra.mxu0 0.0
    %384 = vmatprep.subr.mxu0 0.0
    %385 = vmatpush1.msra.mxu0 0.0
    %386 = vmatprep.subr.mxu0 0.0
    %387 = vmatpush1.msra.mxu0 0.0
    %388 = vmatprep.subr.mxu0 0.0
    %389 = vmatpush1.msra.mxu0 0.0
    %390 = vmatprep.subr.mxu0 0.0
    %391 = vmatpush1.msra.mxu0 0.0
    %392 = vmatprep.subr.mxu0 0.0
    %393 = vmatpush1.msra.mxu0 0.0
    %394 = vmatprep.subr.mxu0 0.0
    %395 = vmatpush1.msra.mxu0 0.0
    %396 = vmatprep.subr.mxu0 0.0
    %397 = vmatpush1.msra.mxu0 0.0
    %398 = vmatprep.subr.mxu0 0.0
    %399 = vmatpush1.msra.mxu0 0.0
    %400 = vmatprep.mubr.f32.mxu0 0.0
    %401 = vmatmul.mubr.f32.gmra.mrb[0].mxu0 %v334
    %v402 = vpop.f32.mrb[0].mxu0
    %v403 = vadd.f32 %v331, %v402
    %v404 = vpop.f32.mrb[0].mxu0
    %405 = vdwg.mxu0
    %v406 = vld [vmem:[%s8] sm:$0xff]
    %v407 = vld [vmem:[%s8 + $0x8] sm:$0xff]
    %v408 = vld [vmem:[%s8 + $0x10] sm:$0xff]
    %v409 = vld [vmem:[%s8 + $0x18] sm:$0xff]
    %v410 = vld [vmem:[%s9] sm:$0x1]
    %412 = vrot.lane.b32.xlu0 %v318, 96
    %v413 = vpop.permute.xlu0 %412
    %vm414 = vcmask 64512
    %v416 = vsel %vm414, %v321, 0
    %v418 = vsel %vm414, %v413, 0
    %420 = vmatprep.subr.mxu0 0.0
    %421 = vmatpush1.xpose.msra.mxu0 %v418
    %422 = vmatprep.subr.mxu0 0.0
    %423 = vmatpush1.xpose.msra.mxu0 0.0
    %424 = vmatprep.subr.mxu0 0.0
    %425 = vmatpush1.xpose.msra.mxu0 0.0
    %426 = vmatprep.subr.mxu0 0.0
    %427 = vmatpush1.xpose.msra.mxu0 0.0
    %428 = vmatprep.subr.mxu0 0.0
    %429 = vmatpush1.xpose.msra.mxu0 0.0
    %430 = vmatprep.subr.mxu0 0.0
    %431 = vmatpush1.xpose.msra.mxu0 0.0
    %432 = vmatprep.subr.mxu0 0.0
    %433 = vmatpush1.xpose.msra.mxu0 0.0
    %434 = vmatprep.subr.mxu0 0.0
    %435 = vmatpush1.xpose.msra.mxu0 0.0
    %436 = vmatprep.subr.mxu0 0.0
    %437 = vmatpush1.xpose.msra.mxu0 0.0
    %438 = vmatprep.subr.mxu0 0.0
    %439 = vmatpush1.xpose.msra.mxu0 0.0
    %440 = vmatprep.subr.mxu0 0.0
    %441 = vmatpush1.xpose.msra.mxu0 0.0
    %442 = vmatprep.subr.mxu0 0.0
    %443 = vmatpush1.xpose.msra.mxu0 0.0
    %444 = vmatprep.subr.mxu0 0.0
    %445 = vmatpush1.xpose.msra.mxu0 0.0
    %446 = vmatprep.subr.mxu0 0.0
    %447 = vmatpush1.xpose.msra.mxu0 0.0
    %448 = vmatprep.subr.mxu0 0.0
    %449 = vmatpush1.xpose.msra.mxu0 0.0
    %450 = vmatprep.subr.mxu0 0.0
    %451 = vmatpush1.xpose.msra.mxu0 0.0
    %452 = vmatprep.subr.mxu0 0.0
    %453 = vmatpush1.xpose.msra.mxu0 0.0
    %454 = vmatprep.subr.mxu0 0.0
    %455 = vmatpush1.xpose.msra.mxu0 0.0
    %456 = vmatprep.subr.mxu0 0.0
    %457 = vmatpush1.xpose.msra.mxu0 0.0
    %458 = vmatprep.subr.mxu0 0.0
    %459 = vmatpush1.xpose.msra.mxu0 0.0
    %460 = vmatprep.subr.mxu0 0.0
    %461 = vmatpush1.xpose.msra.mxu0 0.0
    %462 = vmatprep.subr.mxu0 0.0
    %463 = vmatpush1.xpose.msra.mxu0 0.0
    %464 = vmatprep.subr.mxu0 0.0
    %465 = vmatpush1.xpose.msra.mxu0 0.0
    %466 = vmatprep.subr.mxu0 0.0
    %467 = vmatpush1.xpose.msra.mxu0 0.0
    %468 = vmatprep.subr.mxu0 0.0
    %469 = vmatpush1.xpose.msra.mxu0 0.0
    %470 = vmatprep.subr.mxu0 0.0
    %471 = vmatpush1.xpose.msra.mxu0 0.0
    %472 = vmatprep.subr.mxu0 0.0
    %473 = vmatpush1.xpose.msra.mxu0 0.0
    %474 = vmatprep.subr.mxu0 0.0
    %475 = vmatpush1.xpose.msra.mxu0 0.0
    %476 = vmatprep.subr.mxu0 0.0
    %477 = vmatpush1.xpose.msra.mxu0 0.0
    %478 = vmatprep.subr.mxu0 0.0
    %479 = vmatpush1.xpose.msra.mxu0 0.0
    %480 = vmatprep.subr.mxu0 0.0
    %481 = vmatpush1.xpose.msra.mxu0 0.0
    %482 = vmatprep.subr.mxu0 0.0
    %483 = vmatpush1.xpose.msra.mxu0 0.0
    %484 = vmatprep.mubr.f32.mxu0 0.0
    %485 = vmatmul.mubr.f32.gmra.mrb[0].mxu0 %v416
    %v486 = vpop.f32.mrb[0].mxu0
    %v487 = vadd.f32 0.0, %v486
    %v488 = vpop.f32.mrb[0].mxu0
    %489 = vdwg.mxu0
    %v490 = vsel %vm414, %v487, -inf
    %491 = vmax.xlane.f32.xlu0 %v490
    %v492 = vpop.xlane.xlu0 %491
    %v493 = vsub.f32 %v487, %v492
    %v494 = vmul.f32 %v493, 1.442695
    %v495 = vpow.pop %v494
    %v496 = vsel %vm414, %v495, 0.0
    %497 = vadd.xlane.f32.xlu0 %v496
    %v498 = vpop.xlane.xlu0 %497
    %v499 = vrcp.pop %v498
    %v500 = vmul.f32 %v495, %v499
    %v502 = vsel %vm414, %v500, 0
    %504 = vmatprep.subr.mxu0 0.0
    %505 = vmatpush1.msra.mxu0 %v403
    %506 = vmatprep.subr.mxu0 0.0
    %507 = vmatpush1.msra.mxu0 0.0
    %508 = vmatprep.subr.mxu0 0.0
    %509 = vmatpush1.msra.mxu0 0.0
    %510 = vmatprep.subr.mxu0 0.0
    %511 = vmatpush1.msra.mxu0 0.0
    %512 = vmatprep.subr.mxu0 0.0
    %513 = vmatpush1.msra.mxu0 0.0
    %514 = vmatprep.subr.mxu0 0.0
    %515 = vmatpush1.msra.mxu0 0.0
    %516 = vmatprep.subr.mxu0 0.0
    %517 = vmatpush1.msra.mxu0 0.0
    %518 = vmatprep.subr.mxu0 0.0
    %519 = vmatpush1.msra.mxu0 0.0
    %520 = vmatprep.subr.mxu0 0.0
    %521 = vmatpush1.msra.mxu0 0.0
    %522 = vmatprep.subr.mxu0 0.0
    %523 = vmatpush1.msra.mxu0 0.0
    %524 = vmatprep.subr.mxu0 0.0
    %525 = vmatpush1.msra.mxu0 0.0
    %526 = vmatprep.subr.mxu0 0.0
    %527 = vmatpush1.msra.mxu0 0.0
    %528 = vmatprep.subr.mxu0 0.0
    %529 = vmatpush1.msra.mxu0 0.0
    %530 = vmatprep.subr.mxu0 0.0
    %531 = vmatpush1.msra.mxu0 0.0
    %532 = vmatprep.subr.mxu0 0.0
    %533 = vmatpush1.msra.mxu0 0.0
    %534 = vmatprep.subr.mxu0 0.0
    %535 = vmatpush1.msra.mxu0 0.0
    %536 = vmatprep.subr.mxu0 0.0
    %537 = vmatpush1.msra.mxu0 0.0
    %538 = vmatprep.subr.mxu0 0.0
    %539 = vmatpush1.msra.mxu0 0.0
    %540 = vmatprep.subr.mxu0 0.0
    %541 = vmatpush1.msra.mxu0 0.0
    %542 = vmatprep.subr.mxu0 0.0
    %543 = vmatpush1.msra.mxu0 0.0
    %544 = vmatprep.subr.mxu0 0.0
    %545 = vmatpush1.msra.mxu0 0.0
    %546 = vmatprep.subr.mxu0 0.0
    %547 = vmatpush1.msra.mxu0 0.0
    %548 = vmatprep.subr.mxu0 0.0
    %549 = vmatpush1.msra.mxu0 0.0
    %550 = vmatprep.subr.mxu0 0.0
    %551 = vmatpush1.msra.mxu0 0.0
    %552 = vmatprep.subr.mxu0 0.0
    %553 = vmatpush1.msra.mxu0 0.0
    %554 = vmatprep.subr.mxu0 0.0
    %555 = vmatpush1.msra.mxu0 0.0
    %556 = vmatprep.subr.mxu0 0.0
    %557 = vmatpush1.msra.mxu0 0.0
    %558 = vmatprep.subr.mxu0 0.0
    %559 = vmatpush1.msra.mxu0 0.0
    %560 = vmatprep.subr.mxu0 0.0
    %561 = vmatpush1.msra.mxu0 0.0
    %562 = vmatprep.subr.mxu0 0.0
    %563 = vmatpush1.msra.mxu0 0.0
    %564 = vmatprep.subr.mxu0 0.0
    %565 = vmatpush1.msra.mxu0 0.0
    %566 = vmatprep.subr.mxu0 0.0
    %567 = vmatpush1.msra.mxu0 0.0
    %568 = vmatprep.mubr.f32.mxu0 0.0
    %569 = vmatmul.mubr.f32.gmra.mrb[0].mxu0 %v502
    %v570 = vpop.f32.mrb[0].mxu0
    %v571 = vadd.f32 0.0, %v570
    %v572 = vpop.f32.mrb[0].mxu0
    %573 = vdwg.mxu0
    %574 = vrot.lane.b32.xlu0 %v321, 120
    %v575 = vpop.permute.xlu0 %574
    %576 = vrot.lane.b32.xlu0 %v318, 88
    %v577 = vpop.permute.xlu0 %576
    %v578 = vsel %vm414, %v575, 0
    %v580 = vsel %vm414, %v577, 0
    %582 = vmatprep.subr.mxu0 0.0
    %583 = vmatpush1.xpose.msra.mxu0 %v580
    %584 = vmatprep.subr.mxu0 0.0
    %585 = vmatpush1.xpose.msra.mxu0 0.0
    %586 = vmatprep.subr.mxu0 0.0
    %587 = vmatpush1.xpose.msra.mxu0 0.0
    %588 = vmatprep.subr.mxu0 0.0
    %589 = vmatpush1.xpose.msra.mxu0 0.0
    %590 = vmatprep.subr.mxu0 0.0
    %591 = vmatpush1.xpose.msra.mxu0 0.0
    %592 = vmatprep.subr.mxu0 0.0
    %593 = vmatpush1.xpose.msra.mxu0 0.0
    %594 = vmatprep.subr.mxu0 0.0
    %595 = vmatpush1.xpose.msra.mxu0 0.0
    %596 = vmatprep.subr.mxu0 0.0
    %597 = vmatpush1.xpose.msra.mxu0 0.0
    %598 = vmatprep.subr.mxu0 0.0
    %599 = vmatpush1.xpose.msra.mxu0 0.0
    %600 = vmatprep.subr.mxu0 0.0
    %601 = vmatpush1.xpose.msra.mxu0 0.0
    %602 = vmatprep.subr.mxu0 0.0
    %603 = vmatpush1.xpose.msra.mxu0 0.0
    %604 = vmatprep.subr.mxu0 0.0
    %605 = vmatpush1.xpose.msra.mxu0 0.0
    %606 = vmatprep.subr.mxu0 0.0
    %607 = vmatpush1.xpose.msra.mxu0 0.0
    %608 = vmatprep.subr.mxu0 0.0
    %609 = vmatpush1.xpose.msra.mxu0 0.0
    %610 = vmatprep.subr.mxu0 0.0
    %611 = vmatpush1.xpose.msra.mxu0 0.0
    %612 = vmatprep.subr.mxu0 0.0
    %613 = vmatpush1.xpose.msra.mxu0 0.0
    %614 = vmatprep.subr.mxu0 0.0
    %615 = vmatpush1.xpose.msra.mxu0 0.0
    %616 = vmatprep.subr.mxu0 0.0
    %617 = vmatpush1.xpose.msra.mxu0 0.0
    %618 = vmatprep.subr.mxu0 0.0
    %619 = vmatpush1.xpose.msra.mxu0 0.0
    %620 = vmatprep.subr.mxu0 0.0
    %621 = vmatpush1.xpose.msra.mxu0 0.0
    %622 = vmatprep.subr.mxu0 0.0
    %623 = vmatpush1.xpose.msra.mxu0 0.0
    %624 = vmatprep.subr.mxu0 0.0
    %625 = vmatpush1.xpose.msra.mxu0 0.0
    %626 = vmatprep.subr.mxu0 0.0
    %627 = vmatpush1.xpose.msra.mxu0 0.0
    %628 = vmatprep.subr.mxu0 0.0
    %629 = vmatpush1.xpose.msra.mxu0 0.0
    %630 = vmatprep.subr.mxu0 0.0
    %631 = vmatpush1.xpose.msra.mxu0 0.0
    %632 = vmatprep.subr.mxu0 0.0
    %633 = vmatpush1.xpose.msra.mxu0 0.0
    %634 = vmatprep.subr.mxu0 0.0
    %635 = vmatpush1.xpose.msra.mxu0 0.0
    %636 = vmatprep.subr.mxu0 0.0
    %637 = vmatpush1.xpose.msra.mxu0 0.0
    %638 = vmatprep.subr.mxu0 0.0
    %639 = vmatpush1.xpose.msra.mxu0 0.0
    %640 = vmatprep.subr.mxu0 0.0
    %641 = vmatpush1.xpose.msra.mxu0 0.0
    %642 = vmatprep.subr.mxu0 0.0
    %643 = vmatpush1.xpose.msra.mxu0 0.0
    %644 = vmatprep.subr.mxu0 0.0
    %645 = vmatpush1.xpose.msra.mxu0 0.0
    %646 = vmatprep.mubr.f32.mxu0 0.0
    %647 = vmatmul.mubr.f32.gmra.mrb[0].mxu0 %v578
    %v648 = vpop.f32.mrb[0].mxu0
    %v649 = vadd.f32 0.0, %v648
    %v650 = vpop.f32.mrb[0].mxu0
    %651 = vdwg.mxu0
    %v652 = vsel %vm414, %v649, -inf
    %653 = vmax.xlane.f32.xlu0 %v652
    %v654 = vpop.xlane.xlu0 %653
    %v655 = vsub.f32 %v649, %v654
    %v656 = vmul.f32 %v655, 1.442695
    %v657 = vpow.pop %v656
    %v658 = vsel %vm414, %v657, 0.0
    %659 = vadd.xlane.f32.xlu0 %v658
    %v660 = vpop.xlane.xlu0 %659
    %v661 = vrcp.pop %v660
    %v662 = vmul.f32 %v657, %v661
    %664 = vrot.lane.b32.xlu0 %v403, 120
    %v665 = vpop.permute.xlu0 %664
    %v668 = vsel %vm414, %v662, 0
    %670 = vmatprep.subr.mxu0 0.0
    %671 = vmatpush1.msra.mxu0 %v665
    %672 = vmatprep.subr.mxu0 0.0
    %673 = vmatpush1.msra.mxu0 0.0
    %674 = vmatprep.subr.mxu0 0.0
    %675 = vmatpush1.msra.mxu0 0.0
    %676 = vmatprep.subr.mxu0 0.0
    %677 = vmatpush1.msra.mxu0 0.0
    %678 = vmatprep.subr.mxu0 0.0
    %679 = vmatpush1.msra.mxu0 0.0
    %680 = vmatprep.subr.mxu0 0.0
    %681 = vmatpush1.msra.mxu0 0.0
    %682 = vmatprep.subr.mxu0 0.0
    %683 = vmatpush1.msra.mxu0 0.0
    %684 = vmatprep.subr.mxu0 0.0
    %685 = vmatpush1.msra.mxu0 0.0
    %686 = vmatprep.subr.mxu0 0.0
    %687 = vmatpush1.msra.mxu0 0.0
    %688 = vmatprep.subr.mxu0 0.0
    %689 = vmatpush1.msra.mxu0 0.0
    %690 = vmatprep.subr.mxu0 0.0
    %691 = vmatpush1.msra.mxu0 0.0
    %692 = vmatprep.subr.mxu0 0.0
    %693 = vmatpush1.msra.mxu0 0.0
    %694 = vmatprep.subr.mxu0 0.0
    %695 = vmatpush1.msra.mxu0 0.0
    %696 = vmatprep.subr.mxu0 0.0
    %697 = vmatpush1.msra.mxu0 0.0
    %698 = vmatprep.subr.mxu0 0.0
    %699 = vmatpush1.msra.mxu0 0.0
    %700 = vmatprep.subr.mxu0 0.0
    %701 = vmatpush1.msra.mxu0 0.0
    %702 = vmatprep.subr.mxu0 0.0
    %703 = vmatpush1.msra.mxu0 0.0
    %704 = vmatprep.subr.mxu0 0.0
    %705 = vmatpush1.msra.mxu0 0.0
    %706 = vmatprep.subr.mxu0 0.0
    %707 = vmatpush1.msra.mxu0 0.0
    %708 = vmatprep.subr.mxu0 0.0
    %709 = vmatpush1.msra.mxu0 0.0
    %710 = vmatprep.subr.mxu0 0.0
    %711 = vmatpush1.msra.mxu0 0.0
    %712 = vmatprep.subr.mxu0 0.0
    %713 = vmatpush1.msra.mxu0 0.0
    %714 = vmatprep.subr.mxu0 0.0
    %715 = vmatpush1.msra.mxu0 0.0
    %716 = vmatprep.subr.mxu0 0.0
    %717 = vmatpush1.msra.mxu0 0.0
    %718 = vmatprep.subr.mxu0 0.0
    %719 = vmatpush1.msra.mxu0 0.0
    %720 = vmatprep.subr.mxu0 0.0
    %721 = vmatpush1.msra.mxu0 0.0
    %722 = vmatprep.subr.mxu0 0.0
    %723 = vmatpush1.msra.mxu0 0.0
    %724 = vmatprep.subr.mxu0 0.0
    %725 = vmatpush1.msra.mxu0 0.0
    %726 = vmatprep.subr.mxu0 0.0
    %727 = vmatpush1.msra.mxu0 0.0
    %728 = vmatprep.subr.mxu0 0.0
    %729 = vmatpush1.msra.mxu0 0.0
    %730 = vmatprep.subr.mxu0 0.0
    %731 = vmatpush1.msra.mxu0 0.0
    %732 = vmatprep.subr.mxu0 0.0
    %733 = vmatpush1.msra.mxu0 0.0
    %734 = vmatprep.mubr.f32.mxu0 0.0
    %735 = vmatmul.mubr.f32.gmra.mrb[0].mxu0 %v668
    %v736 = vpop.f32.mrb[0].mxu0
    %v737 = vadd.f32 0.0, %v736
    %v738 = vpop.f32.mrb[0].mxu0
    %739 = vdwg.mxu0
    %740 = vrot.lane.b32.xlu0 %v321, 112
    %v741 = vpop.permute.xlu0 %740
    %742 = vrot.lane.b32.xlu0 %v318, 80
    %v743 = vpop.permute.xlu0 %742
    %v744 = vsel %vm414, %v741, 0
    %v746 = vsel %vm414, %v743, 0
    %748 = vmatprep.subr.mxu0 0.0
    %749 = vmatpush1.xpose.msra.mxu0 %v746
    %750 = vmatprep.subr.mxu0 0.0
    %751 = vmatpush1.xpose.msra.mxu0 0.0
    %752 = vmatprep.subr.mxu0 0.0
    %753 = vmatpush1.xpose.msra.mxu0 0.0
    %754 = vmatprep.subr.mxu0 0.0
    %755 = vmatpush1.xpose.msra.mxu0 0.0
    %756 = vmatprep.subr.mxu0 0.0
    %757 = vmatpush1.xpose.msra.mxu0 0.0
    %758 = vmatprep.subr.mxu0 0.0
    %759 = vmatpush1.xpose.msra.mxu0 0.0
    %760 = vmatprep.subr.mxu0 0.0
    %761 = vmatpush1.xpose.msra.mxu0 0.0
    %762 = vmatprep.subr.mxu0 0.0
    %763 = vmatpush1.xpose.msra.mxu0 0.0
    %764 = vmatprep.subr.mxu0 0.0
    %765 = vmatpush1.xpose.msra.mxu0 0.0
    %766 = vmatprep.subr.mxu0 0.0
    %767 = vmatpush1.xpose.msra.mxu0 0.0
    %768 = vmatprep.subr.mxu0 0.0
    %769 = vmatpush1.xpose.msra.mxu0 0.0
    %770 = vmatprep.subr.mxu0 0.0
    %771 = vmatpush1.xpose.msra.mxu0 0.0
    %772 = vmatprep.subr.mxu0 0.0
    %773 = vmatpush1.xpose.msra.mxu0 0.0
    %774 = vmatprep.subr.mxu0 0.0
    %775 = vmatpush1.xpose.msra.mxu0 0.0
    %776 = vmatprep.subr.mxu0 0.0
    %777 = vmatpush1.xpose.msra.mxu0 0.0
    %778 = vmatprep.subr.mxu0 0.0
    %779 = vmatpush1.xpose.msra.mxu0 0.0
    %780 = vmatprep.subr.mxu0 0.0
    %781 = vmatpush1.xpose.msra.mxu0 0.0
    %782 = vmatprep.subr.mxu0 0.0
    %783 = vmatpush1.xpose.msra.mxu0 0.0
    %784 = vmatprep.subr.mxu0 0.0
    %785 = vmatpush1.xpose.msra.mxu0 0.0
    %786 = vmatprep.subr.mxu0 0.0
    %787 = vmatpush1.xpose.msra.mxu0 0.0
    %788 = vmatprep.subr.mxu0 0.0
    %789 = vmatpush1.xpose.msra.mxu0 0.0
    %790 = vmatprep.subr.mxu0 0.0
    %791 = vmatpush1.xpose.msra.mxu0 0.0
    %792 = vmatprep.subr.mxu0 0.0
    %793 = vmatpush1.xpose.msra.mxu0 0.0
    %794 = vmatprep.subr.mxu0 0.0
    %795 = vmatpush1.xpose.msra.mxu0 0.0
    %796 = vmatprep.subr.mxu0 0.0
    %797 = vmatpush1.xpose.msra.mxu0 0.0
    %798 = vmatprep.subr.mxu0 0.0
    %799 = vmatpush1.xpose.msra.mxu0 0.0
    %800 = vmatprep.subr.mxu0 0.0
    %801 = vmatpush1.xpose.msra.mxu0 0.0
    %802 = vmatprep.subr.mxu0 0.0
    %803 = vmatpush1.xpose.msra.mxu0 0.0
    %804 = vmatprep.subr.mxu0 0.0
    %805 = vmatpush1.xpose.msra.mxu0 0.0
    %806 = vmatprep.subr.mxu0 0.0
    %807 = vmatpush1.xpose.msra.mxu0 0.0
    %808 = vmatprep.subr.mxu0 0.0
    %809 = vmatpush1.xpose.msra.mxu0 0.0
    %810 = vmatprep.subr.mxu0 0.0
    %811 = vmatpush1.xpose.msra.mxu0 0.0
    %812 = vmatprep.mubr.f32.mxu0 0.0
    %813 = vmatmul.mubr.f32.gmra.mrb[0].mxu0 %v744
    %v814 = vpop.f32.mrb[0].mxu0
    %v815 = vadd.f32 0.0, %v814
    %v816 = vpop.f32.mrb[0].mxu0
    %817 = vdwg.mxu0
    %v818 = vsel %vm414, %v815, -inf
    %819 = vmax.xlane.f32.xlu0 %v818
    %v820 = vpop.xlane.xlu0 %819
    %v821 = vsub.f32 %v815, %v820
    %v822 = vmul.f32 %v821, 1.442695
    %v823 = vpow.pop %v822
    %v824 = vsel %vm414, %v823, 0.0
    %825 = vadd.xlane.f32.xlu0 %v824
    %v826 = vpop.xlane.xlu0 %825
    %v827 = vrcp.pop %v826
    %v828 = vmul.f32 %v823, %v827
    %829 = vrot.lane.b32.xlu0 %v403, 112
    %v830 = vpop.permute.xlu0 %829
    %v833 = vsel %vm414, %v828, 0
    %835 = vmatprep.subr.mxu0 0.0
    %836 = vmatpush1.msra.mxu0 %v830
    %837 = vmatprep.subr.mxu0 0.0
    %838 = vmatpush1.msra.mxu0 0.0
    %839 = vmatprep.subr.mxu0 0.0
    %840 = vmatpush1.msra.mxu0 0.0
    %841 = vmatprep.subr.mxu0 0.0
    %842 = vmatpush1.msra.mxu0 0.0
    %843 = vmatprep.subr.mxu0 0.0
    %844 = vmatpush1.msra.mxu0 0.0
    %845 = vmatprep.subr.mxu0 0.0
    %846 = vmatpush1.msra.mxu0 0.0
    %847 = vmatprep.subr.mxu0 0.0
    %848 = vmatpush1.msra.mxu0 0.0
    %849 = vmatprep.subr.mxu0 0.0
    %850 = vmatpush1.msra.mxu0 0.0
    %851 = vmatprep.subr.mxu0 0.0
    %852 = vmatpush1.msra.mxu0 0.0
    %853 = vmatprep.subr.mxu0 0.0
    %854 = vmatpush1.msra.mxu0 0.0
    %855 = vmatprep.subr.mxu0 0.0
    %856 = vmatpush1.msra.mxu0 0.0
    %857 = vmatprep.subr.mxu0 0.0
    %858 = vmatpush1.msra.mxu0 0.0
    %859 = vmatprep.subr.mxu0 0.0
    %860 = vmatpush1.msra.mxu0 0.0
    %861 = vmatprep.subr.mxu0 0.0
    %862 = vmatpush1.msra.mxu0 0.0
    %863 = vmatprep.subr.mxu0 0.0
    %864 = vmatpush1.msra.mxu0 0.0
    %865 = vmatprep.subr.mxu0 0.0
    %866 = vmatpush1.msra.mxu0 0.0
    %867 = vmatprep.subr.mxu0 0.0
    %868 = vmatpush1.msra.mxu0 0.0
    %869 = vmatprep.subr.mxu0 0.0
    %870 = vmatpush1.msra.mxu0 0.0
    %871 = vmatprep.subr.mxu0 0.0
    %872 = vmatpush1.msra.mxu0 0.0
    %873 = vmatprep.subr.mxu0 0.0
    %874 = vmatpush1.msra.mxu0 0.0
    %875 = vmatprep.subr.mxu0 0.0
    %876 = vmatpush1.msra.mxu0 0.0
    %877 = vmatprep.subr.mxu0 0.0
    %878 = vmatpush1.msra.mxu0 0.0
    %879 = vmatprep.subr.mxu0 0.0
    %880 = vmatpush1.msra.mxu0 0.0
    %881 = vmatprep.subr.mxu0 0.0
    %882 = vmatpush1.msra.mxu0 0.0
    %883 = vmatprep.subr.mxu0 0.0
    %884 = vmatpush1.msra.mxu0 0.0
    %885 = vmatprep.subr.mxu0 0.0
    %886 = vmatpush1.msra.mxu0 0.0
    %887 = vmatprep.subr.mxu0 0.0
    %888 = vmatpush1.msra.mxu0 0.0
    %889 = vmatprep.subr.mxu0 0.0
    %890 = vmatpush1.msra.mxu0 0.0
    %891 = vmatprep.subr.mxu0 0.0
    %892 = vmatpush1.msra.mxu0 0.0
    %893 = vmatprep.subr.mxu0 0.0
    %894 = vmatpush1.msra.mxu0 0.0
    %895 = vmatprep.subr.mxu0 0.0
    %896 = vmatpush1.msra.mxu0 0.0
    %897 = vmatprep.subr.mxu0 0.0
    %898 = vmatpush1.msra.mxu0 0.0
    %899 = vmatprep.mubr.f32.mxu0 0.0
    %900 = vmatmul.mubr.f32.gmra.mrb[0].mxu0 %v833
    %v901 = vpop.f32.mrb[0].mxu0
    %v902 = vadd.f32 0.0, %v901
    %v903 = vpop.f32.mrb[0].mxu0
    %904 = vdwg.mxu0
    %905 = vrot.lane.b32.xlu0 %v321, 104
    %v906 = vpop.permute.xlu0 %905
    %907 = vrot.lane.b32.xlu0 %v318, 72
    %v908 = vpop.permute.xlu0 %907
    %v909 = vsel %vm414, %v906, 0
    %v911 = vsel %vm414, %v908, 0
    %913 = vmatprep.subr.mxu0 0.0
    %914 = vmatpush1.xpose.msra.mxu0 %v911
    %915 = vmatprep.subr.mxu0 0.0
    %916 = vmatpush1.xpose.msra.mxu0 0.0
    %917 = vmatprep.subr.mxu0 0.0
    %918 = vmatpush1.xpose.msra.mxu0 0.0
    %919 = vmatprep.subr.mxu0 0.0
    %920 = vmatpush1.xpose.msra.mxu0 0.0
    %921 = vmatprep.subr.mxu0 0.0
    %922 = vmatpush1.xpose.msra.mxu0 0.0
    %923 = vmatprep.subr.mxu0 0.0
    %924 = vmatpush1.xpose.msra.mxu0 0.0
    %925 = vmatprep.subr.mxu0 0.0
    %926 = vmatpush1.xpose.msra.mxu0 0.0
    %927 = vmatprep.subr.mxu0 0.0
    %928 = vmatpush1.xpose.msra.mxu0 0.0
    %929 = vmatprep.subr.mxu0 0.0
    %930 = vmatpush1.xpose.msra.mxu0 0.0
    %931 = vmatprep.subr.mxu0 0.0
    %932 = vmatpush1.xpose.msra.mxu0 0.0
    %933 = vmatprep.subr.mxu0 0.0
    %934 = vmatpush1.xpose.msra.mxu0 0.0
    %935 = vmatprep.subr.mxu0 0.0
    %936 = vmatpush1.xpose.msra.mxu0 0.0
    %937 = vmatprep.subr.mxu0 0.0
    %938 = vmatpush1.xpose.msra.mxu0 0.0
    %939 = vmatprep.subr.mxu0 0.0
    %940 = vmatpush1.xpose.msra.mxu0 0.0
    %941 = vmatprep.subr.mxu0 0.0
    %942 = vmatpush1.xpose.msra.mxu0 0.0
    %943 = vmatprep.subr.mxu0 0.0
    %944 = vmatpush1.xpose.msra.mxu0 0.0
    %945 = vmatprep.subr.mxu0 0.0
    %946 = vmatpush1.xpose.msra.mxu0 0.0
    %947 = vmatprep.subr.mxu0 0.0
    %948 = vmatpush1.xpose.msra.mxu0 0.0
    %949 = vmatprep.subr.mxu0 0.0
    %950 = vmatpush1.xpose.msra.mxu0 0.0
    %951 = vmatprep.subr.mxu0 0.0
    %952 = vmatpush1.xpose.msra.mxu0 0.0
    %953 = vmatprep.subr.mxu0 0.0
    %954 = vmatpush1.xpose.msra.mxu0 0.0
    %955 = vmatprep.subr.mxu0 0.0
    %956 = vmatpush1.xpose.msra.mxu0 0.0
    %957 = vmatprep.subr.mxu0 0.0
    %958 = vmatpush1.xpose.msra.mxu0 0.0
    %959 = vmatprep.subr.mxu0 0.0
    %960 = vmatpush1.xpose.msra.mxu0 0.0
    %961 = vmatprep.subr.mxu0 0.0
    %962 = vmatpush1.xpose.msra.mxu0 0.0
    %963 = vmatprep.subr.mxu0 0.0
    %964 = vmatpush1.xpose.msra.mxu0 0.0
    %965 = vmatprep.subr.mxu0 0.0
    %966 = vmatpush1.xpose.msra.mxu0 0.0
    %967 = vmatprep.subr.mxu0 0.0
    %968 = vmatpush1.xpose.msra.mxu0 0.0
    %969 = vmatprep.subr.mxu0 0.0
    %970 = vmatpush1.xpose.msra.mxu0 0.0
    %971 = vmatprep.subr.mxu0 0.0
    %972 = vmatpush1.xpose.msra.mxu0 0.0
    %973 = vmatprep.subr.mxu0 0.0
    %974 = vmatpush1.xpose.msra.mxu0 0.0
    %975 = vmatprep.subr.mxu0 0.0
    %976 = vmatpush1.xpose.msra.mxu0 0.0
    %977 = vmatprep.mubr.f32.mxu0 0.0
    %978 = vmatmul.mubr.f32.gmra.mrb[0].mxu0 %v909
    %v979 = vpop.f32.mrb[0].mxu0
    %v980 = vadd.f32 0.0, %v979
    %v981 = vpop.f32.mrb[0].mxu0
    %982 = vdwg.mxu0
    %v983 = vsel %vm414, %v980, -inf
    %984 = vmax.xlane.f32.xlu0 %v983
    %v985 = vpop.xlane.xlu0 %984
    %v986 = vsub.f32 %v980, %v985
    %v987 = vmul.f32 %v986, 1.442695
    %v988 = vpow.pop %v987
    %v989 = vsel %vm414, %v988, 0.0
    %990 = vadd.xlane.f32.xlu0 %v989
    %v991 = vpop.xlane.xlu0 %990
    %v992 = vrcp.pop %v991
    %v993 = vmul.f32 %v988, %v992
    %994 = vrot.lane.b32.xlu0 %v403, 104
    %v995 = vpop.permute.xlu0 %994
    %v998 = vsel %vm414, %v993, 0
    %1000 = vmatprep.subr.mxu0 0.0
    %1001 = vmatpush1.msra.mxu0 %v995
    %1002 = vmatprep.subr.mxu0 0.0
    %1003 = vmatpush1.msra.mxu0 0.0
    %1004 = vmatprep.subr.mxu0 0.0
    %1005 = vmatpush1.msra.mxu0 0.0
    %1006 = vmatprep.subr.mxu0 0.0
    %1007 = vmatpush1.msra.mxu0 0.0
    %1008 = vmatprep.subr.mxu0 0.0
    %1009 = vmatpush1.msra.mxu0 0.0
    %1010 = vmatprep.subr.mxu0 0.0
    %1011 = vmatpush1.msra.mxu0 0.0
    %1012 = vmatprep.subr.mxu0 0.0
    %1013 = vmatpush1.msra.mxu0 0.0
    %1014 = vmatprep.subr.mxu0 0.0
    %1015 = vmatpush1.msra.mxu0 0.0
    %1016 = vmatprep.subr.mxu0 0.0
    %1017 = vmatpush1.msra.mxu0 0.0
    %1018 = vmatprep.subr.mxu0 0.0
    %1019 = vmatpush1.msra.mxu0 0.0
    %1020 = vmatprep.subr.mxu0 0.0
    %1021 = vmatpush1.msra.mxu0 0.0
    %1022 = vmatprep.subr.mxu0 0.0
    %1023 = vmatpush1.msra.mxu0 0.0
    %1024 = vmatprep.subr.mxu0 0.0
    %1025 = vmatpush1.msra.mxu0 0.0
    %1026 = vmatprep.subr.mxu0 0.0
    %1027 = vmatpush1.msra.mxu0 0.0
    %1028 = vmatprep.subr.mxu0 0.0
    %1029 = vmatpush1.msra.mxu0 0.0
    %1030 = vmatprep.subr.mxu0 0.0
    %1031 = vmatpush1.msra.mxu0 0.0
    %1032 = vmatprep.subr.mxu0 0.0
    %1033 = vmatpush1.msra.mxu0 0.0
    %1034 = vmatprep.subr.mxu0 0.0
    %1035 = vmatpush1.msra.mxu0 0.0
    %1036 = vmatprep.subr.mxu0 0.0
    %1037 = vmatpush1.msra.mxu0 0.0
    %1038 = vmatprep.subr.mxu0 0.0
    %1039 = vmatpush1.msra.mxu0 0.0
    %1040 = vmatprep.subr.mxu0 0.0
    %1041 = vmatpush1.msra.mxu0 0.0
    %1042 = vmatprep.subr.mxu0 0.0
    %1043 = vmatpush1.msra.mxu0 0.0
    %1044 = vmatprep.subr.mxu0 0.0
    %1045 = vmatpush1.msra.mxu0 0.0
    %1046 = vmatprep.subr.mxu0 0.0
    %1047 = vmatpush1.msra.mxu0 0.0
    %1048 = vmatprep.subr.mxu0 0.0
    %1049 = vmatpush1.msra.mxu0 0.0
    %1050 = vmatprep.subr.mxu0 0.0
    %1051 = vmatpush1.msra.mxu0 0.0
    %1052 = vmatprep.subr.mxu0 0.0
    %1053 = vmatpush1.msra.mxu0 0.0
    %1054 = vmatprep.subr.mxu0 0.0
    %1055 = vmatpush1.msra.mxu0 0.0
    %1056 = vmatprep.subr.mxu0 0.0
    %1057 = vmatpush1.msra.mxu0 0.0
    %1058 = vmatprep.subr.mxu0 0.0
    %1059 = vmatpush1.msra.mxu0 0.0
    %1060 = vmatprep.subr.mxu0 0.0
    %1061 = vmatpush1.msra.mxu0 0.0
    %1062 = vmatprep.subr.mxu0 0.0
    %1063 = vmatpush1.msra.mxu0 0.0
    %1064 = vmatprep.mubr.f32.mxu0 0.0
    %1065 = vmatmul.mubr.f32.gmra.mrb[0].mxu0 %v998
    %v1066 = vpop.f32.mrb[0].mxu0
    %v1067 = vadd.f32 0.0, %v1066
    %v1068 = vpop.f32.mrb[0].mxu0
    %1069 = vdwg.mxu0
    %1071 = vrot.lane.b32.xlu0 %v737, 8
    %v1072 = vpop.permute.xlu0 %1071
    %1075 = vrot.lane.b32.xlu0 %v902, 16
    %v1076 = vpop.permute.xlu0 %1075
    %1079 = vrot.lane.b32.xlu0 %v1067, 24
    %v1080 = vpop.permute.xlu0 %1079
    %v1082 = vsel %vm414, %v571, %v1072
    %vm1083 = vcmask 130048
    %v1084 = vsel %vm1083, %v1082, %v1076
    %vm1085 = vcmask 195584
    %v1086 = vsel %vm1085, %v1084, %v1080
    %v1088 = vlaneseq
    %v1089 = vshrl.u32 %v1088, 7
    %v1090 = vsub.s32 0, %v1089
    %v1091 = vrot.slane %v410, %v1090
    %v1094 = vsel %vm247, %v1086, 0
    %1096 = vmatprep.subr.mxu0 0.0
    %1097 = vmatpush1.msra.mxu0 %v406
    %1098 = vmatprep.subr.mxu0 0.0
    %1099 = vmatpush1.msra.mxu0 %v407
    %1100 = vmatprep.subr.mxu0 0.0
    %1101 = vmatpush1.msra.mxu0 %v408
    %1102 = vmatprep.subr.mxu0 0.0
    %1103 = vmatpush1.msra.mxu0 %v409
    %1104 = vmatprep.subr.mxu0 0.0
    %1105 = vmatpush1.msra.mxu0 0.0
    %1106 = vmatprep.subr.mxu0 0.0
    %1107 = vmatpush1.msra.mxu0 0.0
    %1108 = vmatprep.subr.mxu0 0.0
    %1109 = vmatpush1.msra.mxu0 0.0
    %1110 = vmatprep.subr.mxu0 0.0
    %1111 = vmatpush1.msra.mxu0 0.0
    %1112 = vmatprep.subr.mxu0 0.0
    %1113 = vmatpush1.msra.mxu0 0.0
    %1114 = vmatprep.subr.mxu0 0.0
    %1115 = vmatpush1.msra.mxu0 0.0
    %1116 = vmatprep.subr.mxu0 0.0
    %1117 = vmatpush1.msra.mxu0 0.0
    %1118 = vmatprep.subr.mxu0 0.0
    %1119 = vmatpush1.msra.mxu0 0.0
    %1120 = vmatprep.subr.mxu0 0.0
    %1121 = vmatpush1.msra.mxu0 0.0
    %1122 = vmatprep.subr.mxu0 0.0
    %1123 = vmatpush1.msra.mxu0 0.0
    %1124 = vmatprep.subr.mxu0 0.0
    %1125 = vmatpush1.msra.mxu0 0.0
    %1126 = vmatprep.subr.mxu0 0.0
    %1127 = vmatpush1.msra.mxu0 0.0
    %1128 = vmatprep.subr.mxu0 0.0
    %1129 = vmatpush1.msra.mxu0 0.0
    %1130 = vmatprep.subr.mxu0 0.0
    %1131 = vmatpush1.msra.mxu0 0.0
    %1132 = vmatprep.subr.mxu0 0.0
    %1133 = vmatpush1.msra.mxu0 0.0
    %1134 = vmatprep.subr.mxu0 0.0
    %1135 = vmatpush1.msra.mxu0 0.0
    %1136 = vmatprep.subr.mxu0 0.0
    %1137 = vmatpush1.msra.mxu0 0.0
    %1138 = vmatprep.subr.mxu0 0.0
    %1139 = vmatpush1.msra.mxu0 0.0
    %1140 = vmatprep.subr.mxu0 0.0
    %1141 = vmatpush1.msra.mxu0 0.0
    %1142 = vmatprep.subr.mxu0 0.0
    %1143 = vmatpush1.msra.mxu0 0.0
    %1144 = vmatprep.subr.mxu0 0.0
    %1145 = vmatpush1.msra.mxu0 0.0
    %1146 = vmatprep.subr.mxu0 0.0
    %1147 = vmatpush1.msra.mxu0 0.0
    %1148 = vmatprep.subr.mxu0 0.0
    %1149 = vmatpush1.msra.mxu0 0.0
    %1150 = vmatprep.subr.mxu0 0.0
    %1151 = vmatpush1.msra.mxu0 0.0
    %1152 = vmatprep.subr.mxu0 0.0
    %1153 = vmatpush1.msra.mxu0 0.0
    %1154 = vmatprep.subr.mxu0 0.0
    %1155 = vmatpush1.msra.mxu0 0.0
    %1156 = vmatprep.subr.mxu0 0.0
    %1157 = vmatpush1.msra.mxu0 0.0
    %1158 = vmatprep.subr.mxu0 0.0
    %1159 = vmatpush1.msra.mxu0 0.0
    %1160 = vmatprep.mubr.f32.mxu0 0.0
    %1161 = vmatmul.mubr.f32.gmra.mrb[0].mxu0 %v1094
    %v1162 = vpop.f32.mrb[0].mxu0
    %v1163 = vadd.f32 %v1091, %v1162
    %v1164 = vpop.f32.mrb[0].mxu0
    %1165 = vdwg.mxu0
    %v1166 = vadd.f32 %v221, %v1163
    %v1167 = vsel %vm247, %v1166, 0.0
    %1168 = vadd.xlane.f32.xlu0 %v1167
    %v1169 = vpop.xlane.xlu0 %1168
    %v1170 = vrcp.pop 32.0
    %v1171 = vmul.f32 %v1169, %v1170
    %v1172 = vsub.f32 %v1166, %v1171
    %v1173 = vmul.f32 %v1172, %v1172
    %v1174 = vsel %vm247, %v1173, 0.0
    %1175 = vadd.xlane.f32.xlu0 %v1174
    %v1176 = vpop.xlane.xlu0 %1175
    %v1177 = vmul.f32 %v1176, %v1170
    %v1178 = vadd.f32 %v1177, 1e-05
    %v1179 = vrsqrt.pop %v1178
    %v1180 = vmul.f32 %v1172, %v1179
    %v1182 = vlaneseq
    %v1183 = vshrl.u32 %v1182, 7
    %v1184 = vsub.s32 0, %v1183
    %v1185 = vrot.slane %v229, %v1184
    %v1187 = vmul.f32 %v1180, %v1185
    %v1189 = vlaneseq
    %v1190 = vshrl.u32 %v1189, 7
    %v1191 = vsub.s32 0, %v1190
    %v1192 = vrot.slane %v232, %v1191
    %v1194 = vadd.f32 %v1187, %v1192
    %v1195 = vadd.f32 %v1194, %v222
    %v1196 = vld [vmem:[%s10] sm:$0xff]
    %v1197 = vld [vmem:[%s10 + $0x8] sm:$0xff]
    %v1198 = vld [vmem:[%s10 + $0x10] sm:$0xff]
    %v1199 = vld [vmem:[%s10 + $0x18] sm:$0xff]
    %v1200 = vld [vmem:[#allocation2] sm:$0x1]
    %v1202 = vlaneseq
    %v1203 = vshrl.u32 %v1202, 7
    %v1204 = vsub.s32 0, %v1203
    %v1205 = vrot.slane %v1200, %v1204
    %v1208 = vsel %vm247, %v1195, 0
    %1210 = vmatprep.subr.mxu0 0.0
    %1211 = vmatpush1.msra.mxu0 %v1196
    %1212 = vmatprep.subr.mxu0 0.0
    %1213 = vmatpush1.msra.mxu0 %v1197
    %1214 = vmatprep.subr.mxu0 0.0
    %1215 = vmatpush1.msra.mxu0 %v1198
    %1216 = vmatprep.subr.mxu0 0.0
    %1217 = vmatpush1.msra.mxu0 %v1199
    %1218 = vmatprep.subr.mxu0 0.0
    %1219 = vmatpush1.msra.mxu0 0.0
    %1220 = vmatprep.subr.mxu0 0.0
    %1221 = vmatpush1.msra.mxu0 0.0
    %1222 = vmatprep.subr.mxu0 0.0
    %1223 = vmatpush1.msra.mxu0 0.0
    %1224 = vmatprep.subr.mxu0 0.0
    %1225 = vmatpush1.msra.mxu0 0.0
    %1226 = vmatprep.subr.mxu0 0.0
    %1227 = vmatpush1.msra.mxu0 0.0
    %1228 = vmatprep.subr.mxu0 0.0
    %1229 = vmatpush1.msra.mxu0 0.0
    %1230 = vmatprep.subr.mxu0 0.0
    %1231 = vmatpush1.msra.mxu0 0.0
    %1232 = vmatprep.subr.mxu0 0.0
    %1233 = vmatpush1.msra.mxu0 0.0
    %1234 = vmatprep.subr.mxu0 0.0
    %1235 = vmatpush1.msra.mxu0 0.0
    %1236 = vmatprep.subr.mxu0 0.0
    %1237 = vmatpush1.msra.mxu0 0.0
    %1238 = vmatprep.subr.mxu0 0.0
    %1239 = vmatpush1.msra.mxu0 0.0
    %1240 = vmatprep.subr.mxu0 0.0
    %1241 = vmatpush1.msra.mxu0 0.0
    %1242 = vmatprep.subr.mxu0 0.0
    %1243 = vmatpush1.msra.mxu0 0.0
    %1244 = vmatprep.subr.mxu0 0.0
    %1245 = vmatpush1.msra.mxu0 0.0
    %1246 = vmatprep.subr.mxu0 0.0
    %1247 = vmatpush1.msra.mxu0 0.0
    %1248 = vmatprep.subr.mxu0 0.0
    %1249 = vmatpush1.msra.mxu0 0.0
    %1250 = vmatprep.subr.mxu0 0.0
    %1251 = vmatpush1.msra.mxu0 0.0
    %1252 = vmatprep.subr.mxu0 0.0
    %1253 = vmatpush1.msra.mxu0 0.0
    %1254 = vmatprep.subr.mxu0 0.0
    %1255 = vmatpush1.msra.mxu0 0.0
    %1256 = vmatprep.subr.mxu0 0.0
    %1257 = vmatpush1.msra.mxu0 0.0
    %1258 = vmatprep.subr.mxu0 0.0
    %1259 = vmatpush1.msra.mxu0 0.0
    %1260 = vmatprep.subr.mxu0 0.0
    %1261 = vmatpush1.msra.mxu0 0.0
    %1262 = vmatprep.subr.mxu0 0.0
    %1263 = vmatpush1.msra.mxu0 0.0
    %1264 = vmatprep.subr.mxu0 0.0
    %1265 = vmatpush1.msra.mxu0 0.0
    %1266 = vmatprep.subr.mxu0 0.0
    %1267 = vmatpush1.msra.mxu0 0.0
    %1268 = vmatprep.subr.mxu0 0.0
    %1269 = vmatpush1.msra.mxu0 0.0
    %1270 = vmatprep.subr.mxu0 0.0
    %1271 = vmatpush1.msra.mxu0 0.0
    %1272 = vmatprep.subr.mxu0 0.0
    %1273 = vmatpush1.msra.mxu0 0.0
    %1274 = vmatprep.mubr.f32.mxu0 0.0
    %1275 = vmatmul.mubr.f32.gmra.mrb[0].mxu0 %v1208
    %v1276 = vpop.f32.mrb[0].mxu0
    %v1277 = vadd.f32 %v1205, %v1276
    %v1278 = vpop.f32.mrb[0].mxu0
    %1279 = vdwg.mxu0
    %v1280 = vmul.f32 %v1277, 0.35355338
    %v1281 = vld [vmem:[%s12] sm:$0xff]
    %v1282 = vld [vmem:[%s12 + $0x8] sm:$0xff]
    %v1283 = vld [vmem:[%s12 + $0x10] sm:$0xff]
    %v1284 = vld [vmem:[%s12 + $0x18] sm:$0xff]
    %v1285 = vld [vmem:[#allocation4] sm:$0x1]
    %v1287 = vlaneseq
    %v1288 = vshrl.u32 %v1287, 7
    %v1289 = vsub.s32 0, %v1288
    %v1290 = vrot.slane %v1285, %v1289
    %v1293 = vsel %vm247, %v227, 0
    %v1296 = vsel %vm247, %v228, 0
    %1298 = vmatprep.subr.mxu0 0.0
    %1299 = vmatpush1.msra.mxu0 %v1281
    %1300 = vmatprep.subr.mxu0 0.0
    %1301 = vmatpush1.msra.mxu0 %v1282
    %1302 = vmatprep.subr.mxu0 0.0
    %1303 = vmatpush1.msra.mxu0 %v1283
    %1304 = vmatprep.subr.mxu0 0.0
    %1305 = vmatpush1.msra.mxu0 %v1284
    %1306 = vmatprep.subr.mxu0 0.0
    %1307 = vmatpush1.msra.mxu0 0.0
    %1308 = vmatprep.subr.mxu0 0.0
    %1309 = vmatpush1.msra.mxu0 0.0
    %1310 = vmatprep.subr.mxu0 0.0
    %1311 = vmatpush1.msra.mxu0 0.0
    %1312 = vmatprep.subr.mxu0 0.0
    %1313 = vmatpush1.msra.mxu0 0.0
    %1314 = vmatprep.subr.mxu0 0.0
    %1315 = vmatpush1.msra.mxu0 0.0
    %1316 = vmatprep.subr.mxu0 0.0
    %1317 = vmatpush1.msra.mxu0 0.0
    %1318 = vmatprep.subr.mxu0 0.0
    %1319 = vmatpush1.msra.mxu0 0.0
    %1320 = vmatprep.subr.mxu0 0.0
    %1321 = vmatpush1.msra.mxu0 0.0
    %1322 = vmatprep.subr.mxu0 0.0
    %1323 = vmatpush1.msra.mxu0 0.0
    %1324 = vmatprep.subr.mxu0 0.0
    %1325 = vmatpush1.msra.mxu0 0.0
    %1326 = vmatprep.subr.mxu0 0.0
    %1327 = vmatpush1.msra.mxu0 0.0
    %1328 = vmatprep.subr.mxu0 0.0
    %1329 = vmatpush1.msra.mxu0 0.0
    %1330 = vmatprep.subr.mxu0 0.0
    %1331 = vmatpush1.msra.mxu0 0.0
    %1332 = vmatprep.subr.mxu0 0.0
    %1333 = vmatpush1.msra.mxu0 0.0
    %1334 = vmatprep.subr.mxu0 0.0
    %1335 = vmatpush1.msra.mxu0 0.0
    %1336 = vmatprep.subr.mxu0 0.0
    %1337 = vmatpush1.msra.mxu0 0.0
    %1338 = vmatprep.subr.mxu0 0.0
    %1339 = vmatpush1.msra.mxu0 0.0
    %1340 = vmatprep.subr.mxu0 0.0
    %1341 = vmatpush1.msra.mxu0 0.0
    %1342 = vmatprep.subr.mxu0 0.0
    %1343 = vmatpush1.msra.mxu0 0.0
    %1344 = vmatprep.subr.mxu0 0.0
    %1345 = vmatpush1.msra.mxu0 0.0
    %1346 = vmatprep.subr.mxu0 0.0
    %1347 = vmatpush1.msra.mxu0 0.0
    %1348 = vmatprep.subr.mxu0 0.0
    %1349 = vmatpush1.msra.mxu0 0.0
    %1350 = vmatprep.subr.mxu0 0.0
    %1351 = vmatpush1.msra.mxu0 0.0
    %1352 = vmatprep.subr.mxu0 0.0
    %1353 = vmatpush1.msra.mxu0 0.0
    %1354 = vmatprep.subr.mxu0 0.0
    %1355 = vmatpush1.msra.mxu0 0.0
    %1356 = vmatprep.subr.mxu0 0.0
    %1357 = vmatpush1.msra.mxu0 0.0
    %1358 = vmatprep.subr.mxu0 0.0
    %1359 = vmatpush1.msra.mxu0 0.0
    %1360 = vmatprep.subr.mxu0 0.0
    %1361 = vmatpush1.msra.mxu0 0.0
    %1362 = vmatprep.mubr.f32.mxu0 0.0
    %1363 = vmatmul.mubr.f32.gmra.mrb[0].mxu0 %v1293
    %v1364 = vpop.f32.mrb[0].mxu0
    %v1365 = vadd.f32 %v1290, %v1364
    %v1366 = vpop.f32.mrb[0].mxu0
    %1367 = vmatprep.mubr.f32.mxu0 0.0
    %1368 = vmatmul.mubr.f32.gmra.mrb[0].mxu0 %v1296
    %v1369 = vpop.f32.mrb[0].mxu0
    %v1370 = vadd.f32 %v1290, %v1369
    %v1371 = vpop.f32.mrb[0].mxu0
    %1372 = vdwg.mxu0
    %v1373 = vld [vmem:[#allocation6] sm:$0xff]
    %v1374 = vld [vmem:[#allocation6 + $0x8] sm:$0xff]
    %v1375 = vld [vmem:[#allocation6 + $0x10] sm:$0xff]
    %v1376 = vld [vmem:[#allocation6 + $0x18] sm:$0xff]
    %v1377 = vld [vmem:[#allocation7] sm:$0x1]
    %v1379 = vlaneseq
    %v1380 = vshrl.u32 %v1379, 7
    %v1381 = vsub.s32 0, %v1380
    %v1382 = vrot.slane %v1377, %v1381
    %v1385 = vsel %vm247, %v223, 0
    %v1388 = vsel %vm247, %v224, 0
    %1390 = vmatprep.subr.mxu0 0.0
    %1391 = vmatpush1.msra.mxu0 %v1373
    %1392 = vmatprep.subr.mxu0 0.0
    %1393 = vmatpush1.msra.mxu0 %v1374
    %1394 = vmatprep.subr.mxu0 0.0
    %1395 = vmatpush1.msra.mxu0 %v1375
    %1396 = vmatprep.subr.mxu0 0.0
    %1397 = vmatpush1.msra.mxu0 %v1376
    %1398 = vmatprep.subr.mxu0 0.0
    %1399 = vmatpush1.msra.mxu0 0.0
    %1400 = vmatprep.subr.mxu0 0.0
    %1401 = vmatpush1.msra.mxu0 0.0
    %1402 = vmatprep.subr.mxu0 0.0
    %1403 = vmatpush1.msra.mxu0 0.0
    %1404 = vmatprep.subr.mxu0 0.0
    %1405 = vmatpush1.msra.mxu0 0.0
    %1406 = vmatprep.subr.mxu0 0.0
    %1407 = vmatpush1.msra.mxu0 0.0
    %1408 = vmatprep.subr.mxu0 0.0
    %1409 = vmatpush1.msra.mxu0 0.0
    %1410 = vmatprep.subr.mxu0 0.0
    %1411 = vmatpush1.msra.mxu0 0.0
    %1412 = vmatprep.subr.mxu0 0.0
    %1413 = vmatpush1.msra.mxu0 0.0
    %1414 = vmatprep.subr.mxu0 0.0
    %1415 = vmatpush1.msra.mxu0 0.0
    %1416 = vmatprep.subr.mxu0 0.0
    %1417 = vmatpush1.msra.mxu0 0.0
    %1418 = vmatprep.subr.mxu0 0.0
    %1419 = vmatpush1.msra.mxu0 0.0
    %1420 = vmatprep.subr.mxu0 0.0
    %1421 = vmatpush1.msra.mxu0 0.0
    %1422 = vmatprep.subr.mxu0 0.0
    %1423 = vmatpush1.msra.mxu0 0.0
    %1424 = vmatprep.subr.mxu0 0.0
    %1425 = vmatpush1.msra.mxu0 0.0
    %1426 = vmatprep.subr.mxu0 0.0
    %1427 = vmatpush1.msra.mxu0 0.0
    %1428 = vmatprep.subr.mxu0 0.0
    %1429 = vmatpush1.msra.mxu0 0.0
    %1430 = vmatprep.subr.mxu0 0.0
    %1431 = vmatpush1.msra.mxu0 0.0
    %1432 = vmatprep.subr.mxu0 0.0
    %1433 = vmatpush1.msra.mxu0 0.0
    %1434 = vmatprep.subr.mxu0 0.0
    %1435 = vmatpush1.msra.mxu0 0.0
    %1436 = vmatprep.subr.mxu0 0.0
    %1437 = vmatpush1.msra.mxu0 0.0
    %1438 = vmatprep.subr.mxu0 0.0
    %1439 = vmatpush1.msra.mxu0 0.0
    %1440 = vmatprep.subr.mxu0 0.0
    %1441 = vmatpush1.msra.mxu0 0.0
    %1442 = vmatprep.subr.mxu0 0.0
    %1443 = vmatpush1.msra.mxu0 0.0
    %1444 = vmatprep.subr.mxu0 0.0
    %1445 = vmatpush1.msra.mxu0 0.0
    %1446 = vmatprep.subr.mxu0 0.0
    %1447 = vmatpush1.msra.mxu0 0.0
    %1448 = vmatprep.subr.mxu0 0.0
    %1449 = vmatpush1.msra.mxu0 0.0
    %1450 = vmatprep.subr.mxu0 0.0
    %1451 = vmatpush1.msra.mxu0 0.0
    %1452 = vmatprep.subr.mxu0 0.0
    %1453 = vmatpush1.msra.mxu0 0.0
    %1454 = vmatprep.mubr.f32.mxu0 0.0
    %1455 = vmatmul.mubr.f32.gmra.mrb[0].mxu0 %v1385
    %v1456 = vpop.f32.mrb[0].mxu0
    %v1457 = vadd.f32 %v1382, %v1456
    %v1458 = vpop.f32.mrb[0].mxu0
    %1459 = vmatprep.mubr.f32.mxu0 0.0
    %1460 = vmatmul.mubr.f32.gmra.mrb[0].mxu0 %v1388
    %v1461 = vpop.f32.mrb[0].mxu0
    %v1462 = vadd.f32 %v1382, %v1461
    %v1463 = vpop.f32.mrb[0].mxu0
    %1464 = vdwg.mxu0
    %v1465 = vld [vmem:[#allocation9] sm:$0xff]
    %v1466 = vld [vmem:[#allocation9 + $0x8] sm:$0xff]
    %v1467 = vld [vmem:[#allocation9 + $0x10] sm:$0xff]
    %v1468 = vld [vmem:[#allocation9 + $0x18] sm:$0xff]
    %v1469 = vld [vmem:[#allocation10] sm:$0x1]
    %v1471 = vsel %vm414, %v1280, 0
    %v1474 = vsel %vm414, %v1365, 0
    %v1477 = vsel %vm414, %v1370, 0
    %1479 = vmatprep.subr.mxu0 0.0
    %1480 = vmatpush1.xpose.msra.mxu0 %v1474
    %1481 = vmatprep.subr.mxu0 0.0
    %1482 = vmatpush1.xpose.msra.mxu0 %v1477
    %1483 = vmatprep.subr.mxu0 0.0
    %1484 = vmatpush1.xpose.msra.mxu0 0.0
    %1485 = vmatprep.subr.mxu0 0.0
    %1486 = vmatpush1.xpose.msra.mxu0 0.0
    %1487 = vmatprep.subr.mxu0 0.0
    %1488 = vmatpush1.xpose.msra.mxu0 0.0
    %1489 = vmatprep.subr.mxu0 0.0
    %1490 = vmatpush1.xpose.msra.mxu0 0.0
    %1491 = vmatprep.subr.mxu0 0.0
    %1492 = vmatpush1.xpose.msra.mxu0 0.0
    %1493 = vmatprep.subr.mxu0 0.0
    %1494 = vmatpush1.xpose.msra.mxu0 0.0
    %1495 = vmatprep.subr.mxu0 0.0
    %1496 = vmatpush1.xpose.msra.mxu0 0.0
    %1497 = vmatprep.subr.mxu0 0.0
    %1498 = vmatpush1.xpose.msra.mxu0 0.0
    %1499 = vmatprep.subr.mxu0 0.0
    %1500 = vmatpush1.xpose.msra.mxu0 0.0
    %1501 = vmatprep.subr.mxu0 0.0
    %1502 = vmatpush1.xpose.msra.mxu0 0.0
    %1503 = vmatprep.subr.mxu0 0.0
    %1504 = vmatpush1.xpose.msra.mxu0 0.0
    %1505 = vmatprep.subr.mxu0 0.0
    %1506 = vmatpush1.xpose.msra.mxu0 0.0
    %1507 = vmatprep.subr.mxu0 0.0
    %1508 = vmatpush1.xpose.msra.mxu0 0.0
    %1509 = vmatprep.subr.mxu0 0.0
    %1510 = vmatpush1.xpose.msra.mxu0 0.0
    %1511 = vmatprep.subr.mxu0 0.0
    %1512 = vmatpush1.xpose.msra.mxu0 0.0
    %1513 = vmatprep.subr.mxu0 0.0
    %1514 = vmatpush1.xpose.msra.mxu0 0.0
    %1515 = vmatprep.subr.mxu0 0.0
    %1516 = vmatpush1.xpose.msra.mxu0 0.0
    %1517 = vmatprep.subr.mxu0 0.0
    %1518 = vmatpush1.xpose.msra.mxu0 0.0
    %1519 = vmatprep.subr.mxu0 0.0
    %1520 = vmatpush1.xpose.msra.mxu0 0.0
    %1521 = vmatprep.subr.mxu0 0.0
    %1522 = vmatpush1.xpose.msra.mxu0 0.0
    %1523 = vmatprep.subr.mxu0 0.0
    %1524 = vmatpush1.xpose.msra.mxu0 0.0
    %1525 = vmatprep.subr.mxu0 0.0
    %1526 = vmatpush1.xpose.msra.mxu0 0.0
    %1527 = vmatprep.subr.mxu0 0.0
    %1528 = vmatpush1.xpose.msra.mxu0 0.0
    %1529 = vmatprep.subr.mxu0 0.0
    %1530 = vmatpush1.xpose.msra.mxu0 0.0
    %1531 = vmatprep.subr.mxu0 0.0
    %1532 = vmatpush1.xpose.msra.mxu0 0.0
    %1533 = vmatprep.subr.mxu0 0.0
    %1534 = vmatpush1.xpose.msra.mxu0 0.0
    %1535 = vmatprep.subr.mxu0 0.0
    %1536 = vmatpush1.xpose.msra.mxu0 0.0
    %1537 = vmatprep.subr.mxu0 0.0
    %1538 = vmatpush1.xpose.msra.mxu0 0.0
    %1539 = vmatprep.subr.mxu0 0.0
    %1540 = vmatpush1.xpose.msra.mxu0 0.0
    %1541 = vmatprep.subr.mxu0 0.0
    %1542 = vmatpush1.xpose.msra.mxu0 0.0
    %1543 = vmatprep.mubr.f32.mxu0 0.0
    %1544 = vmatmul.mubr.f32.gmra.mrb[0].mxu0 %v1471
    %v1545 = vpop.f32.mrb[0].mxu0
    %v1546 = vadd.f32 0.0, %v1545
    %v1547 = vpop.f32.mrb[0].mxu0
    %1548 = vdwg.mxu0
    %v1549 = vsel %vm1083, %v1546, -inf
    %1550 = vmax.xlane.f32.xlu0 %v1549
    %v1551 = vpop.xlane.xlu0 %1550
    %v1552 = vsub.f32 %v1546, %v1551
    %v1553 = vmul.f32 %v1552, 1.442695
    %v1554 = vpow.pop %v1553
    %v1555 = vsel %vm1083, %v1554, 0.0
    %1556 = vadd.xlane.f32.xlu0 %v1555
    %v1557 = vpop.xlane.xlu0 %1556
    %v1558 = vrcp.pop %v1557
    %v1559 = vmul.f32 %v1554, %v1558
    %v1561 = vsel %vm1083, %v1559, 0
    %1563 = vmatprep.subr.mxu0 0.0
    %1564 = vmatpush1.msra.mxu0 %v1457
    %1565 = vmatprep.subr.mxu0 0.0
    %1566 = vmatpush1.msra.mxu0 %v1462
    %1567 = vmatprep.subr.mxu0 0.0
    %1568 = vmatpush1.msra.mxu0 0.0
    %1569 = vmatprep.subr.mxu0 0.0
    %1570 = vmatpush1.msra.mxu0 0.0
    %1571 = vmatprep.subr.mxu0 0.0
    %1572 = vmatpush1.msra.mxu0 0.0
    %1573 = vmatprep.subr.mxu0 0.0
    %1574 = vmatpush1.msra.mxu0 0.0
    %1575 = vmatprep.subr.mxu0 0.0
    %1576 = vmatpush1.msra.mxu0 0.0
    %1577 = vmatprep.subr.mxu0 0.0
    %1578 = vmatpush1.msra.mxu0 0.0
    %1579 = vmatprep.subr.mxu0 0.0
    %1580 = vmatpush1.msra.mxu0 0.0
    %1581 = vmatprep.subr.mxu0 0.0
    %1582 = vmatpush1.msra.mxu0 0.0
    %1583 = vmatprep.subr.mxu0 0.0
    %1584 = vmatpush1.msra.mxu0 0.0
    %1585 = vmatprep.subr.mxu0 0.0
    %1586 = vmatpush1.msra.mxu0 0.0
    %1587 = vmatprep.subr.mxu0 0.0
    %1588 = vmatpush1.msra.mxu0 0.0
    %1589 = vmatprep.subr.mxu0 0.0
    %1590 = vmatpush1.msra.mxu0 0.0
    %1591 = vmatprep.subr.mxu0 0.0
    %1592 = vmatpush1.msra.mxu0 0.0
    %1593 = vmatprep.subr.mxu0 0.0
    %1594 = vmatpush1.msra.mxu0 0.0
    %1595 = vmatprep.subr.mxu0 0.0
    %1596 = vmatpush1.msra.mxu0 0.0
    %1597 = vmatprep.subr.mxu0 0.0
    %1598 = vmatpush1.msra.mxu0 0.0
    %1599 = vmatprep.subr.mxu0 0.0
    %1600 = vmatpush1.msra.mxu0 0.0
    %1601 = vmatprep.subr.mxu0 0.0
    %1602 = vmatpush1.msra.mxu0 0.0
    %1603 = vmatprep.subr.mxu0 0.0
    %1604 = vmatpush1.msra.mxu0 0.0
    %1605 = vmatprep.subr.mxu0 0.0
    %1606 = vmatpush1.msra.mxu0 0.0
    %1607 = vmatprep.subr.mxu0 0.0
    %1608 = vmatpush1.msra.mxu0 0.0
    %1609 = vmatprep.subr.mxu0 0.0
    %1610 = vmatpush1.msra.mxu0 0.0
    %1611 = vmatprep.subr.mxu0 0.0
    %1612 = vmatpush1.msra.mxu0 0.0
    %1613 = vmatprep.subr.mxu0 0.0
    %1614 = vmatpush1.msra.mxu0 0.0
    %1615 = vmatprep.subr.mxu0 0.0
    %1616 = vmatpush1.msra.mxu0 0.0
    %1617 = vmatprep.subr.mxu0 0.0
    %1618 = vmatpush1.msra.mxu0 0.0
    %1619 = vmatprep.subr.mxu0 0.0
    %1620 = vmatpush1.msra.mxu0 0.0
    %1621 = vmatprep.subr.mxu0 0.0
    %1622 = vmatpush1.msra.mxu0 0.0
    %1623 = vmatprep.subr.mxu0 0.0
    %1624 = vmatpush1.msra.mxu0 0.0
    %1625 = vmatprep.subr.mxu0 0.0
    %1626 = vmatpush1.msra.mxu0 0.0
    %1627 = vmatprep.mubr.f32.mxu0 0.0
    %1628 = vmatmul.mubr.f32.gmra.mrb[0].mxu0 %v1561
    %v1629 = vpop.f32.mrb[0].mxu0
    %v1630 = vadd.f32 0.0, %v1629
    %v1631 = vpop.f32.mrb[0].mxu0
    %1632 = vdwg.mxu0
    %1633 = vrot.lane.b32.xlu0 %v1280, 120
    %v1634 = vpop.permute.xlu0 %1633
    %1635 = vrot.lane.b32.xlu0 %v1365, 120
    %v1636 = vpop.permute.xlu0 %1635
    %1637 = vrot.lane.b32.xlu0 %v1370, 120
    %v1638 = vpop.permute.xlu0 %1637
    %v1639 = vsel %vm414, %v1634, 0
    %v1641 = vsel %vm414, %v1636, 0
    %v1643 = vsel %vm414, %v1638, 0
    %1645 = vmatprep.subr.mxu0 0.0
    %1646 = vmatpush1.xpose.msra.mxu0 %v1641
    %1647 = vmatprep.subr.mxu0 0.0
    %1648 = vmatpush1.xpose.msra.mxu0 %v1643
    %1649 = vmatprep.subr.mxu0 0.0
    %1650 = vmatpush1.xpose.msra.mxu0 0.0
    %1651 = vmatprep.subr.mxu0 0.0
    %1652 = vmatpush1.xpose.msra.mxu0 0.0
    %1653 = vmatprep.subr.mxu0 0.0
    %1654 = vmatpush1.xpose.msra.mxu0 0.0
    %1655 = vmatprep.subr.mxu0 0.0
    %1656 = vmatpush1.xpose.msra.mxu0 0.0
    %1657 = vmatprep.subr.mxu0 0.0
    %1658 = vmatpush1.xpose.msra.mxu0 0.0
    %1659 = vmatprep.subr.mxu0 0.0
    %1660 = vmatpush1.xpose.msra.mxu0 0.0
    %1661 = vmatprep.subr.mxu0 0.0
    %1662 = vmatpush1.xpose.msra.mxu0 0.0
    %1663 = vmatprep.subr.mxu0 0.0
    %1664 = vmatpush1.xpose.msra.mxu0 0.0
    %1665 = vmatprep.subr.mxu0 0.0
    %1666 = vmatpush1.xpose.msra.mxu0 0.0
    %1667 = vmatprep.subr.mxu0 0.0
    %1668 = vmatpush1.xpose.msra.mxu0 0.0
    %1669 = vmatprep.subr.mxu0 0.0
    %1670 = vmatpush1.xpose.msra.mxu0 0.0
    %1671 = vmatprep.subr.mxu0 0.0
    %1672 = vmatpush1.xpose.msra.mxu0 0.0
    %1673 = vmatprep.subr.mxu0 0.0
    %1674 = vmatpush1.xpose.msra.mxu0 0.0
    %1675 = vmatprep.subr.mxu0 0.0
    %1676 = vmatpush1.xpose.msra.mxu0 0.0
    %1677 = vmatprep.subr.mxu0 0.0
    %1678 = vmatpush1.xpose.msra.mxu0 0.0
    %1679 = vmatprep.subr.mxu0 0.0
    %1680 = vmatpush1.xpose.msra.mxu0 0.0
    %1681 = vmatprep.subr.mxu0 0.0
    %1682 = vmatpush1.xpose.msra.mxu0 0.0
    %1683 = vmatprep.subr.mxu0 0.0
    %1684 = vmatpush1.xpose.msra.mxu0 0.0
    %1685 = vmatprep.subr.mxu0 0.0
    %1686 = vmatpush1.xpose.msra.mxu0 0.0
    %1687 = vmatprep.subr.mxu0 0.0
    %1688 = vmatpush1.xpose.msra.mxu0 0.0
    %1689 = vmatprep.subr.mxu0 0.0
    %1690 = vmatpush1.xpose.msra.mxu0 0.0
    %1691 = vmatprep.subr.mxu0 0.0
    %1692 = vmatpush1.xpose.msra.mxu0 0.0
    %1693 = vmatprep.subr.mxu0 0.0
    %1694 = vmatpush1.xpose.msra.mxu0 0.0
    %1695 = vmatprep.subr.mxu0 0.0
    %1696 = vmatpush1.xpose.msra.mxu0 0.0
    %1697 = vmatprep.subr.mxu0 0.0
    %1698 = vmatpush1.xpose.msra.mxu0 0.0
    %1699 = vmatprep.subr.mxu0 0.0
    %1700 = vmatpush1.xpose.msra.mxu0 0.0
    %1701 = vmatprep.subr.mxu0 0.0
    %1702 = vmatpush1.xpose.msra.mxu0 0.0
    %1703 = vmatprep.subr.mxu0 0.0
    %1704 = vmatpush1.xpose.msra.mxu0 0.0
    %1705 = vmatprep.subr.mxu0 0.0
    %1706 = vmatpush1.xpose.msra.mxu0 0.0
    %1707 = vmatprep.subr.mxu0 0.0
    %1708 = vmatpush1.xpose.msra.mxu0 0.0
    %1709 = vmatprep.mubr.f32.mxu0 0.0
    %1710 = vmatmul.mubr.f32.gmra.mrb[0].mxu0 %v1639
    %v1711 = vpop.f32.mrb[0].mxu0
    %v1712 = vadd.f32 0.0, %v1711
    %v1713 = vpop.f32.mrb[0].mxu0
    %1714 = vdwg.mxu0
    %v1715 = vsel %vm1083, %v1712, -inf
    %1716 = vmax.xlane.f32.xlu0 %v1715
    %v1717 = vpop.xlane.xlu0 %1716
    %v1718 = vsub.f32 %v1712, %v1717
    %v1719 = vmul.f32 %v1718, 1.442695
    %v1720 = vpow.pop %v1719
    %v1721 = vsel %vm1083, %v1720, 0.0
    %1722 = vadd.xlane.f32.xlu0 %v1721
    %v1723 = vpop.xlane.xlu0 %1722
    %v1724 = vrcp.pop %v1723
    %v1725 = vmul.f32 %v1720, %v1724
    %1728 = vrot.lane.b32.xlu0 %v1457, 120
    %v1729 = vpop.permute.xlu0 %1728
    %1730 = vrot.lane.b32.xlu0 %v1462, 120
    %v1731 = vpop.permute.xlu0 %1730
    %v1735 = vsel %vm1083, %v1725, 0
    %1737 = vmatprep.subr.mxu0 0.0
    %1738 = vmatpush1.msra.mxu0 %v1729
    %1739 = vmatprep.subr.mxu0 0.0
    %1740 = vmatpush1.msra.mxu0 %v1731
    %1741 = vmatprep.subr.mxu0 0.0
    %1742 = vmatpush1.msra.mxu0 0.0
    %1743 = vmatprep.subr.mxu0 0.0
    %1744 = vmatpush1.msra.mxu0 0.0
    %1745 = vmatprep.subr.mxu0 0.0
    %1746 = vmatpush1.msra.mxu0 0.0
    %1747 = vmatprep.subr.mxu0 0.0
    %1748 = vmatpush1.msra.mxu0 0.0
    %1749 = vmatprep.subr.mxu0 0.0
    %1750 = vmatpush1.msra.mxu0 0.0
    %1751 = vmatprep.subr.mxu0 0.0
    %1752 = vmatpush1.msra.mxu0 0.0
    %1753 = vmatprep.subr.mxu0 0.0
    %1754 = vmatpush1.msra.mxu0 0.0
    %1755 = vmatprep.subr.mxu0 0.0
    %1756 = vmatpush1.msra.mxu0 0.0
    %1757 = vmatprep.subr.mxu0 0.0
    %1758 = vmatpush1.msra.mxu0 0.0
    %1759 = vmatprep.subr.mxu0 0.0
    %1760 = vmatpush1.msra.mxu0 0.0
    %1761 = vmatprep.subr.mxu0 0.0
    %1762 = vmatpush1.msra.mxu0 0.0
    %1763 = vmatprep.subr.mxu0 0.0
    %1764 = vmatpush1.msra.mxu0 0.0
    %1765 = vmatprep.subr.mxu0 0.0
    %1766 = vmatpush1.msra.mxu0 0.0
    %1767 = vmatprep.subr.mxu0 0.0
    %1768 = vmatpush1.msra.mxu0 0.0
    %1769 = vmatprep.subr.mxu0 0.0
    %1770 = vmatpush1.msra.mxu0 0.0
    %1771 = vmatprep.subr.mxu0 0.0
    %1772 = vmatpush1.msra.mxu0 0.0
    %1773 = vmatprep.subr.mxu0 0.0
    %1774 = vmatpush1.msra.mxu0 0.0
    %1775 = vmatprep.subr.mxu0 0.0
    %1776 = vmatpush1.msra.mxu0 0.0
    %1777 = vmatprep.subr.mxu0 0.0
    %1778 = vmatpush1.msra.mxu0 0.0
    %1779 = vmatprep.subr.mxu0 0.0
    %1780 = vmatpush1.msra.mxu0 0.0
    %1781 = vmatprep.subr.mxu0 0.0
    %1782 = vmatpush1.msra.mxu0 0.0
    %1783 = vmatprep.subr.mxu0 0.0
    %1784 = vmatpush1.msra.mxu0 0.0
    %1785 = vmatprep.subr.mxu0 0.0
    %1786 = vmatpush1.msra.mxu0 0.0
    %1787 = vmatprep.subr.mxu0 0.0
    %1788 = vmatpush1.msra.mxu0 0.0
    %1789 = vmatprep.subr.mxu0 0.0
    %1790 = vmatpush1.msra.mxu0 0.0
    %1791 = vmatprep.subr.mxu0 0.0
    %1792 = vmatpush1.msra.mxu0 0.0
    %1793 = vmatprep.subr.mxu0 0.0
    %1794 = vmatpush1.msra.mxu0 0.0
    %1795 = vmatprep.subr.mxu0 0.0
    %1796 = vmatpush1.msra.mxu0 0.0
    %1797 = vmatprep.subr.mxu0 0.0
    %1798 = vmatpush1.msra.mxu0 0.0
    %1799 = vmatprep.subr.mxu0 0.0
    %1800 = vmatpush1.msra.mxu0 0.0
    %1801 = vmatprep.mubr.f32.mxu0 0.0
    %1802 = vmatmul.mubr.f32.gmra.mrb[0].mxu0 %v1735
    %v1803 = vpop.f32.mrb[0].mxu0
    %v1804 = vadd.f32 0.0, %v1803
    %v1805 = vpop.f32.mrb[0].mxu0
    %1806 = vdwg.mxu0
    %1807 = vrot.lane.b32.xlu0 %v1280, 112
    %v1808 = vpop.permute.xlu0 %1807
    %1809 = vrot.lane.b32.xlu0 %v1365, 112
    %v1810 = vpop.permute.xlu0 %1809
    %1811 = vrot.lane.b32.xlu0 %v1370, 112
    %v1812 = vpop.permute.xlu0 %1811
    %v1813 = vsel %vm414, %v1808, 0
    %v1815 = vsel %vm414, %v1810, 0
    %v1817 = vsel %vm414, %v1812, 0
    %1819 = vmatprep.subr.mxu0 0.0
    %1820 = vmatpush1.xpose.msra.mxu0 %v1815
    %1821 = vmatprep.subr.mxu0 0.0
    %1822 = vmatpush1.xpose.msra.mxu0 %v1817
    %1823 = vmatprep.subr.mxu0 0.0
    %1824 = vmatpush1.xpose.msra.mxu0 0.0
    %1825 = vmatprep.subr.mxu0 0.0
    %1826 = vmatpush1.xpose.msra.mxu0 0.0
    %1827 = vmatprep.subr.mxu0 0.0
    %1828 = vmatpush1.xpose.msra.mxu0 0.0
    %1829 = vmatprep.subr.mxu0 0.0
    %1830 = vmatpush1.xpose.msra.mxu0 0.0
    %1831 = vmatprep.subr.mxu0 0.0
    %1832 = vmatpush1.xpose.msra.mxu0 0.0
    %1833 = vmatprep.subr.mxu0 0.0
    %1834 = vmatpush1.xpose.msra.mxu0 0.0
    %1835 = vmatprep.subr.mxu0 0.0
    %1836 = vmatpush1.xpose.msra.mxu0 0.0
    %1837 = vmatprep.subr.mxu0 0.0
    %1838 = vmatpush1.xpose.msra.mxu0 0.0
    %1839 = vmatprep.subr.mxu0 0.0
    %1840 = vmatpush1.xpose.msra.mxu0 0.0
    %1841 = vmatprep.subr.mxu0 0.0
    %1842 = vmatpush1.xpose.msra.mxu0 0.0
    %1843 = vmatprep.subr.mxu0 0.0
    %1844 = vmatpush1.xpose.msra.mxu0 0.0
    %1845 = vmatprep.subr.mxu0 0.0
    %1846 = vmatpush1.xpose.msra.mxu0 0.0
    %1847 = vmatprep.subr.mxu0 0.0
    %1848 = vmatpush1.xpose.msra.mxu0 0.0
    %1849 = vmatprep.subr.mxu0 0.0
    %1850 = vmatpush1.xpose.msra.mxu0 0.0
    %1851 = vmatprep.subr.mxu0 0.0
    %1852 = vmatpush1.xpose.msra.mxu0 0.0
    %1853 = vmatprep.subr.mxu0 0.0
    %1854 = vmatpush1.xpose.msra.mxu0 0.0
    %1855 = vmatprep.subr.mxu0 0.0
    %1856 = vmatpush1.xpose.msra.mxu0 0.0
    %1857 = vmatprep.subr.mxu0 0.0
    %1858 = vmatpush1.xpose.msra.mxu0 0.0
    %1859 = vmatprep.subr.mxu0 0.0
    %1860 = vmatpush1.xpose.msra.mxu0 0.0
    %1861 = vmatprep.subr.mxu0 0.0
    %1862 = vmatpush1.xpose.msra.mxu0 0.0
    %1863 = vmatprep.subr.mxu0 0.0
    %1864 = vmatpush1.xpose.msra.mxu0 0.0
    %1865 = vmatprep.subr.mxu0 0.0
    %1866 = vmatpush1.xpose.msra.mxu0 0.0
    %1867 = vmatprep.subr.mxu0 0.0
    %1868 = vmatpush1.xpose.msra.mxu0 0.0
    %1869 = vmatprep.subr.mxu0 0.0
    %1870 = vmatpush1.xpose.msra.mxu0 0.0
    %1871 = vmatprep.subr.mxu0 0.0
    %1872 = vmatpush1.xpose.msra.mxu0 0.0
    %1873 = vmatprep.subr.mxu0 0.0
    %1874 = vmatpush1.xpose.msra.mxu0 0.0
    %1875 = vmatprep.subr.mxu0 0.0
    %1876 = vmatpush1.xpose.msra.mxu0 0.0
    %1877 = vmatprep.subr.mxu0 0.0
    %1878 = vmatpush1.xpose.msra.mxu0 0.0
    %1879 = vmatprep.subr.mxu0 0.0
    %1880 = vmatpush1.xpose.msra.mxu0 0.0
    %1881 = vmatprep.subr.mxu0 0.0
    %1882 = vmatpush1.xpose.msra.mxu0 0.0
    %1883 = vmatprep.mubr.f32.mxu0 0.0
    %1884 = vmatmul.mubr.f32.gmra.mrb[0].mxu0 %v1813
    %v1885 = vpop.f32.mrb[0].mxu0
    %v1886 = vadd.f32 0.0, %v1885
    %v1887 = vpop.f32.mrb[0].mxu0
    %1888 = vdwg.mxu0
    %v1889 = vsel %vm1083, %v1886, -inf
    %1890 = vmax.xlane.f32.xlu0 %v1889
    %v1891 = vpop.xlane.xlu0 %1890
    %v1892 = vsub.f32 %v1886, %v1891
    %v1893 = vmul.f32 %v1892, 1.442695
    %v1894 = vpow.pop %v1893
    %v1895 = vsel %vm1083, %v1894, 0.0
    %1896 = vadd.xlane.f32.xlu0 %v1895
    %v1897 = vpop.xlane.xlu0 %1896
    %v1898 = vrcp.pop %v1897
    %v1899 = vmul.f32 %v1894, %v1898
    %1900 = vrot.lane.b32.xlu0 %v1457, 112
    %v1901 = vpop.permute.xlu0 %1900
    %1902 = vrot.lane.b32.xlu0 %v1462, 112
    %v1903 = vpop.permute.xlu0 %1902
    %v1907 = vsel %vm1083, %v1899, 0
    %1909 = vmatprep.subr.mxu0 0.0
    %1910 = vmatpush1.msra.mxu0 %v1901
    %1911 = vmatprep.subr.mxu0 0.0
    %1912 = vmatpush1.msra.mxu0 %v1903
    %1913 = vmatprep.subr.mxu0 0.0
    %1914 = vmatpush1.msra.mxu0 0.0
    %1915 = vmatprep.subr.mxu0 0.0
    %1916 = vmatpush1.msra.mxu0 0.0
    %1917 = vmatprep.subr.mxu0 0.0
    %1918 = vmatpush1.msra.mxu0 0.0
    %1919 = vmatprep.subr.mxu0 0.0
    %1920 = vmatpush1.msra.mxu0 0.0
    %1921 = vmatprep.subr.mxu0 0.0
    %1922 = vmatpush1.msra.mxu0 0.0
    %1923 = vmatprep.subr.mxu0 0.0
    %1924 = vmatpush1.msra.mxu0 0.0
    %1925 = vmatprep.subr.mxu0 0.0
    %1926 = vmatpush1.msra.mxu0 0.0
    %1927 = vmatprep.subr.mxu0 0.0
    %1928 = vmatpush1.msra.mxu0 0.0
    %1929 = vmatprep.subr.mxu0 0.0
    %1930 = vmatpush1.msra.mxu0 0.0
    %1931 = vmatprep.subr.mxu0 0.0
    %1932 = vmatpush1.msra.mxu0 0.0
    %1933 = vmatprep.subr.mxu0 0.0
    %1934 = vmatpush1.msra.mxu0 0.0
    %1935 = vmatprep.subr.mxu0 0.0
    %1936 = vmatpush1.msra.mxu0 0.0
    %1937 = vmatprep.subr.mxu0 0.0
    %1938 = vmatpush1.msra.mxu0 0.0
    %1939 = vmatprep.subr.mxu0 0.0
    %1940 = vmatpush1.msra.mxu0 0.0
    %1941 = vmatprep.subr.mxu0 0.0
    %1942 = vmatpush1.msra.mxu0 0.0
    %1943 = vmatprep.subr.mxu0 0.0
    %1944 = vmatpush1.msra.mxu0 0.0
    %1945 = vmatprep.subr.mxu0 0.0
    %1946 = vmatpush1.msra.mxu0 0.0
    %1947 = vmatprep.subr.mxu0 0.0
    %1948 = vmatpush1.msra.mxu0 0.0
    %1949 = vmatprep.subr.mxu0 0.0
    %1950 = vmatpush1.msra.mxu0 0.0
    %1951 = vmatprep.subr.mxu0 0.0
    %1952 = vmatpush1.msra.mxu0 0.0
    %1953 = vmatprep.subr.mxu0 0.0
    %1954 = vmatpush1.msra.mxu0 0.0
    %1955 = vmatprep.subr.mxu0 0.0
    %1956 = vmatpush1.msra.mxu0 0.0
    %1957 = vmatprep.subr.mxu0 0.0
    %1958 = vmatpush1.msra.mxu0 0.0
    %1959 = vmatprep.subr.mxu0 0.0
    %1960 = vmatpush1.msra.mxu0 0.0
    %1961 = vmatprep.subr.mxu0 0.0
    %1962 = vmatpush1.msra.mxu0 0.0
    %1963 = vmatprep.subr.mxu0 0.0
    %1964 = vmatpush1.msra.mxu0 0.0
    %1965 = vmatprep.subr.mxu0 0.0
    %1966 = vmatpush1.msra.mxu0 0.0
    %1967 = vmatprep.subr.mxu0 0.0
    %1968 = vmatpush1.msra.mxu0 0.0
    %1969 = vmatprep.subr.mxu0 0.0
    %1970 = vmatpush1.msra.mxu0 0.0
    %1971 = vmatprep.subr.mxu0 0.0
    %1972 = vmatpush1.msra.mxu0 0.0
    %1973 = vmatprep.mubr.f32.mxu0 0.0
    %1974 = vmatmul.mubr.f32.gmra.mrb[0].mxu0 %v1907
    %v1975 = vpop.f32.mrb[0].mxu0
    %v1976 = vadd.f32 0.0, %v1975
    %v1977 = vpop.f32.mrb[0].mxu0
    %1978 = vdwg.mxu0
    %1979 = vrot.lane.b32.xlu0 %v1280, 104
    %v1980 = vpop.permute.xlu0 %1979
    %1981 = vrot.lane.b32.xlu0 %v1365, 104
    %v1982 = vpop.permute.xlu0 %1981
    %1983 = vrot.lane.b32.xlu0 %v1370, 104
    %v1984 = vpop.permute.xlu0 %1983
    %v1985 = vsel %vm414, %v1980, 0
    %v1987 = vsel %vm414, %v1982, 0
    %v1989 = vsel %vm414, %v1984, 0
    %1991 = vmatprep.subr.mxu0 0.0
    %1992 = vmatpush1.xpose.msra.mxu0 %v1987
    %1993 = vmatprep.subr.mxu0 0.0
    %1994 = vmatpush1.xpose.msra.mxu0 %v1989
    %1995 = vmatprep.subr.mxu0 0.0
    %1996 = vmatpush1.xpose.msra.mxu0 0.0
    %1997 = vmatprep.subr.mxu0 0.0
    %1998 = vmatpush1.xpose.msra.mxu0 0.0
    %1999 = vmatprep.subr.mxu0 0.0
    %2000 = vmatpush1.xpose.msra.mxu0 0.0
    %2001 = vmatprep.subr.mxu0 0.0
    %2002 = vmatpush1.xpose.msra.mxu0 0.0
    %2003 = vmatprep.subr.mxu0 0.0
    %2004 = vmatpush1.xpose.msra.mxu0 0.0
    %2005 = vmatprep.subr.mxu0 0.0
    %2006 = vmatpush1.xpose.msra.mxu0 0.0
    %2007 = vmatprep.subr.mxu0 0.0
    %2008 = vmatpush1.xpose.msra.mxu0 0.0
    %2009 = vmatprep.subr.mxu0 0.0
    %2010 = vmatpush1.xpose.msra.mxu0 0.0
    %2011 = vmatprep.subr.mxu0 0.0
    %2012 = vmatpush1.xpose.msra.mxu0 0.0
    %2013 = vmatprep.subr.mxu0 0.0
    %2014 = vmatpush1.xpose.msra.mxu0 0.0
    %2015 = vmatprep.subr.mxu0 0.0
    %2016 = vmatpush1.xpose.msra.mxu0 0.0
    %2017 = vmatprep.subr.mxu0 0.0
    %2018 = vmatpush1.xpose.msra.mxu0 0.0
    %2019 = vmatprep.subr.mxu0 0.0
    %2020 = vmatpush1.xpose.msra.mxu0 0.0
    %2021 = vmatprep.subr.mxu0 0.0
    %2022 = vmatpush1.xpose.msra.mxu0 0.0
    %2023 = vmatprep.subr.mxu0 0.0
    %2024 = vmatpush1.xpose.msra.mxu0 0.0
    %2025 = vmatprep.subr.mxu0 0.0
    %2026 = vmatpush1.xpose.msra.mxu0 0.0
    %2027 = vmatprep.subr.mxu0 0.0
    %2028 = vmatpush1.xpose.msra.mxu0 0.0
    %2029 = vmatprep.subr.mxu0 0.0
    %2030 = vmatpush1.xpose.msra.mxu0 0.0
    %2031 = vmatprep.subr.mxu0 0.0
    %2032 = vmatpush1.xpose.msra.mxu0 0.0
    %2033 = vmatprep.subr.mxu0 0.0
    %2034 = vmatpush1.xpose.msra.mxu0 0.0
    %2035 = vmatprep.subr.mxu0 0.0
    %2036 = vmatpush1.xpose.msra.mxu0 0.0
    %2037 = vmatprep.subr.mxu0 0.0
    %2038 = vmatpush1.xpose.msra.mxu0 0.0
    %2039 = vmatprep.subr.mxu0 0.0
    %2040 = vmatpush1.xpose.msra.mxu0 0.0
    %2041 = vmatprep.subr.mxu0 0.0
    %2042 = vmatpush1.xpose.msra.mxu0 0.0
    %2043 = vmatprep.subr.mxu0 0.0
    %2044 = vmatpush1.xpose.msra.mxu0 0.0
    %2045 = vmatprep.subr.mxu0 0.0
    %2046 = vmatpush1.xpose.msra.mxu0 0.0
    %2047 = vmatprep.subr.mxu0 0.0
    %2048 = vmatpush1.xpose.msra.mxu0 0.0
    %2049 = vmatprep.subr.mxu0 0.0
    %2050 = vmatpush1.xpose.msra.mxu0 0.0
    %2051 = vmatprep.subr.mxu0 0.0
    %2052 = vmatpush1.xpose.msra.mxu0 0.0
    %2053 = vmatprep.subr.mxu0 0.0
    %2054 = vmatpush1.xpose.msra.mxu0 0.0
    %2055 = vmatprep.mubr.f32.mxu0 0.0
    %2056 = vmatmul.mubr.f32.gmra.mrb[0].mxu0 %v1985
    %v2057 = vpop.f32.mrb[0].mxu0
    %v2058 = vadd.f32 0.0, %v2057
    %v2059 = vpop.f32.mrb[0].mxu0
    %2060 = vdwg.mxu0
    %v2061 = vsel %vm1083, %v2058, -inf
    %2062 = vmax.xlane.f32.xlu0 %v2061
    %v2063 = vpop.xlane.xlu0 %2062
    %v2064 = vsub.f32 %v2058, %v2063
    %v2065 = vmul.f32 %v2064, 1.442695
    %v2066 = vpow.pop %v2065
    %v2067 = vsel %vm1083, %v2066, 0.0
    %2068 = vadd.xlane.f32.xlu0 %v2067
    %v2069 = vpop.xlane.xlu0 %2068
    %v2070 = vrcp.pop %v2069
    %v2071 = vmul.f32 %v2066, %v2070
    %2072 = vrot.lane.b32.xlu0 %v1457, 104
    %v2073 = vpop.permute.xlu0 %2072
    %2074 = vrot.lane.b32.xlu0 %v1462, 104
    %v2075 = vpop.permute.xlu0 %2074
    %v2079 = vsel %vm1083, %v2071, 0
    %2081 = vmatprep.subr.mxu0 0.0
    %2082 = vmatpush1.msra.mxu0 %v2073
    %2083 = vmatprep.subr.mxu0 0.0
    %2084 = vmatpush1.msra.mxu0 %v2075
    %2085 = vmatprep.subr.mxu0 0.0
    %2086 = vmatpush1.msra.mxu0 0.0
    %2087 = vmatprep.subr.mxu0 0.0
    %2088 = vmatpush1.msra.mxu0 0.0
    %2089 = vmatprep.subr.mxu0 0.0
    %2090 = vmatpush1.msra.mxu0 0.0
    %2091 = vmatprep.subr.mxu0 0.0
    %2092 = vmatpush1.msra.mxu0 0.0
    %2093 = vmatprep.subr.mxu0 0.0
    %2094 = vmatpush1.msra.mxu0 0.0
    %2095 = vmatprep.subr.mxu0 0.0
    %2096 = vmatpush1.msra.mxu0 0.0
    %2097 = vmatprep.subr.mxu0 0.0
    %2098 = vmatpush1.msra.mxu0 0.0
    %2099 = vmatprep.subr.mxu0 0.0
    %2100 = vmatpush1.msra.mxu0 0.0
    %2101 = vmatprep.subr.mxu0 0.0
    %2102 = vmatpush1.msra.mxu0 0.0
    %2103 = vmatprep.subr.mxu0 0.0
    %2104 = vmatpush1.msra.mxu0 0.0
    %2105 = vmatprep.subr.mxu0 0.0
    %2106 = vmatpush1.msra.mxu0 0.0
    %2107 = vmatprep.subr.mxu0 0.0
    %2108 = vmatpush1.msra.mxu0 0.0
    %2109 = vmatprep.subr.mxu0 0.0
    %2110 = vmatpush1.msra.mxu0 0.0
    %2111 = vmatprep.subr.mxu0 0.0
    %2112 = vmatpush1.msra.mxu0 0.0
    %2113 = vmatprep.subr.mxu0 0.0
    %2114 = vmatpush1.msra.mxu0 0.0
    %2115 = vmatprep.subr.mxu0 0.0
    %2116 = vmatpush1.msra.mxu0 0.0
    %2117 = vmatprep.subr.mxu0 0.0
    %2118 = vmatpush1.msra.mxu0 0.0
    %2119 = vmatprep.subr.mxu0 0.0
    %2120 = vmatpush1.msra.mxu0 0.0
    %2121 = vmatprep.subr.mxu0 0.0
    %2122 = vmatpush1.msra.mxu0 0.0
    %2123 = vmatprep.subr.mxu0 0.0
    %2124 = vmatpush1.msra.mxu0 0.0
    %2125 = vmatprep.subr.mxu0 0.0
    %2126 = vmatpush1.msra.mxu0 0.0
    %2127 = vmatprep.subr.mxu0 0.0
    %2128 = vmatpush1.msra.mxu0 0.0
    %2129 = vmatprep.subr.mxu0 0.0
    %2130 = vmatpush1.msra.mxu0 0.0
    %2131 = vmatprep.subr.mxu0 0.0
    %2132 = vmatpush1.msra.mxu0 0.0
    %2133 = vmatprep.subr.mxu0 0.0
    %2134 = vmatpush1.msra.mxu0 0.0
    %2135 = vmatprep.subr.mxu0 0.0
    %2136 = vmatpush1.msra.mxu0 0.0
    %2137 = vmatprep.subr.mxu0 0.0
    %2138 = vmatpush1.msra.mxu0 0.0
    %2139 = vmatprep.subr.mxu0 0.0
    %2140 = vmatpush1.msra.mxu0 0.0
    %2141 = vmatprep.subr.mxu0 0.0
    %2142 = vmatpush1.msra.mxu0 0.0
    %2143 = vmatprep.subr.mxu0 0.0
    %2144 = vmatpush1.msra.mxu0 0.0
    %2145 = vmatprep.mubr.f32.mxu0 0.0
    %2146 = vmatmul.mubr.f32.gmra.mrb[0].mxu0 %v2079
    %v2147 = vpop.f32.mrb[0].mxu0
    %v2148 = vadd.f32 0.0, %v2147
    %v2149 = vpop.f32.mrb[0].mxu0
    %2150 = vdwg.mxu0
    %2152 = vrot.lane.b32.xlu0 %v1804, 8
    %v2153 = vpop.permute.xlu0 %2152
    %2156 = vrot.lane.b32.xlu0 %v1976, 16
    %v2157 = vpop.permute.xlu0 %2156
    %2160 = vrot.lane.b32.xlu0 %v2148, 24
    %v2161 = vpop.permute.xlu0 %2160
    %v2163 = vsel %vm414, %v1630, %v2153
    %v2164 = vsel %vm1083, %v2163, %v2157
    %v2165 = vsel %vm1085, %v2164, %v2161
    %v2167 = vlaneseq
    %v2168 = vshrl.u32 %v2167, 7
    %v2169 = vsub.s32 0, %v2168
    %v2170 = vrot.slane %v1469, %v2169
    %v2173 = vsel %vm247, %v2165, 0
    %2175 = vmatprep.subr.mxu0 0.0
    %2176 = vmatpush1.msra.mxu0 %v1465
    %2177 = vmatprep.subr.mxu0 0.0
    %2178 = vmatpush1.msra.mxu0 %v1466
    %2179 = vmatprep.subr.mxu0 0.0
    %2180 = vmatpush1.msra.mxu0 %v1467
    %2181 = vmatprep.subr.mxu0 0.0
    %2182 = vmatpush1.msra.mxu0 %v1468
    %2183 = vmatprep.subr.mxu0 0.0
    %2184 = vmatpush1.msra.mxu0 0.0
    %2185 = vmatprep.subr.mxu0 0.0
    %2186 = vmatpush1.msra.mxu0 0.0
    %2187 = vmatprep.subr.mxu0 0.0
    %2188 = vmatpush1.msra.mxu0 0.0
    %2189 = vmatprep.subr.mxu0 0.0
    %2190 = vmatpush1.msra.mxu0 0.0
    %2191 = vmatprep.subr.mxu0 0.0
    %2192 = vmatpush1.msra.mxu0 0.0
    %2193 = vmatprep.subr.mxu0 0.0
    %2194 = vmatpush1.msra.mxu0 0.0
    %2195 = vmatprep.subr.mxu0 0.0
    %2196 = vmatpush1.msra.mxu0 0.0
    %2197 = vmatprep.subr.mxu0 0.0
    %2198 = vmatpush1.msra.mxu0 0.0
    %2199 = vmatprep.subr.mxu0 0.0
    %2200 = vmatpush1.msra.mxu0 0.0
    %2201 = vmatprep.subr.mxu0 0.0
    %2202 = vmatpush1.msra.mxu0 0.0
    %2203 = vmatprep.subr.mxu0 0.0
    %2204 = vmatpush1.msra.mxu0 0.0
    %2205 = vmatprep.subr.mxu0 0.0
    %2206 = vmatpush1.msra.mxu0 0.0
    %2207 = vmatprep.subr.mxu0 0.0
    %2208 = vmatpush1.msra.mxu0 0.0
    %2209 = vmatprep.subr.mxu0 0.0
    %2210 = vmatpush1.msra.mxu0 0.0
    %2211 = vmatprep.subr.mxu0 0.0
    %2212 = vmatpush1.msra.mxu0 0.0
    %2213 = vmatprep.subr.mxu0 0.0
    %2214 = vmatpush1.msra.mxu0 0.0
    %2215 = vmatprep.subr.mxu0 0.0
    %2216 = vmatpush1.msra.mxu0 0.0
    %2217 = vmatprep.subr.mxu0 0.0
    %2218 = vmatpush1.msra.mxu0 0.0
    %2219 = vmatprep.subr.mxu0 0.0
    %2220 = vmatpush1.msra.mxu0 0.0
    %2221 = vmatprep.subr.mxu0 0.0
    %2222 = vmatpush1.msra.mxu0 0.0
    %2223 = vmatprep.subr.mxu0 0.0
    %2224 = vmatpush1.msra.mxu0 0.0
    %2225 = vmatprep.subr.mxu0 0.0
    %2226 = vmatpush1.msra.mxu0 0.0
    %2227 = vmatprep.subr.mxu0 0.0
    %2228 = vmatpush1.msra.mxu0 0.0
    %2229 = vmatprep.subr.mxu0 0.0
    %2230 = vmatpush1.msra.mxu0 0.0
    %2231 = vmatprep.subr.mxu0 0.0
    %2232 = vmatpush1.msra.mxu0 0.0
    %2233 = vmatprep.subr.mxu0 0.0
    %2234 = vmatpush1.msra.mxu0 0.0
    %2235 = vmatprep.subr.mxu0 0.0
    %2236 = vmatpush1.msra.mxu0 0.0
    %2237 = vmatprep.subr.mxu0 0.0
    %2238 = vmatpush1.msra.mxu0 0.0
    %2239 = vmatprep.mubr.f32.mxu0 0.0
    %2240 = vmatmul.mubr.f32.gmra.mrb[0].mxu0 %v2173
    %v2241 = vpop.f32.mrb[0].mxu0
    %v2242 = vadd.f32 %v2170, %v2241
    %v2243 = vpop.f32.mrb[0].mxu0
    %2244 = vdwg.mxu0
    %v2245 = vadd.f32 %v1194, %v2242
    %v2246 = vsel %vm247, %v2245, 0.0
    %2247 = vadd.xlane.f32.xlu0 %v2246
    %v2248 = vpop.xlane.xlu0 %2247
    %v2249 = vmul.f32 %v2248, %v1170
    %v2250 = vsub.f32 %v2245, %v2249
    %v2251 = vmul.f32 %v2250, %v2250
    %v2252 = vsel %vm247, %v2251, 0.0
    %2253 = vadd.xlane.f32.xlu0 %v2252
    %v2254 = vpop.xlane.xlu0 %2253
    %v2255 = vmul.f32 %v2254, %v1170
    %v2256 = vadd.f32 %v2255, 1e-05
    %v2257 = vrsqrt.pop %v2256
    %v2258 = vmul.f32 %v2250, %v2257
    %v2260 = vlaneseq
    %v2261 = vshrl.u32 %v2260, 7
    %v2262 = vsub.s32 0, %v2261
    %v2263 = vrot.slane %v230, %v2262
    %v2265 = vmul.f32 %v2258, %v2263
    %v2267 = vlaneseq
    %v2268 = vshrl.u32 %v2267, 7
    %v2269 = vsub.s32 0, %v2268
    %v2270 = vrot.slane %v233, %v2269
    %v2272 = vadd.f32 %v2265, %v2270
    %v2273 = vld [vmem:[%s18] sm:$0xff]
    %v2274 = vld [vmem:[%s18 + $0x8] sm:$0xff]
    %v2275 = vld [vmem:[%s18 + $0x10] sm:$0xff]
    %v2276 = vld [vmem:[%s18 + $0x18] sm:$0xff]
    %v2277 = vld [vmem:[#allocation12] sm:$0x1]
    %v2279 = vlaneseq
    %v2280 = vshrl.u32 %v2279, 7
    %v2281 = vsub.s32 0, %v2280
    %v2282 = vrot.slane %v2277, %v2281
    %v2285 = vsel %vm247, %v2272, 0
    %2287 = vmatprep.subr.mxu0 0.0
    %2288 = vmatpush1.msra.mxu0 %v2273
    %2289 = vmatprep.subr.mxu0 0.0
    %2290 = vmatpush1.msra.mxu0 %v2274
    %2291 = vmatprep.subr.mxu0 0.0
    %2292 = vmatpush1.msra.mxu0 %v2275
    %2293 = vmatprep.subr.mxu0 0.0
    %2294 = vmatpush1.msra.mxu0 %v2276
    %2295 = vmatprep.subr.mxu0 0.0
    %2296 = vmatpush1.msra.mxu0 0.0
    %2297 = vmatprep.subr.mxu0 0.0
    %2298 = vmatpush1.msra.mxu0 0.0
    %2299 = vmatprep.subr.mxu0 0.0
    %2300 = vmatpush1.msra.mxu0 0.0
    %2301 = vmatprep.subr.mxu0 0.0
    %2302 = vmatpush1.msra.mxu0 0.0
    %2303 = vmatprep.subr.mxu0 0.0
    %2304 = vmatpush1.msra.mxu0 0.0
    %2305 = vmatprep.subr.mxu0 0.0
    %2306 = vmatpush1.msra.mxu0 0.0
    %2307 = vmatprep.subr.mxu0 0.0
    %2308 = vmatpush1.msra.mxu0 0.0
    %2309 = vmatprep.subr.mxu0 0.0
    %2310 = vmatpush1.msra.mxu0 0.0
    %2311 = vmatprep.subr.mxu0 0.0
    %2312 = vmatpush1.msra.mxu0 0.0
    %2313 = vmatprep.subr.mxu0 0.0
    %2314 = vmatpush1.msra.mxu0 0.0
    %2315 = vmatprep.subr.mxu0 0.0
    %2316 = vmatpush1.msra.mxu0 0.0
    %2317 = vmatprep.subr.mxu0 0.0
    %2318 = vmatpush1.msra.mxu0 0.0
    %2319 = vmatprep.subr.mxu0 0.0
    %2320 = vmatpush1.msra.mxu0 0.0
    %2321 = vmatprep.subr.mxu0 0.0
    %2322 = vmatpush1.msra.mxu0 0.0
    %2323 = vmatprep.subr.mxu0 0.0
    %2324 = vmatpush1.msra.mxu0 0.0
    %2325 = vmatprep.subr.mxu0 0.0
    %2326 = vmatpush1.msra.mxu0 0.0
    %2327 = vmatprep.subr.mxu0 0.0
    %2328 = vmatpush1.msra.mxu0 0.0
    %2329 = vmatprep.subr.mxu0 0.0
    %2330 = vmatpush1.msra.mxu0 0.0
    %2331 = vmatprep.subr.mxu0 0.0
    %2332 = vmatpush1.msra.mxu0 0.0
    %2333 = vmatprep.subr.mxu0 0.0
    %2334 = vmatpush1.msra.mxu0 0.0
    %2335 = vmatprep.subr.mxu0 0.0
    %2336 = vmatpush1.msra.mxu0 0.0
    %2337 = vmatprep.subr.mxu0 0.0
    %2338 = vmatpush1.msra.mxu0 0.0
    %2339 = vmatprep.subr.mxu0 0.0
    %2340 = vmatpush1.msra.mxu0 0.0
    %2341 = vmatprep.subr.mxu0 0.0
    %2342 = vmatpush1.msra.mxu0 0.0
    %2343 = vmatprep.subr.mxu0 0.0
    %2344 = vmatpush1.msra.mxu0 0.0
    %2345 = vmatprep.subr.mxu0 0.0
    %2346 = vmatpush1.msra.mxu0 0.0
    %2347 = vmatprep.subr.mxu0 0.0
    %2348 = vmatpush1.msra.mxu0 0.0
    %2349 = vmatprep.subr.mxu0 0.0
    %2350 = vmatpush1.msra.mxu0 0.0
    %2351 = vmatprep.mubr.f32.mxu0 0.0
    %2352 = vmatmul.mubr.f32.gmra.mrb[0].mxu0 %v2285
    %v2353 = vpop.f32.mrb[0].mxu0
    %v2354 = vadd.f32 %v2282, %v2353
    %v2355 = vpop.f32.mrb[0].mxu0
    %2356 = vdwg.mxu0
    %v2357 = vmax.f32 %v2354, 0.0
    %v2358 = vld [vmem:[%s20] sm:$0xff]
    %v2359 = vld [vmem:[%s20 + $0x8] sm:$0xff]
    %v2360 = vld [vmem:[%s20 + $0x10] sm:$0xff]
    %v2361 = vld [vmem:[%s20 + $0x18] sm:$0xff]
    %v2362 = vld [vmem:[%s20 + $0x20] sm:$0xff]
    %v2363 = vld [vmem:[%s20 + $0x28] sm:$0xff]
    %v2364 = vld [vmem:[%s20 + $0x30] sm:$0xff]
    %v2365 = vld [vmem:[%s20 + $0x38] sm:$0xff]
    %v2366 = vld [vmem:[#allocation13] sm:$0x1]
    %v2368 = vlaneseq
    %v2369 = vshrl.u32 %v2368, 7
    %v2370 = vsub.s32 0, %v2369
    %v2371 = vrot.slane %v2366, %v2370
    %vm2373 = vcmask 523264
    %v2375 = vsel %vm2373, %v2357, 0
    %2377 = vmatprep.subr.mxu0 0.0
    %2378 = vmatpush1.msra.mxu0 %v2358
    %2379 = vmatprep.subr.mxu0 0.0
    %2380 = vmatpush1.msra.mxu0 %v2359
    %2381 = vmatprep.subr.mxu0 0.0
    %2382 = vmatpush1.msra.mxu0 %v2360
    %2383 = vmatprep.subr.mxu0 0.0
    %2384 = vmatpush1.msra.mxu0 %v2361
    %2385 = vmatprep.subr.mxu0 0.0
    %2386 = vmatpush1.msra.mxu0 %v2362
    %2387 = vmatprep.subr.mxu0 0.0
    %2388 = vmatpush1.msra.mxu0 %v2363
    %2389 = vmatprep.subr.mxu0 0.0
    %2390 = vmatpush1.msra.mxu0 %v2364
    %2391 = vmatprep.subr.mxu0 0.0
    %2392 = vmatpush1.msra.mxu0 %v2365
    %2393 = vmatprep.subr.mxu0 0.0
    %2394 = vmatpush1.msra.mxu0 0.0
    %2395 = vmatprep.subr.mxu0 0.0
    %2396 = vmatpush1.msra.mxu0 0.0
    %2397 = vmatprep.subr.mxu0 0.0
    %2398 = vmatpush1.msra.mxu0 0.0
    %2399 = vmatprep.subr.mxu0 0.0
    %2400 = vmatpush1.msra.mxu0 0.0
    %2401 = vmatprep.subr.mxu0 0.0
    %2402 = vmatpush1.msra.mxu0 0.0
    %2403 = vmatprep.subr.mxu0 0.0
    %2404 = vmatpush1.msra.mxu0 0.0
    %2405 = vmatprep.subr.mxu0 0.0
    %2406 = vmatpush1.msra.mxu0 0.0
    %2407 = vmatprep.subr.mxu0 0.0
    %2408 = vmatpush1.msra.mxu0 0.0
    %2409 = vmatprep.subr.mxu0 0.0
    %2410 = vmatpush1.msra.mxu0 0.0
    %2411 = vmatprep.subr.mxu0 0.0
    %2412 = vmatpush1.msra.mxu0 0.0
    %2413 = vmatprep.subr.mxu0 0.0
    %2414 = vmatpush1.msra.mxu0 0.0
    %2415 = vmatprep.subr.mxu0 0.0
    %2416 = vmatpush1.msra.mxu0 0.0
    %2417 = vmatprep.subr.mxu0 0.0
    %2418 = vmatpush1.msra.mxu0 0.0
    %2419 = vmatprep.subr.mxu0 0.0
    %2420 = vmatpush1.msra.mxu0 0.0
    %2421 = vmatprep.subr.mxu0 0.0
    %2422 = vmatpush1.msra.mxu0 0.0
    %2423 = vmatprep.subr.mxu0 0.0
    %2424 = vmatpush1.msra.mxu0 0.0
    %2425 = vmatprep.subr.mxu0 0.0
    %2426 = vmatpush1.msra.mxu0 0.0
    %2427 = vmatprep.subr.mxu0 0.0
    %2428 = vmatpush1.msra.mxu0 0.0
    %2429 = vmatprep.subr.mxu0 0.0
    %2430 = vmatpush1.msra.mxu0 0.0
    %2431 = vmatprep.subr.mxu0 0.0
    %2432 = vmatpush1.msra.mxu0 0.0
    %2433 = vmatprep.subr.mxu0 0.0
    %2434 = vmatpush1.msra.mxu0 0.0
    %2435 = vmatprep.subr.mxu0 0.0
    %2436 = vmatpush1.msra.mxu0 0.0
    %2437 = vmatprep.subr.mxu0 0.0
    %2438 = vmatpush1.msra.mxu0 0.0
    %2439 = vmatprep.subr.mxu0 0.0
    %2440 = vmatpush1.msra.mxu0 0.0
    %2441 = vmatprep.mubr.f32.mxu0 0.0
    %2442 = vmatmul.mubr.f32.gmra.mrb[0].mxu0 %v2375
    %v2443 = vpop.f32.mrb[0].mxu0
    %v2444 = vadd.f32 %v2371, %v2443
    %v2445 = vpop.f32.mrb[0].mxu0
    %2446 = vdwg.mxu0
    %v2447 = vadd.f32 %v2272, %v2444
    %v2448 = vsel %vm247, %v2447, 0.0
    %2449 = vadd.xlane.f32.xlu0 %v2448
    %v2450 = vpop.xlane.xlu0 %2449
    %v2451 = vmul.f32 %v2450, %v1170
    %v2452 = vsub.f32 %v2447, %v2451
    %v2453 = vmul.f32 %v2452, %v2452
    %v2454 = vsel %vm247, %v2453, 0.0
    %2455 = vadd.xlane.f32.xlu0 %v2454
    %v2456 = vpop.xlane.xlu0 %2455
    %v2457 = vmul.f32 %v2456, %v1170
    %v2458 = vadd.f32 %v2457, 1e-05
    %v2459 = vrsqrt.pop %v2458
    %v2460 = vmul.f32 %v2452, %v2459
    %v2462 = vlaneseq
    %v2463 = vshrl.u32 %v2462, 7
    %v2464 = vsub.s32 0, %v2463
    %v2465 = vrot.slane %v231, %v2464
    %v2467 = vmul.f32 %v2460, %v2465
    %v2469 = vlaneseq
    %v2470 = vshrl.u32 %v2469, 7
    %v2471 = vsub.s32 0, %v2470
    %v2472 = vrot.slane %v234, %v2471
    %v2474 = vadd.f32 %v2467, %v2472
    %s2475 = scalar_lea.vmem [#allocation15], 3
    %v2476 = vld [vmem:[%s2475] sm:$0x1]
    %v2477 = vld [vmem:[%s2475 + $0x1] sm:$0x1]
    %v2478 = vld [vmem:[%s2475 + $0x2] sm:$0x1]
    %s2479 = scalar_lea.vmem [#allocation16], 3
    %v2480 = vld [vmem:[%s2479] sm:$0x1]
    %v2481 = vld [vmem:[%s2479 + $0x1] sm:$0x1]
    %v2482 = vld [vmem:[%s2479 + $0x2] sm:$0x1]
    %v2483 = vadd.f32 %v2474, %v222
    %s2484 = scalar_lea.vmem %s4, 32
    %v2485 = vld [vmem:[%s2484] sm:$0xff]
    %v2486 = vld [vmem:[%s2484 + $0x8] sm:$0xff]
    %v2487 = vld [vmem:[%s2484 + $0x10] sm:$0xff]
    %v2488 = vld [vmem:[%s2484 + $0x18] sm:$0xff]
    %s2489 = scalar_lea.vmem %s5, 1
    %v2490 = vld [vmem:[%s2489] sm:$0x1]
    %v2492 = vlaneseq
    %v2493 = vshrl.u32 %v2492, 7
    %v2494 = vsub.s32 0, %v2493
    %v2495 = vrot.slane %v2490, %v2494
    %v2498 = vsel %vm247, %v2483, 0
    %2500 = vmatprep.subr.mxu0 0.0
    %2501 = vmatpush1.msra.mxu0 %v2485
    %2502 = vmatprep.subr.mxu0 0.0
    %2503 = vmatpush1.msra.mxu0 %v2486
    %2504 = vmatprep.subr.mxu0 0.0
    %2505 = vmatpush1.msra.mxu0 %v2487
    %2506 = vmatprep.subr.mxu0 0.0
    %2507 = vmatpush1.msra.mxu0 %v2488
    %2508 = vmatprep.subr.mxu0 0.0
    %2509 = vmatpush1.msra.mxu0 0.0
    %2510 = vmatprep.subr.mxu0 0.0
    %2511 = vmatpush1.msra.mxu0 0.0
    %2512 = vmatprep.subr.mxu0 0.0
    %2513 = vmatpush1.msra.mxu0 0.0
    %2514 = vmatprep.subr.mxu0 0.0
    %2515 = vmatpush1.msra.mxu0 0.0
    %2516 = vmatprep.subr.mxu0 0.0
    %2517 = vmatpush1.msra.mxu0 0.0
    %2518 = vmatprep.subr.mxu0 0.0
    %2519 = vmatpush1.msra.mxu0 0.0
    %2520 = vmatprep.subr.mxu0 0.0
    %2521 = vmatpush1.msra.mxu0 0.0
    %2522 = vmatprep.subr.mxu0 0.0
    %2523 = vmatpush1.msra.mxu0 0.0
    %2524 = vmatprep.subr.mxu0 0.0
    %2525 = vmatpush1.msra.mxu0 0.0
    %2526 = vmatprep.subr.mxu0 0.0
    %2527 = vmatpush1.msra.mxu0 0.0
    %2528 = vmatprep.subr.mxu0 0.0
    %2529 = vmatpush1.msra.mxu0 0.0
    %2530 = vmatprep.subr.mxu0 0.0
    %2531 = vmatpush1.msra.mxu0 0.0
    %2532 = vmatprep.subr.mxu0 0.0
    %2533 = vmatpush1.msra.mxu0 0.0
    %2534 = vmatprep.subr.mxu0 0.0
    %2535 = vmatpush1.msra.mxu0 0.0
    %2536 = vmatprep.subr.mxu0 0.0
    %2537 = vmatpush1.msra.mxu0 0.0
    %2538 = vmatprep.subr.mxu0 0.0
    %2539 = vmatpush1.msra.mxu0 0.0
    %2540 = vmatprep.subr.mxu0 0.0
    %2541 = vmatpush1.msra.mxu0 0.0
    %2542 = vmatprep.subr.mxu0 0.0
    %2543 = vmatpush1.msra.mxu0 0.0
    %2544 = vmatprep.subr.mxu0 0.0
    %2545 = vmatpush1.msra.mxu0 0.0
    %2546 = vmatprep.subr.mxu0 0.0
    %2547 = vmatpush1.msra.mxu0 0.0
    %2548 = vmatprep.subr.mxu0 0.0
    %2549 = vmatpush1.msra.mxu0 0.0
    %2550 = vmatprep.subr.mxu0 0.0
    %2551 = vmatpush1.msra.mxu0 0.0
    %2552 = vmatprep.subr.mxu0 0.0
    %2553 = vmatpush1.msra.mxu0 0.0
    %2554 = vmatprep.subr.mxu0 0.0
    %2555 = vmatpush1.msra.mxu0 0.0
    %2556 = vmatprep.subr.mxu0 0.0
    %2557 = vmatpush1.msra.mxu0 0.0
    %2558 = vmatprep.subr.mxu0 0.0
    %2559 = vmatpush1.msra.mxu0 0.0
    %2560 = vmatprep.subr.mxu0 0.0
    %2561 = vmatpush1.msra.mxu0 0.0
    %2562 = vmatprep.subr.mxu0 0.0
    %2563 = vmatpush1.msra.mxu0 0.0
    %2564 = vmatprep.mubr.f32.mxu0 0.0
    %2565 = vmatmul.mubr.f32.gmra.mrb[0].mxu0 %v2498
    %v2566 = vpop.f32.mrb[0].mxu0
    %v2567 = vadd.f32 %v2495, %v2566
    %v2568 = vpop.f32.mrb[0].mxu0
    %2569 = vdwg.mxu0
    %v2570 = vmul.f32 %v2567, 0.35355338
    %s2571 = scalar_lea.vmem %s6, 32
    %v2572 = vld [vmem:[%s2571] sm:$0xff]
    %v2573 = vld [vmem:[%s2571 + $0x8] sm:$0xff]
    %v2574 = vld [vmem:[%s2571 + $0x10] sm:$0xff]
    %v2575 = vld [vmem:[%s2571 + $0x18] sm:$0xff]
    %s2576 = scalar_lea.vmem %s7, 1
    %v2577 = vld [vmem:[%s2576] sm:$0x1]
    %v2579 = vlaneseq
    %v2580 = vshrl.u32 %v2579, 7
    %v2581 = vsub.s32 0, %v2580
    %v2582 = vrot.slane %v2577, %v2581
    %v2585 = vsel %vm247, %v2474, 0
    %2587 = vmatprep.subr.mxu0 0.0
    %2588 = vmatpush1.msra.mxu0 %v2572
    %2589 = vmatprep.subr.mxu0 0.0
    %2590 = vmatpush1.msra.mxu0 %v2573
    %2591 = vmatprep.subr.mxu0 0.0
    %2592 = vmatpush1.msra.mxu0 %v2574
    %2593 = vmatprep.subr.mxu0 0.0
    %2594 = vmatpush1.msra.mxu0 %v2575
    %2595 = vmatprep.subr.mxu0 0.0
    %2596 = vmatpush1.msra.mxu0 0.0
    %2597 = vmatprep.subr.mxu0 0.0
    %2598 = vmatpush1.msra.mxu0 0.0
    %2599 = vmatprep.subr.mxu0 0.0
    %2600 = vmatpush1.msra.mxu0 0.0
    %2601 = vmatprep.subr.mxu0 0.0
    %2602 = vmatpush1.msra.mxu0 0.0
    %2603 = vmatprep.subr.mxu0 0.0
    %2604 = vmatpush1.msra.mxu0 0.0
    %2605 = vmatprep.subr.mxu0 0.0
    %2606 = vmatpush1.msra.mxu0 0.0
    %2607 = vmatprep.subr.mxu0 0.0
    %2608 = vmatpush1.msra.mxu0 0.0
    %2609 = vmatprep.subr.mxu0 0.0
    %2610 = vmatpush1.msra.mxu0 0.0
    %2611 = vmatprep.subr.mxu0 0.0
    %2612 = vmatpush1.msra.mxu0 0.0
    %2613 = vmatprep.subr.mxu0 0.0
    %2614 = vmatpush1.msra.mxu0 0.0
    %2615 = vmatprep.subr.mxu0 0.0
    %2616 = vmatpush1.msra.mxu0 0.0
    %2617 = vmatprep.subr.mxu0 0.0
    %2618 = vmatpush1.msra.mxu0 0.0
    %2619 = vmatprep.subr.mxu0 0.0
    %2620 = vmatpush1.msra.mxu0 0.0
    %2621 = vmatprep.subr.mxu0 0.0
    %2622 = vmatpush1.msra.mxu0 0.0
    %2623 = vmatprep.subr.mxu0 0.0
    %2624 = vmatpush1.msra.mxu0 0.0
    %2625 = vmatprep.subr.mxu0 0.0
    %2626 = vmatpush1.msra.mxu0 0.0
    %2627 = vmatprep.subr.mxu0 0.0
    %2628 = vmatpush1.msra.mxu0 0.0
    %2629 = vmatprep.subr.mxu0 0.0
    %2630 = vmatpush1.msra.mxu0 0.0
    %2631 = vmatprep.subr.mxu0 0.0
    %2632 = vmatpush1.msra.mxu0 0.0
    %2633 = vmatprep.subr.mxu0 0.0
    %2634 = vmatpush1.msra.mxu0 0.0
    %2635 = vmatprep.subr.mxu0 0.0
    %2636 = vmatpush1.msra.mxu0 0.0
    %2637 = vmatprep.subr.mxu0 0.0
    %2638 = vmatpush1.msra.mxu0 0.0
    %2639 = vmatprep.subr.mxu0 0.0
    %2640 = vmatpush1.msra.mxu0 0.0
    %2641 = vmatprep.subr.mxu0 0.0
    %2642 = vmatpush1.msra.mxu0 0.0
    %2643 = vmatprep.subr.mxu0 0.0
    %2644 = vmatpush1.msra.mxu0 0.0
    %2645 = vmatprep.subr.mxu0 0.0
    %2646 = vmatpush1.msra.mxu0 0.0
    %2647 = vmatprep.subr.mxu0 0.0
    %2648 = vmatpush1.msra.mxu0 0.0
    %2649 = vmatprep.subr.mxu0 0.0
    %2650 = vmatpush1.msra.mxu0 0.0
    %2651 = vmatprep.mubr.f32.mxu0 0.0
    %2652 = vmatmul.mubr.f32.gmra.mrb[0].mxu0 %v2585
    %v2653 = vpop.f32.mrb[0].mxu0
    %v2654 = vadd.f32 %v2582, %v2653
    %v2655 = vpop.f32.mrb[0].mxu0
    %2656 = vdwg.mxu0
    %s2657 = scalar_lea.vmem %s8, 32
    %v2658 = vld [vmem:[%s2657] sm:$0xff]
    %v2659 = vld [vmem:[%s2657 + $0x8] sm:$0xff]
    %v2660 = vld [vmem:[%s2657 + $0x10] sm:$0xff]
    %v2661 = vld [vmem:[%s2657 + $0x18] sm:$0xff]
    %s2662 = scalar_lea.vmem %s9, 1
    %v2663 = vld [vmem:[%s2662] sm:$0x1]
    %2665 = vrot.lane.b32.xlu0 %v2567, 96
    %v2666 = vpop.permute.xlu0 %2665
    %v2668 = vsel %vm414, %v2570, 0
    %v2670 = vsel %vm414, %v2666, 0
    %2672 = vmatprep.subr.mxu0 0.0
    %2673 = vmatpush1.xpose.msra.mxu0 %v2670
    %2674 = vmatprep.subr.mxu0 0.0
    %2675 = vmatpush1.xpose.msra.mxu0 0.0
    %2676 = vmatprep.subr.mxu0 0.0
    %2677 = vmatpush1.xpose.msra.mxu0 0.0
    %2678 = vmatprep.subr.mxu0 0.0
    %2679 = vmatpush1.xpose.msra.mxu0 0.0
    %2680 = vmatprep.subr.mxu0 0.0
    %2681 = vmatpush1.xpose.msra.mxu0 0.0
    %2682 = vmatprep.subr.mxu0 0.0
    %2683 = vmatpush1.xpose.msra.mxu0 0.0
    %2684 = vmatprep.subr.mxu0 0.0
    %2685 = vmatpush1.xpose.msra.mxu0 0.0
    %2686 = vmatprep.subr.mxu0 0.0
    %2687 = vmatpush1.xpose.msra.mxu0 0.0
    %2688 = vmatprep.subr.mxu0 0.0
    %2689 = vmatpush1.xpose.msra.mxu0 0.0
    %2690 = vmatprep.subr.mxu0 0.0
    %2691 = vmatpush1.xpose.msra.mxu0 0.0
    %2692 = vmatprep.subr.mxu0 0.0
    %2693 = vmatpush1.xpose.msra.mxu0 0.0
    %2694 = vmatprep.subr.mxu0 0.0
    %2695 = vmatpush1.xpose.msra.mxu0 0.0
    %2696 = vmatprep.subr.mxu0 0.0
    %2697 = vmatpush1.xpose.msra.mxu0 0.0
    %2698 = vmatprep.subr.mxu0 0.0
    %2699 = vmatpush1.xpose.msra.mxu0 0.0
    %2700 = vmatprep.subr.mxu0 0.0
    %2701 = vmatpush1.xpose.msra.mxu0 0.0
    %2702 = vmatprep.subr.mxu0 0.0
    %2703 = vmatpush1.xpose.msra.mxu0 0.0
    %2704 = vmatprep.subr.mxu0 0.0
    %2705 = vmatpush1.xpose.msra.mxu0 0.0
    %2706 = vmatprep.subr.mxu0 0.0
    %2707 = vmatpush1.xpose.msra.mxu0 0.0
    %2708 = vmatprep.subr.mxu0 0.0
    %2709 = vmatpush1.xpose.msra.mxu0 0.0
    %2710 = vmatprep.subr.mxu0 0.0
    %2711 = vmatpush1.xpose.msra.mxu0 0.0
    %2712 = vmatprep.subr.mxu0 0.0
    %2713 = vmatpush1.xpose.msra.mxu0 0.0
    %2714 = vmatprep.subr.mxu0 0.0
    %2715 = vmatpush1.xpose.msra.mxu0 0.0
    %2716 = vmatprep.subr.mxu0 0.0
    %2717 = vmatpush1.xpose.msra.mxu0 0.0
    %2718 = vmatprep.subr.mxu0 0.0
    %2719 = vmatpush1.xpose.msra.mxu0 0.0
    %2720 = vmatprep.subr.mxu0 0.0
    %2721 = vmatpush1.xpose.msra.mxu0 0.0
    %2722 = vmatprep.subr.mxu0 0.0
    %2723 = vmatpush1.xpose.msra.mxu0 0.0
    %2724 = vmatprep.subr.mxu0 0.0
    %2725 = vmatpush1.xpose.msra.mxu0 0.0
    %2726 = vmatprep.subr.mxu0 0.0
    %2727 = vmatpush1.xpose.msra.mxu0 0.0
    %2728 = vmatprep.subr.mxu0 0.0
    %2729 = vmatpush1.xpose.msra.mxu0 0.0
    %2730 = vmatprep.subr.mxu0 0.0
    %2731 = vmatpush1.xpose.msra.mxu0 0.0
    %2732 = vmatprep.subr.mxu0 0.0
    %2733 = vmatpush1.xpose.msra.mxu0 0.0
    %2734 = vmatprep.subr.mxu0 0.0
    %2735 = vmatpush1.xpose.msra.mxu0 0.0
    %2736 = vmatprep.mubr.f32.mxu0 0.0
    %2737 = vmatmul.mubr.f32.gmra.mrb[0].mxu0 %v2668
    %v2738 = vpop.f32.mrb[0].mxu0
    %v2739 = vadd.f32 0.0, %v2738
    %v2740 = vpop.f32.mrb[0].mxu0
    %2741 = vdwg.mxu0
    %v2742 = vsel %vm414, %v2739, -inf
    %2743 = vmax.xlane.f32.xlu0 %v2742
    %v2744 = vpop.xlane.xlu0 %2743
    %v2745 = vsub.f32 %v2739, %v2744
    %v2746 = vmul.f32 %v2745, 1.442695
    %v2747 = vpow.pop %v2746
    %v2748 = vsel %vm414, %v2747, 0.0
    %2749 = vadd.xlane.f32.xlu0 %v2748
    %v2750 = vpop.xlane.xlu0 %2749
    %v2751 = vrcp.pop %v2750
    %v2752 = vmul.f32 %v2747, %v2751
    %v2754 = vsel %vm414, %v2752, 0
    %2756 = vmatprep.subr.mxu0 0.0
    %2757 = vmatpush1.msra.mxu0 %v2654
    %2758 = vmatprep.subr.mxu0 0.0
    %2759 = vmatpush1.msra.mxu0 0.0
    %2760 = vmatprep.subr.mxu0 0.0
    %2761 = vmatpush1.msra.mxu0 0.0
    %2762 = vmatprep.subr.mxu0 0.0
    %2763 = vmatpush1.msra.mxu0 0.0
    %2764 = vmatprep.subr.mxu0 0.0
    %2765 = vmatpush1.msra.mxu0 0.0
    %2766 = vmatprep.subr.mxu0 0.0
    %2767 = vmatpush1.msra.mxu0 0.0
    %2768 = vmatprep.subr.mxu0 0.0
    %2769 = vmatpush1.msra.mxu0 0.0
    %2770 = vmatprep.subr.mxu0 0.0
    %2771 = vmatpush1.msra.mxu0 0.0
    %2772 = vmatprep.subr.mxu0 0.0
    %2773 = vmatpush1.msra.mxu0 0.0
    %2774 = vmatprep.subr.mxu0 0.0
    %2775 = vmatpush1.msra.mxu0 0.0
    %2776 = vmatprep.subr.mxu0 0.0
    %2777 = vmatpush1.msra.mxu0 0.0
    %2778 = vmatprep.subr.mxu0 0.0
    %2779 = vmatpush1.msra.mxu0 0.0
    %2780 = vmatprep.subr.mxu0 0.0
    %2781 = vmatpush1.msra.mxu0 0.0
    %2782 = vmatprep.subr.mxu0 0.0
    %2783 = vmatpush1.msra.mxu0 0.0
    %2784 = vmatprep.subr.mxu0 0.0
    %2785 = vmatpush1.msra.mxu0 0.0
    %2786 = vmatprep.subr.mxu0 0.0
    %2787 = vmatpush1.msra.mxu0 0.0
    %2788 = vmatprep.subr.mxu0 0.0
    %2789 = vmatpush1.msra.mxu0 0.0
    %2790 = vmatprep.subr.mxu0 0.0
    %2791 = vmatpush1.msra.mxu0 0.0
    %2792 = vmatprep.subr.mxu0 0.0
    %2793 = vmatpush1.msra.mxu0 0.0
    %2794 = vmatprep.subr.mxu0 0.0
    %2795 = vmatpush1.msra.mxu0 0.0
    %2796 = vmatprep.subr.mxu0 0.0
    %2797 = vmatpush1.msra.mxu0 0.0
    %2798 = vmatprep.subr.mxu0 0.0
    %2799 = vmatpush1.msra.mxu0 0.0
    %2800 = vmatprep.subr.mxu0 0.0
    %2801 = vmatpush1.msra.mxu0 0.0
    %2802 = vmatprep.subr.mxu0 0.0
    %2803 = vmatpush1.msra.mxu0 0.0
    %2804 = vmatprep.subr.mxu0 0.0
    %2805 = vmatpush1.msra.mxu0 0.0
    %2806 = vmatprep.subr.mxu0 0.0
    %2807 = vmatpush1.msra.mxu0 0.0
    %2808 = vmatprep.subr.mxu0 0.0
    %2809 = vmatpush1.msra.mxu0 0.0
    %2810 = vmatprep.subr.mxu0 0.0
    %2811 = vmatpush1.msra.mxu0 0.0
    %2812 = vmatprep.subr.mxu0 0.0
    %2813 = vmatpush1.msra.mxu0 0.0
    %2814 = vmatprep.subr.mxu0 0.0
    %2815 = vmatpush1.msra.mxu0 0.0
    %2816 = vmatprep.subr.mxu0 0.0
    %2817 = vmatpush1.msra.mxu0 0.0
    %2818 = vmatprep.subr.mxu0 0.0
    %2819 = vmatpush1.msra.mxu0 0.0
    %2820 = vmatprep.mubr.f32.mxu0 0.0
    %2821 = vmatmul.mubr.f32.gmra.mrb[0].mxu0 %v2754
    %v2822 = vpop.f32.mrb[0].mxu0
    %v2823 = vadd.f32 0.0, %v2822
    %v2824 = vpop.f32.mrb[0].mxu0
    %2825 = vdwg.mxu0
    %2826 = vrot.lane.b32.xlu0 %v2570, 120
    %v2827 = vpop.permute.xlu0 %2826
    %2828 = vrot.lane.b32.xlu0 %v2567, 88
    %v2829 = vpop.permute.xlu0 %2828
    %v2830 = vsel %vm414, %v2827, 0
    %v2832 = vsel %vm414, %v2829, 0
    %2834 = vmatprep.subr.mxu0 0.0
    %2835 = vmatpush1.xpose.msra.mxu0 %v2832
    %2836 = vmatprep.subr.mxu0 0.0
    %2837 = vmatpush1.xpose.msra.mxu0 0.0
    %2838 = vmatprep.subr.mxu0 0.0
    %2839 = vmatpush1.xpose.msra.mxu0 0.0
    %2840 = vmatprep.subr.mxu0 0.0
    %2841 = vmatpush1.xpose.msra.mxu0 0.0
    %2842 = vmatprep.subr.mxu0 0.0
    %2843 = vmatpush1.xpose.msra.mxu0 0.0
    %2844 = vmatprep.subr.mxu0 0.0
    %2845 = vmatpush1.xpose.msra.mxu0 0.0
    %2846 = vmatprep.subr.mxu0 0.0
    %2847 = vmatpush1.xpose.msra.mxu0 0.0
    %2848 = vmatprep.subr.mxu0 0.0
    %2849 = vmatpush1.xpose.msra.mxu0 0.0
    %2850 = vmatprep.subr.mxu0 0.0
    %2851 = vmatpush1.xpose.msra.mxu0 0.0
    %2852 = vmatprep.subr.mxu0 0.0
    %2853 = vmatpush1.xpose.msra.mxu0 0.0
    %2854 = vmatprep.subr.mxu0 0.0
    %2855 = vmatpush1.xpose.msra.mxu0 0.0
    %2856 = vmatprep.subr.mxu0 0.0
    %2857 = vmatpush1.xpose.msra.mxu0 0.0
    %2858 = vmatprep.subr.mxu0 0.0
    %2859 = vmatpush1.xpose.msra.mxu0 0.0
    %2860 = vmatprep.subr.mxu0 0.0
    %2861 = vmatpush1.xpose.msra.mxu0 0.0
    %2862 = vmatprep.subr.mxu0 0.0
    %2863 = vmatpush1.xpose.msra.mxu0 0.0
    %2864 = vmatprep.subr.mxu0 0.0
    %2865 = vmatpush1.xpose.msra.mxu0 0.0
    %2866 = vmatprep.subr.mxu0 0.0
    %2867 = vmatpush1.xpose.msra.mxu0 0.0
    %2868 = vmatprep.subr.mxu0 0.0
    %2869 = vmatpush1.xpose.msra.mxu0 0.0
    %2870 = vmatprep.subr.mxu0 0.0
    %2871 = vmatpush1.xpose.msra.mxu0 0.0
    %2872 = vmatprep.subr.mxu0 0.0
    %2873 = vmatpush1.xpose.msra.mxu0 0.0
    %2874 = vmatprep.subr.mxu0 0.0
    %2875 = vmatpush1.xpose.msra.mxu0 0.0
    %2876 = vmatprep.subr.mxu0 0.0
    %2877 = vmatpush1.xpose.msra.mxu0 0.0
    %2878 = vmatprep.subr.mxu0 0.0
    %2879 = vmatpush1.xpose.msra.mxu0 0.0
    %2880 = vmatprep.subr.mxu0 0.0
    %2881 = vmatpush1.xpose.msra.mxu0 0.0
    %2882 = vmatprep.subr.mxu0 0.0
    %2883 = vmatpush1.xpose.msra.mxu0 0.0
    %2884 = vmatprep.subr.mxu0 0.0
    %2885 = vmatpush1.xpose.msra.mxu0 0.0
    %2886 = vmatprep.subr.mxu0 0.0
    %2887 = vmatpush1.xpose.msra.mxu0 0.0
    %2888 = vmatprep.subr.mxu0 0.0
    %2889 = vmatpush1.xpose.msra.mxu0 0.0
    %2890 = vmatprep.subr.mxu0 0.0
    %2891 = vmatpush1.xpose.msra.mxu0 0.0
    %2892 = vmatprep.subr.mxu0 0.0
    %2893 = vmatpush1.xpose.msra.mxu0 0.0
    %2894 = vmatprep.subr.mxu0 0.0
    %2895 = vmatpush1.xpose.msra.mxu0 0.0
    %2896 = vmatprep.subr.mxu0 0.0
    %2897 = vmatpush1.xpose.msra.mxu0 0.0
    %2898 = vmatprep.mubr.f32.mxu0 0.0
    %2899 = vmatmul.mubr.f32.gmra.mrb[0].mxu0 %v2830
    %v2900 = vpop.f32.mrb[0].mxu0
    %v2901 = vadd.f32 0.0, %v2900
    %v2902 = vpop.f32.mrb[0].mxu0
    %2903 = vdwg.mxu0
    %v2904 = vsel %vm414, %v2901, -inf
    %2905 = vmax.xlane.f32.xlu0 %v2904
    %v2906 = vpop.xlane.xlu0 %2905
    %v2907 = vsub.f32 %v2901, %v2906
    %v2908 = vmul.f32 %v2907, 1.442695
    %v2909 = vpow.pop %v2908
    %v2910 = vsel %vm414, %v2909, 0.0
    %2911 = vadd.xlane.f32.xlu0 %v2910
    %v2912 = vpop.xlane.xlu0 %2911
    %v2913 = vrcp.pop %v2912
    %v2914 = vmul.f32 %v2909, %v2913
    %2916 = vrot.lane.b32.xlu0 %v2654, 120
    %v2917 = vpop.permute.xlu0 %2916
    %v2920 = vsel %vm414, %v2914, 0
    %2922 = vmatprep.subr.mxu0 0.0
    %2923 = vmatpush1.msra.mxu0 %v2917
    %2924 = vmatprep.subr.mxu0 0.0
    %2925 = vmatpush1.msra.mxu0 0.0
    %2926 = vmatprep.subr.mxu0 0.0
    %2927 = vmatpush1.msra.mxu0 0.0
    %2928 = vmatprep.subr.mxu0 0.0
    %2929 = vmatpush1.msra.mxu0 0.0
    %2930 = vmatprep.subr.mxu0 0.0
    %2931 = vmatpush1.msra.mxu0 0.0
    %2932 = vmatprep.subr.mxu0 0.0
    %2933 = vmatpush1.msra.mxu0 0.0
    %2934 = vmatprep.subr.mxu0 0.0
    %2935 = vmatpush1.msra.mxu0 0.0
    %2936 = vmatprep.subr.mxu0 0.0
    %2937 = vmatpush1.msra.mxu0 0.0
    %2938 = vmatprep.subr.mxu0 0.0
    %2939 = vmatpush1.msra.mxu0 0.0
    %2940 = vmatprep.subr.mxu0 0.0
    %2941 = vmatpush1.msra.mxu0 0.0
    %2942 = vmatprep.subr.mxu0 0.0
    %2943 = vmatpush1.msra.mxu0 0.0
    %2944 = vmatprep.subr.mxu0 0.0
    %2945 = vmatpush1.msra.mxu0 0.0
    %2946 = vmatprep.subr.mxu0 0.0
    %2947 = vmatpush1.msra.mxu0 0.0
    %2948 = vmatprep.subr.mxu0 0.0
    %2949 = vmatpush1.msra.mxu0 0.0
    %2950 = vmatprep.subr.mxu0 0.0
    %2951 = vmatpush1.msra.mxu0 0.0
    %2952 = vmatprep.subr.mxu0 0.0
    %2953 = vmatpush1.msra.mxu0 0.0
    %2954 = vmatprep.subr.mxu0 0.0
    %2955 = vmatpush1.msra.mxu0 0.0
    %2956 = vmatprep.subr.mxu0 0.0
    %2957 = vmatpush1.msra.mxu0 0.0
    %2958 = vmatprep.subr.mxu0 0.0
    %2959 = vmatpush1.msra.mxu0 0.0
    %2960 = vmatprep.subr.mxu0 0.0
    %2961 = vmatpush1.msra.mxu0 0.0
    %2962 = vmatprep.subr.mxu0 0.0
    %2963 = vmatpush1.msra.mxu0 0.0
    %2964 = vmatprep.subr.mxu0 0.0
    %2965 = vmatpush1.msra.mxu0 0.0
    %2966 = vmatprep.subr.mxu0 0.0
    %2967 = vmatpush1.msra.mxu0 0.0
    %2968 = vmatprep.subr.mxu0 0.0
    %2969 = vmatpush1.msra.mxu0 0.0
    %2970 = vmatprep.subr.mxu0 0.0
    %2971 = vmatpush1.msra.mxu0 0.0
    %2972 = vmatprep.subr.mxu0 0.0
    %2973 = vmatpush1.msra.mxu0 0.0
    %2974 = vmatprep.subr.mxu0 0.0
    %2975 = vmatpush1.msra.mxu0 0.0
    %2976 = vmatprep.subr.mxu0 0.0
    %2977 = vmatpush1.msra.mxu0 0.0
    %2978 = vmatprep.subr.mxu0 0.0
    %2979 = vmatpush1.msra.mxu0 0.0
    %2980 = vmatprep.subr.mxu0 0.0
    %2981 = vmatpush1.msra.mxu0 0.0
    %2982 = vmatprep.subr.mxu0 0.0
    %2983 = vmatpush1.msra.mxu0 0.0
    %2984 = vmatprep.subr.mxu0 0.0
    %2985 = vmatpush1.msra.mxu0 0.0
    %2986 = vmatprep.mubr.f32.mxu0 0.0
    %2987 = vmatmul.mubr.f32.gmra.mrb[0].mxu0 %v2920
    %v2988 = vpop.f32.mrb[0].mxu0
    %v2989 = vadd.f32 0.0, %v2988
    %v2990 = vpop.f32.mrb[0].mxu0
    %2991 = vdwg.mxu0
    %2992 = vrot.lane.b32.xlu0 %v2570, 112
    %v2993 = vpop.permute.xlu0 %2992
    %2994 = vrot.lane.b32.xlu0 %v2567, 80
    %v2995 = vpop.permute.xlu0 %2994
    %v2996 = vsel %vm414, %v2993, 0
    %v2998 = vsel %vm414, %v2995, 0
    %3000 = vmatprep.subr.mxu0 0.0
    %3001 = vmatpush1.xpose.msra.mxu0 %v2998
    %3002 = vmatprep.subr.mxu0 0.0
    %3003 = vmatpush1.xpose.msra.mxu0 0.0
    %3004 = vmatprep.subr.mxu0 0.0
    %3005 = vmatpush1.xpose.msra.mxu0 0.0
    %3006 = vmatprep.subr.mxu0 0.0
    %3007 = vmatpush1.xpose.msra.mxu0 0.0
    %3008 = vmatprep.subr.mxu0 0.0
    %3009 = vmatpush1.xpose.msra.mxu0 0.0
    %3010 = vmatprep.subr.mxu0 0.0
    %3011 = vmatpush1.xpose.msra.mxu0 0.0
    %3012 = vmatprep.subr.mxu0 0.0
    %3013 = vmatpush1.xpose.msra.mxu0 0.0
    %3014 = vmatprep.subr.mxu0 0.0
    %3015 = vmatpush1.xpose.msra.mxu0 0.0
    %3016 = vmatprep.subr.mxu0 0.0
    %3017 = vmatpush1.xpose.msra.mxu0 0.0
    %3018 = vmatprep.subr.mxu0 0.0
    %3019 = vmatpush1.xpose.msra.mxu0 0.0
    %3020 = vmatprep.subr.mxu0 0.0
    %3021 = vmatpush1.xpose.msra.mxu0 0.0
    %3022 = vmatprep.subr.mxu0 0.0
    %3023 = vmatpush1.xpose.msra.mxu0 0.0
    %3024 = vmatprep.subr.mxu0 0.0
    %3025 = vmatpush1.xpose.msra.mxu0 0.0
    %3026 = vmatprep.subr.mxu0 0.0
    %3027 = vmatpush1.xpose.msra.mxu0 0.0
    %3028 = vmatprep.subr.mxu0 0.0
    %3029 = vmatpush1.xpose.msra.mxu0 0.0
    %3030 = vmatprep.subr.mxu0 0.0
    %3031 = vmatpush1.xpose.msra.mxu0 0.0
    %3032 = vmatprep.subr.mxu0 0.0
    %3033 = vmatpush1.xpose.msra.mxu0 0.0
    %3034 = vmatprep.subr.mxu0 0.0
    %3035 = vmatpush1.xpose.msra.mxu0 0.0
    %3036 = vmatprep.subr.mxu0 0.0
    %3037 = vmatpush1.xpose.msra.mxu0 0.0
    %3038 = vmatprep.subr.mxu0 0.0
    %3039 = vmatpush1.xpose.msra.mxu0 0.0
    %3040 = vmatprep.subr.mxu0 0.0
    %3041 = vmatpush1.xpose.msra.mxu0 0.0
    %3042 = vmatprep.subr.mxu0 0.0
    %3043 = vmatpush1.xpose.msra.mxu0 0.0
    %3044 = vmatprep.subr.mxu0 0.0
    %3045 = vmatpush1.xpose.msra.mxu0 0.0
    %3046 = vmatprep.subr.mxu0 0.0
    %3047 = vmatpush1.xpose.msra.mxu0 0.0
    %3048 = vmatprep.subr.mxu0 0.0
    %3049 = vmatpush1.xpose.msra.mxu0 0.0
    %3050 = vmatprep.subr.mxu0 0.0
    %3051 = vmatpush1.xpose.msra.mxu0 0.0
    %3052 = vmatprep.subr.mxu0 0.0
    %3053 = vmatpush1.xpose.msra.mxu0 0.0
    %3054 = vmatprep.subr.mxu0 0.0
    %3055 = vmatpush1.xpose.msra.mxu0 0.0
    %3056 = vmatprep.subr.mxu0 0.0
    %3057 = vmatpush1.xpose.msra.mxu0 0.0
    %3058 = vmatprep.subr.mxu0 0.0
    %3059 = vmatpush1.xpose.msra.mxu0 0.0
    %3060 = vmatprep.subr.mxu0 0.0
    %3061 = vmatpush1.xpose.msra.mxu0 0.0
    %3062 = vmatprep.subr.mxu0 0.0
    %3063 = vmatpush1.xpose.msra.mxu0 0.0
    %3064 = vmatprep.mubr.f32.mxu0 0.0
    %3065 = vmatmul.mubr.f32.gmra.mrb[0].mxu0 %v2996
    %v3066 = vpop.f32.mrb[0].mxu0
    %v3067 = vadd.f32 0.0, %v3066
    %v3068 = vpop.f32.mrb[0].mxu0
    %3069 = vdwg.mxu0
    %v3070 = vsel %vm414, %v3067, -inf
    %3071 = vmax.xlane.f32.xlu0 %v3070
    %v3072 = vpop.xlane.xlu0 %3071
    %v3073 = vsub.f32 %v3067, %v3072
    %v3074 = vmul.f32 %v3073, 1.442695
    %v3075 = vpow.pop %v3074
    %v3076 = vsel %vm414, %v3075, 0.0
    %3077 = vadd.xlane.f32.xlu0 %v3076
    %v3078 = vpop.xlane.xlu0 %3077
    %v3079 = vrcp.pop %v3078
    %v3080 = vmul.f32 %v3075, %v3079
    %3081 = vrot.lane.b32.xlu0 %v2654, 112
    %v3082 = vpop.permute.xlu0 %3081
    %v3085 = vsel %vm414, %v3080, 0
    %3087 = vmatprep.subr.mxu0 0.0
    %3088 = vmatpush1.msra.mxu0 %v3082
    %3089 = vmatprep.subr.mxu0 0.0
    %3090 = vmatpush1.msra.mxu0 0.0
    %3091 = vmatprep.subr.mxu0 0.0
    %3092 = vmatpush1.msra.mxu0 0.0
    %3093 = vmatprep.subr.mxu0 0.0
    %3094 = vmatpush1.msra.mxu0 0.0
    %3095 = vmatprep.subr.mxu0 0.0
    %3096 = vmatpush1.msra.mxu0 0.0
    %3097 = vmatprep.subr.mxu0 0.0
    %3098 = vmatpush1.msra.mxu0 0.0
    %3099 = vmatprep.subr.mxu0 0.0
    %3100 = vmatpush1.msra.mxu0 0.0
    %3101 = vmatprep.subr.mxu0 0.0
    %3102 = vmatpush1.msra.mxu0 0.0
    %3103 = vmatprep.subr.mxu0 0.0
    %3104 = vmatpush1.msra.mxu0 0.0
    %3105 = vmatprep.subr.mxu0 0.0
    %3106 = vmatpush1.msra.mxu0 0.0
    %3107 = vmatprep.subr.mxu0 0.0
    %3108 = vmatpush1.msra.mxu0 0.0
    %3109 = vmatprep.subr.mxu0 0.0
    %3110 = vmatpush1.msra.mxu0 0.0
    %3111 = vmatprep.subr.mxu0 0.0
    %3112 = vmatpush1.msra.mxu0 0.0
    %3113 = vmatprep.subr.mxu0 0.0
    %3114 = vmatpush1.msra.mxu0 0.0
    %3115 = vmatprep.subr.mxu0 0.0
    %3116 = vmatpush1.msra.mxu0 0.0
    %3117 = vmatprep.subr.mxu0 0.0
    %3118 = vmatpush1.msra.mxu0 0.0
    %3119 = vmatprep.subr.mxu0 0.0
    %3120 = vmatpush1.msra.mxu0 0.0
    %3121 = vmatprep.subr.mxu0 0.0
    %3122 = vmatpush1.msra.mxu0 0.0
    %3123 = vmatprep.subr.mxu0 0.0
    %3124 = vmatpush1.msra.mxu0 0.0
    %3125 = vmatprep.subr.mxu0 0.0
    %3126 = vmatpush1.msra.mxu0 0.0
    %3127 = vmatprep.subr.mxu0 0.0
    %3128 = vmatpush1.msra.mxu0 0.0
    %3129 = vmatprep.subr.mxu0 0.0
    %3130 = vmatpush1.msra.mxu0 0.0
    %3131 = vmatprep.subr.mxu0 0.0
    %3132 = vmatpush1.msra.mxu0 0.0
    %3133 = vmatprep.subr.mxu0 0.0
    %3134 = vmatpush1.msra.mxu0 0.0
    %3135 = vmatprep.subr.mxu0 0.0
    %3136 = vmatpush1.msra.mxu0 0.0
    %3137 = vmatprep.subr.mxu0 0.0
    %3138 = vmatpush1.msra.mxu0 0.0
    %3139 = vmatprep.subr.mxu0 0.0
    %3140 = vmatpush1.msra.mxu0 0.0
    %3141 = vmatprep.subr.mxu0 0.0
    %3142 = vmatpush1.msra.mxu0 0.0
    %3143 = vmatprep.subr.mxu0 0.0
    %3144 = vmatpush1.msra.mxu0 0.0
    %3145 = vmatprep.subr.mxu0 0.0
    %3146 = vmatpush1.msra.mxu0 0.0
    %3147 = vmatprep.subr.mxu0 0.0
    %3148 = vmatpush1.msra.mxu0 0.0
    %3149 = vmatprep.subr.mxu0 0.0
    %3150 = vmatpush1.msra.mxu0 0.0
    %3151 = vmatprep.mubr.f32.mxu0 0.0
    %3152 = vmatmul.mubr.f32.gmra.mrb[0].mxu0 %v3085
    %v3153 = vpop.f32.mrb[0].mxu0
    %v3154 = vadd.f32 0.0, %v3153
    %v3155 = vpop.f32.mrb[0].mxu0
    %3156 = vdwg.mxu0
    %3157 = vrot.lane.b32.xlu0 %v2570, 104
    %v3158 = vpop.permute.xlu0 %3157
    %3159 = vrot.lane.b32.xlu0 %v2567, 72
    %v3160 = vpop.permute.xlu0 %3159
    %v3161 = vsel %vm414, %v3158, 0
    %v3163 = vsel %vm414, %v3160, 0
    %3165 = vmatprep.subr.mxu0 0.0
    %3166 = vmatpush1.xpose.msra.mxu0 %v3163
    %3167 = vmatprep.subr.mxu0 0.0
    %3168 = vmatpush1.xpose.msra.mxu0 0.0
    %3169 = vmatprep.subr.mxu0 0.0
    %3170 = vmatpush1.xpose.msra.mxu0 0.0
    %3171 = vmatprep.subr.mxu0 0.0
    %3172 = vmatpush1.xpose.msra.mxu0 0.0
    %3173 = vmatprep.subr.mxu0 0.0
    %3174 = vmatpush1.xpose.msra.mxu0 0.0
    %3175 = vmatprep.subr.mxu0 0.0
    %3176 = vmatpush1.xpose.msra.mxu0 0.0
    %3177 = vmatprep.subr.mxu0 0.0
    %3178 = vmatpush1.xpose.msra.mxu0 0.0
    %3179 = vmatprep.subr.mxu0 0.0
    %3180 = vmatpush1.xpose.msra.mxu0 0.0
    %3181 = vmatprep.subr.mxu0 0.0
    %3182 = vmatpush1.xpose.msra.mxu0 0.0
    %3183 = vmatprep.subr.mxu0 0.0
    %3184 = vmatpush1.xpose.msra.mxu0 0.0
    %3185 = vmatprep.subr.mxu0 0.0
    %3186 = vmatpush1.xpose.msra.mxu0 0.0
    %3187 = vmatprep.subr.mxu0 0.0
    %3188 = vmatpush1.xpose.msra.mxu0 0.0
    %3189 = vmatprep.subr.mxu0 0.0
    %3190 = vmatpush1.xpose.msra.mxu0 0.0
    %3191 = vmatprep.subr.mxu0 0.0
    %3192 = vmatpush1.xpose.msra.mxu0 0.0
    %3193 = vmatprep.subr.mxu0 0.0
    %3194 = vmatpush1.xpose.msra.mxu0 0.0
    %3195 = vmatprep.subr.mxu0 0.0
    %3196 = vmatpush1.xpose.msra.mxu0 0.0
    %3197 = vmatprep.subr.mxu0 0.0
    %3198 = vmatpush1.xpose.msra.mxu0 0.0
    %3199 = vmatprep.subr.mxu0 0.0
    %3200 = vmatpush1.xpose.msra.mxu0 0.0
    %3201 = vmatprep.subr.mxu0 0.0
    %3202 = vmatpush1.xpose.msra.mxu0 0.0
    %3203 = vmatprep.subr.mxu0 0.0
    %3204 = vmatpush1.xpose.msra.mxu0 0.0
    %3205 = vmatprep.subr.mxu0 0.0
    %3206 = vmatpush1.xpose.msra.mxu0 0.0
    %3207 = vmatprep.subr.mxu0 0.0
    %3208 = vmatpush1.xpose.msra.mxu0 0.0
    %3209 = vmatprep.subr.mxu0 0.0
    %3210 = vmatpush1.xpose.msra.mxu0 0.0
    %3211 = vmatprep.subr.mxu0 0.0
    %3212 = vmatpush1.xpose.msra.mxu0 0.0
    %3213 = vmatprep.subr.mxu0 0.0
    %3214 = vmatpush1.xpose.msra.mxu0 0.0
    %3215 = vmatprep.subr.mxu0 0.0
    %3216 = vmatpush1.xpose.msra.mxu0 0.0
    %3217 = vmatprep.subr.mxu0 0.0
    %3218 = vmatpush1.xpose.msra.mxu0 0.0
    %3219 = vmatprep.subr.mxu0 0.0
    %3220 = vmatpush1.xpose.msra.mxu0 0.0
    %3221 = vmatprep.subr.mxu0 0.0
    %3222 = vmatpush1.xpose.msra.mxu0 0.0
    %3223 = vmatprep.subr.mxu0 0.0
    %3224 = vmatpush1.xpose.msra.mxu0 0.0
    %3225 = vmatprep.subr.mxu0 0.0
    %3226 = vmatpush1.xpose.msra.mxu0 0.0
    %3227 = vmatprep.subr.mxu0 0.0
    %3228 = vmatpush1.xpose.msra.mxu0 0.0
    %3229 = vmatprep.mubr.f32.mxu0 0.0
    %3230 = vmatmul.mubr.f32.gmra.mrb[0].mxu0 %v3161
    %v3231 = vpop.f32.mrb[0].mxu0
    %v3232 = vadd.f32 0.0, %v3231
    %v3233 = vpop.f32.mrb[0].mxu0
    %3234 = vdwg.mxu0
    %v3235 = vsel %vm414, %v3232, -inf
    %3236 = vmax.xlane.f32.xlu0 %v3235
    %v3237 = vpop.xlane.xlu0 %3236
    %v3238 = vsub.f32 %v3232, %v3237
    %v3239 = vmul.f32 %v3238, 1.442695
    %v3240 = vpow.pop %v3239
    %v3241 = vsel %vm414, %v3240, 0.0
    %3242 = vadd.xlane.f32.xlu0 %v3241
    %v3243 = vpop.xlane.xlu0 %3242
    %v3244 = vrcp.pop %v3243
    %v3245 = vmul.f32 %v3240, %v3244
    %3246 = vrot.lane.b32.xlu0 %v2654, 104
    %v3247 = vpop.permute.xlu0 %3246
    %v3250 = vsel %vm414, %v3245, 0
    %3252 = vmatprep.subr.mxu0 0.0
    %3253 = vmatpush1.msra.mxu0 %v3247
    %3254 = vmatprep.subr.mxu0 0.0
    %3255 = vmatpush1.msra.mxu0 0.0
    %3256 = vmatprep.subr.mxu0 0.0
    %3257 = vmatpush1.msra.mxu0 0.0
    %3258 = vmatprep.subr.mxu0 0.0
    %3259 = vmatpush1.msra.mxu0 0.0
    %3260 = vmatprep.subr.mxu0 0.0
    %3261 = vmatpush1.msra.mxu0 0.0
    %3262 = vmatprep.subr.mxu0 0.0
    %3263 = vmatpush1.msra.mxu0 0.0
    %3264 = vmatprep.subr.mxu0 0.0
    %3265 = vmatpush1.msra.mxu0 0.0
    %3266 = vmatprep.subr.mxu0 0.0
    %3267 = vmatpush1.msra.mxu0 0.0
    %3268 = vmatprep.subr.mxu0 0.0
    %3269 = vmatpush1.msra.mxu0 0.0
    %3270 = vmatprep.subr.mxu0 0.0
    %3271 = vmatpush1.msra.mxu0 0.0
    %3272 = vmatprep.subr.mxu0 0.0
    %3273 = vmatpush1.msra.mxu0 0.0
    %3274 = vmatprep.subr.mxu0 0.0
    %3275 = vmatpush1.msra.mxu0 0.0
    %3276 = vmatprep.subr.mxu0 0.0
    %3277 = vmatpush1.msra.mxu0 0.0
    %3278 = vmatprep.subr.mxu0 0.0
    %3279 = vmatpush1.msra.mxu0 0.0
    %3280 = vmatprep.subr.mxu0 0.0
    %3281 = vmatpush1.msra.mxu0 0.0
    %3282 = vmatprep.subr.mxu0 0.0
    %3283 = vmatpush1.msra.mxu0 0.0
    %3284 = vmatprep.subr.mxu0 0.0
    %3285 = vmatpush1.msra.mxu0 0.0
    %3286 = vmatprep.subr.mxu0 0.0
    %3287 = vmatpush1.msra.mxu0 0.0
    %3288 = vmatprep.subr.mxu0 0.0
    %3289 = vmatpush1.msra.mxu0 0.0
    %3290 = vmatprep.subr.mxu0 0.0
    %3291 = vmatpush1.msra.mxu0 0.0
    %3292 = vmatprep.subr.mxu0 0.0
    %3293 = vmatpush1.msra.mxu0 0.0
    %3294 = vmatprep.subr.mxu0 0.0
    %3295 = vmatpush1.msra.mxu0 0.0
    %3296 = vmatprep.subr.mxu0 0.0
    %3297 = vmatpush1.msra.mxu0 0.0
    %3298 = vmatprep.subr.mxu0 0.0
    %3299 = vmatpush1.msra.mxu0 0.0
    %3300 = vmatprep.subr.mxu0 0.0
    %3301 = vmatpush1.msra.mxu0 0.0
    %3302 = vmatprep.subr.mxu0 0.0
    %3303 = vmatpush1.msra.mxu0 0.0
    %3304 = vmatprep.subr.mxu0 0.0
    %3305 = vmatpush1.msra.mxu0 0.0
    %3306 = vmatprep.subr.mxu0 0.0
    %3307 = vmatpush1.msra.mxu0 0.0
    %3308 = vmatprep.subr.mxu0 0.0
    %3309 = vmatpush1.msra.mxu0 0.0
    %3310 = vmatprep.subr.mxu0 0.0
    %3311 = vmatpush1.msra.mxu0 0.0
    %3312 = vmatprep.subr.mxu0 0.0
    %3313 = vmatpush1.msra.mxu0 0.0
    %3314 = vmatprep.subr.mxu0 0.0
    %3315 = vmatpush1.msra.mxu0 0.0
    %3316 = vmatprep.mubr.f32.mxu0 0.0
    %3317 = vmatmul.mubr.f32.gmra.mrb[0].mxu0 %v3250
    %v3318 = vpop.f32.mrb[0].mxu0
    %v3319 = vadd.f32 0.0, %v3318
    %v3320 = vpop.f32.mrb[0].mxu0
    %3321 = vdwg.mxu0
    %3323 = vrot.lane.b32.xlu0 %v2989, 8
    %v3324 = vpop.permute.xlu0 %3323
    %3327 = vrot.lane.b32.xlu0 %v3154, 16
    %v3328 = vpop.permute.xlu0 %3327
    %3331 = vrot.lane.b32.xlu0 %v3319, 24
    %v3332 = vpop.permute.xlu0 %3331
    %v3334 = vsel %vm414, %v2823, %v3324
    %v3335 = vsel %vm1083, %v3334, %v3328
    %v3336 = vsel %vm1085, %v3335, %v3332
    %v3338 = vlaneseq
    %v3339 = vshrl.u32 %v3338, 7
    %v3340 = vsub.s32 0, %v3339
    %v3341 = vrot.slane %v2663, %v3340
    %v3344 = vsel %vm247, %v3336, 0
    %3346 = vmatprep.subr.mxu0 0.0
    %3347 = vmatpush1.msra.mxu0 %v2658
    %3348 = vmatprep.subr.mxu0 0.0
    %3349 = vmatpush1.msra.mxu0 %v2659
    %3350 = vmatprep.subr.mxu0 0.0
    %3351 = vmatpush1.msra.mxu0 %v2660
    %3352 = vmatprep.subr.mxu0 0.0
    %3353 = vmatpush1.msra.mxu0 %v2661
    %3354 = vmatprep.subr.mxu0 0.0
    %3355 = vmatpush1.msra.mxu0 0.0
    %3356 = vmatprep.subr.mxu0 0.0
    %3357 = vmatpush1.msra.mxu0 0.0
    %3358 = vmatprep.subr.mxu0 0.0
    %3359 = vmatpush1.msra.mxu0 0.0
    %3360 = vmatprep.subr.mxu0 0.0
    %3361 = vmatpush1.msra.mxu0 0.0
    %3362 = vmatprep.subr.mxu0 0.0
    %3363 = vmatpush1.msra.mxu0 0.0
    %3364 = vmatprep.subr.mxu0 0.0
    %3365 = vmatpush1.msra.mxu0 0.0
    %3366 = vmatprep.subr.mxu0 0.0
    %3367 = vmatpush1.msra.mxu0 0.0
    %3368 = vmatprep.subr.mxu0 0.0
    %3369 = vmatpush1.msra.mxu0 0.0
    %3370 = vmatprep.subr.mxu0 0.0
    %3371 = vmatpush1.msra.mxu0 0.0
    %3372 = vmatprep.subr.mxu0 0.0
    %3373 = vmatpush1.msra.mxu0 0.0
    %3374 = vmatprep.subr.mxu0 0.0
    %3375 = vmatpush1.msra.mxu0 0.0
    %3376 = vmatprep.subr.mxu0 0.0
    %3377 = vmatpush1.msra.mxu0 0.0
    %3378 = vmatprep.subr.mxu0 0.0
    %3379 = vmatpush1.msra.mxu0 0.0
    %3380 = vmatprep.subr.mxu0 0.0
    %3381 = vmatpush1.msra.mxu0 0.0
    %3382 = vmatprep.subr.mxu0 0.0
    %3383 = vmatpush1.msra.mxu0 0.0
    %3384 = vmatprep.subr.mxu0 0.0
    %3385 = vmatpush1.msra.mxu0 0.0
    %3386 = vmatprep.subr.mxu0 0.0
    %3387 = vmatpush1.msra.mxu0 0.0
    %3388 = vmatprep.subr.mxu0 0.0
    %3389 = vmatpush1.msra.mxu0 0.0
    %3390 = vmatprep.subr.mxu0 0.0
    %3391 = vmatpush1.msra.mxu0 0.0
    %3392 = vmatprep.subr.mxu0 0.0
    %3393 = vmatpush1.msra.mxu0 0.0
    %3394 = vmatprep.subr.mxu0 0.0
    %3395 = vmatpush1.msra.mxu0 0.0
    %3396 = vmatprep.subr.mxu0 0.0
    %3397 = vmatpush1.msra.mxu0 0.0
    %3398 = vmatprep.subr.mxu0 0.0
    %3399 = vmatpush1.msra.mxu0 0.0
    %3400 = vmatprep.subr.mxu0 0.0
    %3401 = vmatpush1.msra.mxu0 0.0
    %3402 = vmatprep.subr.mxu0 0.0
    %3403 = vmatpush1.msra.mxu0 0.0
    %3404 = vmatprep.subr.mxu0 0.0
    %3405 = vmatpush1.msra.mxu0 0.0
    %3406 = vmatprep.subr.mxu0 0.0
    %3407 = vmatpush1.msra.mxu0 0.0
    %3408 = vmatprep.subr.mxu0 0.0
    %3409 = vmatpush1.msra.mxu0 0.0
    %3410 = vmatprep.mubr.f32.mxu0 0.0
    %3411 = vmatmul.mubr.f32.gmra.mrb[0].mxu0 %v3344
    %v3412 = vpop.f32.mrb[0].mxu0
    %v3413 = vadd.f32 %v3341, %v3412
    %v3414 = vpop.f32.mrb[0].mxu0
    %3415 = vdwg.mxu0
    %v3416 = vadd.f32 %v2474, %v3413
    %v3417 = vsel %vm247, %v3416, 0.0
    %3418 = vadd.xlane.f32.xlu0 %v3417
    %v3419 = vpop.xlane.xlu0 %3418
    %v3420 = vmul.f32 %v3419, %v1170
    %v3421 = vsub.f32 %v3416, %v3420
    %v3422 = vmul.f32 %v3421, %v3421
    %v3423 = vsel %vm247, %v3422, 0.0
    %3424 = vadd.xlane.f32.xlu0 %v3423
    %v3425 = vpop.xlane.xlu0 %3424
    %v3426 = vmul.f32 %v3425, %v1170
    %v3427 = vadd.f32 %v3426, 1e-05
    %v3428 = vrsqrt.pop %v3427
    %v3429 = vmul.f32 %v3421, %v3428
    %v3431 = vlaneseq
    %v3432 = vshrl.u32 %v3431, 7
    %v3433 = vsub.s32 0, %v3432
    %v3434 = vrot.slane %v2476, %v3433
    %v3436 = vmul.f32 %v3429, %v3434
    %v3438 = vlaneseq
    %v3439 = vshrl.u32 %v3438, 7
    %v3440 = vsub.s32 0, %v3439
    %v3441 = vrot.slane %v2480, %v3440
    %v3443 = vadd.f32 %v3436, %v3441
    %v3444 = vadd.f32 %v3443, %v222
    %s3445 = scalar_lea.vmem %s10, 32
    %v3446 = vld [vmem:[%s3445] sm:$0xff]
    %v3447 = vld [vmem:[%s3445 + $0x8] sm:$0xff]
    %v3448 = vld [vmem:[%s3445 + $0x10] sm:$0xff]
    %v3449 = vld [vmem:[%s3445 + $0x18] sm:$0xff]
    %s3450 = scalar_lea.vmem [#allocation2], 1
    %v3451 = vld [vmem:[%s3450] sm:$0x1]
    %v3453 = vlaneseq
    %v3454 = vshrl.u32 %v3453, 7
    %v3455 = vsub.s32 0, %v3454
    %v3456 = vrot.slane %v3451, %v3455
    %v3459 = vsel %vm247, %v3444, 0
    %3461 = vmatprep.subr.mxu0 0.0
    %3462 = vmatpush1.msra.mxu0 %v3446
    %3463 = vmatprep.subr.mxu0 0.0
    %3464 = vmatpush1.msra.mxu0 %v3447
    %3465 = vmatprep.subr.mxu0 0.0
    %3466 = vmatpush1.msra.mxu0 %v3448
    %3467 = vmatprep.subr.mxu0 0.0
    %3468 = vmatpush1.msra.mxu0 %v3449
    %3469 = vmatprep.subr.mxu0 0.0
    %3470 = vmatpush1.msra.mxu0 0.0
    %3471 = vmatprep.subr.mxu0 0.0
    %3472 = vmatpush1.msra.mxu0 0.0
    %3473 = vmatprep.subr.mxu0 0.0
    %3474 = vmatpush1.msra.mxu0 0.0
    %3475 = vmatprep.subr.mxu0 0.0
    %3476 = vmatpush1.msra.mxu0 0.0
    %3477 = vmatprep.subr.mxu0 0.0
    %3478 = vmatpush1.msra.mxu0 0.0
    %3479 = vmatprep.subr.mxu0 0.0
    %3480 = vmatpush1.msra.mxu0 0.0
    %3481 = vmatprep.subr.mxu0 0.0
    %3482 = vmatpush1.msra.mxu0 0.0
    %3483 = vmatprep.subr.mxu0 0.0
    %3484 = vmatpush1.msra.mxu0 0.0
    %3485 = vmatprep.subr.mxu0 0.0
    %3486 = vmatpush1.msra.mxu0 0.0
    %3487 = vmatprep.subr.mxu0 0.0
    %3488 = vmatpush1.msra.mxu0 0.0
    %3489 = vmatprep.subr.mxu0 0.0
    %3490 = vmatpush1.msra.mxu0 0.0
    %3491 = vmatprep.subr.mxu0 0.0
    %3492 = vmatpush1.msra.mxu0 0.0
    %3493 = vmatprep.subr.mxu0 0.0
    %3494 = vmatpush1.msra.mxu0 0.0
    %3495 = vmatprep.subr.mxu0 0.0
    %3496 = vmatpush1.msra.mxu0 0.0
    %3497 = vmatprep.subr.mxu0 0.0
    %3498 = vmatpush1.msra.mxu0 0.0
    %3499 = vmatprep.subr.mxu0 0.0
    %3500 = vmatpush1.msra.mxu0 0.0
    %3501 = vmatprep.subr.mxu0 0.0
    %3502 = vmatpush1.msra.mxu0 0.0
    %3503 = vmatprep.subr.mxu0 0.0
    %3504 = vmatpush1.msra.mxu0 0.0
    %3505 = vmatprep.subr.mxu0 0.0
    %3506 = vmatpush1.msra.mxu0 0.0
    %3507 = vmatprep.subr.mxu0 0.0
    %3508 = vmatpush1.msra.mxu0 0.0
    %3509 = vmatprep.subr.mxu0 0.0
    %3510 = vmatpush1.msra.mxu0 0.0
    %3511 = vmatprep.subr.mxu0 0.0
    %3512 = vmatpush1.msra.mxu0 0.0
    %3513 = vmatprep.subr.mxu0 0.0
    %3514 = vmatpush1.msra.mxu0 0.0
    %3515 = vmatprep.subr.mxu0 0.0
    %3516 = vmatpush1.msra.mxu0 0.0
    %3517 = vmatprep.subr.mxu0 0.0
    %3518 = vmatpush1.msra.mxu0 0.0
    %3519 = vmatprep.subr.mxu0 0.0
    %3520 = vmatpush1.msra.mxu0 0.0
    %3521 = vmatprep.subr.mxu0 0.0
    %3522 = vmatpush1.msra.mxu0 0.0
    %3523 = vmatprep.subr.mxu0 0.0
    %3524 = vmatpush1.msra.mxu0 0.0
    %3525 = vmatprep.mubr.f32.mxu0 0.0
    %3526 = vmatmul.mubr.f32.gmra.mrb[0].mxu0 %v3459
    %v3527 = vpop.f32.mrb[0].mxu0
    %v3528 = vadd.f32 %v3456, %v3527
    %v3529 = vpop.f32.mrb[0].mxu0
    %3530 = vdwg.mxu0
    %v3531 = vmul.f32 %v3528, 0.35355338
    %s3532 = scalar_lea.vmem %s12, 32
    %v3533 = vld [vmem:[%s3532] sm:$0xff]
    %v3534 = vld [vmem:[%s3532 + $0x8] sm:$0xff]
    %v3535 = vld [vmem:[%s3532 + $0x10] sm:$0xff]
    %v3536 = vld [vmem:[%s3532 + $0x18] sm:$0xff]
    %s3537 = scalar_lea.vmem [#allocation4], 1
    %v3538 = vld [vmem:[%s3537] sm:$0x1]
    %v3540 = vlaneseq
    %v3541 = vshrl.u32 %v3540, 7
    %v3542 = vsub.s32 0, %v3541
    %v3543 = vrot.slane %v3538, %v3542
    %3545 = vmatprep.subr.mxu0 0.0
    %3546 = vmatpush1.msra.mxu0 %v3533
    %3547 = vmatprep.subr.mxu0 0.0
    %3548 = vmatpush1.msra.mxu0 %v3534
    %3549 = vmatprep.subr.mxu0 0.0
    %3550 = vmatpush1.msra.mxu0 %v3535
    %3551 = vmatprep.subr.mxu0 0.0
    %3552 = vmatpush1.msra.mxu0 %v3536
    %3553 = vmatprep.subr.mxu0 0.0
    %3554 = vmatpush1.msra.mxu0 0.0
    %3555 = vmatprep.subr.mxu0 0.0
    %3556 = vmatpush1.msra.mxu0 0.0
    %3557 = vmatprep.subr.mxu0 0.0
    %3558 = vmatpush1.msra.mxu0 0.0
    %3559 = vmatprep.subr.mxu0 0.0
    %3560 = vmatpush1.msra.mxu0 0.0
    %3561 = vmatprep.subr.mxu0 0.0
    %3562 = vmatpush1.msra.mxu0 0.0
    %3563 = vmatprep.subr.mxu0 0.0
    %3564 = vmatpush1.msra.mxu0 0.0
    %3565 = vmatprep.subr.mxu0 0.0
    %3566 = vmatpush1.msra.mxu0 0.0
    %3567 = vmatprep.subr.mxu0 0.0
    %3568 = vmatpush1.msra.mxu0 0.0
    %3569 = vmatprep.subr.mxu0 0.0
    %3570 = vmatpush1.msra.mxu0 0.0
    %3571 = vmatprep.subr.mxu0 0.0
    %3572 = vmatpush1.msra.mxu0 0.0
    %3573 = vmatprep.subr.mxu0 0.0
    %3574 = vmatpush1.msra.mxu0 0.0
    %3575 = vmatprep.subr.mxu0 0.0
    %3576 = vmatpush1.msra.mxu0 0.0
    %3577 = vmatprep.subr.mxu0 0.0
    %3578 = vmatpush1.msra.mxu0 0.0
    %3579 = vmatprep.subr.mxu0 0.0
    %3580 = vmatpush1.msra.mxu0 0.0
    %3581 = vmatprep.subr.mxu0 0.0
    %3582 = vmatpush1.msra.mxu0 0.0
    %3583 = vmatprep.subr.mxu0 0.0
    %3584 = vmatpush1.msra.mxu0 0.0
    %3585 = vmatprep.subr.mxu0 0.0
    %3586 = vmatpush1.msra.mxu0 0.0
    %3587 = vmatprep.subr.mxu0 0.0
    %3588 = vmatpush1.msra.mxu0 0.0
    %3589 = vmatprep.subr.mxu0 0.0
    %3590 = vmatpush1.msra.mxu0 0.0
    %3591 = vmatprep.subr.mxu0 0.0
    %3592 = vmatpush1.msra.mxu0 0.0
    %3593 = vmatprep.subr.mxu0 0.0
    %3594 = vmatpush1.msra.mxu0 0.0
    %3595 = vmatprep.subr.mxu0 0.0
    %3596 = vmatpush1.msra.mxu0 0.0
    %3597 = vmatprep.subr.mxu0 0.0
    %3598 = vmatpush1.msra.mxu0 0.0
    %3599 = vmatprep.subr.mxu0 0.0
    %3600 = vmatpush1.msra.mxu0 0.0
    %3601 = vmatprep.subr.mxu0 0.0
    %3602 = vmatpush1.msra.mxu0 0.0
    %3603 = vmatprep.subr.mxu0 0.0
    %3604 = vmatpush1.msra.mxu0 0.0
    %3605 = vmatprep.subr.mxu0 0.0
    %3606 = vmatpush1.msra.mxu0 0.0
    %3607 = vmatprep.subr.mxu0 0.0
    %3608 = vmatpush1.msra.mxu0 0.0
    %3609 = vmatprep.mubr.f32.mxu0 0.0
    %3610 = vmatmul.mubr.f32.gmra.mrb[0].mxu0 %v1293
    %v3611 = vpop.f32.mrb[0].mxu0
    %v3612 = vadd.f32 %v3543, %v3611
    %v3613 = vpop.f32.mrb[0].mxu0
    %3614 = vmatprep.mubr.f32.mxu0 0.0
    %3615 = vmatmul.mubr.f32.gmra.mrb[0].mxu0 %v1296
    %v3616 = vpop.f32.mrb[0].mxu0
    %v3617 = vadd.f32 %v3543, %v3616
    %v3618 = vpop.f32.mrb[0].mxu0
    %3619 = vdwg.mxu0
    %s3620 = scalar_lea.vmem [#allocation6], 32
    %v3621 = vld [vmem:[%s3620] sm:$0xff]
    %v3622 = vld [vmem:[%s3620 + $0x8] sm:$0xff]
    %v3623 = vld [vmem:[%s3620 + $0x10] sm:$0xff]
    %v3624 = vld [vmem:[%s3620 + $0x18] sm:$0xff]
    %s3625 = scalar_lea.vmem [#allocation7], 1
    %v3626 = vld [vmem:[%s3625] sm:$0x1]
    %v3628 = vlaneseq
    %v3629 = vshrl.u32 %v3628, 7
    %v3630 = vsub.s32 0, %v3629
    %v3631 = vrot.slane %v3626, %v3630
    %3633 = vmatprep.subr.mxu0 0.0
    %3634 = vmatpush1.msra.mxu0 %v3621
    %3635 = vmatprep.subr.mxu0 0.0
    %3636 = vmatpush1.msra.mxu0 %v3622
    %3637 = vmatprep.subr.mxu0 0.0
    %3638 = vmatpush1.msra.mxu0 %v3623
    %3639 = vmatprep.subr.mxu0 0.0
    %3640 = vmatpush1.msra.mxu0 %v3624
    %3641 = vmatprep.subr.mxu0 0.0
    %3642 = vmatpush1.msra.mxu0 0.0
    %3643 = vmatprep.subr.mxu0 0.0
    %3644 = vmatpush1.msra.mxu0 0.0
    %3645 = vmatprep.subr.mxu0 0.0
    %3646 = vmatpush1.msra.mxu0 0.0
    %3647 = vmatprep.subr.mxu0 0.0
    %3648 = vmatpush1.msra.mxu0 0.0
    %3649 = vmatprep.subr.mxu0 0.0
    %3650 = vmatpush1.msra.mxu0 0.0
    %3651 = vmatprep.subr.mxu0 0.0
    %3652 = vmatpush1.msra.mxu0 0.0
    %3653 = vmatprep.subr.mxu0 0.0
    %3654 = vmatpush1.msra.mxu0 0.0
    %3655 = vmatprep.subr.mxu0 0.0
    %3656 = vmatpush1.msra.mxu0 0.0
    %3657 = vmatprep.subr.mxu0 0.0
    %3658 = vmatpush1.msra.mxu0 0.0
    %3659 = vmatprep.subr.mxu0 0.0
    %3660 = vmatpush1.msra.mxu0 0.0
    %3661 = vmatprep.subr.mxu0 0.0
    %3662 = vmatpush1.msra.mxu0 0.0
    %3663 = vmatprep.subr.mxu0 0.0
    %3664 = vmatpush1.msra.mxu0 0.0
    %3665 = vmatprep.subr.mxu0 0.0
    %3666 = vmatpush1.msra.mxu0 0.0
    %3667 = vmatprep.subr.mxu0 0.0
    %3668 = vmatpush1.msra.mxu0 0.0
    %3669 = vmatprep.subr.mxu0 0.0
    %3670 = vmatpush1.msra.mxu0 0.0
    %3671 = vmatprep.subr.mxu0 0.0
    %3672 = vmatpush1.msra.mxu0 0.0
    %3673 = vmatprep.subr.mxu0 0.0
    %3674 = vmatpush1.msra.mxu0 0.0
    %3675 = vmatprep.subr.mxu0 0.0
    %3676 = vmatpush1.msra.mxu0 0.0
    %3677 = vmatprep.subr.mxu0 0.0
    %3678 = vmatpush1.msra.mxu0 0.0
    %3679 = vmatprep.subr.mxu0 0.0
    %3680 = vmatpush1.msra.mxu0 0.0
    %3681 = vmatprep.subr.mxu0 0.0
    %3682 = vmatpush1.msra.mxu0 0.0
    %3683 = vmatprep.subr.mxu0 0.0
    %3684 = vmatpush1.msra.mxu0 0.0
    %3685 = vmatprep.subr.mxu0 0.0
    %3686 = vmatpush1.msra.mxu0 0.0
    %3687 = vmatprep.subr.mxu0 0.0
    %3688 = vmatpush1.msra.mxu0 0.0
    %3689 = vmatprep.subr.mxu0 0.0
    %3690 = vmatpush1.msra.mxu0 0.0
    %3691 = vmatprep.subr.mxu0 0.0
    %3692 = vmatpush1.msra.mxu0 0.0
    %3693 = vmatprep.subr.mxu0 0.0
    %3694 = vmatpush1.msra.mxu0 0.0
    %3695 = vmatprep.subr.mxu0 0.0
    %3696 = vmatpush1.msra.mxu0 0.0
    %3697 = vmatprep.mubr.f32.mxu0 0.0
    %3698 = vmatmul.mubr.f32.gmra.mrb[0].mxu0 %v1385
    %v3699 = vpop.f32.mrb[0].mxu0
    %v3700 = vadd.f32 %v3631, %v3699
    %v3701 = vpop.f32.mrb[0].mxu0
    %3702 = vmatprep.mubr.f32.mxu0 0.0
    %3703 = vmatmul.mubr.f32.gmra.mrb[0].mxu0 %v1388
    %v3704 = vpop.f32.mrb[0].mxu0
    %v3705 = vadd.f32 %v3631, %v3704
    %v3706 = vpop.f32.mrb[0].mxu0
    %3707 = vdwg.mxu0
    %s3708 = scalar_lea.vmem [#allocation9], 32
    %v3709 = vld [vmem:[%s3708] sm:$0xff]
    %v3710 = vld [vmem:[%s3708 + $0x8] sm:$0xff]
    %v3711 = vld [vmem:[%s3708 + $0x10] sm:$0xff]
    %v3712 = vld [vmem:[%s3708 + $0x18] sm:$0xff]
    %s3713 = scalar_lea.vmem [#allocation10], 1
    %v3714 = vld [vmem:[%s3713] sm:$0x1]
    %v3716 = vsel %vm414, %v3531, 0
    %v3719 = vsel %vm414, %v3612, 0
    %v3722 = vsel %vm414, %v3617, 0
    %3724 = vmatprep.subr.mxu0 0.0
    %3725 = vmatpush1.xpose.msra.mxu0 %v3719
    %3726 = vmatprep.subr.mxu0 0.0
    %3727 = vmatpush1.xpose.msra.mxu0 %v3722
    %3728 = vmatprep.subr.mxu0 0.0
    %3729 = vmatpush1.xpose.msra.mxu0 0.0
    %3730 = vmatprep.subr.mxu0 0.0
    %3731 = vmatpush1.xpose.msra.mxu0 0.0
    %3732 = vmatprep.subr.mxu0 0.0
    %3733 = vmatpush1.xpose.msra.mxu0 0.0
    %3734 = vmatprep.subr.mxu0 0.0
    %3735 = vmatpush1.xpose.msra.mxu0 0.0
    %3736 = vmatprep.subr.mxu0 0.0
    %3737 = vmatpush1.xpose.msra.mxu0 0.0
    %3738 = vmatprep.subr.mxu0 0.0
    %3739 = vmatpush1.xpose.msra.mxu0 0.0
    %3740 = vmatprep.subr.mxu0 0.0
    %3741 = vmatpush1.xpose.msra.mxu0 0.0
    %3742 = vmatprep.subr.mxu0 0.0
    %3743 = vmatpush1.xpose.msra.mxu0 0.0
    %3744 = vmatprep.subr.mxu0 0.0
    %3745 = vmatpush1.xpose.msra.mxu0 0.0
    %3746 = vmatprep.subr.mxu0 0.0
    %3747 = vmatpush1.xpose.msra.mxu0 0.0
    %3748 = vmatprep.subr.mxu0 0.0
    %3749 = vmatpush1.xpose.msra.mxu0 0.0
    %3750 = vmatprep.subr.mxu0 0.0
    %3751 = vmatpush1.xpose.msra.mxu0 0.0
    %3752 = vmatprep.subr.mxu0 0.0
    %3753 = vmatpush1.xpose.msra.mxu0 0.0
    %3754 = vmatprep.subr.mxu0 0.0
    %3755 = vmatpush1.xpose.msra.mxu0 0.0
    %3756 = vmatprep.subr.mxu0 0.0
    %3757 = vmatpush1.xpose.msra.mxu0 0.0
    %3758 = vmatprep.subr.mxu0 0.0
    %3759 = vmatpush1.xpose.msra.mxu0 0.0
    %3760 = vmatprep.subr.mxu0 0.0
    %3761 = vmatpush1.xpose.msra.mxu0 0.0
    %3762 = vmatprep.subr.mxu0 0.0
    %3763 = vmatpush1.xpose.msra.mxu0 0.0
    %3764 = vmatprep.subr.mxu0 0.0
    %3765 = vmatpush1.xpose.msra.mxu0 0.0
    %3766 = vmatprep.subr.mxu0 0.0
    %3767 = vmatpush1.xpose.msra.mxu0 0.0
    %3768 = vmatprep.subr.mxu0 0.0
    %3769 = vmatpush1.xpose.msra.mxu0 0.0
    %3770 = vmatprep.subr.mxu0 0.0
    %3771 = vmatpush1.xpose.msra.mxu0 0.0
    %3772 = vmatprep.subr.mxu0 0.0
    %3773 = vmatpush1.xpose.msra.mxu0 0.0
    %3774 = vmatprep.subr.mxu0 0.0
    %3775 = vmatpush1.xpose.msra.mxu0 0.0
    %3776 = vmatprep.subr.mxu0 0.0
    %3777 = vmatpush1.xpose.msra.mxu0 0.0
    %3778 = vmatprep.subr.mxu0 0.0
    %3779 = vmatpush1.xpose.msra.mxu0 0.0
    %3780 = vmatprep.subr.mxu0 0.0
    %3781 = vmatpush1.xpose.msra.mxu0 0.0
    %3782 = vmatprep.subr.mxu0 0.0
    %3783 = vmatpush1.xpose.msra.mxu0 0.0
    %3784 = vmatprep.subr.mxu0 0.0
    %3785 = vmatpush1.xpose.msra.mxu0 0.0
    %3786 = vmatprep.subr.mxu0 0.0
    %3787 = vmatpush1.xpose.msra.mxu0 0.0
    %3788 = vmatprep.mubr.f32.mxu0 0.0
    %3789 = vmatmul.mubr.f32.gmra.mrb[0].mxu0 %v3716
    %v3790 = vpop.f32.mrb[0].mxu0
    %v3791 = vadd.f32 0.0, %v3790
    %v3792 = vpop.f32.mrb[0].mxu0
    %3793 = vdwg.mxu0
    %v3794 = vsel %vm1083, %v3791, -inf
    %3795 = vmax.xlane.f32.xlu0 %v3794
    %v3796 = vpop.xlane.xlu0 %3795
    %v3797 = vsub.f32 %v3791, %v3796
    %v3798 = vmul.f32 %v3797, 1.442695
    %v3799 = vpow.pop %v3798
    %v3800 = vsel %vm1083, %v3799, 0.0
    %3801 = vadd.xlane.f32.xlu0 %v3800
    %v3802 = vpop.xlane.xlu0 %3801
    %v3803 = vrcp.pop %v3802
    %v3804 = vmul.f32 %v3799, %v3803
    %v3806 = vsel %vm1083, %v3804, 0
    %3808 = vmatprep.subr.mxu0 0.0
    %3809 = vmatpush1.msra.mxu0 %v3700
    %3810 = vmatprep.subr.mxu0 0.0
    %3811 = vmatpush1.msra.mxu0 %v3705
    %3812 = vmatprep.subr.mxu0 0.0
    %3813 = vmatpush1.msra.mxu0 0.0
    %3814 = vmatprep.subr.mxu0 0.0
    %3815 = vmatpush1.msra.mxu0 0.0
    %3816 = vmatprep.subr.mxu0 0.0
    %3817 = vmatpush1.msra.mxu0 0.0
    %3818 = vmatprep.subr.mxu0 0.0
    %3819 = vmatpush1.msra.mxu0 0.0
    %3820 = vmatprep.subr.mxu0 0.0
    %3821 = vmatpush1.msra.mxu0 0.0
    %3822 = vmatprep.subr.mxu0 0.0
    %3823 = vmatpush1.msra.mxu0 0.0
    %3824 = vmatprep.subr.mxu0 0.0
    %3825 = vmatpush1.msra.mxu0 0.0
    %3826 = vmatprep.subr.mxu0 0.0
    %3827 = vmatpush1.msra.mxu0 0.0
    %3828 = vmatprep.subr.mxu0 0.0
    %3829 = vmatpush1.msra.mxu0 0.0
    %3830 = vmatprep.subr.mxu0 0.0
    %3831 = vmatpush1.msra.mxu0 0.0
    %3832 = vmatprep.subr.mxu0 0.0
    %3833 = vmatpush1.msra.mxu0 0.0
    %3834 = vmatprep.subr.mxu0 0.0
    %3835 = vmatpush1.msra.mxu0 0.0
    %3836 = vmatprep.subr.mxu0 0.0
    %3837 = vmatpush1.msra.mxu0 0.0
    %3838 = vmatprep.subr.mxu0 0.0
    %3839 = vmatpush1.msra.mxu0 0.0
    %3840 = vmatprep.subr.mxu0 0.0
    %3841 = vmatpush1.msra.mxu0 0.0
    %3842 = vmatprep.subr.mxu0 0.0
    %3843 = vmatpush1.msra.mxu0 0.0
    %3844 = vmatprep.subr.mxu0 0.0
    %3845 = vmatpush1.msra.mxu0 0.0
    %3846 = vmatprep.subr.mxu0 0.0
    %3847 = vmatpush1.msra.mxu0 0.0
    %3848 = vmatprep.subr.mxu0 0.0
    %3849 = vmatpush1.msra.mxu0 0.0
    %3850 = vmatprep.subr.mxu0 0.0
    %3851 = vmatpush1.msra.mxu0 0.0
    %3852 = vmatprep.subr.mxu0 0.0
    %3853 = vmatpush1.msra.mxu0 0.0
    %3854 = vmatprep.subr.mxu0 0.0
    %3855 = vmatpush1.msra.mxu0 0.0
    %3856 = vmatprep.subr.mxu0 0.0
    %3857 = vmatpush1.msra.mxu0 0.0
    %3858 = vmatprep.subr.mxu0 0.0
    %3859 = vmatpush1.msra.mxu0 0.0
    %3860 = vmatprep.subr.mxu0 0.0
    %3861 = vmatpush1.msra.mxu0 0.0
    %3862 = vmatprep.subr.mxu0 0.0
    %3863 = vmatpush1.msra.mxu0 0.0
    %3864 = vmatprep.subr.mxu0 0.0
    %3865 = vmatpush1.msra.mxu0 0.0
    %3866 = vmatprep.subr.mxu0 0.0
    %3867 = vmatpush1.msra.mxu0 0.0
    %3868 = vmatprep.subr.mxu0 0.0
    %3869 = vmatpush1.msra.mxu0 0.0
    %3870 = vmatprep.subr.mxu0 0.0
    %3871 = vmatpush1.msra.mxu0 0.0
    %3872 = vmatprep.mubr.f32.mxu0 0.0
    %3873 = vmatmul.mubr.f32.gmra.mrb[0].mxu0 %v3806
    %v3874 = vpop.f32.mrb[0].mxu0
    %v3875 = vadd.f32 0.0, %v3874
    %v3876 = vpop.f32.mrb[0].mxu0
    %3877 = vdwg.mxu0
    %3878 = vrot.lane.b32.xlu0 %v3531, 120
    %v3879 = vpop.permute.xlu0 %3878
    %3880 = vrot.lane.b32.xlu0 %v3612, 120
    %v3881 = vpop.permute.xlu0 %3880
    %3882 = vrot.lane.b32.xlu0 %v3617, 120
    %v3883 = vpop.permute.xlu0 %3882
    %v3884 = vsel %vm414, %v3879, 0
    %v3886 = vsel %vm414, %v3881, 0
    %v3888 = vsel %vm414, %v3883, 0
    %3890 = vmatprep.subr.mxu0 0.0
    %3891 = vmatpush1.xpose.msra.mxu0 %v3886
    %3892 = vmatprep.subr.mxu0 0.0
    %3893 = vmatpush1.xpose.msra.mxu0 %v3888
    %3894 = vmatprep.subr.mxu0 0.0
    %3895 = vmatpush1.xpose.msra.mxu0 0.0
    %3896 = vmatprep.subr.mxu0 0.0
    %3897 = vmatpush1.xpose.msra.mxu0 0.0
    %3898 = vmatprep.subr.mxu0 0.0
    %3899 = vmatpush1.xpose.msra.mxu0 0.0
    %3900 = vmatprep.subr.mxu0 0.0
    %3901 = vmatpush1.xpose.msra.mxu0 0.0
    %3902 = vmatprep.subr.mxu0 0.0
    %3903 = vmatpush1.xpose.msra.mxu0 0.0
    %3904 = vmatprep.subr.mxu0 0.0
    %3905 = vmatpush1.xpose.msra.mxu0 0.0
    %3906 = vmatprep.subr.mxu0 0.0
    %3907 = vmatpush1.xpose.msra.mxu0 0.0
    %3908 = vmatprep.subr.mxu0 0.0
    %3909 = vmatpush1.xpose.msra.mxu0 0.0
    %3910 = vmatprep.subr.mxu0 0.0
    %3911 = vmatpush1.xpose.msra.mxu0 0.0
    %3912 = vmatprep.subr.mxu0 0.0
    %3913 = vmatpush1.xpose.msra.mxu0 0.0
    %3914 = vmatprep.subr.mxu0 0.0
    %3915 = vmatpush1.xpose.msra.mxu0 0.0
    %3916 = vmatprep.subr.mxu0 0.0
    %3917 = vmatpush1.xpose.msra.mxu0 0.0
    %3918 = vmatprep.subr.mxu0 0.0
    %3919 = vmatpush1.xpose.msra.mxu0 0.0
    %3920 = vmatprep.subr.mxu0 0.0
    %3921 = vmatpush1.xpose.msra.mxu0 0.0
    %3922 = vmatprep.subr.mxu0 0.0
    %3923 = vmatpush1.xpose.msra.mxu0 0.0
    %3924 = vmatprep.subr.mxu0 0.0
    %3925 = vmatpush1.xpose.msra.mxu0 0.0
    %3926 = vmatprep.subr.mxu0 0.0
    %3927 = vmatpush1.xpose.msra.mxu0 0.0
    %3928 = vmatprep.subr.mxu0 0.0
    %3929 = vmatpush1.xpose.msra.mxu0 0.0
    %3930 = vmatprep.subr.mxu0 0.0
    %3931 = vmatpush1.xpose.msra.mxu0 0.0
    %3932 = vmatprep.subr.mxu0 0.0
    %3933 = vmatpush1.xpose.msra.mxu0 0.0
    %3934 = vmatprep.subr.mxu0 0.0
    %3935 = vmatpush1.xpose.msra.mxu0 0.0
    %3936 = vmatprep.subr.mxu0 0.0
    %3937 = vmatpush1.xpose.msra.mxu0 0.0
    %3938 = vmatprep.subr.mxu0 0.0
    %3939 = vmatpush1.xpose.msra.mxu0 0.0
    %3940 = vmatprep.subr.mxu0 0.0
    %3941 = vmatpush1.xpose.msra.mxu0 0.0
    %3942 = vmatprep.subr.mxu0 0.0
    %3943 = vmatpush1.xpose.msra.mxu0 0.0
    %3944 = vmatprep.subr.mxu0 0.0
    %3945 = vmatpush1.xpose.msra.mxu0 0.0
    %3946 = vmatprep.subr.mxu0 0.0
    %3947 = vmatpush1.xpose.msra.mxu0 0.0
    %3948 = vmatprep.subr.mxu0 0.0
    %3949 = vmatpush1.xpose.msra.mxu0 0.0
    %3950 = vmatprep.subr.mxu0 0.0
    %3951 = vmatpush1.xpose.msra.mxu0 0.0
    %3952 = vmatprep.subr.mxu0 0.0
    %3953 = vmatpush1.xpose.msra.mxu0 0.0
    %3954 = vmatprep.mubr.f32.mxu0 0.0
    %3955 = vmatmul.mubr.f32.gmra.mrb[0].mxu0 %v3884
    %v3956 = vpop.f32.mrb[0].mxu0
    %v3957 = vadd.f32 0.0, %v3956
    %v3958 = vpop.f32.mrb[0].mxu0
    %3959 = vdwg.mxu0
    %v3960 = vsel %vm1083, %v3957, -inf
    %3961 = vmax.xlane.f32.xlu0 %v3960
    %v3962 = vpop.xlane.xlu0 %3961
    %v3963 = vsub.f32 %v3957, %v3962
    %v3964 = vmul.f32 %v3963, 1.442695
    %v3965 = vpow.pop %v3964
    %v3966 = vsel %vm1083, %v3965, 0.0
    %3967 = vadd.xlane.f32.xlu0 %v3966
    %v3968 = vpop.xlane.xlu0 %3967
    %v3969 = vrcp.pop %v3968
    %v3970 = vmul.f32 %v3965, %v3969
    %3973 = vrot.lane.b32.xlu0 %v3700, 120
    %v3974 = vpop.permute.xlu0 %3973
    %3975 = vrot.lane.b32.xlu0 %v3705, 120
    %v3976 = vpop.permute.xlu0 %3975
    %v3980 = vsel %vm1083, %v3970, 0
    %3982 = vmatprep.subr.mxu0 0.0
    %3983 = vmatpush1.msra.mxu0 %v3974
    %3984 = vmatprep.subr.mxu0 0.0
    %3985 = vmatpush1.msra.mxu0 %v3976
    %3986 = vmatprep.subr.mxu0 0.0
    %3987 = vmatpush1.msra.mxu0 0.0
    %3988 = vmatprep.subr.mxu0 0.0
    %3989 = vmatpush1.msra.mxu0 0.0
    %3990 = vmatprep.subr.mxu0 0.0
    %3991 = vmatpush1.msra.mxu0 0.0
    %3992 = vmatprep.subr.mxu0 0.0
    %3993 = vmatpush1.msra.mxu0 0.0
    %3994 = vmatprep.subr.mxu0 0.0
    %3995 = vmatpush1.msra.mxu0 0.0
    %3996 = vmatprep.subr.mxu0 0.0
    %3997 = vmatpush1.msra.mxu0 0.0
    %3998 = vmatprep.subr.mxu0 0.0
    %3999 = vmatpush1.msra.mxu0 0.0
    %4000 = vmatprep.subr.mxu0 0.0
    %4001 = vmatpush1.msra.mxu0 0.0
    %4002 = vmatprep.subr.mxu0 0.0
    %4003 = vmatpush1.msra.mxu0 0.0
    %4004 = vmatprep.subr.mxu0 0.0
    %4005 = vmatpush1.msra.mxu0 0.0
    %4006 = vmatprep.subr.mxu0 0.0
    %4007 = vmatpush1.msra.mxu0 0.0
    %4008 = vmatprep.subr.mxu0 0.0
    %4009 = vmatpush1.msra.mxu0 0.0
    %4010 = vmatprep.subr.mxu0 0.0
    %4011 = vmatpush1.msra.mxu0 0.0
    %4012 = vmatprep.subr.mxu0 0.0
    %4013 = vmatpush1.msra.mxu0 0.0
    %4014 = vmatprep.subr.mxu0 0.0
    %4015 = vmatpush1.msra.mxu0 0.0
    %4016 = vmatprep.subr.mxu0 0.0
    %4017 = vmatpush1.msra.mxu0 0.0
    %4018 = vmatprep.subr.mxu0 0.0
    %4019 = vmatpush1.msra.mxu0 0.0
    %4020 = vmatprep.subr.mxu0 0.0
    %4021 = vmatpush1.msra.mxu0 0.0
    %4022 = vmatprep.subr.mxu0 0.0
    %4023 = vmatpush1.msra.mxu0 0.0
    %4024 = vmatprep.subr.mxu0 0.0
    %4025 = vmatpush1.msra.mxu0 0.0
    %4026 = vmatprep.subr.mxu0 0.0
    %4027 = vmatpush1.msra.mxu0 0.0
    %4028 = vmatprep.subr.mxu0 0.0
    %4029 = vmatpush1.msra.mxu0 0.0
    %4030 = vmatprep.subr.mxu0 0.0
    %4031 = vmatpush1.msra.mxu0 0.0
    %4032 = vmatprep.subr.mxu0 0.0
    %4033 = vmatpush1.msra.mxu0 0.0
    %4034 = vmatprep.subr.mxu0 0.0
    %4035 = vmatpush1.msra.mxu0 0.0
    %4036 = vmatprep.subr.mxu0 0.0
    %4037 = vmatpush1.msra.mxu0 0.0
    %4038 = vmatprep.subr.mxu0 0.0
    %4039 = vmatpush1.msra.mxu0 0.0
    %4040 = vmatprep.subr.mxu0 0.0
    %4041 = vmatpush1.msra.mxu0 0.0
    %4042 = vmatprep.subr.mxu0 0.0
    %4043 = vmatpush1.msra.mxu0 0.0
    %4044 = vmatprep.subr.mxu0 0.0
    %4045 = vmatpush1.msra.mxu0 0.0
    %4046 = vmatprep.mubr.f32.mxu0 0.0
    %4047 = vmatmul.mubr.f32.gmra.mrb[0].mxu0 %v3980
    %v4048 = vpop.f32.mrb[0].mxu0
    %v4049 = vadd.f32 0.0, %v4048
    %v4050 = vpop.f32.mrb[0].mxu0
    %4051 = vdwg.mxu0
    %4052 = vrot.lane.b32.xlu0 %v3531, 112
    %v4053 = vpop.permute.xlu0 %4052
    %4054 = vrot.lane.b32.xlu0 %v3612, 112
    %v4055 = vpop.permute.xlu0 %4054
    %4056 = vrot.lane.b32.xlu0 %v3617, 112
    %v4057 = vpop.permute.xlu0 %4056
    %v4058 = vsel %vm414, %v4053, 0
    %v4060 = vsel %vm414, %v4055, 0
    %v4062 = vsel %vm414, %v4057, 0
    %4064 = vmatprep.subr.mxu0 0.0
    %4065 = vmatpush1.xpose.msra.mxu0 %v4060
    %4066 = vmatprep.subr.mxu0 0.0
    %4067 = vmatpush1.xpose.msra.mxu0 %v4062
    %4068 = vmatprep.subr.mxu0 0.0
    %4069 = vmatpush1.xpose.msra.mxu0 0.0
    %4070 = vmatprep.subr.mxu0 0.0
    %4071 = vmatpush1.xpose.msra.mxu0 0.0
    %4072 = vmatprep.subr.mxu0 0.0
    %4073 = vmatpush1.xpose.msra.mxu0 0.0
    %4074 = vmatprep.subr.mxu0 0.0
    %4075 = vmatpush1.xpose.msra.mxu0 0.0
    %4076 = vmatprep.subr.mxu0 0.0
    %4077 = vmatpush1.xpose.msra.mxu0 0.0
    %4078 = vmatprep.subr.mxu0 0.0
    %4079 = vmatpush1.xpose.msra.mxu0 0.0
    %4080 = vmatprep.subr.mxu0 0.0
    %4081 = vmatpush1.xpose.msra.mxu0 0.0
    %4082 = vmatprep.subr.mxu0 0.0
    %4083 = vmatpush1.xpose.msra.mxu0 0.0
    %4084 = vmatprep.subr.mxu0 0.0
    %4085 = vmatpush1.xpose.msra.mxu0 0.0
    %4086 = vmatprep.subr.mxu0 0.0
    %4087 = vmatpush1.xpose.msra.mxu0 0.0
    %4088 = vmatprep.subr.mxu0 0.0
    %4089 = vmatpush1.xpose.msra.mxu0 0.0
    %4090 = vmatprep.subr.mxu0 0.0
    %4091 = vmatpush1.xpose.msra.mxu0 0.0
    %4092 = vmatprep.subr.mxu0 0.0
    %4093 = vmatpush1.xpose.msra.mxu0 0.0
    %4094 = vmatprep.subr.mxu0 0.0
    %4095 = vmatpush1.xpose.msra.mxu0 0.0
    %4096 = vmatprep.subr.mxu0 0.0
    %4097 = vmatpush1.xpose.msra.mxu0 0.0
    %4098 = vmatprep.subr.mxu0 0.0
    %4099 = vmatpush1.xpose.msra.mxu0 0.0
    %4100 = vmatprep.subr.mxu0 0.0
    %4101 = vmatpush1.xpose.msra.mxu0 0.0
    %4102 = vmatprep.subr.mxu0 0.0
    %4103 = vmatpush1.xpose.msra.mxu0 0.0
    %4104 = vmatprep.subr.mxu0 0.0
    %4105 = vmatpush1.xpose.msra.mxu0 0.0
    %4106 = vmatprep.subr.mxu0 0.0
    %4107 = vmatpush1.xpose.msra.mxu0 0.0
    %4108 = vmatprep.subr.mxu0 0.0
    %4109 = vmatpush1.xpose.msra.mxu0 0.0
    %4110 = vmatprep.subr.mxu0 0.0
    %4111 = vmatpush1.xpose.msra.mxu0 0.0
    %4112 = vmatprep.subr.mxu0 0.0
    %4113 = vmatpush1.xpose.msra.mxu0 0.0
    %4114 = vmatprep.subr.mxu0 0.0
    %4115 = vmatpush1.xpose.msra.mxu0 0.0
    %4116 = vmatprep.subr.mxu0 0.0
    %4117 = vmatpush1.xpose.msra.mxu0 0.0
    %4118 = vmatprep.subr.mxu0 0.0
    %4119 = vmatpush1.xpose.msra.mxu0 0.0
    %4120 = vmatprep.subr.mxu0 0.0
    %4121 = vmatpush1.xpose.msra.mxu0 0.0
    %4122 = vmatprep.subr.mxu0 0.0
    %4123 = vmatpush1.xpose.msra.mxu0 0.0
    %4124 = vmatprep.subr.mxu0 0.0
    %4125 = vmatpush1.xpose.msra.mxu0 0.0
    %4126 = vmatprep.subr.mxu0 0.0
    %4127 = vmatpush1.xpose.msra.mxu0 0.0
    %4128 = vmatprep.mubr.f32.mxu0 0.0
    %4129 = vmatmul.mubr.f32.gmra.mrb[0].mxu0 %v4058
    %v4130 = vpop.f32.mrb[0].mxu0
    %v4131 = vadd.f32 0.0, %v4130
    %v4132 = vpop.f32.mrb[0].mxu0
    %4133 = vdwg.mxu0
    %v4134 = vsel %vm1083, %v4131, -inf
    %4135 = vmax.xlane.f32.xlu0 %v4134
    %v4136 = vpop.xlane.xlu0 %4135
    %v4137 = vsub.f32 %v4131, %v4136
    %v4138 = vmul.f32 %v4137, 1.442695
    %v4139 = vpow.pop %v4138
    %v4140 = vsel %vm1083, %v4139, 0.0
    %4141 = vadd.xlane.f32.xlu0 %v4140
    %v4142 = vpop.xlane.xlu0 %4141
    %v4143 = vrcp.pop %v4142
    %v4144 = vmul.f32 %v4139, %v4143
    %4145 = vrot.lane.b32.xlu0 %v3700, 112
    %v4146 = vpop.permute.xlu0 %4145
    %4147 = vrot.lane.b32.xlu0 %v3705, 112
    %v4148 = vpop.permute.xlu0 %4147
    %v4152 = vsel %vm1083, %v4144, 0
    %4154 = vmatprep.subr.mxu0 0.0
    %4155 = vmatpush1.msra.mxu0 %v4146
    %4156 = vmatprep.subr.mxu0 0.0
    %4157 = vmatpush1.msra.mxu0 %v4148
    %4158 = vmatprep.subr.mxu0 0.0
    %4159 = vmatpush1.msra.mxu0 0.0
    %4160 = vmatprep.subr.mxu0 0.0
    %4161 = vmatpush1.msra.mxu0 0.0
    %4162 = vmatprep.subr.mxu0 0.0
    %4163 = vmatpush1.msra.mxu0 0.0
    %4164 = vmatprep.subr.mxu0 0.0
    %4165 = vmatpush1.msra.mxu0 0.0
    %4166 = vmatprep.subr.mxu0 0.0
    %4167 = vmatpush1.msra.mxu0 0.0
    %4168 = vmatprep.subr.mxu0 0.0
    %4169 = vmatpush1.msra.mxu0 0.0
    %4170 = vmatprep.subr.mxu0 0.0
    %4171 = vmatpush1.msra.mxu0 0.0
    %4172 = vmatprep.subr.mxu0 0.0
    %4173 = vmatpush1.msra.mxu0 0.0
    %4174 = vmatprep.subr.mxu0 0.0
    %4175 = vmatpush1.msra.mxu0 0.0
    %4176 = vmatprep.subr.mxu0 0.0
    %4177 = vmatpush1.msra.mxu0 0.0
    %4178 = vmatprep.subr.mxu0 0.0
    %4179 = vmatpush1.msra.mxu0 0.0
    %4180 = vmatprep.subr.mxu0 0.0
    %4181 = vmatpush1.msra.mxu0 0.0
    %4182 = vmatprep.subr.mxu0 0.0
    %4183 = vmatpush1.msra.mxu0 0.0
    %4184 = vmatprep.subr.mxu0 0.0
    %4185 = vmatpush1.msra.mxu0 0.0
    %4186 = vmatprep.subr.mxu0 0.0
    %4187 = vmatpush1.msra.mxu0 0.0
    %4188 = vmatprep.subr.mxu0 0.0
    %4189 = vmatpush1.msra.mxu0 0.0
    %4190 = vmatprep.subr.mxu0 0.0
    %4191 = vmatpush1.msra.mxu0 0.0
    %4192 = vmatprep.subr.mxu0 0.0
    %4193 = vmatpush1.msra.mxu0 0.0
    %4194 = vmatprep.subr.mxu0 0.0
    %4195 = vmatpush1.msra.mxu0 0.0
    %4196 = vmatprep.subr.mxu0 0.0
    %4197 = vmatpush1.msra.mxu0 0.0
    %4198 = vmatprep.subr.mxu0 0.0
    %4199 = vmatpush1.msra.mxu0 0.0
    %4200 = vmatprep.subr.mxu0 0.0
    %4201 = vmatpush1.msra.mxu0 0.0
    %4202 = vmatprep.subr.mxu0 0.0
    %4203 = vmatpush1.msra.mxu0 0.0
    %4204 = vmatprep.subr.mxu0 0.0
    %4205 = vmatpush1.msra.mxu0 0.0
    %4206 = vmatprep.subr.mxu0 0.0
    %4207 = vmatpush1.msra.mxu0 0.0
    %4208 = vmatprep.subr.mxu0 0.0
    %4209 = vmatpush1.msra.mxu0 0.0
    %4210 = vmatprep.subr.mxu0 0.0
    %4211 = vmatpush1.msra.mxu0 0.0
    %4212 = vmatprep.subr.mxu0 0.0
    %4213 = vmatpush1.msra.mxu0 0.0
    %4214 = vmatprep.subr.mxu0 0.0
    %4215 = vmatpush1.msra.mxu0 0.0
    %4216 = vmatprep.subr.mxu0 0.0
    %4217 = vmatpush1.msra.mxu0 0.0
    %4218 = vmatprep.mubr.f32.mxu0 0.0
    %4219 = vmatmul.mubr.f32.gmra.mrb[0].mxu0 %v4152
    %v4220 = vpop.f32.mrb[0].mxu0
    %v4221 = vadd.f32 0.0, %v4220
    %v4222 = vpop.f32.mrb[0].mxu0
    %4223 = vdwg.mxu0
    %4224 = vrot.lane.b32.xlu0 %v3531, 104
    %v4225 = vpop.permute.xlu0 %4224
    %4226 = vrot.lane.b32.xlu0 %v3612, 104
    %v4227 = vpop.permute.xlu0 %4226
    %4228 = vrot.lane.b32.xlu0 %v3617, 104
    %v4229 = vpop.permute.xlu0 %4228
    %v4230 = vsel %vm414, %v4225, 0
    %v4232 = vsel %vm414, %v4227, 0
    %v4234 = vsel %vm414, %v4229, 0
    %4236 = vmatprep.subr.mxu0 0.0
    %4237 = vmatpush1.xpose.msra.mxu0 %v4232
    %4238 = vmatprep.subr.mxu0 0.0
    %4239 = vmatpush1.xpose.msra.mxu0 %v4234
    %4240 = vmatprep.subr.mxu0 0.0
    %4241 = vmatpush1.xpose.msra.mxu0 0.0
    %4242 = vmatprep.subr.mxu0 0.0
    %4243 = vmatpush1.xpose.msra.mxu0 0.0
    %4244 = vmatprep.subr.mxu0 0.0
    %4245 = vmatpush1.xpose.msra.mxu0 0.0
    %4246 = vmatprep.subr.mxu0 0.0
    %4247 = vmatpush1.xpose.msra.mxu0 0.0
    %4248 = vmatprep.subr.mxu0 0.0
    %4249 = vmatpush1.xpose.msra.mxu0 0.0
    %4250 = vmatprep.subr.mxu0 0.0
    %4251 = vmatpush1.xpose.msra.mxu0 0.0
    %4252 = vmatprep.subr.mxu0 0.0
    %4253 = vmatpush1.xpose.msra.mxu0 0.0
    %4254 = vmatprep.subr.mxu0 0.0
    %4255 = vmatpush1.xpose.msra.mxu0 0.0
    %4256 = vmatprep.subr.mxu0 0.0
    %4257 = vmatpush1.xpose.msra.mxu0 0.0
    %4258 = vmatprep.subr.mxu0 0.0
    %4259 = vmatpush1.xpose.msra.mxu0 0.0
    %4260 = vmatprep.subr.mxu0 0.0
    %4261 = vmatpush1.xpose.msra.mxu0 0.0
    %4262 = vmatprep.subr.mxu0 0.0
    %4263 = vmatpush1.xpose.msra.mxu0 0.0
    %4264 = vmatprep.subr.mxu0 0.0
    %4265 = vmatpush1.xpose.msra.mxu0 0.0
    %4266 = vmatprep.subr.mxu0 0.0
    %4267 = vmatpush1.xpose.msra.mxu0 0.0
    %4268 = vmatprep.subr.mxu0 0.0
    %4269 = vmatpush1.xpose.msra.mxu0 0.0
    %4270 = vmatprep.subr.mxu0 0.0
    %4271 = vmatpush1.xpose.msra.mxu0 0.0
    %4272 = vmatprep.subr.mxu0 0.0
    %4273 = vmatpush1.xpose.msra.mxu0 0.0
    %4274 = vmatprep.subr.mxu0 0.0
    %4275 = vmatpush1.xpose.msra.mxu0 0.0
    %4276 = vmatprep.subr.mxu0 0.0
    %4277 = vmatpush1.xpose.msra.mxu0 0.0
    %4278 = vmatprep.subr.mxu0 0.0
    %4279 = vmatpush1.xpose.msra.mxu0 0.0
    %4280 = vmatprep.subr.mxu0 0.0
    %4281 = vmatpush1.xpose.msra.mxu0 0.0
    %4282 = vmatprep.subr.mxu0 0.0
    %4283 = vmatpush1.xpose.msra.mxu0 0.0
    %4284 = vmatprep.subr.mxu0 0.0
    %4285 = vmatpush1.xpose.msra.mxu0 0.0
    %4286 = vmatprep.subr.mxu0 0.0
    %4287 = vmatpush1.xpose.msra.mxu0 0.0
    %4288 = vmatprep.subr.mxu0 0.0
    %4289 = vmatpush1.xpose.msra.mxu0 0.0
    %4290 = vmatprep.subr.mxu0 0.0
    %4291 = vmatpush1.xpose.msra.mxu0 0.0
    %4292 = vmatprep.subr.mxu0 0.0
    %4293 = vmatpush1.xpose.msra.mxu0 0.0
    %4294 = vmatprep.subr.mxu0 0.0
    %4295 = vmatpush1.xpose.msra.mxu0 0.0
    %4296 = vmatprep.subr.mxu0 0.0
    %4297 = vmatpush1.xpose.msra.mxu0 0.0
    %4298 = vmatprep.subr.mxu0 0.0
    %4299 = vmatpush1.xpose.msra.mxu0 0.0
    %4300 = vmatprep.mubr.f32.mxu0 0.0
    %4301 = vmatmul.mubr.f32.gmra.mrb[0].mxu0 %v4230
    %v4302 = vpop.f32.mrb[0].mxu0
    %v4303 = vadd.f32 0.0, %v4302
    %v4304 = vpop.f32.mrb[0].mxu0
    %4305 = vdwg.mxu0
    %v4306 = vsel %vm1083, %v4303, -inf
    %4307 = vmax.xlane.f32.xlu0 %v4306
    %v4308 = vpop.xlane.xlu0 %4307
    %v4309 = vsub.f32 %v4303, %v4308
    %v4310 = vmul.f32 %v4309, 1.442695
    %v4311 = vpow.pop %v4310
    %v4312 = vsel %vm1083, %v4311, 0.0
    %4313 = vadd.xlane.f32.xlu0 %v4312
    %v4314 = vpop.xlane.xlu0 %4313
    %v4315 = vrcp.pop %v4314
    %v4316 = vmul.f32 %v4311, %v4315
    %4317 = vrot.lane.b32.xlu0 %v3700, 104
    %v4318 = vpop.permute.xlu0 %4317
    %4319 = vrot.lane.b32.xlu0 %v3705, 104
    %v4320 = vpop.permute.xlu0 %4319
    %v4324 = vsel %vm1083, %v4316, 0
    %4326 = vmatprep.subr.mxu0 0.0
    %4327 = vmatpush1.msra.mxu0 %v4318
    %4328 = vmatprep.subr.mxu0 0.0
    %4329 = vmatpush1.msra.mxu0 %v4320
    %4330 = vmatprep.subr.mxu0 0.0
    %4331 = vmatpush1.msra.mxu0 0.0
    %4332 = vmatprep.subr.mxu0 0.0
    %4333 = vmatpush1.msra.mxu0 0.0
    %4334 = vmatprep.subr.mxu0 0.0
    %4335 = vmatpush1.msra.mxu0 0.0
    %4336 = vmatprep.subr.mxu0 0.0
    %4337 = vmatpush1.msra.mxu0 0.0
    %4338 = vmatprep.subr.mxu0 0.0
    %4339 = vmatpush1.msra.mxu0 0.0
    %4340 = vmatprep.subr.mxu0 0.0
    %4341 = vmatpush1.msra.mxu0 0.0
    %4342 = vmatprep.subr.mxu0 0.0
    %4343 = vmatpush1.msra.mxu0 0.0
    %4344 = vmatprep.subr.mxu0 0.0
    %4345 = vmatpush1.msra.mxu0 0.0
    %4346 = vmatprep.subr.mxu0 0.0
    %4347 = vmatpush1.msra.mxu0 0.0
    %4348 = vmatprep.subr.mxu0 0.0
    %4349 = vmatpush1.msra.mxu0 0.0
    %4350 = vmatprep.subr.mxu0 0.0
    %4351 = vmatpush1.msra.mxu0 0.0
    %4352 = vmatprep.subr.mxu0 0.0
    %4353 = vmatpush1.msra.mxu0 0.0
    %4354 = vmatprep.subr.mxu0 0.0
    %4355 = vmatpush1.msra.mxu0 0.0
    %4356 = vmatprep.subr.mxu0 0.0
    %4357 = vmatpush1.msra.mxu0 0.0
    %4358 = vmatprep.subr.mxu0 0.0
    %4359 = vmatpush1.msra.mxu0 0.0
    %4360 = vmatprep.subr.mxu0 0.0
    %4361 = vmatpush1.msra.mxu0 0.0
    %4362 = vmatprep.subr.mxu0 0.0
    %4363 = vmatpush1.msra.mxu0 0.0
    %4364 = vmatprep.subr.mxu0 0.0
    %4365 = vmatpush1.msra.mxu0 0.0
    %4366 = vmatprep.subr.mxu0 0.0
    %4367 = vmatpush1.msra.mxu0 0.0
    %4368 = vmatprep.subr.mxu0 0.0
    %4369 = vmatpush1.msra.mxu0 0.0
    %4370 = vmatprep.subr.mxu0 0.0
    %4371 = vmatpush1.msra.mxu0 0.0
    %4372 = vmatprep.subr.mxu0 0.0
    %4373 = vmatpush1.msra.mxu0 0.0
    %4374 = vmatprep.subr.mxu0 0.0
    %4375 = vmatpush1.msra.mxu0 0.0
    %4376 = vmatprep.subr.mxu0 0.0
    %4377 = vmatpush1.msra.mxu0 0.0
    %4378 = vmatprep.subr.mxu0 0.0
    %4379 = vmatpush1.msra.mxu0 0.0
    %4380 = vmatprep.subr.mxu0 0.0
    %4381 = vmatpush1.msra.mxu0 0.0
    %4382 = vmatprep.subr.mxu0 0.0
    %4383 = vmatpush1.msra.mxu0 0.0
    %4384 = vmatprep.subr.mxu0 0.0
    %4385 = vmatpush1.msra.mxu0 0.0
    %4386 = vmatprep.subr.mxu0 0.0
    %4387 = vmatpush1.msra.mxu0 0.0
    %4388 = vmatprep.subr.mxu0 0.0
    %4389 = vmatpush1.msra.mxu0 0.0
    %4390 = vmatprep.mubr.f32.mxu0 0.0
    %4391 = vmatmul.mubr.f32.gmra.mrb[0].mxu0 %v4324
    %v4392 = vpop.f32.mrb[0].mxu0
    %v4393 = vadd.f32 0.0, %v4392
    %v4394 = vpop.f32.mrb[0].mxu0
    %4395 = vdwg.mxu0
    %4397 = vrot.lane.b32.xlu0 %v4049, 8
    %v4398 = vpop.permute.xlu0 %4397
    %4401 = vrot.lane.b32.xlu0 %v4221, 16
    %v4402 = vpop.permute.xlu0 %4401
    %4405 = vrot.lane.b32.xlu0 %v4393, 24
    %v4406 = vpop.permute.xlu0 %4405
    %v4408 = vsel %vm414, %v3875, %v4398
    %v4409 = vsel %vm1083, %v4408, %v4402
    %v4410 = vsel %vm1085, %v4409, %v4406
    %v4412 = vlaneseq
    %v4413 = vshrl.u32 %v4412, 7
    %v4414 = vsub.s32 0, %v4413
    %v4415 = vrot.slane %v3714, %v4414
    %v4418 = vsel %vm247, %v4410, 0
    %4420 = vmatprep.subr.mxu0 0.0
    %4421 = vmatpush1.msra.mxu0 %v3709
    %4422 = vmatprep.subr.mxu0 0.0
    %4423 = vmatpush1.msra.mxu0 %v3710
    %4424 = vmatprep.subr.mxu0 0.0
    %4425 = vmatpush1.msra.mxu0 %v3711
    %4426 = vmatprep.subr.mxu0 0.0
    %4427 = vmatpush1.msra.mxu0 %v3712
    %4428 = vmatprep.subr.mxu0 0.0
    %4429 = vmatpush1.msra.mxu0 0.0
    %4430 = vmatprep.subr.mxu0 0.0
    %4431 = vmatpush1.msra.mxu0 0.0
    %4432 = vmatprep.subr.mxu0 0.0
    %4433 = vmatpush1.msra.mxu0 0.0
    %4434 = vmatprep.subr.mxu0 0.0
    %4435 = vmatpush1.msra.mxu0 0.0
    %4436 = vmatprep.subr.mxu0 0.0
    %4437 = vmatpush1.msra.mxu0 0.0
    %4438 = vmatprep.subr.mxu0 0.0
    %4439 = vmatpush1.msra.mxu0 0.0
    %4440 = vmatprep.subr.mxu0 0.0
    %4441 = vmatpush1.msra.mxu0 0.0
    %4442 = vmatprep.subr.mxu0 0.0
    %4443 = vmatpush1.msra.mxu0 0.0
    %4444 = vmatprep.subr.mxu0 0.0
    %4445 = vmatpush1.msra.mxu0 0.0
    %4446 = vmatprep.subr.mxu0 0.0
    %4447 = vmatpush1.msra.mxu0 0.0
    %4448 = vmatprep.subr.mxu0 0.0
    %4449 = vmatpush1.msra.mxu0 0.0
    %4450 = vmatprep.subr.mxu0 0.0
    %4451 = vmatpush1.msra.mxu0 0.0
    %4452 = vmatprep.subr.mxu0 0.0
    %4453 = vmatpush1.msra.mxu0 0.0
    %4454 = vmatprep.subr.mxu0 0.0
    %4455 = vmatpush1.msra.mxu0 0.0
    %4456 = vmatprep.subr.mxu0 0.0
    %4457 = vmatpush1.msra.mxu0 0.0
    %4458 = vmatprep.subr.mxu0 0.0
    %4459 = vmatpush1.msra.mxu0 0.0
    %4460 = vmatprep.subr.mxu0 0.0
    %4461 = vmatpush1.msra.mxu0 0.0
    %4462 = vmatprep.subr.mxu0 0.0
    %4463 = vmatpush1.msra.mxu0 0.0
    %4464 = vmatprep.subr.mxu0 0.0
    %4465 = vmatpush1.msra.mxu0 0.0
    %4466 = vmatprep.subr.mxu0 0.0
    %4467 = vmatpush1.msra.mxu0 0.0
    %4468 = vmatprep.subr.mxu0 0.0
    %4469 = vmatpush1.msra.mxu0 0.0
    %4470 = vmatprep.subr.mxu0 0.0
    %4471 = vmatpush1.msra.mxu0 0.0
    %4472 = vmatprep.subr.mxu0 0.0
    %4473 = vmatpush1.msra.mxu0 0.0
    %4474 = vmatprep.subr.mxu0 0.0
    %4475 = vmatpush1.msra.mxu0 0.0
    %4476 = vmatprep.subr.mxu0 0.0
    %4477 = vmatpush1.msra.mxu0 0.0
    %4478 = vmatprep.subr.mxu0 0.0
    %4479 = vmatpush1.msra.mxu0 0.0
    %4480 = vmatprep.subr.mxu0 0.0
    %4481 = vmatpush1.msra.mxu0 0.0
    %4482 = vmatprep.subr.mxu0 0.0
    %4483 = vmatpush1.msra.mxu0 0.0
    %4484 = vmatprep.mubr.f32.mxu0 0.0
    %4485 = vmatmul.mubr.f32.gmra.mrb[0].mxu0 %v4418
    %v4486 = vpop.f32.mrb[0].mxu0
    %v4487 = vadd.f32 %v4415, %v4486
    %v4488 = vpop.f32.mrb[0].mxu0
    %4489 = vdwg.mxu0
    %v4490 = vadd.f32 %v3443, %v4487
    %v4491 = vsel %vm247, %v4490, 0.0
    %4492 = vadd.xlane.f32.xlu0 %v4491
    %v4493 = vpop.xlane.xlu0 %4492
    %v4494 = vmul.f32 %v4493, %v1170
    %v4495 = vsub.f32 %v4490, %v4494
    %v4496 = vmul.f32 %v4495, %v4495
    %v4497 = vsel %vm247, %v4496, 0.0
    %4498 = vadd.xlane.f32.xlu0 %v4497
    %v4499 = vpop.xlane.xlu0 %4498
    %v4500 = vmul.f32 %v4499, %v1170
    %v4501 = vadd.f32 %v4500, 1e-05
    %v4502 = vrsqrt.pop %v4501
    %v4503 = vmul.f32 %v4495, %v4502
    %v4505 = vlaneseq
    %v4506 = vshrl.u32 %v4505, 7
    %v4507 = vsub.s32 0, %v4506
    %v4508 = vrot.slane %v2477, %v4507
    %v4510 = vmul.f32 %v4503, %v4508
    %v4512 = vlaneseq
    %v4513 = vshrl.u32 %v4512, 7
    %v4514 = vsub.s32 0, %v4513
    %v4515 = vrot.slane %v2481, %v4514
    %v4517 = vadd.f32 %v4510, %v4515
    %s4518 = scalar_lea.vmem %s18, 32
    %v4519 = vld [vmem:[%s4518] sm:$0xff]
    %v4520 = vld [vmem:[%s4518 + $0x8] sm:$0xff]
    %v4521 = vld [vmem:[%s4518 + $0x10] sm:$0xff]
    %v4522 = vld [vmem:[%s4518 + $0x18] sm:$0xff]
    %s4523 = scalar_lea.vmem [#allocation12], 1
    %v4524 = vld [vmem:[%s4523] sm:$0x1]
    %v4526 = vlaneseq
    %v4527 = vshrl.u32 %v4526, 7
    %v4528 = vsub.s32 0, %v4527
    %v4529 = vrot.slane %v4524, %v4528
    %v4532 = vsel %vm247, %v4517, 0
    %4534 = vmatprep.subr.mxu0 0.0
    %4535 = vmatpush1.msra.mxu0 %v4519
    %4536 = vmatprep.subr.mxu0 0.0
    %4537 = vmatpush1.msra.mxu0 %v4520
    %4538 = vmatprep.subr.mxu0 0.0
    %4539 = vmatpush1.msra.mxu0 %v4521
    %4540 = vmatprep.subr.mxu0 0.0
    %4541 = vmatpush1.msra.mxu0 %v4522
    %4542 = vmatprep.subr.mxu0 0.0
    %4543 = vmatpush1.msra.mxu0 0.0
    %4544 = vmatprep.subr.mxu0 0.0
    %4545 = vmatpush1.msra.mxu0 0.0
    %4546 = vmatprep.subr.mxu0 0.0
    %4547 = vmatpush1.msra.mxu0 0.0
    %4548 = vmatprep.subr.mxu0 0.0
    %4549 = vmatpush1.msra.mxu0 0.0
    %4550 = vmatprep.subr.mxu0 0.0
    %4551 = vmatpush1.msra.mxu0 0.0
    %4552 = vmatprep.subr.mxu0 0.0
    %4553 = vmatpush1.msra.mxu0 0.0
    %4554 = vmatprep.subr.mxu0 0.0
    %4555 = vmatpush1.msra.mxu0 0.0
    %4556 = vmatprep.subr.mxu0 0.0
    %4557 = vmatpush1.msra.mxu0 0.0
    %4558 = vmatprep.subr.mxu0 0.0
    %4559 = vmatpush1.msra.mxu0 0.0
    %4560 = vmatprep.subr.mxu0 0.0
    %4561 = vmatpush1.msra.mxu0 0.0
    %4562 = vmatprep.subr.mxu0 0.0
    %4563 = vmatpush1.msra.mxu0 0.0
    %4564 = vmatprep.subr.mxu0 0.0
    %4565 = vmatpush1.msra.mxu0 0.0
    %4566 = vmatprep.subr.mxu0 0.0
    %4567 = vmatpush1.msra.mxu0 0.0
    %4568 = vmatprep.subr.mxu0 0.0
    %4569 = vmatpush1.msra.mxu0 0.0
    %4570 = vmatprep.subr.mxu0 0.0
    %4571 = vmatpush1.msra.mxu0 0.0
    %4572 = vmatprep.subr.mxu0 0.0
    %4573 = vmatpush1.msra.mxu0 0.0
    %4574 = vmatprep.subr.mxu0 0.0
    %4575 = vmatpush1.msra.mxu0 0.0
    %4576 = vmatprep.subr.mxu0 0.0
    %4577 = vmatpush1.msra.mxu0 0.0
    %4578 = vmatprep.subr.mxu0 0.0
    %4579 = vmatpush1.msra.mxu0 0.0
    %4580 = vmatprep.subr.mxu0 0.0
    %4581 = vmatpush1.msra.mxu0 0.0
    %4582 = vmatprep.subr.mxu0 0.0
    %4583 = vmatpush1.msra.mxu0 0.0
    %4584 = vmatprep.subr.mxu0 0.0
    %4585 = vmatpush1.msra.mxu0 0.0
    %4586 = vmatprep.subr.mxu0 0.0
    %4587 = vmatpush1.msra.mxu0 0.0
    %4588 = vmatprep.subr.mxu0 0.0
    %4589 = vmatpush1.msra.mxu0 0.0
    %4590 = vmatprep.subr.mxu0 0.0
    %4591 = vmatpush1.msra.mxu0 0.0
    %4592 = vmatprep.subr.mxu0 0.0
    %4593 = vmatpush1.msra.mxu0 0.0
    %4594 = vmatprep.subr.mxu0 0.0
    %4595 = vmatpush1.msra.mxu0 0.0
    %4596 = vmatprep.subr.mxu0 0.0
    %4597 = vmatpush1.msra.mxu0 0.0
    %4598 = vmatprep.mubr.f32.mxu0 0.0
    %4599 = vmatmul.mubr.f32.gmra.mrb[0].mxu0 %v4532
    %v4600 = vpop.f32.mrb[0].mxu0
    %v4601 = vadd.f32 %v4529, %v4600
    %v4602 = vpop.f32.mrb[0].mxu0
    %4603 = vdwg.mxu0
    %v4604 = vmax.f32 %v4601, 0.0
    %s4605 = scalar_lea.vmem %s20, 64
    %v4606 = vld [vmem:[%s4605] sm:$0xff]
    %v4607 = vld [vmem:[%s4605 + $0x8] sm:$0xff]
    %v4608 = vld [vmem:[%s4605 + $0x10] sm:$0xff]
    %v4609 = vld [vmem:[%s4605 + $0x18] sm:$0xff]
    %v4610 = vld [vmem:[%s4605 + $0x20] sm:$0xff]
    %v4611 = vld [vmem:[%s4605 + $0x28] sm:$0xff]
    %v4612 = vld [vmem:[%s4605 + $0x30] sm:$0xff]
    %v4613 = vld [vmem:[%s4605 + $0x38] sm:$0xff]
    %s4614 = scalar_lea.vmem [#allocation13], 1
    %v4615 = vld [vmem:[%s4614] sm:$0x1]
    %v4617 = vlaneseq
    %v4618 = vshrl.u32 %v4617, 7
    %v4619 = vsub.s32 0, %v4618
    %v4620 = vrot.slane %v4615, %v4619
    %v4623 = vsel %vm2373, %v4604, 0
    %4625 = vmatprep.subr.mxu0 0.0
    %4626 = vmatpush1.msra.mxu0 %v4606
    %4627 = vmatprep.subr.mxu0 0.0
    %4628 = vmatpush1.msra.mxu0 %v4607
    %4629 = vmatprep.subr.mxu0 0.0
    %4630 = vmatpush1.msra.mxu0 %v4608
    %4631 = vmatprep.subr.mxu0 0.0
    %4632 = vmatpush1.msra.mxu0 %v4609
    %4633 = vmatprep.subr.mxu0 0.0
    %4634 = vmatpush1.msra.mxu0 %v4610
    %4635 = vmatprep.subr.mxu0 0.0
    %4636 = vmatpush1.msra.mxu0 %v4611
    %4637 = vmatprep.subr.mxu0 0.0
    %4638 = vmatpush1.msra.mxu0 %v4612
    %4639 = vmatprep.subr.mxu0 0.0
    %4640 = vmatpush1.msra.mxu0 %v4613
    %4641 = vmatprep.subr.mxu0 0.0
    %4642 = vmatpush1.msra.mxu0 0.0
    %4643 = vmatprep.subr.mxu0 0.0
    %4644 = vmatpush1.msra.mxu0 0.0
    %4645 = vmatprep.subr.mxu0 0.0
    %4646 = vmatpush1.msra.mxu0 0.0
    %4647 = vmatprep.subr.mxu0 0.0
    %4648 = vmatpush1.msra.mxu0 0.0
    %4649 = vmatprep.subr.mxu0 0.0
    %4650 = vmatpush1.msra.mxu0 0.0
    %4651 = vmatprep.subr.mxu0 0.0
    %4652 = vmatpush1.msra.mxu0 0.0
    %4653 = vmatprep.subr.mxu0 0.0
    %4654 = vmatpush1.msra.mxu0 0.0
    %4655 = vmatprep.subr.mxu0 0.0
    %4656 = vmatpush1.msra.mxu0 0.0
    %4657 = vmatprep.subr.mxu0 0.0
    %4658 = vmatpush1.msra.mxu0 0.0
    %4659 = vmatprep.subr.mxu0 0.0
    %4660 = vmatpush1.msra.mxu0 0.0
    %4661 = vmatprep.subr.mxu0 0.0
    %4662 = vmatpush1.msra.mxu0 0.0
    %4663 = vmatprep.subr.mxu0 0.0
    %4664 = vmatpush1.msra.mxu0 0.0
    %4665 = vmatprep.subr.mxu0 0.0
    %4666 = vmatpush1.msra.mxu0 0.0
    %4667 = vmatprep.subr.mxu0 0.0
    %4668 = vmatpush1.msra.mxu0 0.0
    %4669 = vmatprep.subr.mxu0 0.0
    %4670 = vmatpush1.msra.mxu0 0.0
    %4671 = vmatprep.subr.mxu0 0.0
    %4672 = vmatpush1.msra.mxu0 0.0
    %4673 = vmatprep.subr.mxu0 0.0
    %4674 = vmatpush1.msra.mxu0 0.0
    %4675 = vmatprep.subr.mxu0 0.0
    %4676 = vmatpush1.msra.mxu0 0.0
    %4677 = vmatprep.subr.mxu0 0.0
    %4678 = vmatpush1.msra.mxu0 0.0
    %4679 = vmatprep.subr.mxu0 0.0
    %4680 = vmatpush1.msra.mxu0 0.0
    %4681 = vmatprep.subr.mxu0 0.0
    %4682 = vmatpush1.msra.mxu0 0.0
    %4683 = vmatprep.subr.mxu0 0.0
    %4684 = vmatpush1.msra.mxu0 0.0
    %4685 = vmatprep.subr.mxu0 0.0
    %4686 = vmatpush1.msra.mxu0 0.0
    %4687 = vmatprep.subr.mxu0 0.0
    %4688 = vmatpush1.msra.mxu0 0.0
    %4689 = vmatprep.mubr.f32.mxu0 0.0
    %4690 = vmatmul.mubr.f32.gmra.mrb[0].mxu0 %v4623
    %v4691 = vpop.f32.mrb[0].mxu0
    %v4692 = vadd.f32 %v4620, %v4691
    %v4693 = vpop.f32.mrb[0].mxu0
    %4694 = vdwg.mxu0
    %v4695 = vadd.f32 %v4517, %v4692
    %v4696 = vsel %vm247, %v4695, 0.0
    %4697 = vadd.xlane.f32.xlu0 %v4696
    %v4698 = vpop.xlane.xlu0 %4697
    %v4699 = vmul.f32 %v4698, %v1170
    %v4700 = vsub.f32 %v4695, %v4699
    %v4701 = vmul.f32 %v4700, %v4700
    %v4702 = vsel %vm247, %v4701, 0.0
    %4703 = vadd.xlane.f32.xlu0 %v4702
    %v4704 = vpop.xlane.xlu0 %4703
    %v4705 = vmul.f32 %v4704, %v1170
    %v4706 = vadd.f32 %v4705, 1e-05
    %v4707 = vrsqrt.pop %v4706
    %v4708 = vmul.f32 %v4700, %v4707
    %v4710 = vlaneseq
    %v4711 = vshrl.u32 %v4710, 7
    %v4712 = vsub.s32 0, %v4711
    %v4713 = vrot.slane %v2478, %v4712
    %v4715 = vmul.f32 %v4708, %v4713
    %v4717 = vlaneseq
    %v4718 = vshrl.u32 %v4717, 7
    %v4719 = vsub.s32 0, %v4718
    %v4720 = vrot.slane %v2482, %v4719
    %v4722 = vadd.f32 %v4715, %v4720
    %v4723 = vsel %vm247, %v4722, 0.0
    %4724 = vadd.xlane.f32.xlu0 %v4723
    %v4725 = vpop.xlane.xlu0 %4724
    %v4726 = vmul.f32 %v4725, %v1170
    %v4727 = vsub.f32 %v4722, %v4726
    %v4728 = vmul.f32 %v4727, %v4727
    %v4729 = vsel %vm247, %v4728, 0.0
    %4730 = vadd.xlane.f32.xlu0 %v4729
    %v4731 = vpop.xlane.xlu0 %4730
    %v4732 = vmul.f32 %v4731, %v1170
    %v4733 = vadd.f32 %v4732, 1e-05
    %v4734 = vrsqrt.pop %v4733
    %v4735 = vmul.f32 %v4727, %v4734
    %v4737 = vlaneseq
    %v4738 = vshrl.u32 %v4737, 7
    %v4739 = vsub.s32 0, %v4738
    %v4740 = vrot.slane %v219, %v4739
    %v4742 = vmul.f32 %v4735, %v4740
    %v4744 = vlaneseq
    %v4745 = vshrl.u32 %v4744, 7
    %v4746 = vsub.s32 0, %v4745
    %v4747 = vrot.slane %v220, %v4746
    %v4749 = vadd.f32 %v4742, %v4747
    %4750 = vst.msk [vmem:[%s26] sm:$0xff] %vm247, %v4749
    %s4751 = scalar_lea.vmem %s0, 8
    %v4752 = vld [vmem:[%s4751] sm:$0xff]
    %s4753 = scalar_lea.vmem %s2, 8
    %v4754 = vld [vmem:[%s4753] sm:$0xff]
    %s4755 = scalar_lea.vmem %s1, 16
    %v4756 = vld [vmem:[%s4755] sm:$0xff]
    %v4757 = vld [vmem:[%s4755 + $0x8] sm:$0xff]
    %s4758 = scalar_lea.vmem %s3, 16
    %v4759 = vld [vmem:[%s4758] sm:$0xff]
    %v4760 = vld [vmem:[%s4758 + $0x8] sm:$0xff]
    %v4761 = vadd.f32 %v4756, %v4759
    %v4762 = vadd.f32 %v4757, %v4760
    %v4763 = vld [vmem:[#allocation15] sm:$0x1]
    %v4764 = vld [vmem:[#allocation15 + $0x1] sm:$0x1]
    %v4765 = vld [vmem:[#allocation15 + $0x2] sm:$0x1]
    %v4766 = vld [vmem:[#allocation16] sm:$0x1]
    %v4767 = vld [vmem:[#allocation16 + $0x1] sm:$0x1]
    %v4768 = vld [vmem:[#allocation16 + $0x2] sm:$0x1]
    %v4769 = vadd.f32 %v4752, %v4754
    %v4770 = vld [vmem:[%s4] sm:$0xff]
    %v4771 = vld [vmem:[%s4 + $0x8] sm:$0xff]
    %v4772 = vld [vmem:[%s4 + $0x10] sm:$0xff]
    %v4773 = vld [vmem:[%s4 + $0x18] sm:$0xff]
    %v4774 = vld [vmem:[%s5] sm:$0x1]
    %v4776 = vlaneseq
    %v4777 = vshrl.u32 %v4776, 7
    %v4778 = vsub.s32 0, %v4777
    %v4779 = vrot.slane %v4774, %v4778
    %v4782 = vsel %vm247, %v4769, 0
    %4784 = vmatprep.subr.mxu0 0.0
    %4785 = vmatpush1.msra.mxu0 %v4770
    %4786 = vmatprep.subr.mxu0 0.0
    %4787 = vmatpush1.msra.mxu0 %v4771
    %4788 = vmatprep.subr.mxu0 0.0
    %4789 = vmatpush1.msra.mxu0 %v4772
    %4790 = vmatprep.subr.mxu0 0.0
    %4791 = vmatpush1.msra.mxu0 %v4773
    %4792 = vmatprep.subr.mxu0 0.0
    %4793 = vmatpush1.msra.mxu0 0.0
    %4794 = vmatprep.subr.mxu0 0.0
    %4795 = vmatpush1.msra.mxu0 0.0
    %4796 = vmatprep.subr.mxu0 0.0
    %4797 = vmatpush1.msra.mxu0 0.0
    %4798 = vmatprep.subr.mxu0 0.0
    %4799 = vmatpush1.msra.mxu0 0.0
    %4800 = vmatprep.subr.mxu0 0.0
    %4801 = vmatpush1.msra.mxu0 0.0
    %4802 = vmatprep.subr.mxu0 0.0
    %4803 = vmatpush1.msra.mxu0 0.0
    %4804 = vmatprep.subr.mxu0 0.0
    %4805 = vmatpush1.msra.mxu0 0.0
    %4806 = vmatprep.subr.mxu0 0.0
    %4807 = vmatpush1.msra.mxu0 0.0
    %4808 = vmatprep.subr.mxu0 0.0
    %4809 = vmatpush1.msra.mxu0 0.0
    %4810 = vmatprep.subr.mxu0 0.0
    %4811 = vmatpush1.msra.mxu0 0.0
    %4812 = vmatprep.subr.mxu0 0.0
    %4813 = vmatpush1.msra.mxu0 0.0
    %4814 = vmatprep.subr.mxu0 0.0
    %4815 = vmatpush1.msra.mxu0 0.0
    %4816 = vmatprep.subr.mxu0 0.0
    %4817 = vmatpush1.msra.mxu0 0.0
    %4818 = vmatprep.subr.mxu0 0.0
    %4819 = vmatpush1.msra.mxu0 0.0
    %4820 = vmatprep.subr.mxu0 0.0
    %4821 = vmatpush1.msra.mxu0 0.0
    %4822 = vmatprep.subr.mxu0 0.0
    %4823 = vmatpush1.msra.mxu0 0.0
    %4824 = vmatprep.subr.mxu0 0.0
    %4825 = vmatpush1.msra.mxu0 0.0
    %4826 = vmatprep.subr.mxu0 0.0
    %4827 = vmatpush1.msra.mxu0 0.0
    %4828 = vmatprep.subr.mxu0 0.0
    %4829 = vmatpush1.msra.mxu0 0.0
    %4830 = vmatprep.subr.mxu0 0.0
    %4831 = vmatpush1.msra.mxu0 0.0
    %4832 = vmatprep.subr.mxu0 0.0
    %4833 = vmatpush1.msra.mxu0 0.0
    %4834 = vmatprep.subr.mxu0 0.0
    %4835 = vmatpush1.msra.mxu0 0.0
    %4836 = vmatprep.subr.mxu0 0.0
    %4837 = vmatpush1.msra.mxu0 0.0
    %4838 = vmatprep.subr.mxu0 0.0
    %4839 = vmatpush1.msra.mxu0 0.0
    %4840 = vmatprep.subr.mxu0 0.0
    %4841 = vmatpush1.msra.mxu0 0.0
    %4842 = vmatprep.subr.mxu0 0.0
    %4843 = vmatpush1.msra.mxu0 0.0
    %4844 = vmatprep.subr.mxu0 0.0
    %4845 = vmatpush1.msra.mxu0 0.0
    %4846 = vmatprep.subr.mxu0 0.0
    %4847 = vmatpush1.msra.mxu0 0.0
    %4848 = vmatprep.mubr.f32.mxu0 0.0
    %4849 = vmatmul.mubr.f32.gmra.mrb[0].mxu0 %v4782
    %v4850 = vpop.f32.mrb[0].mxu0
    %v4851 = vadd.f32 %v4779, %v4850
    %v4852 = vpop.f32.mrb[0].mxu0
    %4853 = vdwg.mxu0
    %v4854 = vmul.f32 %v4851, 0.35355338
    %v4855 = vld [vmem:[%s6] sm:$0xff]
    %v4856 = vld [vmem:[%s6 + $0x8] sm:$0xff]
    %v4857 = vld [vmem:[%s6 + $0x10] sm:$0xff]
    %v4858 = vld [vmem:[%s6 + $0x18] sm:$0xff]
    %v4859 = vld [vmem:[%s7] sm:$0x1]
    %v4861 = vlaneseq
    %v4862 = vshrl.u32 %v4861, 7
    %v4863 = vsub.s32 0, %v4862
    %v4864 = vrot.slane %v4859, %v4863
    %v4867 = vsel %vm247, %v4752, 0
    %4869 = vmatprep.subr.mxu0 0.0
    %4870 = vmatpush1.msra.mxu0 %v4855
    %4871 = vmatprep.subr.mxu0 0.0
    %4872 = vmatpush1.msra.mxu0 %v4856
    %4873 = vmatprep.subr.mxu0 0.0
    %4874 = vmatpush1.msra.mxu0 %v4857
    %4875 = vmatprep.subr.mxu0 0.0
    %4876 = vmatpush1.msra.mxu0 %v4858
    %4877 = vmatprep.subr.mxu0 0.0
    %4878 = vmatpush1.msra.mxu0 0.0
    %4879 = vmatprep.subr.mxu0 0.0
    %4880 = vmatpush1.msra.mxu0 0.0
    %4881 = vmatprep.subr.mxu0 0.0
    %4882 = vmatpush1.msra.mxu0 0.0
    %4883 = vmatprep.subr.mxu0 0.0
    %4884 = vmatpush1.msra.mxu0 0.0
    %4885 = vmatprep.subr.mxu0 0.0
    %4886 = vmatpush1.msra.mxu0 0.0
    %4887 = vmatprep.subr.mxu0 0.0
    %4888 = vmatpush1.msra.mxu0 0.0
    %4889 = vmatprep.subr.mxu0 0.0
    %4890 = vmatpush1.msra.mxu0 0.0
    %4891 = vmatprep.subr.mxu0 0.0
    %4892 = vmatpush1.msra.mxu0 0.0
    %4893 = vmatprep.subr.mxu0 0.0
    %4894 = vmatpush1.msra.mxu0 0.0
    %4895 = vmatprep.subr.mxu0 0.0
    %4896 = vmatpush1.msra.mxu0 0.0
    %4897 = vmatprep.subr.mxu0 0.0
    %4898 = vmatpush1.msra.mxu0 0.0
    %4899 = vmatprep.subr.mxu0 0.0
    %4900 = vmatpush1.msra.mxu0 0.0
    %4901 = vmatprep.subr.mxu0 0.0
    %4902 = vmatpush1.msra.mxu0 0.0
    %4903 = vmatprep.subr.mxu0 0.0
    %4904 = vmatpush1.msra.mxu0 0.0
    %4905 = vmatprep.subr.mxu0 0.0
    %4906 = vmatpush1.msra.mxu0 0.0
    %4907 = vmatprep.subr.mxu0 0.0
    %4908 = vmatpush1.msra.mxu0 0.0
    %4909 = vmatprep.subr.mxu0 0.0
    %4910 = vmatpush1.msra.mxu0 0.0
    %4911 = vmatprep.subr.mxu0 0.0
    %4912 = vmatpush1.msra.mxu0 0.0
    %4913 = vmatprep.subr.mxu0 0.0
    %4914 = vmatpush1.msra.mxu0 0.0
    %4915 = vmatprep.subr.mxu0 0.0
    %4916 = vmatpush1.msra.mxu0 0.0
    %4917 = vmatprep.subr.mxu0 0.0
    %4918 = vmatpush1.msra.mxu0 0.0
    %4919 = vmatprep.subr.mxu0 0.0
    %4920 = vmatpush1.msra.mxu0 0.0
    %4921 = vmatprep.subr.mxu0 0.0
    %4922 = vmatpush1.msra.mxu0 0.0
    %4923 = vmatprep.subr.mxu0 0.0
    %4924 = vmatpush1.msra.mxu0 0.0
    %4925 = vmatprep.subr.mxu0 0.0
    %4926 = vmatpush1.msra.mxu0 0.0
    %4927 = vmatprep.subr.mxu0 0.0
    %4928 = vmatpush1.msra.mxu0 0.0
    %4929 = vmatprep.subr.mxu0 0.0
    %4930 = vmatpush1.msra.mxu0 0.0
    %4931 = vmatprep.subr.mxu0 0.0
    %4932 = vmatpush1.msra.mxu0 0.0
    %4933 = vmatprep.mubr.f32.mxu0 0.0
    %4934 = vmatmul.mubr.f32.gmra.mrb[0].mxu0 %v4867
    %v4935 = vpop.f32.mrb[0].mxu0
    %v4936 = vadd.f32 %v4864, %v4935
    %v4937 = vpop.f32.mrb[0].mxu0
    %4938 = vdwg.mxu0
    %v4939 = vld [vmem:[%s8] sm:$0xff]
    %v4940 = vld [vmem:[%s8 + $0x8] sm:$0xff]
    %v4941 = vld [vmem:[%s8 + $0x10] sm:$0xff]
    %v4942 = vld [vmem:[%s8 + $0x18] sm:$0xff]
    %v4943 = vld [vmem:[%s9] sm:$0x1]
    %4945 = vrot.lane.b32.xlu0 %v4851, 96
    %v4946 = vpop.permute.xlu0 %4945
    %v4948 = vsel %vm414, %v4854, 0
    %v4950 = vsel %vm414, %v4946, 0
    %4952 = vmatprep.subr.mxu0 0.0
    %4953 = vmatpush1.xpose.msra.mxu0 %v4950
    %4954 = vmatprep.subr.mxu0 0.0
    %4955 = vmatpush1.xpose.msra.mxu0 0.0
    %4956 = vmatprep.subr.mxu0 0.0
    %4957 = vmatpush1.xpose.msra.mxu0 0.0
    %4958 = vmatprep.subr.mxu0 0.0
    %4959 = vmatpush1.xpose.msra.mxu0 0.0
    %4960 = vmatprep.subr.mxu0 0.0
    %4961 = vmatpush1.xpose.msra.mxu0 0.0
    %4962 = vmatprep.subr.mxu0 0.0
    %4963 = vmatpush1.xpose.msra.mxu0 0.0
    %4964 = vmatprep.subr.mxu0 0.0
    %4965 = vmatpush1.xpose.msra.mxu0 0.0
    %4966 = vmatprep.subr.mxu0 0.0
    %4967 = vmatpush1.xpose.msra.mxu0 0.0
    %4968 = vmatprep.subr.mxu0 0.0
    %4969 = vmatpush1.xpose.msra.mxu0 0.0
    %4970 = vmatprep.subr.mxu0 0.0
    %4971 = vmatpush1.xpose.msra.mxu0 0.0
    %4972 = vmatprep.subr.mxu0 0.0
    %4973 = vmatpush1.xpose.msra.mxu0 0.0
    %4974 = vmatprep.subr.mxu0 0.0
    %4975 = vmatpush1.xpose.msra.mxu0 0.0
    %4976 = vmatprep.subr.mxu0 0.0
    %4977 = vmatpush1.xpose.msra.mxu0 0.0
    %4978 = vmatprep.subr.mxu0 0.0
    %4979 = vmatpush1.xpose.msra.mxu0 0.0
    %4980 = vmatprep.subr.mxu0 0.0
    %4981 = vmatpush1.xpose.msra.mxu0 0.0
    %4982 = vmatprep.subr.mxu0 0.0
    %4983 = vmatpush1.xpose.msra.mxu0 0.0
    %4984 = vmatprep.subr.mxu0 0.0
    %4985 = vmatpush1.xpose.msra.mxu0 0.0
    %4986 = vmatprep.subr.mxu0 0.0
    %4987 = vmatpush1.xpose.msra.mxu0 0.0
    %4988 = vmatprep.subr.mxu0 0.0
    %4989 = vmatpush1.xpose.msra.mxu0 0.0
    %4990 = vmatprep.subr.mxu0 0.0
    %4991 = vmatpush1.xpose.msra.mxu0 0.0
    %4992 = vmatprep.subr.mxu0 0.0
    %4993 = vmatpush1.xpose.msra.mxu0 0.0
    %4994 = vmatprep.subr.mxu0 0.0
    %4995 = vmatpush1.xpose.msra.mxu0 0.0
    %4996 = vmatprep.subr.mxu0 0.0
    %4997 = vmatpush1.xpose.msra.mxu0 0.0
    %4998 = vmatprep.subr.mxu0 0.0
    %4999 = vmatpush1.xpose.msra.mxu0 0.0
    %5000 = vmatprep.subr.mxu0 0.0
    %5001 = vmatpush1.xpose.msra.mxu0 0.0
    %5002 = vmatprep.subr.mxu0 0.0
    %5003 = vmatpush1.xpose.msra.mxu0 0.0
    %5004 = vmatprep.subr.mxu0 0.0
    %5005 = vmatpush1.xpose.msra.mxu0 0.0
    %5006 = vmatprep.subr.mxu0 0.0
    %5007 = vmatpush1.xpose.msra.mxu0 0.0
    %5008 = vmatprep.subr.mxu0 0.0
    %5009 = vmatpush1.xpose.msra.mxu0 0.0
    %5010 = vmatprep.subr.mxu0 0.0
    %5011 = vmatpush1.xpose.msra.mxu0 0.0
    %5012 = vmatprep.subr.mxu0 0.0
    %5013 = vmatpush1.xpose.msra.mxu0 0.0
    %5014 = vmatprep.subr.mxu0 0.0
    %5015 = vmatpush1.xpose.msra.mxu0 0.0
    %5016 = vmatprep.mubr.f32.mxu0 0.0
    %5017 = vmatmul.mubr.f32.gmra.mrb[0].mxu0 %v4948
    %v5018 = vpop.f32.mrb[0].mxu0
    %v5019 = vadd.f32 0.0, %v5018
    %v5020 = vpop.f32.mrb[0].mxu0
    %5021 = vdwg.mxu0
    %v5022 = vsel %vm414, %v5019, -inf
    %5023 = vmax.xlane.f32.xlu0 %v5022
    %v5024 = vpop.xlane.xlu0 %5023
    %v5025 = vsub.f32 %v5019, %v5024
    %v5026 = vmul.f32 %v5025, 1.442695
    %v5027 = vpow.pop %v5026
    %v5028 = vsel %vm414, %v5027, 0.0
    %5029 = vadd.xlane.f32.xlu0 %v5028
    %v5030 = vpop.xlane.xlu0 %5029
    %v5031 = vrcp.pop %v5030
    %v5032 = vmul.f32 %v5027, %v5031
    %v5034 = vsel %vm414, %v5032, 0
    %5036 = vmatprep.subr.mxu0 0.0
    %5037 = vmatpush1.msra.mxu0 %v4936
    %5038 = vmatprep.subr.mxu0 0.0
    %5039 = vmatpush1.msra.mxu0 0.0
    %5040 = vmatprep.subr.mxu0 0.0
    %5041 = vmatpush1.msra.mxu0 0.0
    %5042 = vmatprep.subr.mxu0 0.0
    %5043 = vmatpush1.msra.mxu0 0.0
    %5044 = vmatprep.subr.mxu0 0.0
    %5045 = vmatpush1.msra.mxu0 0.0
    %5046 = vmatprep.subr.mxu0 0.0
    %5047 = vmatpush1.msra.mxu0 0.0
    %5048 = vmatprep.subr.mxu0 0.0
    %5049 = vmatpush1.msra.mxu0 0.0
    %5050 = vmatprep.subr.mxu0 0.0
    %5051 = vmatpush1.msra.mxu0 0.0
    %5052 = vmatprep.subr.mxu0 0.0
    %5053 = vmatpush1.msra.mxu0 0.0
    %5054 = vmatprep.subr.mxu0 0.0
    %5055 = vmatpush1.msra.mxu0 0.0
    %5056 = vmatprep.subr.mxu0 0.0
    %5057 = vmatpush1.msra.mxu0 0.0
    %5058 = vmatprep.subr.mxu0 0.0
    %5059 = vmatpush1.msra.mxu0 0.0
    %5060 = vmatprep.subr.mxu0 0.0
    %5061 = vmatpush1.msra.mxu0 0.0
    %5062 = vmatprep.subr.mxu0 0.0
    %5063 = vmatpush1.msra.mxu0 0.0
    %5064 = vmatprep.subr.mxu0 0.0
    %5065 = vmatpush1.msra.mxu0 0.0
    %5066 = vmatprep.subr.mxu0 0.0
    %5067 = vmatpush1.msra.mxu0 0.0
    %5068 = vmatprep.subr.mxu0 0.0
    %5069 = vmatpush1.msra.mxu0 0.0
    %5070 = vmatprep.subr.mxu0 0.0
    %5071 = vmatpush1.msra.mxu0 0.0
    %5072 = vmatprep.subr.mxu0 0.0
    %5073 = vmatpush1.msra.mxu0 0.0
    %5074 = vmatprep.subr.mxu0 0.0
    %5075 = vmatpush1.msra.mxu0 0.0
    %5076 = vmatprep.subr.mxu0 0.0
    %5077 = vmatpush1.msra.mxu0 0.0
    %5078 = vmatprep.subr.mxu0 0.0
    %5079 = vmatpush1.msra.mxu0 0.0
    %5080 = vmatprep.subr.mxu0 0.0
    %5081 = vmatpush1.msra.mxu0 0.0
    %5082 = vmatprep.subr.mxu0 0.0
    %5083 = vmatpush1.msra.mxu0 0.0
    %5084 = vmatprep.subr.mxu0 0.0
    %5085 = vmatpush1.msra.mxu0 0.0
    %5086 = vmatprep.subr.mxu0 0.0
    %5087 = vmatpush1.msra.mxu0 0.0
    %5088 = vmatprep.subr.mxu0 0.0
    %5089 = vmatpush1.msra.mxu0 0.0
    %5090 = vmatprep.subr.mxu0 0.0
    %5091 = vmatpush1.msra.mxu0 0.0
    %5092 = vmatprep.subr.mxu0 0.0
    %5093 = vmatpush1.msra.mxu0 0.0
    %5094 = vmatprep.subr.mxu0 0.0
    %5095 = vmatpush1.msra.mxu0 0.0
    %5096 = vmatprep.subr.mxu0 0.0
    %5097 = vmatpush1.msra.mxu0 0.0
    %5098 = vmatprep.subr.mxu0 0.0
    %5099 = vmatpush1.msra.mxu0 0.0
    %5100 = vmatprep.mubr.f32.mxu0 0.0
    %5101 = vmatmul.mubr.f32.gmra.mrb[0].mxu0 %v5034
    %v5102 = vpop.f32.mrb[0].mxu0
    %v5103 = vadd.f32 0.0, %v5102
    %v5104 = vpop.f32.mrb[0].mxu0
    %5105 = vdwg.mxu0
    %5106 = vrot.lane.b32.xlu0 %v4854, 120
    %v5107 = vpop.permute.xlu0 %5106
    %5108 = vrot.lane.b32.xlu0 %v4851, 88
    %v5109 = vpop.permute.xlu0 %5108
    %v5110 = vsel %vm414, %v5107, 0
    %v5112 = vsel %vm414, %v5109, 0
    %5114 = vmatprep.subr.mxu0 0.0
    %5115 = vmatpush1.xpose.msra.mxu0 %v5112
    %5116 = vmatprep.subr.mxu0 0.0
    %5117 = vmatpush1.xpose.msra.mxu0 0.0
    %5118 = vmatprep.subr.mxu0 0.0
    %5119 = vmatpush1.xpose.msra.mxu0 0.0
    %5120 = vmatprep.subr.mxu0 0.0
    %5121 = vmatpush1.xpose.msra.mxu0 0.0
    %5122 = vmatprep.subr.mxu0 0.0
    %5123 = vmatpush1.xpose.msra.mxu0 0.0
    %5124 = vmatprep.subr.mxu0 0.0
    %5125 = vmatpush1.xpose.msra.mxu0 0.0
    %5126 = vmatprep.subr.mxu0 0.0
    %5127 = vmatpush1.xpose.msra.mxu0 0.0
    %5128 = vmatprep.subr.mxu0 0.0
    %5129 = vmatpush1.xpose.msra.mxu0 0.0
    %5130 = vmatprep.subr.mxu0 0.0
    %5131 = vmatpush1.xpose.msra.mxu0 0.0
    %5132 = vmatprep.subr.mxu0 0.0
    %5133 = vmatpush1.xpose.msra.mxu0 0.0
    %5134 = vmatprep.subr.mxu0 0.0
    %5135 = vmatpush1.xpose.msra.mxu0 0.0
    %5136 = vmatprep.subr.mxu0 0.0
    %5137 = vmatpush1.xpose.msra.mxu0 0.0
    %5138 = vmatprep.subr.mxu0 0.0
    %5139 = vmatpush1.xpose.msra.mxu0 0.0
    %5140 = vmatprep.subr.mxu0 0.0
    %5141 = vmatpush1.xpose.msra.mxu0 0.0
    %5142 = vmatprep.subr.mxu0 0.0
    %5143 = vmatpush1.xpose.msra.mxu0 0.0
    %5144 = vmatprep.subr.mxu0 0.0
    %5145 = vmatpush1.xpose.msra.mxu0 0.0
    %5146 = vmatprep.subr.mxu0 0.0
    %5147 = vmatpush1.xpose.msra.mxu0 0.0
    %5148 = vmatprep.subr.mxu0 0.0
    %5149 = vmatpush1.xpose.msra.mxu0 0.0
    %5150 = vmatprep.subr.mxu0 0.0
    %5151 = vmatpush1.xpose.msra.mxu0 0.0
    %5152 = vmatprep.subr.mxu0 0.0
    %5153 = vmatpush1.xpose.msra.mxu0 0.0
    %5154 = vmatprep.subr.mxu0 0.0
    %5155 = vmatpush1.xpose.msra.mxu0 0.0
    %5156 = vmatprep.subr.mxu0 0.0
    %5157 = vmatpush1.xpose.msra.mxu0 0.0
    %5158 = vmatprep.subr.mxu0 0.0
    %5159 = vmatpush1.xpose.msra.mxu0 0.0
    %5160 = vmatprep.subr.mxu0 0.0
    %5161 = vmatpush1.xpose.msra.mxu0 0.0
    %5162 = vmatprep.subr.mxu0 0.0
    %5163 = vmatpush1.xpose.msra.mxu0 0.0
    %5164 = vmatprep.subr.mxu0 0.0
    %5165 = vmatpush1.xpose.msra.mxu0 0.0
    %5166 = vmatprep.subr.mxu0 0.0
    %5167 = vmatpush1.xpose.msra.mxu0 0.0
    %5168 = vmatprep.subr.mxu0 0.0
    %5169 = vmatpush1.xpose.msra.mxu0 0.0
    %5170 = vmatprep.subr.mxu0 0.0
    %5171 = vmatpush1.xpose.msra.mxu0 0.0
    %5172 = vmatprep.subr.mxu0 0.0
    %5173 = vmatpush1.xpose.msra.mxu0 0.0
    %5174 = vmatprep.subr.mxu0 0.0
    %5175 = vmatpush1.xpose.msra.mxu0 0.0
    %5176 = vmatprep.subr.mxu0 0.0
    %5177 = vmatpush1.xpose.msra.mxu0 0.0
    %5178 = vmatprep.mubr.f32.mxu0 0.0
    %5179 = vmatmul.mubr.f32.gmra.mrb[0].mxu0 %v5110
    %v5180 = vpop.f32.mrb[0].mxu0
    %v5181 = vadd.f32 0.0, %v5180
    %v5182 = vpop.f32.mrb[0].mxu0
    %5183 = vdwg.mxu0
    %v5184 = vsel %vm414, %v5181, -inf
    %5185 = vmax.xlane.f32.xlu0 %v5184
    %v5186 = vpop.xlane.xlu0 %5185
    %v5187 = vsub.f32 %v5181, %v5186
    %v5188 = vmul.f32 %v5187, 1.442695
    %v5189 = vpow.pop %v5188
    %v5190 = vsel %vm414, %v5189, 0.0
    %5191 = vadd.xlane.f32.xlu0 %v5190
    %v5192 = vpop.xlane.xlu0 %5191
    %v5193 = vrcp.pop %v5192
    %v5194 = vmul.f32 %v5189, %v5193
    %5196 = vrot.lane.b32.xlu0 %v4936, 120
    %v5197 = vpop.permute.xlu0 %5196
    %v5200 = vsel %vm414, %v5194, 0
    %5202 = vmatprep.subr.mxu0 0.0
    %5203 = vmatpush1.msra.mxu0 %v5197
    %5204 = vmatprep.subr.mxu0 0.0
    %5205 = vmatpush1.msra.mxu0 0.0
    %5206 = vmatprep.subr.mxu0 0.0
    %5207 = vmatpush1.msra.mxu0 0.0
    %5208 = vmatprep.subr.mxu0 0.0
    %5209 = vmatpush1.msra.mxu0 0.0
    %5210 = vmatprep.subr.mxu0 0.0
    %5211 = vmatpush1.msra.mxu0 0.0
    %5212 = vmatprep.subr.mxu0 0.0
    %5213 = vmatpush1.msra.mxu0 0.0
    %5214 = vmatprep.subr.mxu0 0.0
    %5215 = vmatpush1.msra.mxu0 0.0
    %5216 = vmatprep.subr.mxu0 0.0
    %5217 = vmatpush1.msra.mxu0 0.0
    %5218 = vmatprep.subr.mxu0 0.0
    %5219 = vmatpush1.msra.mxu0 0.0
    %5220 = vmatprep.subr.mxu0 0.0
    %5221 = vmatpush1.msra.mxu0 0.0
    %5222 = vmatprep.subr.mxu0 0.0
    %5223 = vmatpush1.msra.mxu0 0.0
    %5224 = vmatprep.subr.mxu0 0.0
    %5225 = vmatpush1.msra.mxu0 0.0
    %5226 = vmatprep.subr.mxu0 0.0
    %5227 = vmatpush1.msra.mxu0 0.0
    %5228 = vmatprep.subr.mxu0 0.0
    %5229 = vmatpush1.msra.mxu0 0.0
    %5230 = vmatprep.subr.mxu0 0.0
    %5231 = vmatpush1.msra.mxu0 0.0
    %5232 = vmatprep.subr.mxu0 0.0
    %5233 = vmatpush1.msra.mxu0 0.0
    %5234 = vmatprep.subr.mxu0 0.0
    %5235 = vmatpush1.msra.mxu0 0.0
    %5236 = vmatprep.subr.mxu0 0.0
    %5237 = vmatpush1.msra.mxu0 0.0
    %5238 = vmatprep.subr.mxu0 0.0
    %5239 = vmatpush1.msra.mxu0 0.0
    %5240 = vmatprep.subr.mxu0 0.0
    %5241 = vmatpush1.msra.mxu0 0.0
    %5242 = vmatprep.subr.mxu0 0.0
    %5243 = vmatpush1.msra.mxu0 0.0
    %5244 = vmatprep.subr.mxu0 0.0
    %5245 = vmatpush1.msra.mxu0 0.0
    %5246 = vmatprep.subr.mxu0 0.0
    %5247 = vmatpush1.msra.mxu0 0.0
    %5248 = vmatprep.subr.mxu0 0.0
    %5249 = vmatpush1.msra.mxu0 0.0
    %5250 = vmatprep.subr.mxu0 0.0
    %5251 = vmatpush1.msra.mxu0 0.0
    %5252 = vmatprep.subr.mxu0 0.0
    %5253 = vmatpush1.msra.mxu0 0.0
    %5254 = vmatprep.subr.mxu0 0.0
    %5255 = vmatpush1.msra.mxu0 0.0
    %5256 = vmatprep.subr.mxu0 0.0
    %5257 = vmatpush1.msra.mxu0 0.0
    %5258 = vmatprep.subr.mxu0 0.0
    %5259 = vmatpush1.msra.mxu0 0.0
    %5260 = vmatprep.subr.mxu0 0.0
    %5261 = vmatpush1.msra.mxu0 0.0
    %5262 = vmatprep.subr.mxu0 0.0
    %5263 = vmatpush1.msra.mxu0 0.0
    %5264 = vmatprep.subr.mxu0 0.0
    %5265 = vmatpush1.msra.mxu0 0.0
    %5266 = vmatprep.mubr.f32.mxu0 0.0
    %5267 = vmatmul.mubr.f32.gmra.mrb[0].mxu0 %v5200
    %v5268 = vpop.f32.mrb[0].mxu0
    %v5269 = vadd.f32 0.0, %v5268
    %v5270 = vpop.f32.mrb[0].mxu0
    %5271 = vdwg.mxu0
    %5272 = vrot.lane.b32.xlu0 %v4854, 112
    %v5273 = vpop.permute.xlu0 %5272
    %5274 = vrot.lane.b32.xlu0 %v4851, 80
    %v5275 = vpop.permute.xlu0 %5274
    %v5276 = vsel %vm414, %v5273, 0
    %v5278 = vsel %vm414, %v5275, 0
    %5280 = vmatprep.subr.mxu0 0.0
    %5281 = vmatpush1.xpose.msra.mxu0 %v5278
    %5282 = vmatprep.subr.mxu0 0.0
    %5283 = vmatpush1.xpose.msra.mxu0 0.0
    %5284 = vmatprep.subr.mxu0 0.0
    %5285 = vmatpush1.xpose.msra.mxu0 0.0
    %5286 = vmatprep.subr.mxu0 0.0
    %5287 = vmatpush1.xpose.msra.mxu0 0.0
    %5288 = vmatprep.subr.mxu0 0.0
    %5289 = vmatpush1.xpose.msra.mxu0 0.0
    %5290 = vmatprep.subr.mxu0 0.0
    %5291 = vmatpush1.xpose.msra.mxu0 0.0
    %5292 = vmatprep.subr.mxu0 0.0
    %5293 = vmatpush1.xpose.msra.mxu0 0.0
    %5294 = vmatprep.subr.mxu0 0.0
    %5295 = vmatpush1.xpose.msra.mxu0 0.0
    %5296 = vmatprep.subr.mxu0 0.0
    %5297 = vmatpush1.xpose.msra.mxu0 0.0
    %5298 = vmatprep.subr.mxu0 0.0
    %5299 = vmatpush1.xpose.msra.mxu0 0.0
    %5300 = vmatprep.subr.mxu0 0.0
    %5301 = vmatpush1.xpose.msra.mxu0 0.0
    %5302 = vmatprep.subr.mxu0 0.0
    %5303 = vmatpush1.xpose.msra.mxu0 0.0
    %5304 = vmatprep.subr.mxu0 0.0
    %5305 = vmatpush1.xpose.msra.mxu0 0.0
    %5306 = vmatprep.subr.mxu0 0.0
    %5307 = vmatpush1.xpose.msra.mxu0 0.0
    %5308 = vmatprep.subr.mxu0 0.0
    %5309 = vmatpush1.xpose.msra.mxu0 0.0
    %5310 = vmatprep.subr.mxu0 0.0
    %5311 = vmatpush1.xpose.msra.mxu0 0.0
    %5312 = vmatprep.subr.mxu0 0.0
    %5313 = vmatpush1.xpose.msra.mxu0 0.0
    %5314 = vmatprep.subr.mxu0 0.0
    %5315 = vmatpush1.xpose.msra.mxu0 0.0
    %5316 = vmatprep.subr.mxu0 0.0
    %5317 = vmatpush1.xpose.msra.mxu0 0.0
    %5318 = vmatprep.subr.mxu0 0.0
    %5319 = vmatpush1.xpose.msra.mxu0 0.0
    %5320 = vmatprep.subr.mxu0 0.0
    %5321 = vmatpush1.xpose.msra.mxu0 0.0
    %5322 = vmatprep.subr.mxu0 0.0
    %5323 = vmatpush1.xpose.msra.mxu0 0.0
    %5324 = vmatprep.subr.mxu0 0.0
    %5325 = vmatpush1.xpose.msra.mxu0 0.0
    %5326 = vmatprep.subr.mxu0 0.0
    %5327 = vmatpush1.xpose.msra.mxu0 0.0
    %5328 = vmatprep.subr.mxu0 0.0
    %5329 = vmatpush1.xpose.msra.mxu0 0.0
    %5330 = vmatprep.subr.mxu0 0.0
    %5331 = vmatpush1.xpose.msra.mxu0 0.0
    %5332 = vmatprep.subr.mxu0 0.0
    %5333 = vmatpush1.xpose.msra.mxu0 0.0
    %5334 = vmatprep.subr.mxu0 0.0
    %5335 = vmatpush1.xpose.msra.mxu0 0.0
    %5336 = vmatprep.subr.mxu0 0.0
    %5337 = vmatpush1.xpose.msra.mxu0 0.0
    %5338 = vmatprep.subr.mxu0 0.0
    %5339 = vmatpush1.xpose.msra.mxu0 0.0
    %5340 = vmatprep.subr.mxu0 0.0
    %5341 = vmatpush1.xpose.msra.mxu0 0.0
    %5342 = vmatprep.subr.mxu0 0.0
    %5343 = vmatpush1.xpose.msra.mxu0 0.0
    %5344 = vmatprep.mubr.f32.mxu0 0.0
    %5345 = vmatmul.mubr.f32.gmra.mrb[0].mxu0 %v5276
    %v5346 = vpop.f32.mrb[0].mxu0
    %v5347 = vadd.f32 0.0, %v5346
    %v5348 = vpop.f32.mrb[0].mxu0
    %5349 = vdwg.mxu0
    %v5350 = vsel %vm414, %v5347, -inf
    %5351 = vmax.xlane.f32.xlu0 %v5350
    %v5352 = vpop.xlane.xlu0 %5351
    %v5353 = vsub.f32 %v5347, %v5352
    %v5354 = vmul.f32 %v5353, 1.442695
    %v5355 = vpow.pop %v5354
    %v5356 = vsel %vm414, %v5355, 0.0
    %5357 = vadd.xlane.f32.xlu0 %v5356
    %v5358 = vpop.xlane.xlu0 %5357
    %v5359 = vrcp.pop %v5358
    %v5360 = vmul.f32 %v5355, %v5359
    %5361 = vrot.lane.b32.xlu0 %v4936, 112
    %v5362 = vpop.permute.xlu0 %5361
    %v5365 = vsel %vm414, %v5360, 0
    %5367 = vmatprep.subr.mxu0 0.0
    %5368 = vmatpush1.msra.mxu0 %v5362
    %5369 = vmatprep.subr.mxu0 0.0
    %5370 = vmatpush1.msra.mxu0 0.0
    %5371 = vmatprep.subr.mxu0 0.0
    %5372 = vmatpush1.msra.mxu0 0.0
    %5373 = vmatprep.subr.mxu0 0.0
    %5374 = vmatpush1.msra.mxu0 0.0
    %5375 = vmatprep.subr.mxu0 0.0
    %5376 = vmatpush1.msra.mxu0 0.0
    %5377 = vmatprep.subr.mxu0 0.0
    %5378 = vmatpush1.msra.mxu0 0.0
    %5379 = vmatprep.subr.mxu0 0.0
    %5380 = vmatpush1.msra.mxu0 0.0
    %5381 = vmatprep.subr.mxu0 0.0
    %5382 = vmatpush1.msra.mxu0 0.0
    %5383 = vmatprep.subr.mxu0 0.0
    %5384 = vmatpush1.msra.mxu0 0.0
    %5385 = vmatprep.subr.mxu0 0.0
    %5386 = vmatpush1.msra.mxu0 0.0
    %5387 = vmatprep.subr.mxu0 0.0
    %5388 = vmatpush1.msra.mxu0 0.0
    %5389 = vmatprep.subr.mxu0 0.0
    %5390 = vmatpush1.msra.mxu0 0.0
    %5391 = vmatprep.subr.mxu0 0.0
    %5392 = vmatpush1.msra.mxu0 0.0
    %5393 = vmatprep.subr.mxu0 0.0
    %5394 = vmatpush1.msra.mxu0 0.0
    %5395 = vmatprep.subr.mxu0 0.0
    %5396 = vmatpush1.msra.mxu0 0.0
    %5397 = vmatprep.subr.mxu0 0.0
    %5398 = vmatpush1.msra.mxu0 0.0
    %5399 = vmatprep.subr.mxu0 0.0
    %5400 = vmatpush1.msra.mxu0 0.0
    %5401 = vmatprep.subr.mxu0 0.0
    %5402 = vmatpush1.msra.mxu0 0.0
    %5403 = vmatprep.subr.mxu0 0.0
    %5404 = vmatpush1.msra.mxu0 0.0
    %5405 = vmatprep.subr.mxu0 0.0
    %5406 = vmatpush1.msra.mxu0 0.0
    %5407 = vmatprep.subr.mxu0 0.0
    %5408 = vmatpush1.msra.mxu0 0.0
    %5409 = vmatprep.subr.mxu0 0.0
    %5410 = vmatpush1.msra.mxu0 0.0
    %5411 = vmatprep.subr.mxu0 0.0
    %5412 = vmatpush1.msra.mxu0 0.0
    %5413 = vmatprep.subr.mxu0 0.0
    %5414 = vmatpush1.msra.mxu0 0.0
    %5415 = vmatprep.subr.mxu0 0.0
    %5416 = vmatpush1.msra.mxu0 0.0
    %5417 = vmatprep.subr.mxu0 0.0
    %5418 = vmatpush1.msra.mxu0 0.0
    %5419 = vmatprep.subr.mxu0 0.0
    %5420 = vmatpush1.msra.mxu0 0.0
    %5421 = vmatprep.subr.mxu0 0.0
    %5422 = vmatpush1.msra.mxu0 0.0
    %5423 = vmatprep.subr.mxu0 0.0
    %5424 = vmatpush1.msra.mxu0 0.0
    %5425 = vmatprep.subr.mxu0 0.0
    %5426 = vmatpush1.msra.mxu0 0.0
    %5427 = vmatprep.subr.mxu0 0.0
    %5428 = vmatpush1.msra.mxu0 0.0
    %5429 = vmatprep.subr.mxu0 0.0
    %5430 = vmatpush1.msra.mxu0 0.0
    %5431 = vmatprep.mubr.f32.mxu0 0.0
    %5432 = vmatmul.mubr.f32.gmra.mrb[0].mxu0 %v5365
    %v5433 = vpop.f32.mrb[0].mxu0
    %v5434 = vadd.f32 0.0, %v5433
    %v5435 = vpop.f32.mrb[0].mxu0
    %5436 = vdwg.mxu0
    %5437 = vrot.lane.b32.xlu0 %v4854, 104
    %v5438 = vpop.permute.xlu0 %5437
    %5439 = vrot.lane.b32.xlu0 %v4851, 72
    %v5440 = vpop.permute.xlu0 %5439
    %v5441 = vsel %vm414, %v5438, 0
    %v5443 = vsel %vm414, %v5440, 0
    %5445 = vmatprep.subr.mxu0 0.0
    %5446 = vmatpush1.xpose.msra.mxu0 %v5443
    %5447 = vmatprep.subr.mxu0 0.0
    %5448 = vmatpush1.xpose.msra.mxu0 0.0
    %5449 = vmatprep.subr.mxu0 0.0
    %5450 = vmatpush1.xpose.msra.mxu0 0.0
    %5451 = vmatprep.subr.mxu0 0.0
    %5452 = vmatpush1.xpose.msra.mxu0 0.0
    %5453 = vmatprep.subr.mxu0 0.0
    %5454 = vmatpush1.xpose.msra.mxu0 0.0
    %5455 = vmatprep.subr.mxu0 0.0
    %5456 = vmatpush1.xpose.msra.mxu0 0.0
    %5457 = vmatprep.subr.mxu0 0.0
    %5458 = vmatpush1.xpose.msra.mxu0 0.0
    %5459 = vmatprep.subr.mxu0 0.0
    %5460 = vmatpush1.xpose.msra.mxu0 0.0
    %5461 = vmatprep.subr.mxu0 0.0
    %5462 = vmatpush1.xpose.msra.mxu0 0.0
    %5463 = vmatprep.subr.mxu0 0.0
    %5464 = vmatpush1.xpose.msra.mxu0 0.0
    %5465 = vmatprep.subr.mxu0 0.0
    %5466 = vmatpush1.xpose.msra.mxu0 0.0
    %5467 = vmatprep.subr.mxu0 0.0
    %5468 = vmatpush1.xpose.msra.mxu0 0.0
    %5469 = vmatprep.subr.mxu0 0.0
    %5470 = vmatpush1.xpose.msra.mxu0 0.0
    %5471 = vmatprep.subr.mxu0 0.0
    %5472 = vmatpush1.xpose.msra.mxu0 0.0
    %5473 = vmatprep.subr.mxu0 0.0
    %5474 = vmatpush1.xpose.msra.mxu0 0.0
    %5475 = vmatprep.subr.mxu0 0.0
    %5476 = vmatpush1.xpose.msra.mxu0 0.0
    %5477 = vmatprep.subr.mxu0 0.0
    %5478 = vmatpush1.xpose.msra.mxu0 0.0
    %5479 = vmatprep.subr.mxu0 0.0
    %5480 = vmatpush1.xpose.msra.mxu0 0.0
    %5481 = vmatprep.subr.mxu0 0.0
    %5482 = vmatpush1.xpose.msra.mxu0 0.0
    %5483 = vmatprep.subr.mxu0 0.0
    %5484 = vmatpush1.xpose.msra.mxu0 0.0
    %5485 = vmatprep.subr.mxu0 0.0
    %5486 = vmatpush1.xpose.msra.mxu0 0.0
    %5487 = vmatprep.subr.mxu0 0.0
    %5488 = vmatpush1.xpose.msra.mxu0 0.0
    %5489 = vmatprep.subr.mxu0 0.0
    %5490 = vmatpush1.xpose.msra.mxu0 0.0
    %5491 = vmatprep.subr.mxu0 0.0
    %5492 = vmatpush1.xpose.msra.mxu0 0.0
    %5493 = vmatprep.subr.mxu0 0.0
    %5494 = vmatpush1.xpose.msra.mxu0 0.0
    %5495 = vmatprep.subr.mxu0 0.0
    %5496 = vmatpush1.xpose.msra.mxu0 0.0
    %5497 = vmatprep.subr.mxu0 0.0
    %5498 = vmatpush1.xpose.msra.mxu0 0.0
    %5499 = vmatprep.subr.mxu0 0.0
    %5500 = vmatpush1.xpose.msra.mxu0 0.0
    %5501 = vmatprep.subr.mxu0 0.0
    %5502 = vmatpush1.xpose.msra.mxu0 0.0
    %5503 = vmatprep.subr.mxu0 0.0
    %5504 = vmatpush1.xpose.msra.mxu0 0.0
    %5505 = vmatprep.subr.mxu0 0.0
    %5506 = vmatpush1.xpose.msra.mxu0 0.0
    %5507 = vmatprep.subr.mxu0 0.0
    %5508 = vmatpush1.xpose.msra.mxu0 0.0
    %5509 = vmatprep.mubr.f32.mxu0 0.0
    %5510 = vmatmul.mubr.f32.gmra.mrb[0].mxu0 %v5441
    %v5511 = vpop.f32.mrb[0].mxu0
    %v5512 = vadd.f32 0.0, %v5511
    %v5513 = vpop.f32.mrb[0].mxu0
    %5514 = vdwg.mxu0
    %v5515 = vsel %vm414, %v5512, -inf
    %5516 = vmax.xlane.f32.xlu0 %v5515
    %v5517 = vpop.xlane.xlu0 %5516
    %v5518 = vsub.f32 %v5512, %v5517
    %v5519 = vmul.f32 %v5518, 1.442695
    %v5520 = vpow.pop %v5519
    %v5521 = vsel %vm414, %v5520, 0.0
    %5522 = vadd.xlane.f32.xlu0 %v5521
    %v5523 = vpop.xlane.xlu0 %5522
    %v5524 = vrcp.pop %v5523
    %v5525 = vmul.f32 %v5520, %v5524
    %5526 = vrot.lane.b32.xlu0 %v4936, 104
    %v5527 = vpop.permute.xlu0 %5526
    %v5530 = vsel %vm414, %v5525, 0
    %5532 = vmatprep.subr.mxu0 0.0
    %5533 = vmatpush1.msra.mxu0 %v5527
    %5534 = vmatprep.subr.mxu0 0.0
    %5535 = vmatpush1.msra.mxu0 0.0
    %5536 = vmatprep.subr.mxu0 0.0
    %5537 = vmatpush1.msra.mxu0 0.0
    %5538 = vmatprep.subr.mxu0 0.0
    %5539 = vmatpush1.msra.mxu0 0.0
    %5540 = vmatprep.subr.mxu0 0.0
    %5541 = vmatpush1.msra.mxu0 0.0
    %5542 = vmatprep.subr.mxu0 0.0
    %5543 = vmatpush1.msra.mxu0 0.0
    %5544 = vmatprep.subr.mxu0 0.0
    %5545 = vmatpush1.msra.mxu0 0.0
    %5546 = vmatprep.subr.mxu0 0.0
    %5547 = vmatpush1.msra.mxu0 0.0
    %5548 = vmatprep.subr.mxu0 0.0
    %5549 = vmatpush1.msra.mxu0 0.0
    %5550 = vmatprep.subr.mxu0 0.0
    %5551 = vmatpush1.msra.mxu0 0.0
    %5552 = vmatprep.subr.mxu0 0.0
    %5553 = vmatpush1.msra.mxu0 0.0
    %5554 = vmatprep.subr.mxu0 0.0
    %5555 = vmatpush1.msra.mxu0 0.0
    %5556 = vmatprep.subr.mxu0 0.0
    %5557 = vmatpush1.msra.mxu0 0.0
    %5558 = vmatprep.subr.mxu0 0.0
    %5559 = vmatpush1.msra.mxu0 0.0
    %5560 = vmatprep.subr.mxu0 0.0
    %5561 = vmatpush1.msra.mxu0 0.0
    %5562 = vmatprep.subr.mxu0 0.0
    %5563 = vmatpush1.msra.mxu0 0.0
    %5564 = vmatprep.subr.mxu0 0.0
    %5565 = vmatpush1.msra.mxu0 0.0
    %5566 = vmatprep.subr.mxu0 0.0
    %5567 = vmatpush1.msra.mxu0 0.0
    %5568 = vmatprep.subr.mxu0 0.0
    %5569 = vmatpush1.msra.mxu0 0.0
    %5570 = vmatprep.subr.mxu0 0.0
    %5571 = vmatpush1.msra.mxu0 0.0
    %5572 = vmatprep.subr.mxu0 0.0
    %5573 = vmatpush1.msra.mxu0 0.0
    %5574 = vmatprep.subr.mxu0 0.0
    %5575 = vmatpush1.msra.mxu0 0.0
    %5576 = vmatprep.subr.mxu0 0.0
    %5577 = vmatpush1.msra.mxu0 0.0
    %5578 = vmatprep.subr.mxu0 0.0
    %5579 = vmatpush1.msra.mxu0 0.0
    %5580 = vmatprep.subr.mxu0 0.0
    %5581 = vmatpush1.msra.mxu0 0.0
    %5582 = vmatprep.subr.mxu0 0.0
    %5583 = vmatpush1.msra.mxu0 0.0
    %5584 = vmatprep.subr.mxu0 0.0
    %5585 = vmatpush1.msra.mxu0 0.0
    %5586 = vmatprep.subr.mxu0 0.0
    %5587 = vmatpush1.msra.mxu0 0.0
    %5588 = vmatprep.subr.mxu0 0.0
    %5589 = vmatpush1.msra.mxu0 0.0
    %5590 = vmatprep.subr.mxu0 0.0
    %5591 = vmatpush1.msra.mxu0 0.0
    %5592 = vmatprep.subr.mxu0 0.0
    %5593 = vmatpush1.msra.mxu0 0.0
    %5594 = vmatprep.subr.mxu0 0.0
    %5595 = vmatpush1.msra.mxu0 0.0
    %5596 = vmatprep.mubr.f32.mxu0 0.0
    %5597 = vmatmul.mubr.f32.gmra.mrb[0].mxu0 %v5530
    %v5598 = vpop.f32.mrb[0].mxu0
    %v5599 = vadd.f32 0.0, %v5598
    %v5600 = vpop.f32.mrb[0].mxu0
    %5601 = vdwg.mxu0
    %5603 = vrot.lane.b32.xlu0 %v5269, 8
    %v5604 = vpop.permute.xlu0 %5603
    %5607 = vrot.lane.b32.xlu0 %v5434, 16
    %v5608 = vpop.permute.xlu0 %5607
    %5611 = vrot.lane.b32.xlu0 %v5599, 24
    %v5612 = vpop.permute.xlu0 %5611
    %v5614 = vsel %vm414, %v5103, %v5604
    %v5615 = vsel %vm1083, %v5614, %v5608
    %v5616 = vsel %vm1085, %v5615, %v5612
    %v5618 = vlaneseq
    %v5619 = vshrl.u32 %v5618, 7
    %v5620 = vsub.s32 0, %v5619
    %v5621 = vrot.slane %v4943, %v5620
    %v5624 = vsel %vm247, %v5616, 0
    %5626 = vmatprep.subr.mxu0 0.0
    %5627 = vmatpush1.msra.mxu0 %v4939
    %5628 = vmatprep.subr.mxu0 0.0
    %5629 = vmatpush1.msra.mxu0 %v4940
    %5630 = vmatprep.subr.mxu0 0.0
    %5631 = vmatpush1.msra.mxu0 %v4941
    %5632 = vmatprep.subr.mxu0 0.0
    %5633 = vmatpush1.msra.mxu0 %v4942
    %5634 = vmatprep.subr.mxu0 0.0
    %5635 = vmatpush1.msra.mxu0 0.0
    %5636 = vmatprep.subr.mxu0 0.0
    %5637 = vmatpush1.msra.mxu0 0.0
    %5638 = vmatprep.subr.mxu0 0.0
    %5639 = vmatpush1.msra.mxu0 0.0
    %5640 = vmatprep.subr.mxu0 0.0
    %5641 = vmatpush1.msra.mxu0 0.0
    %5642 = vmatprep.subr.mxu0 0.0
    %5643 = vmatpush1.msra.mxu0 0.0
    %5644 = vmatprep.subr.mxu0 0.0
    %5645 = vmatpush1.msra.mxu0 0.0
    %5646 = vmatprep.subr.mxu0 0.0
    %5647 = vmatpush1.msra.mxu0 0.0
    %5648 = vmatprep.subr.mxu0 0.0
    %5649 = vmatpush1.msra.mxu0 0.0
    %5650 = vmatprep.subr.mxu0 0.0
    %5651 = vmatpush1.msra.mxu0 0.0
    %5652 = vmatprep.subr.mxu0 0.0
    %5653 = vmatpush1.msra.mxu0 0.0
    %5654 = vmatprep.subr.mxu0 0.0
    %5655 = vmatpush1.msra.mxu0 0.0
    %5656 = vmatprep.subr.mxu0 0.0
    %5657 = vmatpush1.msra.mxu0 0.0
    %5658 = vmatprep.subr.mxu0 0.0
    %5659 = vmatpush1.msra.mxu0 0.0
    %5660 = vmatprep.subr.mxu0 0.0
    %5661 = vmatpush1.msra.mxu0 0.0
    %5662 = vmatprep.subr.mxu0 0.0
    %5663 = vmatpush1.msra.mxu0 0.0
    %5664 = vmatprep.subr.mxu0 0.0
    %5665 = vmatpush1.msra.mxu0 0.0
    %5666 = vmatprep.subr.mxu0 0.0
    %5667 = vmatpush1.msra.mxu0 0.0
    %5668 = vmatprep.subr.mxu0 0.0
    %5669 = vmatpush1.msra.mxu0 0.0
    %5670 = vmatprep.subr.mxu0 0.0
    %5671 = vmatpush1.msra.mxu0 0.0
    %5672 = vmatprep.subr.mxu0 0.0
    %5673 = vmatpush1.msra.mxu0 0.0
    %5674 = vmatprep.subr.mxu0 0.0
    %5675 = vmatpush1.msra.mxu0 0.0
    %5676 = vmatprep.subr.mxu0 0.0
    %5677 = vmatpush1.msra.mxu0 0.0
    %5678 = vmatprep.subr.mxu0 0.0
    %5679 = vmatpush1.msra.mxu0 0.0
    %5680 = vmatprep.subr.mxu0 0.0
    %5681 = vmatpush1.msra.mxu0 0.0
    %5682 = vmatprep.subr.mxu0 0.0
    %5683 = vmatpush1.msra.mxu0 0.0
    %5684 = vmatprep.subr.mxu0 0.0
    %5685 = vmatpush1.msra.mxu0 0.0
    %5686 = vmatprep.subr.mxu0 0.0
    %5687 = vmatpush1.msra.mxu0 0.0
    %5688 = vmatprep.subr.mxu0 0.0
    %5689 = vmatpush1.msra.mxu0 0.0
    %5690 = vmatprep.mubr.f32.mxu0 0.0
    %5691 = vmatmul.mubr.f32.gmra.mrb[0].mxu0 %v5624
    %v5692 = vpop.f32.mrb[0].mxu0
    %v5693 = vadd.f32 %v5621, %v5692
    %v5694 = vpop.f32.mrb[0].mxu0
    %5695 = vdwg.mxu0
    %v5696 = vadd.f32 %v4752, %v5693
    %v5697 = vsel %vm247, %v5696, 0.0
    %5698 = vadd.xlane.f32.xlu0 %v5697
    %v5699 = vpop.xlane.xlu0 %5698
    %v5700 = vmul.f32 %v5699, %v1170
    %v5701 = vsub.f32 %v5696, %v5700
    %v5702 = vmul.f32 %v5701, %v5701
    %v5703 = vsel %vm247, %v5702, 0.0
    %5704 = vadd.xlane.f32.xlu0 %v5703
    %v5705 = vpop.xlane.xlu0 %5704
    %v5706 = vmul.f32 %v5705, %v1170
    %v5707 = vadd.f32 %v5706, 1e-05
    %v5708 = vrsqrt.pop %v5707
    %v5709 = vmul.f32 %v5701, %v5708
    %v5711 = vlaneseq
    %v5712 = vshrl.u32 %v5711, 7
    %v5713 = vsub.s32 0, %v5712
    %v5714 = vrot.slane %v4763, %v5713
    %v5716 = vmul.f32 %v5709, %v5714
    %v5718 = vlaneseq
    %v5719 = vshrl.u32 %v5718, 7
    %v5720 = vsub.s32 0, %v5719
    %v5721 = vrot.slane %v4766, %v5720
    %v5723 = vadd.f32 %v5716, %v5721
    %v5724 = vadd.f32 %v5723, %v4754
    %v5725 = vld [vmem:[%s10] sm:$0xff]
    %v5726 = vld [vmem:[%s10 + $0x8] sm:$0xff]
    %v5727 = vld [vmem:[%s10 + $0x10] sm:$0xff]
    %v5728 = vld [vmem:[%s10 + $0x18] sm:$0xff]
    %v5729 = vld [vmem:[#allocation2] sm:$0x1]
    %v5731 = vlaneseq
    %v5732 = vshrl.u32 %v5731, 7
    %v5733 = vsub.s32 0, %v5732
    %v5734 = vrot.slane %v5729, %v5733
    %v5737 = vsel %vm247, %v5724, 0
    %5739 = vmatprep.subr.mxu0 0.0
    %5740 = vmatpush1.msra.mxu0 %v5725
    %5741 = vmatprep.subr.mxu0 0.0
    %5742 = vmatpush1.msra.mxu0 %v5726
    %5743 = vmatprep.subr.mxu0 0.0
    %5744 = vmatpush1.msra.mxu0 %v5727
    %5745 = vmatprep.subr.mxu0 0.0
    %5746 = vmatpush1.msra.mxu0 %v5728
    %5747 = vmatprep.subr.mxu0 0.0
    %5748 = vmatpush1.msra.mxu0 0.0
    %5749 = vmatprep.subr.mxu0 0.0
    %5750 = vmatpush1.msra.mxu0 0.0
    %5751 = vmatprep.subr.mxu0 0.0
    %5752 = vmatpush1.msra.mxu0 0.0
    %5753 = vmatprep.subr.mxu0 0.0
    %5754 = vmatpush1.msra.mxu0 0.0
    %5755 = vmatprep.subr.mxu0 0.0
    %5756 = vmatpush1.msra.mxu0 0.0
    %5757 = vmatprep.subr.mxu0 0.0
    %5758 = vmatpush1.msra.mxu0 0.0
    %5759 = vmatprep.subr.mxu0 0.0
    %5760 = vmatpush1.msra.mxu0 0.0
    %5761 = vmatprep.subr.mxu0 0.0
    %5762 = vmatpush1.msra.mxu0 0.0
    %5763 = vmatprep.subr.mxu0 0.0
    %5764 = vmatpush1.msra.mxu0 0.0
    %5765 = vmatprep.subr.mxu0 0.0
    %5766 = vmatpush1.msra.mxu0 0.0
    %5767 = vmatprep.subr.mxu0 0.0
    %5768 = vmatpush1.msra.mxu0 0.0
    %5769 = vmatprep.subr.mxu0 0.0
    %5770 = vmatpush1.msra.mxu0 0.0
    %5771 = vmatprep.subr.mxu0 0.0
    %5772 = vmatpush1.msra.mxu0 0.0
    %5773 = vmatprep.subr.mxu0 0.0
    %5774 = vmatpush1.msra.mxu0 0.0
    %5775 = vmatprep.subr.mxu0 0.0
    %5776 = vmatpush1.msra.mxu0 0.0
    %5777 = vmatprep.subr.mxu0 0.0
    %5778 = vmatpush1.msra.mxu0 0.0
    %5779 = vmatprep.subr.mxu0 0.0
    %5780 = vmatpush1.msra.mxu0 0.0
    %5781 = vmatprep.subr.mxu0 0.0
    %5782 = vmatpush1.msra.mxu0 0.0
    %5783 = vmatprep.subr.mxu0 0.0
    %5784 = vmatpush1.msra.mxu0 0.0
    %5785 = vmatprep.subr.mxu0 0.0
    %5786 = vmatpush1.msra.mxu0 0.0
    %5787 = vmatprep.subr.mxu0 0.0
    %5788 = vmatpush1.msra.mxu0 0.0
    %5789 = vmatprep.subr.mxu0 0.0
    %5790 = vmatpush1.msra.mxu0 0.0
    %5791 = vmatprep.subr.mxu0 0.0
    %5792 = vmatpush1.msra.mxu0 0.0
    %5793 = vmatprep.subr.mxu0 0.0
    %5794 = vmatpush1.msra.mxu0 0.0
    %5795 = vmatprep.subr.mxu0 0.0
    %5796 = vmatpush1.msra.mxu0 0.0
    %5797 = vmatprep.subr.mxu0 0.0
    %5798 = vmatpush1.msra.mxu0 0.0
    %5799 = vmatprep.subr.mxu0 0.0
    %5800 = vmatpush1.msra.mxu0 0.0
    %5801 = vmatprep.subr.mxu0 0.0
    %5802 = vmatpush1.msra.mxu0 0.0
    %5803 = vmatprep.mubr.f32.mxu0 0.0
    %5804 = vmatmul.mubr.f32.gmra.mrb[0].mxu0 %v5737
    %v5805 = vpop.f32.mrb[0].mxu0
    %v5806 = vadd.f32 %v5734, %v5805
    %v5807 = vpop.f32.mrb[0].mxu0
    %5808 = vdwg.mxu0
    %v5809 = vmul.f32 %v5806, 0.35355338
    %v5810 = vld [vmem:[%s12] sm:$0xff]
    %v5811 = vld [vmem:[%s12 + $0x8] sm:$0xff]
    %v5812 = vld [vmem:[%s12 + $0x10] sm:$0xff]
    %v5813 = vld [vmem:[%s12 + $0x18] sm:$0xff]
    %v5814 = vld [vmem:[#allocation4] sm:$0x1]
    %v5816 = vlaneseq
    %v5817 = vshrl.u32 %v5816, 7
    %v5818 = vsub.s32 0, %v5817
    %v5819 = vrot.slane %v5814, %v5818
    %v5822 = vsel %vm247, %v4761, 0
    %v5825 = vsel %vm247, %v4762, 0
    %5827 = vmatprep.subr.mxu0 0.0
    %5828 = vmatpush1.msra.mxu0 %v5810
    %5829 = vmatprep.subr.mxu0 0.0
    %5830 = vmatpush1.msra.mxu0 %v5811
    %5831 = vmatprep.subr.mxu0 0.0
    %5832 = vmatpush1.msra.mxu0 %v5812
    %5833 = vmatprep.subr.mxu0 0.0
    %5834 = vmatpush1.msra.mxu0 %v5813
    %5835 = vmatprep.subr.mxu0 0.0
    %5836 = vmatpush1.msra.mxu0 0.0
    %5837 = vmatprep.subr.mxu0 0.0
    %5838 = vmatpush1.msra.mxu0 0.0
    %5839 = vmatprep.subr.mxu0 0.0
    %5840 = vmatpush1.msra.mxu0 0.0
    %5841 = vmatprep.subr.mxu0 0.0
    %5842 = vmatpush1.msra.mxu0 0.0
    %5843 = vmatprep.subr.mxu0 0.0
    %5844 = vmatpush1.msra.mxu0 0.0
    %5845 = vmatprep.subr.mxu0 0.0
    %5846 = vmatpush1.msra.mxu0 0.0
    %5847 = vmatprep.subr.mxu0 0.0
    %5848 = vmatpush1.msra.mxu0 0.0
    %5849 = vmatprep.subr.mxu0 0.0
    %5850 = vmatpush1.msra.mxu0 0.0
    %5851 = vmatprep.subr.mxu0 0.0
    %5852 = vmatpush1.msra.mxu0 0.0
    %5853 = vmatprep.subr.mxu0 0.0
    %5854 = vmatpush1.msra.mxu0 0.0
    %5855 = vmatprep.subr.mxu0 0.0
    %5856 = vmatpush1.msra.mxu0 0.0
    %5857 = vmatprep.subr.mxu0 0.0
    %5858 = vmatpush1.msra.mxu0 0.0
    %5859 = vmatprep.subr.mxu0 0.0
    %5860 = vmatpush1.msra.mxu0 0.0
    %5861 = vmatprep.subr.mxu0 0.0
    %5862 = vmatpush1.msra.mxu0 0.0
    %5863 = vmatprep.subr.mxu0 0.0
    %5864 = vmatpush1.msra.mxu0 0.0
    %5865 = vmatprep.subr.mxu0 0.0
    %5866 = vmatpush1.msra.mxu0 0.0
    %5867 = vmatprep.subr.mxu0 0.0
    %5868 = vmatpush1.msra.mxu0 0.0
    %5869 = vmatprep.subr.mxu0 0.0
    %5870 = vmatpush1.msra.mxu0 0.0
    %5871 = vmatprep.subr.mxu0 0.0
    %5872 = vmatpush1.msra.mxu0 0.0
    %5873 = vmatprep.subr.mxu0 0.0
    %5874 = vmatpush1.msra.mxu0 0.0
    %5875 = vmatprep.subr.mxu0 0.0
    %5876 = vmatpush1.msra.mxu0 0.0
    %5877 = vmatprep.subr.mxu0 0.0
    %5878 = vmatpush1.msra.mxu0 0.0
    %5879 = vmatprep.subr.mxu0 0.0
    %5880 = vmatpush1.msra.mxu0 0.0
    %5881 = vmatprep.subr.mxu0 0.0
    %5882 = vmatpush1.msra.mxu0 0.0
    %5883 = vmatprep.subr.mxu0 0.0
    %5884 = vmatpush1.msra.mxu0 0.0
    %5885 = vmatprep.subr.mxu0 0.0
    %5886 = vmatpush1.msra.mxu0 0.0
    %5887 = vmatprep.subr.mxu0 0.0
    %5888 = vmatpush1.msra.mxu0 0.0
    %5889 = vmatprep.subr.mxu0 0.0
    %5890 = vmatpush1.msra.mxu0 0.0
    %5891 = vmatprep.mubr.f32.mxu0 0.0
    %5892 = vmatmul.mubr.f32.gmra.mrb[0].mxu0 %v5822
    %v5893 = vpop.f32.mrb[0].mxu0
    %v5894 = vadd.f32 %v5819, %v5893
    %v5895 = vpop.f32.mrb[0].mxu0
    %5896 = vmatprep.mubr.f32.mxu0 0.0
    %5897 = vmatmul.mubr.f32.gmra.mrb[0].mxu0 %v5825
    %v5898 = vpop.f32.mrb[0].mxu0
    %v5899 = vadd.f32 %v5819, %v5898
    %v5900 = vpop.f32.mrb[0].mxu0
    %5901 = vdwg.mxu0
    %v5902 = vld [vmem:[#allocation6] sm:$0xff]
    %v5903 = vld [vmem:[#allocation6 + $0x8] sm:$0xff]
    %v5904 = vld [vmem:[#allocation6 + $0x10] sm:$0xff]
    %v5905 = vld [vmem:[#allocation6 + $0x18] sm:$0xff]
    %v5906 = vld [vmem:[#allocation7] sm:$0x1]
    %v5908 = vlaneseq
    %v5909 = vshrl.u32 %v5908, 7
    %v5910 = vsub.s32 0, %v5909
    %v5911 = vrot.slane %v5906, %v5910
    %v5914 = vsel %vm247, %v4756, 0
    %v5917 = vsel %vm247, %v4757, 0
    %5919 = vmatprep.subr.mxu0 0.0
    %5920 = vmatpush1.msra.mxu0 %v5902
    %5921 = vmatprep.subr.mxu0 0.0
    %5922 = vmatpush1.msra.mxu0 %v5903
    %5923 = vmatprep.subr.mxu0 0.0
    %5924 = vmatpush1.msra.mxu0 %v5904
    %5925 = vmatprep.subr.mxu0 0.0
    %5926 = vmatpush1.msra.mxu0 %v5905
    %5927 = vmatprep.subr.mxu0 0.0
    %5928 = vmatpush1.msra.mxu0 0.0
    %5929 = vmatprep.subr.mxu0 0.0
    %5930 = vmatpush1.msra.mxu0 0.0
    %5931 = vmatprep.subr.mxu0 0.0
    %5932 = vmatpush1.msra.mxu0 0.0
    %5933 = vmatprep.subr.mxu0 0.0
    %5934 = vmatpush1.msra.mxu0 0.0
    %5935 = vmatprep.subr.mxu0 0.0
    %5936 = vmatpush1.msra.mxu0 0.0
    %5937 = vmatprep.subr.mxu0 0.0
    %5938 = vmatpush1.msra.mxu0 0.0
    %5939 = vmatprep.subr.mxu0 0.0
    %5940 = vmatpush1.msra.mxu0 0.0
    %5941 = vmatprep.subr.mxu0 0.0
    %5942 = vmatpush1.msra.mxu0 0.0
    %5943 = vmatprep.subr.mxu0 0.0
    %5944 = vmatpush1.msra.mxu0 0.0
    %5945 = vmatprep.subr.mxu0 0.0
    %5946 = vmatpush1.msra.mxu0 0.0
    %5947 = vmatprep.subr.mxu0 0.0
    %5948 = vmatpush1.msra.mxu0 0.0
    %5949 = vmatprep.subr.mxu0 0.0
    %5950 = vmatpush1.msra.mxu0 0.0
    %5951 = vmatprep.subr.mxu0 0.0
    %5952 = vmatpush1.msra.mxu0 0.0
    %5953 = vmatprep.subr.mxu0 0.0
    %5954 = vmatpush1.msra.mxu0 0.0
    %5955 = vmatprep.subr.mxu0 0.0
    %5956 = vmatpush1.msra.mxu0 0.0
    %5957 = vmatprep.subr.mxu0 0.0
    %5958 = vmatpush1.msra.mxu0 0.0
    %5959 = vmatprep.subr.mxu0 0.0
    %5960 = vmatpush1.msra.mxu0 0.0
    %5961 = vmatprep.subr.mxu0 0.0
    %5962 = vmatpush1.msra.mxu0 0.0
    %5963 = vmatprep.subr.mxu0 0.0
    %5964 = vmatpush1.msra.mxu0 0.0
    %5965 = vmatprep.subr.mxu0 0.0
    %5966 = vmatpush1.msra.mxu0 0.0
    %5967 = vmatprep.subr.mxu0 0.0
    %5968 = vmatpush1.msra.mxu0 0.0
    %5969 = vmatprep.subr.mxu0 0.0
    %5970 = vmatpush1.msra.mxu0 0.0
    %5971 = vmatprep.subr.mxu0 0.0
    %5972 = vmatpush1.msra.mxu0 0.0
    %5973 = vmatprep.subr.mxu0 0.0
    %5974 = vmatpush1.msra.mxu0 0.0
    %5975 = vmatprep.subr.mxu0 0.0
    %5976 = vmatpush1.msra.mxu0 0.0
    %5977 = vmatprep.subr.mxu0 0.0
    %5978 = vmatpush1.msra.mxu0 0.0
    %5979 = vmatprep.subr.mxu0 0.0
    %5980 = vmatpush1.msra.mxu0 0.0
    %5981 = vmatprep.subr.mxu0 0.0
    %5982 = vmatpush1.msra.mxu0 0.0
    %5983 = vmatprep.mubr.f32.mxu0 0.0
    %5984 = vmatmul.mubr.f32.gmra.mrb[0].mxu0 %v5914
    %v5985 = vpop.f32.mrb[0].mxu0
    %v5986 = vadd.f32 %v5911, %v5985
    %v5987 = vpop.f32.mrb[0].mxu0
    %5988 = vmatprep.mubr.f32.mxu0 0.0
    %5989 = vmatmul.mubr.f32.gmra.mrb[0].mxu0 %v5917
    %v5990 = vpop.f32.mrb[0].mxu0
    %v5991 = vadd.f32 %v5911, %v5990
    %v5992 = vpop.f32.mrb[0].mxu0
    %5993 = vdwg.mxu0
    %v5994 = vld [vmem:[#allocation9] sm:$0xff]
    %v5995 = vld [vmem:[#allocation9 + $0x8] sm:$0xff]
    %v5996 = vld [vmem:[#allocation9 + $0x10] sm:$0xff]
    %v5997 = vld [vmem:[#allocation9 + $0x18] sm:$0xff]
    %v5998 = vld [vmem:[#allocation10] sm:$0x1]
    %v6000 = vsel %vm414, %v5809, 0
    %v6003 = vsel %vm414, %v5894, 0
    %v6006 = vsel %vm414, %v5899, 0
    %6008 = vmatprep.subr.mxu0 0.0
    %6009 = vmatpush1.xpose.msra.mxu0 %v6003
    %6010 = vmatprep.subr.mxu0 0.0
    %6011 = vmatpush1.xpose.msra.mxu0 %v6006
    %6012 = vmatprep.subr.mxu0 0.0
    %6013 = vmatpush1.xpose.msra.mxu0 0.0
    %6014 = vmatprep.subr.mxu0 0.0
    %6015 = vmatpush1.xpose.msra.mxu0 0.0
    %6016 = vmatprep.subr.mxu0 0.0
    %6017 = vmatpush1.xpose.msra.mxu0 0.0
    %6018 = vmatprep.subr.mxu0 0.0
    %6019 = vmatpush1.xpose.msra.mxu0 0.0
    %6020 = vmatprep.subr.mxu0 0.0
    %6021 = vmatpush1.xpose.msra.mxu0 0.0
    %6022 = vmatprep.subr.mxu0 0.0
    %6023 = vmatpush1.xpose.msra.mxu0 0.0
    %6024 = vmatprep.subr.mxu0 0.0
    %6025 = vmatpush1.xpose.msra.mxu0 0.0
    %6026 = vmatprep.subr.mxu0 0.0
    %6027 = vmatpush1.xpose.msra.mxu0 0.0
    %6028 = vmatprep.subr.mxu0 0.0
    %6029 = vmatpush1.xpose.msra.mxu0 0.0
    %6030 = vmatprep.subr.mxu0 0.0
    %6031 = vmatpush1.xpose.msra.mxu0 0.0
    %6032 = vmatprep.subr.mxu0 0.0
    %6033 = vmatpush1.xpose.msra.mxu0 0.0
    %6034 = vmatprep.subr.mxu0 0.0
    %6035 = vmatpush1.xpose.msra.mxu0 0.0
    %6036 = vmatprep.subr.mxu0 0.0
    %6037 = vmatpush1.xpose.msra.mxu0 0.0
    %6038 = vmatprep.subr.mxu0 0.0
    %6039 = vmatpush1.xpose.msra.mxu0 0.0
    %6040 = vmatprep.subr.mxu0 0.0
    %6041 = vmatpush1.xpose.msra.mxu0 0.0
    %6042 = vmatprep.subr.mxu0 0.0
    %6043 = vmatpush1.xpose.msra.mxu0 0.0
    %6044 = vmatprep.subr.mxu0 0.0
    %6045 = vmatpush1.xpose.msra.mxu0 0.0
    %6046 = vmatprep.subr.mxu0 0.0
    %6047 = vmatpush1.xpose.msra.mxu0 0.0
    %6048 = vmatprep.subr.mxu0 0.0
    %6049 = vmatpush1.xpose.msra.mxu0 0.0
    %6050 = vmatprep.subr.mxu0 0.0
    %6051 = vmatpush1.xpose.msra.mxu0 0.0
    %6052 = vmatprep.subr.mxu0 0.0
    %6053 = vmatpush1.xpose.msra.mxu0 0.0
    %6054 = vmatprep.subr.mxu0 0.0
    %6055 = vmatpush1.xpose.msra.mxu0 0.0
    %6056 = vmatprep.subr.mxu0 0.0
    %6057 = vmatpush1.xpose.msra.mxu0 0.0
    %6058 = vmatprep.subr.mxu0 0.0
    %6059 = vmatpush1.xpose.msra.mxu0 0.0
    %6060 = vmatprep.subr.mxu0 0.0
    %6061 = vmatpush1.xpose.msra.mxu0 0.0
    %6062 = vmatprep.subr.mxu0 0.0
    %6063 = vmatpush1.xpose.msra.mxu0 0.0
    %6064 = vmatprep.subr.mxu0 0.0
    %6065 = vmatpush1.xpose.msra.mxu0 0.0
    %6066 = vmatprep.subr.mxu0 0.0
    %6067 = vmatpush1.xpose.msra.mxu0 0.0
    %6068 = vmatprep.subr.mxu0 0.0
    %6069 = vmatpush1.xpose.msra.mxu0 0.0
    %6070 = vmatprep.subr.mxu0 0.0
    %6071 = vmatpush1.xpose.msra.mxu0 0.0
    %6072 = vmatprep.mubr.f32.mxu0 0.0
    %6073 = vmatmul.mubr.f32.gmra.mrb[0].mxu0 %v6000
    %v6074 = vpop.f32.mrb[0].mxu0
    %v6075 = vadd.f32 0.0, %v6074
    %v6076 = vpop.f32.mrb[0].mxu0
    %6077 = vdwg.mxu0
    %v6078 = vsel %vm1083, %v6075, -inf
    %6079 = vmax.xlane.f32.xlu0 %v6078
    %v6080 = vpop.xlane.xlu0 %6079
    %v6081 = vsub.f32 %v6075, %v6080
    %v6082 = vmul.f32 %v6081, 1.442695
    %v6083 = vpow.pop %v6082
    %v6084 = vsel %vm1083, %v6083, 0.0
    %6085 = vadd.xlane.f32.xlu0 %v6084
    %v6086 = vpop.xlane.xlu0 %6085
    %v6087 = vrcp.pop %v6086
    %v6088 = vmul.f32 %v6083, %v6087
    %v6090 = vsel %vm1083, %v6088, 0
    %6092 = vmatprep.subr.mxu0 0.0
    %6093 = vmatpush1.msra.mxu0 %v5986
    %6094 = vmatprep.subr.mxu0 0.0
    %6095 = vmatpush1.msra.mxu0 %v5991
    %6096 = vmatprep.subr.mxu0 0.0
    %6097 = vmatpush1.msra.mxu0 0.0
    %6098 = vmatprep.subr.mxu0 0.0
    %6099 = vmatpush1.msra.mxu0 0.0
    %6100 = vmatprep.subr.mxu0 0.0
    %6101 = vmatpush1.msra.mxu0 0.0
    %6102 = vmatprep.subr.mxu0 0.0
    %6103 = vmatpush1.msra.mxu0 0.0
    %6104 = vmatprep.subr.mxu0 0.0
    %6105 = vmatpush1.msra.mxu0 0.0
    %6106 = vmatprep.subr.mxu0 0.0
    %6107 = vmatpush1.msra.mxu0 0.0
    %6108 = vmatprep.subr.mxu0 0.0
    %6109 = vmatpush1.msra.mxu0 0.0
    %6110 = vmatprep.subr.mxu0 0.0
    %6111 = vmatpush1.msra.mxu0 0.0
    %6112 = vmatprep.subr.mxu0 0.0
    %6113 = vmatpush1.msra.mxu0 0.0
    %6114 = vmatprep.subr.mxu0 0.0
    %6115 = vmatpush1.msra.mxu0 0.0
    %6116 = vmatprep.subr.mxu0 0.0
    %6117 = vmatpush1.msra.mxu0 0.0
    %6118 = vmatprep.subr.mxu0 0.0
    %6119 = vmatpush1.msra.mxu0 0.0
    %6120 = vmatprep.subr.mxu0 0.0
    %6121 = vmatpush1.msra.mxu0 0.0
    %6122 = vmatprep.subr.mxu0 0.0
    %6123 = vmatpush1.msra.mxu0 0.0
    %6124 = vmatprep.subr.mxu0 0.0
    %6125 = vmatpush1.msra.mxu0 0.0
    %6126 = vmatprep.subr.mxu0 0.0
    %6127 = vmatpush1.msra.mxu0 0.0
    %6128 = vmatprep.subr.mxu0 0.0
    %6129 = vmatpush1.msra.mxu0 0.0
    %6130 = vmatprep.subr.mxu0 0.0
    %6131 = vmatpush1.msra.mxu0 0.0
    %6132 = vmatprep.subr.mxu0 0.0
    %6133 = vmatpush1.msra.mxu0 0.0
    %6134 = vmatprep.subr.mxu0 0.0
    %6135 = vmatpush1.msra.mxu0 0.0
    %6136 = vmatprep.subr.mxu0 0.0
    %6137 = vmatpush1.msra.mxu0 0.0
    %6138 = vmatprep.subr.mxu0 0.0
    %6139 = vmatpush1.msra.mxu0 0.0
    %6140 = vmatprep.subr.mxu0 0.0
    %6141 = vmatpush1.msra.mxu0 0.0
    %6142 = vmatprep.subr.mxu0 0.0
    %6143 = vmatpush1.msra.mxu0 0.0
    %6144 = vmatprep.subr.mxu0 0.0
    %6145 = vmatpush1.msra.mxu0 0.0
    %6146 = vmatprep.subr.mxu0 0.0
    %6147 = vmatpush1.msra.mxu0 0.0
    %6148 = vmatprep.subr.mxu0 0.0
    %6149 = vmatpush1.msra.mxu0 0.0
    %6150 = vmatprep.subr.mxu0 0.0
    %6151 = vmatpush1.msra.mxu0 0.0
    %6152 = vmatprep.subr.mxu0 0.0
    %6153 = vmatpush1.msra.mxu0 0.0
    %6154 = vmatprep.subr.mxu0 0.0
    %6155 = vmatpush1.msra.mxu0 0.0
    %6156 = vmatprep.mubr.f32.mxu0 0.0
    %6157 = vmatmul.mubr.f32.gmra.mrb[0].mxu0 %v6090
    %v6158 = vpop.f32.mrb[0].mxu0
    %v6159 = vadd.f32 0.0, %v6158
    %v6160 = vpop.f32.mrb[0].mxu0
    %6161 = vdwg.mxu0
    %6162 = vrot.lane.b32.xlu0 %v5809, 120
    %v6163 = vpop.permute.xlu0 %6162
    %6164 = vrot.lane.b32.xlu0 %v5894, 120
    %v6165 = vpop.permute.xlu0 %6164
    %6166 = vrot.lane.b32.xlu0 %v5899, 120
    %v6167 = vpop.permute.xlu0 %6166
    %v6168 = vsel %vm414, %v6163, 0
    %v6170 = vsel %vm414, %v6165, 0
    %v6172 = vsel %vm414, %v6167, 0
    %6174 = vmatprep.subr.mxu0 0.0
    %6175 = vmatpush1.xpose.msra.mxu0 %v6170
    %6176 = vmatprep.subr.mxu0 0.0
    %6177 = vmatpush1.xpose.msra.mxu0 %v6172
    %6178 = vmatprep.subr.mxu0 0.0
    %6179 = vmatpush1.xpose.msra.mxu0 0.0
    %6180 = vmatprep.subr.mxu0 0.0
    %6181 = vmatpush1.xpose.msra.mxu0 0.0
    %6182 = vmatprep.subr.mxu0 0.0
    %6183 = vmatpush1.xpose.msra.mxu0 0.0
    %6184 = vmatprep.subr.mxu0 0.0
    %6185 = vmatpush1.xpose.msra.mxu0 0.0
    %6186 = vmatprep.subr.mxu0 0.0
    %6187 = vmatpush1.xpose.msra.mxu0 0.0
    %6188 = vmatprep.subr.mxu0 0.0
    %6189 = vmatpush1.xpose.msra.mxu0 0.0
    %6190 = vmatprep.subr.mxu0 0.0
    %6191 = vmatpush1.xpose.msra.mxu0 0.0
    %6192 = vmatprep.subr.mxu0 0.0
    %6193 = vmatpush1.xpose.msra.mxu0 0.0
    %6194 = vmatprep.subr.mxu0 0.0
    %6195 = vmatpush1.xpose.msra.mxu0 0.0
    %6196 = vmatprep.subr.mxu0 0.0
    %6197 = vmatpush1.xpose.msra.mxu0 0.0
    %6198 = vmatprep.subr.mxu0 0.0
    %6199 = vmatpush1.xpose.msra.mxu0 0.0
    %6200 = vmatprep.subr.mxu0 0.0
    %6201 = vmatpush1.xpose.msra.mxu0 0.0
    %6202 = vmatprep.subr.mxu0 0.0
    %6203 = vmatpush1.xpose.msra.mxu0 0.0
    %6204 = vmatprep.subr.mxu0 0.0
    %6205 = vmatpush1.xpose.msra.mxu0 0.0
    %6206 = vmatprep.subr.mxu0 0.0
    %6207 = vmatpush1.xpose.msra.mxu0 0.0
    %6208 = vmatprep.subr.mxu0 0.0
    %6209 = vmatpush1.xpose.msra.mxu0 0.0
    %6210 = vmatprep.subr.mxu0 0.0
    %6211 = vmatpush1.xpose.msra.mxu0 0.0
    %6212 = vmatprep.subr.mxu0 0.0
    %6213 = vmatpush1.xpose.msra.mxu0 0.0
    %6214 = vmatprep.subr.mxu0 0.0
    %6215 = vmatpush1.xpose.msra.mxu0 0.0
    %6216 = vmatprep.subr.mxu0 0.0
    %6217 = vmatpush1.xpose.msra.mxu0 0.0
    %6218 = vmatprep.subr.mxu0 0.0
    %6219 = vmatpush1.xpose.msra.mxu0 0.0
    %6220 = vmatprep.subr.mxu0 0.0
    %6221 = vmatpush1.xpose.msra.mxu0 0.0
    %6222 = vmatprep.subr.mxu0 0.0
    %6223 = vmatpush1.xpose.msra.mxu0 0.0
    %6224 = vmatprep.subr.mxu0 0.0
    %6225 = vmatpush1.xpose.msra.mxu0 0.0
    %6226 = vmatprep.subr.mxu0 0.0
    %6227 = vmatpush1.xpose.msra.mxu0 0.0
    %6228 = vmatprep.subr.mxu0 0.0
    %6229 = vmatpush1.xpose.msra.mxu0 0.0
    %6230 = vmatprep.subr.mxu0 0.0
    %6231 = vmatpush1.xpose.msra.mxu0 0.0
    %6232 = vmatprep.subr.mxu0 0.0
    %6233 = vmatpush1.xpose.msra.mxu0 0.0
    %6234 = vmatprep.subr.mxu0 0.0
    %6235 = vmatpush1.xpose.msra.mxu0 0.0
    %6236 = vmatprep.subr.mxu0 0.0
    %6237 = vmatpush1.xpose.msra.mxu0 0.0
    %6238 = vmatprep.mubr.f32.mxu0 0.0
    %6239 = vmatmul.mubr.f32.gmra.mrb[0].mxu0 %v6168
    %v6240 = vpop.f32.mrb[0].mxu0
    %v6241 = vadd.f32 0.0, %v6240
    %v6242 = vpop.f32.mrb[0].mxu0
    %6243 = vdwg.mxu0
    %v6244 = vsel %vm1083, %v6241, -inf
    %6245 = vmax.xlane.f32.xlu0 %v6244
    %v6246 = vpop.xlane.xlu0 %6245
    %v6247 = vsub.f32 %v6241, %v6246
    %v6248 = vmul.f32 %v6247, 1.442695
    %v6249 = vpow.pop %v6248
    %v6250 = vsel %vm1083, %v6249, 0.0
    %6251 = vadd.xlane.f32.xlu0 %v6250
    %v6252 = vpop.xlane.xlu0 %6251
    %v6253 = vrcp.pop %v6252
    %v6254 = vmul.f32 %v6249, %v6253
    %6257 = vrot.lane.b32.xlu0 %v5986, 120
    %v6258 = vpop.permute.xlu0 %6257
    %6259 = vrot.lane.b32.xlu0 %v5991, 120
    %v6260 = vpop.permute.xlu0 %6259
    %v6264 = vsel %vm1083, %v6254, 0
    %6266 = vmatprep.subr.mxu0 0.0
    %6267 = vmatpush1.msra.mxu0 %v6258
    %6268 = vmatprep.subr.mxu0 0.0
    %6269 = vmatpush1.msra.mxu0 %v6260
    %6270 = vmatprep.subr.mxu0 0.0
    %6271 = vmatpush1.msra.mxu0 0.0
    %6272 = vmatprep.subr.mxu0 0.0
    %6273 = vmatpush1.msra.mxu0 0.0
    %6274 = vmatprep.subr.mxu0 0.0
    %6275 = vmatpush1.msra.mxu0 0.0
    %6276 = vmatprep.subr.mxu0 0.0
    %6277 = vmatpush1.msra.mxu0 0.0
    %6278 = vmatprep.subr.mxu0 0.0
    %6279 = vmatpush1.msra.mxu0 0.0
    %6280 = vmatprep.subr.mxu0 0.0
    %6281 = vmatpush1.msra.mxu0 0.0
    %6282 = vmatprep.subr.mxu0 0.0
    %6283 = vmatpush1.msra.mxu0 0.0
    %6284 = vmatprep.subr.mxu0 0.0
    %6285 = vmatpush1.msra.mxu0 0.0
    %6286 = vmatprep.subr.mxu0 0.0
    %6287 = vmatpush1.msra.mxu0 0.0
    %6288 = vmatprep.subr.mxu0 0.0
    %6289 = vmatpush1.msra.mxu0 0.0
    %6290 = vmatprep.subr.mxu0 0.0
    %6291 = vmatpush1.msra.mxu0 0.0
    %6292 = vmatprep.subr.mxu0 0.0
    %6293 = vmatpush1.msra.mxu0 0.0
    %6294 = vmatprep.subr.mxu0 0.0
    %6295 = vmatpush1.msra.mxu0 0.0
    %6296 = vmatprep.subr.mxu0 0.0
    %6297 = vmatpush1.msra.mxu0 0.0
    %6298 = vmatprep.subr.mxu0 0.0
    %6299 = vmatpush1.msra.mxu0 0.0
    %6300 = vmatprep.subr.mxu0 0.0
    %6301 = vmatpush1.msra.mxu0 0.0
    %6302 = vmatprep.subr.mxu0 0.0
    %6303 = vmatpush1.msra.mxu0 0.0
    %6304 = vmatprep.subr.mxu0 0.0
    %6305 = vmatpush1.msra.mxu0 0.0
    %6306 = vmatprep.subr.mxu0 0.0
    %6307 = vmatpush1.msra.mxu0 0.0
    %6308 = vmatprep.subr.mxu0 0.0
    %6309 = vmatpush1.msra.mxu0 0.0
    %6310 = vmatprep.subr.mxu0 0.0
    %6311 = vmatpush1.msra.mxu0 0.0
    %6312 = vmatprep.subr.mxu0 0.0
    %6313 = vmatpush1.msra.mxu0 0.0
    %6314 = vmatprep.subr.mxu0 0.0
    %6315 = vmatpush1.msra.mxu0 0.0
    %6316 = vmatprep.subr.mxu0 0.0
    %6317 = vmatpush1.msra.mxu0 0.0
    %6318 = vmatprep.subr.mxu0 0.0
    %6319 = vmatpush1.msra.mxu0 0.0
    %6320 = vmatprep.subr.mxu0 0.0
    %6321 = vmatpush1.msra.mxu0 0.0
    %6322 = vmatprep.subr.mxu0 0.0
    %6323 = vmatpush1.msra.mxu0 0.0
    %6324 = vmatprep.subr.mxu0 0.0
    %6325 = vmatpush1.msra.mxu0 0.0
    %6326 = vmatprep.subr.mxu0 0.0
    %6327 = vmatpush1.msra.mxu0 0.0
    %6328 = vmatprep.subr.mxu0 0.0
    %6329 = vmatpush1.msra.mxu0 0.0
    %6330 = vmatprep.mubr.f32.mxu0 0.0
    %6331 = vmatmul.mubr.f32.gmra.mrb[0].mxu0 %v6264
    %v6332 = vpop.f32.mrb[0].mxu0
    %v6333 = vadd.f32 0.0, %v6332
    %v6334 = vpop.f32.mrb[0].mxu0
    %6335 = vdwg.mxu0
    %6336 = vrot.lane.b32.xlu0 %v5809, 112
    %v6337 = vpop.permute.xlu0 %6336
    %6338 = vrot.lane.b32.xlu0 %v5894, 112
    %v6339 = vpop.permute.xlu0 %6338
    %6340 = vrot.lane.b32.xlu0 %v5899, 112
    %v6341 = vpop.permute.xlu0 %6340
    %v6342 = vsel %vm414, %v6337, 0
    %v6344 = vsel %vm414, %v6339, 0
    %v6346 = vsel %vm414, %v6341, 0
    %6348 = vmatprep.subr.mxu0 0.0
    %6349 = vmatpush1.xpose.msra.mxu0 %v6344
    %6350 = vmatprep.subr.mxu0 0.0
    %6351 = vmatpush1.xpose.msra.mxu0 %v6346
    %6352 = vmatprep.subr.mxu0 0.0
    %6353 = vmatpush1.xpose.msra.mxu0 0.0
    %6354 = vmatprep.subr.mxu0 0.0
    %6355 = vmatpush1.xpose.msra.mxu0 0.0
    %6356 = vmatprep.subr.mxu0 0.0
    %6357 = vmatpush1.xpose.msra.mxu0 0.0
    %6358 = vmatprep.subr.mxu0 0.0
    %6359 = vmatpush1.xpose.msra.mxu0 0.0
    %6360 = vmatprep.subr.mxu0 0.0
    %6361 = vmatpush1.xpose.msra.mxu0 0.0
    %6362 = vmatprep.subr.mxu0 0.0
    %6363 = vmatpush1.xpose.msra.mxu0 0.0
    %6364 = vmatprep.subr.mxu0 0.0
    %6365 = vmatpush1.xpose.msra.mxu0 0.0
    %6366 = vmatprep.subr.mxu0 0.0
    %6367 = vmatpush1.xpose.msra.mxu0 0.0
    %6368 = vmatprep.subr.mxu0 0.0
    %6369 = vmatpush1.xpose.msra.mxu0 0.0
    %6370 = vmatprep.subr.mxu0 0.0
    %6371 = vmatpush1.xpose.msra.mxu0 0.0
    %6372 = vmatprep.subr.mxu0 0.0
    %6373 = vmatpush1.xpose.msra.mxu0 0.0
    %6374 = vmatprep.subr.mxu0 0.0
    %6375 = vmatpush1.xpose.msra.mxu0 0.0
    %6376 = vmatprep.subr.mxu0 0.0
    %6377 = vmatpush1.xpose.msra.mxu0 0.0
    %6378 = vmatprep.subr.mxu0 0.0
    %6379 = vmatpush1.xpose.msra.mxu0 0.0
    %6380 = vmatprep.subr.mxu0 0.0
    %6381 = vmatpush1.xpose.msra.mxu0 0.0
    %6382 = vmatprep.subr.mxu0 0.0
    %6383 = vmatpush1.xpose.msra.mxu0 0.0
    %6384 = vmatprep.subr.mxu0 0.0
    %6385 = vmatpush1.xpose.msra.mxu0 0.0
    %6386 = vmatprep.subr.mxu0 0.0
    %6387 = vmatpush1.xpose.msra.mxu0 0.0
    %6388 = vmatprep.subr.mxu0 0.0
    %6389 = vmatpush1.xpose.msra.mxu0 0.0
    %6390 = vmatprep.subr.mxu0 0.0
    %6391 = vmatpush1.xpose.msra.mxu0 0.0
    %6392 = vmatprep.subr.mxu0 0.0
    %6393 = vmatpush1.xpose.msra.mxu0 0.0
    %6394 = vmatprep.subr.mxu0 0.0
    %6395 = vmatpush1.xpose.msra.mxu0 0.0
    %6396 = vmatprep.subr.mxu0 0.0
    %6397 = vmatpush1.xpose.msra.mxu0 0.0
    %6398 = vmatprep.subr.mxu0 0.0
    %6399 = vmatpush1.xpose.msra.mxu0 0.0
    %6400 = vmatprep.subr.mxu0 0.0
    %6401 = vmatpush1.xpose.msra.mxu0 0.0
    %6402 = vmatprep.subr.mxu0 0.0
    %6403 = vmatpush1.xpose.msra.mxu0 0.0
    %6404 = vmatprep.subr.mxu0 0.0
    %6405 = vmatpush1.xpose.msra.mxu0 0.0
    %6406 = vmatprep.subr.mxu0 0.0
    %6407 = vmatpush1.xpose.msra.mxu0 0.0
    %6408 = vmatprep.subr.mxu0 0.0
    %6409 = vmatpush1.xpose.msra.mxu0 0.0
    %6410 = vmatprep.subr.mxu0 0.0
    %6411 = vmatpush1.xpose.msra.mxu0 0.0
    %6412 = vmatprep.mubr.f32.mxu0 0.0
    %6413 = vmatmul.mubr.f32.gmra.mrb[0].mxu0 %v6342
    %v6414 = vpop.f32.mrb[0].mxu0
    %v6415 = vadd.f32 0.0, %v6414
    %v6416 = vpop.f32.mrb[0].mxu0
    %6417 = vdwg.mxu0
    %v6418 = vsel %vm1083, %v6415, -inf
    %6419 = vmax.xlane.f32.xlu0 %v6418
    %v6420 = vpop.xlane.xlu0 %6419
    %v6421 = vsub.f32 %v6415, %v6420
    %v6422 = vmul.f32 %v6421, 1.442695
    %v6423 = vpow.pop %v6422
    %v6424 = vsel %vm1083, %v6423, 0.0
    %6425 = vadd.xlane.f32.xlu0 %v6424
    %v6426 = vpop.xlane.xlu0 %6425
    %v6427 = vrcp.pop %v6426
    %v6428 = vmul.f32 %v6423, %v6427
    %6429 = vrot.lane.b32.xlu0 %v5986, 112
    %v6430 = vpop.permute.xlu0 %6429
    %6431 = vrot.lane.b32.xlu0 %v5991, 112
    %v6432 = vpop.permute.xlu0 %6431
    %v6436 = vsel %vm1083, %v6428, 0
    %6438 = vmatprep.subr.mxu0 0.0
    %6439 = vmatpush1.msra.mxu0 %v6430
    %6440 = vmatprep.subr.mxu0 0.0
    %6441 = vmatpush1.msra.mxu0 %v6432
    %6442 = vmatprep.subr.mxu0 0.0
    %6443 = vmatpush1.msra.mxu0 0.0
    %6444 = vmatprep.subr.mxu0 0.0
    %6445 = vmatpush1.msra.mxu0 0.0
    %6446 = vmatprep.subr.mxu0 0.0
    %6447 = vmatpush1.msra.mxu0 0.0
    %6448 = vmatprep.subr.mxu0 0.0
    %6449 = vmatpush1.msra.mxu0 0.0
    %6450 = vmatprep.subr.mxu0 0.0
    %6451 = vmatpush1.msra.mxu0 0.0
    %6452 = vmatprep.subr.mxu0 0.0
    %6453 = vmatpush1.msra.mxu0 0.0
    %6454 = vmatprep.subr.mxu0 0.0
    %6455 = vmatpush1.msra.mxu0 0.0
    %6456 = vmatprep.subr.mxu0 0.0
    %6457 = vmatpush1.msra.mxu0 0.0
    %6458 = vmatprep.subr.mxu0 0.0
    %6459 = vmatpush1.msra.mxu0 0.0
    %6460 = vmatprep.subr.mxu0 0.0
    %6461 = vmatpush1.msra.mxu0 0.0
    %6462 = vmatprep.subr.mxu0 0.0
    %6463 = vmatpush1.msra.mxu0 0.0
    %6464 = vmatprep.subr.mxu0 0.0
    %6465 = vmatpush1.msra.mxu0 0.0
    %6466 = vmatprep.subr.mxu0 0.0
    %6467 = vmatpush1.msra.mxu0 0.0
    %6468 = vmatprep.subr.mxu0 0.0
    %6469 = vmatpush1.msra.mxu0 0.0
    %6470 = vmatprep.subr.mxu0 0.0
    %6471 = vmatpush1.msra.mxu0 0.0
    %6472 = vmatprep.subr.mxu0 0.0
    %6473 = vmatpush1.msra.mxu0 0.0
    %6474 = vmatprep.subr.mxu0 0.0
    %6475 = vmatpush1.msra.mxu0 0.0
    %6476 = vmatprep.subr.mxu0 0.0
    %6477 = vmatpush1.msra.mxu0 0.0
    %6478 = vmatprep.subr.mxu0 0.0
    %6479 = vmatpush1.msra.mxu0 0.0
    %6480 = vmatprep.subr.mxu0 0.0
    %6481 = vmatpush1.msra.mxu0 0.0
    %6482 = vmatprep.subr.mxu0 0.0
    %6483 = vmatpush1.msra.mxu0 0.0
    %6484 = vmatprep.subr.mxu0 0.0
    %6485 = vmatpush1.msra.mxu0 0.0
    %6486 = vmatprep.subr.mxu0 0.0
    %6487 = vmatpush1.msra.mxu0 0.0
    %6488 = vmatprep.subr.mxu0 0.0
    %6489 = vmatpush1.msra.mxu0 0.0
    %6490 = vmatprep.subr.mxu0 0.0
    %6491 = vmatpush1.msra.mxu0 0.0
    %6492 = vmatprep.subr.mxu0 0.0
    %6493 = vmatpush1.msra.mxu0 0.0
    %6494 = vmatprep.subr.mxu0 0.0
    %6495 = vmatpush1.msra.mxu0 0.0
    %6496 = vmatprep.subr.mxu0 0.0
    %6497 = vmatpush1.msra.mxu0 0.0
    %6498 = vmatprep.subr.mxu0 0.0
    %6499 = vmatpush1.msra.mxu0 0.0
    %6500 = vmatprep.subr.mxu0 0.0
    %6501 = vmatpush1.msra.mxu0 0.0
    %6502 = vmatprep.mubr.f32.mxu0 0.0
    %6503 = vmatmul.mubr.f32.gmra.mrb[0].mxu0 %v6436
    %v6504 = vpop.f32.mrb[0].mxu0
    %v6505 = vadd.f32 0.0, %v6504
    %v6506 = vpop.f32.mrb[0].mxu0
    %6507 = vdwg.mxu0
    %6508 = vrot.lane.b32.xlu0 %v5809, 104
    %v6509 = vpop.permute.xlu0 %6508
    %6510 = vrot.lane.b32.xlu0 %v5894, 104
    %v6511 = vpop.permute.xlu0 %6510
    %6512 = vrot.lane.b32.xlu0 %v5899, 104
    %v6513 = vpop.permute.xlu0 %6512
    %v6514 = vsel %vm414, %v6509, 0
    %v6516 = vsel %vm414, %v6511, 0
    %v6518 = vsel %vm414, %v6513, 0
    %6520 = vmatprep.subr.mxu0 0.0
    %6521 = vmatpush1.xpose.msra.mxu0 %v6516
    %6522 = vmatprep.subr.mxu0 0.0
    %6523 = vmatpush1.xpose.msra.mxu0 %v6518
    %6524 = vmatprep.subr.mxu0 0.0
    %6525 = vmatpush1.xpose.msra.mxu0 0.0
    %6526 = vmatprep.subr.mxu0 0.0
    %6527 = vmatpush1.xpose.msra.mxu0 0.0
    %6528 = vmatprep.subr.mxu0 0.0
    %6529 = vmatpush1.xpose.msra.mxu0 0.0
    %6530 = vmatprep.subr.mxu0 0.0
    %6531 = vmatpush1.xpose.msra.mxu0 0.0
    %6532 = vmatprep.subr.mxu0 0.0
    %6533 = vmatpush1.xpose.msra.mxu0 0.0
    %6534 = vmatprep.subr.mxu0 0.0
    %6535 = vmatpush1.xpose.msra.mxu0 0.0
    %6536 = vmatprep.subr.mxu0 0.0
    %6537 = vmatpush1.xpose.msra.mxu0 0.0
    %6538 = vmatprep.subr.mxu0 0.0
    %6539 = vmatpush1.xpose.msra.mxu0 0.0
    %6540 = vmatprep.subr.mxu0 0.0
    %6541 = vmatpush1.xpose.msra.mxu0 0.0
    %6542 = vmatprep.subr.mxu0 0.0
    %6543 = vmatpush1.xpose.msra.mxu0 0.0
    %6544 = vmatprep.subr.mxu0 0.0
    %6545 = vmatpush1.xpose.msra.mxu0 0.0
    %6546 = vmatprep.subr.mxu0 0.0
    %6547 = vmatpush1.xpose.msra.mxu0 0.0
    %6548 = vmatprep.subr.mxu0 0.0
    %6549 = vmatpush1.xpose.msra.mxu0 0.0
    %6550 = vmatprep.subr.mxu0 0.0
    %6551 = vmatpush1.xpose.msra.mxu0 0.0
    %6552 = vmatprep.subr.mxu0 0.0
    %6553 = vmatpush1.xpose.msra.mxu0 0.0
    %6554 = vmatprep.subr.mxu0 0.0
    %6555 = vmatpush1.xpose.msra.mxu0 0.0
    %6556 = vmatprep.subr.mxu0 0.0
    %6557 = vmatpush1.xpose.msra.mxu0 0.0
    %6558 = vmatprep.subr.mxu0 0.0
    %6559 = vmatpush1.xpose.msra.mxu0 0.0
    %6560 = vmatprep.subr.mxu0 0.0
    %6561 = vmatpush1.xpose.msra.mxu0 0.0
    %6562 = vmatprep.subr.mxu0 0.0
    %6563 = vmatpush1.xpose.msra.mxu0 0.0
    %6564 = vmatprep.subr.mxu0 0.0
    %6565 = vmatpush1.xpose.msra.mxu0 0.0
    %6566 = vmatprep.subr.mxu0 0.0
    %6567 = vmatpush1.xpose.msra.mxu0 0.0
    %6568 = vmatprep.subr.mxu0 0.0
    %6569 = vmatpush1.xpose.msra.mxu0 0.0
    %6570 = vmatprep.subr.mxu0 0.0
    %6571 = vmatpush1.xpose.msra.mxu0 0.0
    %6572 = vmatprep.subr.mxu0 0.0
    %6573 = vmatpush1.xpose.msra.mxu0 0.0
    %6574 = vmatprep.subr.mxu0 0.0
    %6575 = vmatpush1.xpose.msra.mxu0 0.0
    %6576 = vmatprep.subr.mxu0 0.0
    %6577 = vmatpush1.xpose.msra.mxu0 0.0
    %6578 = vmatprep.subr.mxu0 0.0
    %6579 = vmatpush1.xpose.msra.mxu0 0.0
    %6580 = vmatprep.subr.mxu0 0.0
    %6581 = vmatpush1.xpose.msra.mxu0 0.0
    %6582 = vmatprep.subr.mxu0 0.0
    %6583 = vmatpush1.xpose.msra.mxu0 0.0
    %6584 = vmatprep.mubr.f32.mxu0 0.0
    %6585 = vmatmul.mubr.f32.gmra.mrb[0].mxu0 %v6514
    %v6586 = vpop.f32.mrb[0].mxu0
    %v6587 = vadd.f32 0.0, %v6586
    %v6588 = vpop.f32.mrb[0].mxu0
    %6589 = vdwg.mxu0
    %v6590 = vsel %vm1083, %v6587, -inf
    %6591 = vmax.xlane.f32.xlu0 %v6590
    %v6592 = vpop.xlane.xlu0 %6591
    %v6593 = vsub.f32 %v6587, %v6592
    %v6594 = vmul.f32 %v6593, 1.442695
    %v6595 = vpow.pop %v6594
    %v6596 = vsel %vm1083, %v6595, 0.0
    %6597 = vadd.xlane.f32.xlu0 %v6596
    %v6598 = vpop.xlane.xlu0 %6597
    %v6599 = vrcp.pop %v6598
    %v6600 = vmul.f32 %v6595, %v6599
    %6601 = vrot.lane.b32.xlu0 %v5986, 104
    %v6602 = vpop.permute.xlu0 %6601
    %6603 = vrot.lane.b32.xlu0 %v5991, 104
    %v6604 = vpop.permute.xlu0 %6603
    %v6608 = vsel %vm1083, %v6600, 0
    %6610 = vmatprep.subr.mxu0 0.0
    %6611 = vmatpush1.msra.mxu0 %v6602
    %6612 = vmatprep.subr.mxu0 0.0
    %6613 = vmatpush1.msra.mxu0 %v6604
    %6614 = vmatprep.subr.mxu0 0.0
    %6615 = vmatpush1.msra.mxu0 0.0
    %6616 = vmatprep.subr.mxu0 0.0
    %6617 = vmatpush1.msra.mxu0 0.0
    %6618 = vmatprep.subr.mxu0 0.0
    %6619 = vmatpush1.msra.mxu0 0.0
    %6620 = vmatprep.subr.mxu0 0.0
    %6621 = vmatpush1.msra.mxu0 0.0
    %6622 = vmatprep.subr.mxu0 0.0
    %6623 = vmatpush1.msra.mxu0 0.0
    %6624 = vmatprep.subr.mxu0 0.0
    %6625 = vmatpush1.msra.mxu0 0.0
    %6626 = vmatprep.subr.mxu0 0.0
    %6627 = vmatpush1.msra.mxu0 0.0
    %6628 = vmatprep.subr.mxu0 0.0
    %6629 = vmatpush1.msra.mxu0 0.0
    %6630 = vmatprep.subr.mxu0 0.0
    %6631 = vmatpush1.msra.mxu0 0.0
    %6632 = vmatprep.subr.mxu0 0.0
    %6633 = vmatpush1.msra.mxu0 0.0
    %6634 = vmatprep.subr.mxu0 0.0
    %6635 = vmatpush1.msra.mxu0 0.0
    %6636 = vmatprep.subr.mxu0 0.0
    %6637 = vmatpush1.msra.mxu0 0.0
    %6638 = vmatprep.subr.mxu0 0.0
    %6639 = vmatpush1.msra.mxu0 0.0
    %6640 = vmatprep.subr.mxu0 0.0
    %6641 = vmatpush1.msra.mxu0 0.0
    %6642 = vmatprep.subr.mxu0 0.0
    %6643 = vmatpush1.msra.mxu0 0.0
    %6644 = vmatprep.subr.mxu0 0.0
    %6645 = vmatpush1.msra.mxu0 0.0
    %6646 = vmatprep.subr.mxu0 0.0
    %6647 = vmatpush1.msra.mxu0 0.0
    %6648 = vmatprep.subr.mxu0 0.0
    %6649 = vmatpush1.msra.mxu0 0.0
    %6650 = vmatprep.subr.mxu0 0.0
    %6651 = vmatpush1.msra.mxu0 0.0
    %6652 = vmatprep.subr.mxu0 0.0
    %6653 = vmatpush1.msra.mxu0 0.0
    %6654 = vmatprep.subr.mxu0 0.0
    %6655 = vmatpush1.msra.mxu0 0.0
    %6656 = vmatprep.subr.mxu0 0.0
    %6657 = vmatpush1.msra.mxu0 0.0
    %6658 = vmatprep.subr.mxu0 0.0
    %6659 = vmatpush1.msra.mxu0 0.0
    %6660 = vmatprep.subr.mxu0 0.0
    %6661 = vmatpush1.msra.mxu0 0.0
    %6662 = vmatprep.subr.mxu0 0.0
    %6663 = vmatpush1.msra.mxu0 0.0
    %6664 = vmatprep.subr.mxu0 0.0
    %6665 = vmatpush1.msra.mxu0 0.0
    %6666 = vmatprep.subr.mxu0 0.0
    %6667 = vmatpush1.msra.mxu0 0.0
    %6668 = vmatprep.subr.mxu0 0.0
    %6669 = vmatpush1.msra.mxu0 0.0
    %6670 = vmatprep.subr.mxu0 0.0
    %6671 = vmatpush1.msra.mxu0 0.0
    %6672 = vmatprep.subr.mxu0 0.0
    %6673 = vmatpush1.msra.mxu0 0.0
    %6674 = vmatprep.mubr.f32.mxu0 0.0
    %6675 = vmatmul.mubr.f32.gmra.mrb[0].mxu0 %v6608
    %v6676 = vpop.f32.mrb[0].mxu0
    %v6677 = vadd.f32 0.0, %v6676
    %v6678 = vpop.f32.mrb[0].mxu0
    %6679 = vdwg.mxu0
    %6681 = vrot.lane.b32.xlu0 %v6333, 8
    %v6682 = vpop.permute.xlu0 %6681
    %6685 = vrot.lane.b32.xlu0 %v6505, 16
    %v6686 = vpop.permute.xlu0 %6685
    %6689 = vrot.lane.b32.xlu0 %v6677, 24
    %v6690 = vpop.permute.xlu0 %6689
    %v6692 = vsel %vm414, %v6159, %v6682
    %v6693 = vsel %vm1083, %v6692, %v6686
    %v6694 = vsel %vm1085, %v6693, %v6690
    %v6696 = vlaneseq
    %v6697 = vshrl.u32 %v6696, 7
    %v6698 = vsub.s32 0, %v6697
    %v6699 = vrot.slane %v5998, %v6698
    %v6702 = vsel %vm247, %v6694, 0
    %6704 = vmatprep.subr.mxu0 0.0
    %6705 = vmatpush1.msra.mxu0 %v5994
    %6706 = vmatprep.subr.mxu0 0.0
    %6707 = vmatpush1.msra.mxu0 %v5995
    %6708 = vmatprep.subr.mxu0 0.0
    %6709 = vmatpush1.msra.mxu0 %v5996
    %6710 = vmatprep.subr.mxu0 0.0
    %6711 = vmatpush1.msra.mxu0 %v5997
    %6712 = vmatprep.subr.mxu0 0.0
    %6713 = vmatpush1.msra.mxu0 0.0
    %6714 = vmatprep.subr.mxu0 0.0
    %6715 = vmatpush1.msra.mxu0 0.0
    %6716 = vmatprep.subr.mxu0 0.0
    %6717 = vmatpush1.msra.mxu0 0.0
    %6718 = vmatprep.subr.mxu0 0.0
    %6719 = vmatpush1.msra.mxu0 0.0
    %6720 = vmatprep.subr.mxu0 0.0
    %6721 = vmatpush1.msra.mxu0 0.0
    %6722 = vmatprep.subr.mxu0 0.0
    %6723 = vmatpush1.msra.mxu0 0.0
    %6724 = vmatprep.subr.mxu0 0.0
    %6725 = vmatpush1.msra.mxu0 0.0
    %6726 = vmatprep.subr.mxu0 0.0
    %6727 = vmatpush1.msra.mxu0 0.0
    %6728 = vmatprep.subr.mxu0 0.0
    %6729 = vmatpush1.msra.mxu0 0.0
    %6730 = vmatprep.subr.mxu0 0.0
    %6731 = vmatpush1.msra.mxu0 0.0
    %6732 = vmatprep.subr.mxu0 0.0
    %6733 = vmatpush1.msra.mxu0 0.0
    %6734 = vmatprep.subr.mxu0 0.0
    %6735 = vmatpush1.msra.mxu0 0.0
    %6736 = vmatprep.subr.mxu0 0.0
    %6737 = vmatpush1.msra.mxu0 0.0
    %6738 = vmatprep.subr.mxu0 0.0
    %6739 = vmatpush1.msra.mxu0 0.0
    %6740 = vmatprep.subr.mxu0 0.0
    %6741 = vmatpush1.msra.mxu0 0.0
    %6742 = vmatprep.subr.mxu0 0.0
    %6743 = vmatpush1.msra.mxu0 0.0
    %6744 = vmatprep.subr.mxu0 0.0
    %6745 = vmatpush1.msra.mxu0 0.0
    %6746 = vmatprep.subr.mxu0 0.0
    %6747 = vmatpush1.msra.mxu0 0.0
    %6748 = vmatprep.subr.mxu0 0.0
    %6749 = vmatpush1.msra.mxu0 0.0
    %6750 = vmatprep.subr.mxu0 0.0
    %6751 = vmatpush1.msra.mxu0 0.0
    %6752 = vmatprep.subr.mxu0 0.0
    %6753 = vmatpush1.msra.mxu0 0.0
    %6754 = vmatprep.subr.mxu0 0.0
    %6755 = vmatpush1.msra.mxu0 0.0
    %6756 = vmatprep.subr.mxu0 0.0
    %6757 = vmatpush1.msra.mxu0 0.0
    %6758 = vmatprep.subr.mxu0 0.0
    %6759 = vmatpush1.msra.mxu0 0.0
    %6760 = vmatprep.subr.mxu0 0.0
    %6761 = vmatpush1.msra.mxu0 0.0
    %6762 = vmatprep.subr.mxu0 0.0
    %6763 = vmatpush1.msra.mxu0 0.0
    %6764 = vmatprep.subr.mxu0 0.0
    %6765 = vmatpush1.msra.mxu0 0.0
    %6766 = vmatprep.subr.mxu0 0.0
    %6767 = vmatpush1.msra.mxu0 0.0
    %6768 = vmatprep.mubr.f32.mxu0 0.0
    %6769 = vmatmul.mubr.f32.gmra.mrb[0].mxu0 %v6702
    %v6770 = vpop.f32.mrb[0].mxu0
    %v6771 = vadd.f32 %v6699, %v6770
    %v6772 = vpop.f32.mrb[0].mxu0
    %6773 = vdwg.mxu0
    %v6774 = vadd.f32 %v5723, %v6771
    %v6775 = vsel %vm247, %v6774, 0.0
    %6776 = vadd.xlane.f32.xlu0 %v6775
    %v6777 = vpop.xlane.xlu0 %6776
    %v6778 = vmul.f32 %v6777, %v1170
    %v6779 = vsub.f32 %v6774, %v6778
    %v6780 = vmul.f32 %v6779, %v6779
    %v6781 = vsel %vm247, %v6780, 0.0
    %6782 = vadd.xlane.f32.xlu0 %v6781
    %v6783 = vpop.xlane.xlu0 %6782
    %v6784 = vmul.f32 %v6783, %v1170
    %v6785 = vadd.f32 %v6784, 1e-05
    %v6786 = vrsqrt.pop %v6785
    %v6787 = vmul.f32 %v6779, %v6786
    %v6789 = vlaneseq
    %v6790 = vshrl.u32 %v6789, 7
    %v6791 = vsub.s32 0, %v6790
    %v6792 = vrot.slane %v4764, %v6791
    %v6794 = vmul.f32 %v6787, %v6792
    %v6796 = vlaneseq
    %v6797 = vshrl.u32 %v6796, 7
    %v6798 = vsub.s32 0, %v6797
    %v6799 = vrot.slane %v4767, %v6798
    %v6801 = vadd.f32 %v6794, %v6799
    %v6802 = vld [vmem:[%s18] sm:$0xff]
    %v6803 = vld [vmem:[%s18 + $0x8] sm:$0xff]
    %v6804 = vld [vmem:[%s18 + $0x10] sm:$0xff]
    %v6805 = vld [vmem:[%s18 + $0x18] sm:$0xff]
    %v6806 = vld [vmem:[#allocation12] sm:$0x1]
    %v6808 = vlaneseq
    %v6809 = vshrl.u32 %v6808, 7
    %v6810 = vsub.s32 0, %v6809
    %v6811 = vrot.slane %v6806, %v6810
    %v6814 = vsel %vm247, %v6801, 0
    %6816 = vmatprep.subr.mxu0 0.0
    %6817 = vmatpush1.msra.mxu0 %v6802
    %6818 = vmatprep.subr.mxu0 0.0
    %6819 = vmatpush1.msra.mxu0 %v6803
    %6820 = vmatprep.subr.mxu0 0.0
    %6821 = vmatpush1.msra.mxu0 %v6804
    %6822 = vmatprep.subr.mxu0 0.0
    %6823 = vmatpush1.msra.mxu0 %v6805
    %6824 = vmatprep.subr.mxu0 0.0
    %6825 = vmatpush1.msra.mxu0 0.0
    %6826 = vmatprep.subr.mxu0 0.0
    %6827 = vmatpush1.msra.mxu0 0.0
    %6828 = vmatprep.subr.mxu0 0.0
    %6829 = vmatpush1.msra.mxu0 0.0
    %6830 = vmatprep.subr.mxu0 0.0
    %6831 = vmatpush1.msra.mxu0 0.0
    %6832 = vmatprep.subr.mxu0 0.0
    %6833 = vmatpush1.msra.mxu0 0.0
    %6834 = vmatprep.subr.mxu0 0.0
    %6835 = vmatpush1.msra.mxu0 0.0
    %6836 = vmatprep.subr.mxu0 0.0
    %6837 = vmatpush1.msra.mxu0 0.0
    %6838 = vmatprep.subr.mxu0 0.0
    %6839 = vmatpush1.msra.mxu0 0.0
    %6840 = vmatprep.subr.mxu0 0.0
    %6841 = vmatpush1.msra.mxu0 0.0
    %6842 = vmatprep.subr.mxu0 0.0
    %6843 = vmatpush1.msra.mxu0 0.0
    %6844 = vmatprep.subr.mxu0 0.0
    %6845 = vmatpush1.msra.mxu0 0.0
    %6846 = vmatprep.subr.mxu0 0.0
    %6847 = vmatpush1.msra.mxu0 0.0
    %6848 = vmatprep.subr.mxu0 0.0
    %6849 = vmatpush1.msra.mxu0 0.0
    %6850 = vmatprep.subr.mxu0 0.0
    %6851 = vmatpush1.msra.mxu0 0.0
    %6852 = vmatprep.subr.mxu0 0.0
    %6853 = vmatpush1.msra.mxu0 0.0
    %6854 = vmatprep.subr.mxu0 0.0
    %6855 = vmatpush1.msra.mxu0 0.0
    %6856 = vmatprep.subr.mxu0 0.0
    %6857 = vmatpush1.msra.mxu0 0.0
    %6858 = vmatprep.subr.mxu0 0.0
    %6859 = vmatpush1.msra.mxu0 0.0
    %6860 = vmatprep.subr.mxu0 0.0
    %6861 = vmatpush1.msra.mxu0 0.0
    %6862 = vmatprep.subr.mxu0 0.0
    %6863 = vmatpush1.msra.mxu0 0.0
    %6864 = vmatprep.subr.mxu0 0.0
    %6865 = vmatpush1.msra.mxu0 0.0
    %6866 = vmatprep.subr.mxu0 0.0
    %6867 = vmatpush1.msra.mxu0 0.0
    %6868 = vmatprep.subr.mxu0 0.0
    %6869 = vmatpush1.msra.mxu0 0.0
    %6870 = vmatprep.subr.mxu0 0.0
    %6871 = vmatpush1.msra.mxu0 0.0
    %6872 = vmatprep.subr.mxu0 0.0
    %6873 = vmatpush1.msra.mxu0 0.0
    %6874 = vmatprep.subr.mxu0 0.0
    %6875 = vmatpush1.msra.mxu0 0.0
    %6876 = vmatprep.subr.mxu0 0.0
    %6877 = vmatpush1.msra.mxu0 0.0
    %6878 = vmatprep.subr.mxu0 0.0
    %6879 = vmatpush1.msra.mxu0 0.0
    %6880 = vmatprep.mubr.f32.mxu0 0.0
    %6881 = vmatmul.mubr.f32.gmra.mrb[0].mxu0 %v6814
    %v6882 = vpop.f32.mrb[0].mxu0
    %v6883 = vadd.f32 %v6811, %v6882
    %v6884 = vpop.f32.mrb[0].mxu0
    %6885 = vdwg.mxu0
    %v6886 = vmax.f32 %v6883, 0.0
    %v6887 = vld [vmem:[%s20] sm:$0xff]
    %v6888 = vld [vmem:[%s20 + $0x8] sm:$0xff]
    %v6889 = vld [vmem:[%s20 + $0x10] sm:$0xff]
    %v6890 = vld [vmem:[%s20 + $0x18] sm:$0xff]
    %v6891 = vld [vmem:[%s20 + $0x20] sm:$0xff]
    %v6892 = vld [vmem:[%s20 + $0x28] sm:$0xff]
    %v6893 = vld [vmem:[%s20 + $0x30] sm:$0xff]
    %v6894 = vld [vmem:[%s20 + $0x38] sm:$0xff]
    %v6895 = vld [vmem:[#allocation13] sm:$0x1]
    %v6897 = vlaneseq
    %v6898 = vshrl.u32 %v6897, 7
    %v6899 = vsub.s32 0, %v6898
    %v6900 = vrot.slane %v6895, %v6899
    %v6903 = vsel %vm2373, %v6886, 0
    %6905 = vmatprep.subr.mxu0 0.0
    %6906 = vmatpush1.msra.mxu0 %v6887
    %6907 = vmatprep.subr.mxu0 0.0
    %6908 = vmatpush1.msra.mxu0 %v6888
    %6909 = vmatprep.subr.mxu0 0.0
    %6910 = vmatpush1.msra.mxu0 %v6889
    %6911 = vmatprep.subr.mxu0 0.0
    %6912 = vmatpush1.msra.mxu0 %v6890
    %6913 = vmatprep.subr.mxu0 0.0
    %6914 = vmatpush1.msra.mxu0 %v6891
    %6915 = vmatprep.subr.mxu0 0.0
    %6916 = vmatpush1.msra.mxu0 %v6892
    %6917 = vmatprep.subr.mxu0 0.0
    %6918 = vmatpush1.msra.mxu0 %v6893
    %6919 = vmatprep.subr.mxu0 0.0
    %6920 = vmatpush1.msra.mxu0 %v6894
    %6921 = vmatprep.subr.mxu0 0.0
    %6922 = vmatpush1.msra.mxu0 0.0
    %6923 = vmatprep.subr.mxu0 0.0
    %6924 = vmatpush1.msra.mxu0 0.0
    %6925 = vmatprep.subr.mxu0 0.0
    %6926 = vmatpush1.msra.mxu0 0.0
    %6927 = vmatprep.subr.mxu0 0.0
    %6928 = vmatpush1.msra.mxu0 0.0
    %6929 = vmatprep.subr.mxu0 0.0
    %6930 = vmatpush1.msra.mxu0 0.0
    %6931 = vmatprep.subr.mxu0 0.0
    %6932 = vmatpush1.msra.mxu0 0.0
    %6933 = vmatprep.subr.mxu0 0.0
    %6934 = vmatpush1.msra.mxu0 0.0
    %6935 = vmatprep.subr.mxu0 0.0
    %6936 = vmatpush1.msra.mxu0 0.0
    %6937 = vmatprep.subr.mxu0 0.0
    %6938 = vmatpush1.msra.mxu0 0.0
    %6939 = vmatprep.subr.mxu0 0.0
    %6940 = vmatpush1.msra.mxu0 0.0
    %6941 = vmatprep.subr.mxu0 0.0
    %6942 = vmatpush1.msra.mxu0 0.0
    %6943 = vmatprep.subr.mxu0 0.0
    %6944 = vmatpush1.msra.mxu0 0.0
    %6945 = vmatprep.subr.mxu0 0.0
    %6946 = vmatpush1.msra.mxu0 0.0
    %6947 = vmatprep.subr.mxu0 0.0
    %6948 = vmatpush1.msra.mxu0 0.0
    %6949 = vmatprep.subr.mxu0 0.0
    %6950 = vmatpush1.msra.mxu0 0.0
    %6951 = vmatprep.subr.mxu0 0.0
    %6952 = vmatpush1.msra.mxu0 0.0
    %6953 = vmatprep.subr.mxu0 0.0
    %6954 = vmatpush1.msra.mxu0 0.0
    %6955 = vmatprep.subr.mxu0 0.0
    %6956 = vmatpush1.msra.mxu0 0.0
    %6957 = vmatprep.subr.mxu0 0.0
    %6958 = vmatpush1.msra.mxu0 0.0
    %6959 = vmatprep.subr.mxu0 0.0
    %6960 = vmatpush1.msra.mxu0 0.0
    %6961 = vmatprep.subr.mxu0 0.0
    %6962 = vmatpush1.msra.mxu0 0.0
    %6963 = vmatprep.subr.mxu0 0.0
    %6964 = vmatpush1.msra.mxu0 0.0
    %6965 = vmatprep.subr.mxu0 0.0
    %6966 = vmatpush1.msra.mxu0 0.0
    %6967 = vmatprep.subr.mxu0 0.0
    %6968 = vmatpush1.msra.mxu0 0.0
    %6969 = vmatprep.mubr.f32.mxu0 0.0
    %6970 = vmatmul.mubr.f32.gmra.mrb[0].mxu0 %v6903
    %v6971 = vpop.f32.mrb[0].mxu0
    %v6972 = vadd.f32 %v6900, %v6971
    %v6973 = vpop.f32.mrb[0].mxu0
    %6974 = vdwg.mxu0
    %v6975 = vadd.f32 %v6801, %v6972
    %v6976 = vsel %vm247, %v6975, 0.0
    %6977 = vadd.xlane.f32.xlu0 %v6976
    %v6978 = vpop.xlane.xlu0 %6977
    %v6979 = vmul.f32 %v6978, %v1170
    %v6980 = vsub.f32 %v6975, %v6979
    %v6981 = vmul.f32 %v6980, %v6980
    %v6982 = vsel %vm247, %v6981, 0.0
    %6983 = vadd.xlane.f32.xlu0 %v6982
    %v6984 = vpop.xlane.xlu0 %6983
    %v6985 = vmul.f32 %v6984, %v1170
    %v6986 = vadd.f32 %v6985, 1e-05
    %v6987 = vrsqrt.pop %v6986
    %v6988 = vmul.f32 %v6980, %v6987
    %v6990 = vlaneseq
    %v6991 = vshrl.u32 %v6990, 7
    %v6992 = vsub.s32 0, %v6991
    %v6993 = vrot.slane %v4765, %v6992
    %v6995 = vmul.f32 %v6988, %v6993
    %v6997 = vlaneseq
    %v6998 = vshrl.u32 %v6997, 7
    %v6999 = vsub.s32 0, %v6998
    %v7000 = vrot.slane %v4768, %v6999
    %v7002 = vadd.f32 %v6995, %v7000
    %v7003 = vld [vmem:[%s2475] sm:$0x1]
    %v7004 = vld [vmem:[%s2475 + $0x1] sm:$0x1]
    %v7005 = vld [vmem:[%s2475 + $0x2] sm:$0x1]
    %v7006 = vld [vmem:[%s2479] sm:$0x1]
    %v7007 = vld [vmem:[%s2479 + $0x1] sm:$0x1]
    %v7008 = vld [vmem:[%s2479 + $0x2] sm:$0x1]
    %v7009 = vadd.f32 %v7002, %v4754
    %v7010 = vld [vmem:[%s2484] sm:$0xff]
    %v7011 = vld [vmem:[%s2484 + $0x8] sm:$0xff]
    %v7012 = vld [vmem:[%s2484 + $0x10] sm:$0xff]
    %v7013 = vld [vmem:[%s2484 + $0x18] sm:$0xff]
    %v7014 = vld [vmem:[%s2489] sm:$0x1]
    %v7016 = vlaneseq
    %v7017 = vshrl.u32 %v7016, 7
    %v7018 = vsub.s32 0, %v7017
    %v7019 = vrot.slane %v7014, %v7018
    %v7022 = vsel %vm247, %v7009, 0
    %7024 = vmatprep.subr.mxu0 0.0
    %7025 = vmatpush1.msra.mxu0 %v7010
    %7026 = vmatprep.subr.mxu0 0.0
    %7027 = vmatpush1.msra.mxu0 %v7011
    %7028 = vmatprep.subr.mxu0 0.0
    %7029 = vmatpush1.msra.mxu0 %v7012
    %7030 = vmatprep.subr.mxu0 0.0
    %7031 = vmatpush1.msra.mxu0 %v7013
    %7032 = vmatprep.subr.mxu0 0.0
    %7033 = vmatpush1.msra.mxu0 0.0
    %7034 = vmatprep.subr.mxu0 0.0
    %7035 = vmatpush1.msra.mxu0 0.0
    %7036 = vmatprep.subr.mxu0 0.0
    %7037 = vmatpush1.msra.mxu0 0.0
    %7038 = vmatprep.subr.mxu0 0.0
    %7039 = vmatpush1.msra.mxu0 0.0
    %7040 = vmatprep.subr.mxu0 0.0
    %7041 = vmatpush1.msra.mxu0 0.0
    %7042 = vmatprep.subr.mxu0 0.0
    %7043 = vmatpush1.msra.mxu0 0.0
    %7044 = vmatprep.subr.mxu0 0.0
    %7045 = vmatpush1.msra.mxu0 0.0
    %7046 = vmatprep.subr.mxu0 0.0
    %7047 = vmatpush1.msra.mxu0 0.0
    %7048 = vmatprep.subr.mxu0 0.0
    %7049 = vmatpush1.msra.mxu0 0.0
    %7050 = vmatprep.subr.mxu0 0.0
    %7051 = vmatpush1.msra.mxu0 0.0
    %7052 = vmatprep.subr.mxu0 0.0
    %7053 = vmatpush1.msra.mxu0 0.0
    %7054 = vmatprep.subr.mxu0 0.0
    %7055 = vmatpush1.msra.mxu0 0.0
    %7056 = vmatprep.subr.mxu0 0.0
    %7057 = vmatpush1.msra.mxu0 0.0
    %7058 = vmatprep.subr.mxu0 0.0
    %7059 = vmatpush1.msra.mxu0 0.0
    %7060 = vmatprep.subr.mxu0 0.0
    %7061 = vmatpush1.msra.mxu0 0.0
    %7062 = vmatprep.subr.mxu0 0.0
    %7063 = vmatpush1.msra.mxu0 0.0
    %7064 = vmatprep.subr.mxu0 0.0
    %7065 = vmatpush1.msra.mxu0 0.0
    %7066 = vmatprep.subr.mxu0 0.0
    %7067 = vmatpush1.msra.mxu0 0.0
    %7068 = vmatprep.subr.mxu0 0.0
    %7069 = vmatpush1.msra.mxu0 0.0
    %7070 = vmatprep.subr.mxu0 0.0
    %7071 = vmatpush1.msra.mxu0 0.0
    %7072 = vmatprep.subr.mxu0 0.0
    %7073 = vmatpush1.msra.mxu0 0.0
    %7074 = vmatprep.subr.mxu0 0.0
    %7075 = vmatpush1.msra.mxu0 0.0
    %7076 = vmatprep.subr.mxu0 0.0
    %7077 = vmatpush1.msra.mxu0 0.0
    %7078 = vmatprep.subr.mxu0 0.0
    %7079 = vmatpush1.msra.mxu0 0.0
    %7080 = vmatprep.subr.mxu0 0.0
    %7081 = vmatpush1.msra.mxu0 0.0
    %7082 = vmatprep.subr.mxu0 0.0
    %7083 = vmatpush1.msra.mxu0 0.0
    %7084 = vmatprep.subr.mxu0 0.0
    %7085 = vmatpush1.msra.mxu0 0.0
    %7086 = vmatprep.subr.mxu0 0.0
    %7087 = vmatpush1.msra.mxu0 0.0
    %7088 = vmatprep.mubr.f32.mxu0 0.0
    %7089 = vmatmul.mubr.f32.gmra.mrb[0].mxu0 %v7022
    %v7090 = vpop.f32.mrb[0].mxu0
    %v7091 = vadd.f32 %v7019, %v7090
    %v7092 = vpop.f32.mrb[0].mxu0
    %7093 = vdwg.mxu0
    %v7094 = vmul.f32 %v7091, 0.35355338
    %v7095 = vld [vmem:[%s2571] sm:$0xff]
    %v7096 = vld [vmem:[%s2571 + $0x8] sm:$0xff]
    %v7097 = vld [vmem:[%s2571 + $0x10] sm:$0xff]
    %v7098 = vld [vmem:[%s2571 + $0x18] sm:$0xff]
    %v7099 = vld [vmem:[%s2576] sm:$0x1]
    %v7101 = vlaneseq
    %v7102 = vshrl.u32 %v7101, 7
    %v7103 = vsub.s32 0, %v7102
    %v7104 = vrot.slane %v7099, %v7103
    %v7107 = vsel %vm247, %v7002, 0
    %7109 = vmatprep.subr.mxu0 0.0
    %7110 = vmatpush1.msra.mxu0 %v7095
    %7111 = vmatprep.subr.mxu0 0.0
    %7112 = vmatpush1.msra.mxu0 %v7096
    %7113 = vmatprep.subr.mxu0 0.0
    %7114 = vmatpush1.msra.mxu0 %v7097
    %7115 = vmatprep.subr.mxu0 0.0
    %7116 = vmatpush1.msra.mxu0 %v7098
    %7117 = vmatprep.subr.mxu0 0.0
    %7118 = vmatpush1.msra.mxu0 0.0
    %7119 = vmatprep.subr.mxu0 0.0
    %7120 = vmatpush1.msra.mxu0 0.0
    %7121 = vmatprep.subr.mxu0 0.0
    %7122 = vmatpush1.msra.mxu0 0.0
    %7123 = vmatprep.subr.mxu0 0.0
    %7124 = vmatpush1.msra.mxu0 0.0
    %7125 = vmatprep.subr.mxu0 0.0
    %7126 = vmatpush1.msra.mxu0 0.0
    %7127 = vmatprep.subr.mxu0 0.0
    %7128 = vmatpush1.msra.mxu0 0.0
    %7129 = vmatprep.subr.mxu0 0.0
    %7130 = vmatpush1.msra.mxu0 0.0
    %7131 = vmatprep.subr.mxu0 0.0
    %7132 = vmatpush1.msra.mxu0 0.0
    %7133 = vmatprep.subr.mxu0 0.0
    %7134 = vmatpush1.msra.mxu0 0.0
    %7135 = vmatprep.subr.mxu0 0.0
    %7136 = vmatpush1.msra.mxu0 0.0
    %7137 = vmatprep.subr.mxu0 0.0
    %7138 = vmatpush1.msra.mxu0 0.0
    %7139 = vmatprep.subr.mxu0 0.0
    %7140 = vmatpush1.msra.mxu0 0.0
    %7141 = vmatprep.subr.mxu0 0.0
    %7142 = vmatpush1.msra.mxu0 0.0
    %7143 = vmatprep.subr.mxu0 0.0
    %7144 = vmatpush1.msra.mxu0 0.0
    %7145 = vmatprep.subr.mxu0 0.0
    %7146 = vmatpush1.msra.mxu0 0.0
    %7147 = vmatprep.subr.mxu0 0.0
    %7148 = vmatpush1.msra.mxu0 0.0
    %7149 = vmatprep.subr.mxu0 0.0
    %7150 = vmatpush1.msra.mxu0 0.0
    %7151 = vmatprep.subr.mxu0 0.0
    %7152 = vmatpush1.msra.mxu0 0.0
    %7153 = vmatprep.subr.mxu0 0.0
    %7154 = vmatpush1.msra.mxu0 0.0
    %7155 = vmatprep.subr.mxu0 0.0
    %7156 = vmatpush1.msra.mxu0 0.0
    %7157 = vmatprep.subr.mxu0 0.0
    %7158 = vmatpush1.msra.mxu0 0.0
    %7159 = vmatprep.subr.mxu0 0.0
    %7160 = vmatpush1.msra.mxu0 0.0
    %7161 = vmatprep.subr.mxu0 0.0
    %7162 = vmatpush1.msra.mxu0 0.0
    %7163 = vmatprep.subr.mxu0 0.0
    %7164 = vmatpush1.msra.mxu0 0.0
    %7165 = vmatprep.subr.mxu0 0.0
    %7166 = vmatpush1.msra.mxu0 0.0
    %7167 = vmatprep.subr.mxu0 0.0
    %7168 = vmatpush1.msra.mxu0 0.0
    %7169 = vmatprep.subr.mxu0 0.0
    %7170 = vmatpush1.msra.mxu0 0.0
    %7171 = vmatprep.subr.mxu0 0.0
    %7172 = vmatpush1.msra.mxu0 0.0
    %7173 = vmatprep.mubr.f32.mxu0 0.0
    %7174 = vmatmul.mubr.f32.gmra.mrb[0].mxu0 %v7107
    %v7175 = vpop.f32.mrb[0].mxu0
    %v7176 = vadd.f32 %v7104, %v7175
    %v7177 = vpop.f32.mrb[0].mxu0
    %7178 = vdwg.mxu0
    %v7179 = vld [vmem:[%s2657] sm:$0xff]
    %v7180 = vld [vmem:[%s2657 + $0x8] sm:$0xff]
    %v7181 = vld [vmem:[%s2657 + $0x10] sm:$0xff]
    %v7182 = vld [vmem:[%s2657 + $0x18] sm:$0xff]
    %v7183 = vld [vmem:[%s2662] sm:$0x1]
    %7185 = vrot.lane.b32.xlu0 %v7091, 96
    %v7186 = vpop.permute.xlu0 %7185
    %v7188 = vsel %vm414, %v7094, 0
    %v7190 = vsel %vm414, %v7186, 0
    %7192 = vmatprep.subr.mxu0 0.0
    %7193 = vmatpush1.xpose.msra.mxu0 %v7190
    %7194 = vmatprep.subr.mxu0 0.0
    %7195 = vmatpush1.xpose.msra.mxu0 0.0
    %7196 = vmatprep.subr.mxu0 0.0
    %7197 = vmatpush1.xpose.msra.mxu0 0.0
    %7198 = vmatprep.subr.mxu0 0.0
    %7199 = vmatpush1.xpose.msra.mxu0 0.0
    %7200 = vmatprep.subr.mxu0 0.0
    %7201 = vmatpush1.xpose.msra.mxu0 0.0
    %7202 = vmatprep.subr.mxu0 0.0
    %7203 = vmatpush1.xpose.msra.mxu0 0.0
    %7204 = vmatprep.subr.mxu0 0.0
    %7205 = vmatpush1.xpose.msra.mxu0 0.0
    %7206 = vmatprep.subr.mxu0 0.0
    %7207 = vmatpush1.xpose.msra.mxu0 0.0
    %7208 = vmatprep.subr.mxu0 0.0
    %7209 = vmatpush1.xpose.msra.mxu0 0.0
    %7210 = vmatprep.subr.mxu0 0.0
    %7211 = vmatpush1.xpose.msra.mxu0 0.0
    %7212 = vmatprep.subr.mxu0 0.0
    %7213 = vmatpush1.xpose.msra.mxu0 0.0
    %7214 = vmatprep.subr.mxu0 0.0
    %7215 = vmatpush1.xpose.msra.mxu0 0.0
    %7216 = vmatprep.subr.mxu0 0.0
    %7217 = vmatpush1.xpose.msra.mxu0 0.0
    %7218 = vmatprep.subr.mxu0 0.0
    %7219 = vmatpush1.xpose.msra.mxu0 0.0
    %7220 = vmatprep.subr.mxu0 0.0
    %7221 = vmatpush1.xpose.msra.mxu0 0.0
    %7222 = vmatprep.subr.mxu0 0.0
    %7223 = vmatpush1.xpose.msra.mxu0 0.0
    %7224 = vmatprep.subr.mxu0 0.0
    %7225 = vmatpush1.xpose.msra.mxu0 0.0
    %7226 = vmatprep.subr.mxu0 0.0
    %7227 = vmatpush1.xpose.msra.mxu0 0.0
    %7228 = vmatprep.subr.mxu0 0.0
    %7229 = vmatpush1.xpose.msra.mxu0 0.0
    %7230 = vmatprep.subr.mxu0 0.0
    %7231 = vmatpush1.xpose.msra.mxu0 0.0
    %7232 = vmatprep.subr.mxu0 0.0
    %7233 = vmatpush1.xpose.msra.mxu0 0.0
    %7234 = vmatprep.subr.mxu0 0.0
    %7235 = vmatpush1.xpose.msra.mxu0 0.0
    %7236 = vmatprep.subr.mxu0 0.0
    %7237 = vmatpush1.xpose.msra.mxu0 0.0
    %7238 = vmatprep.subr.mxu0 0.0
    %7239 = vmatpush1.xpose.msra.mxu0 0.0
    %7240 = vmatprep.subr.mxu0 0.0
    %7241 = vmatpush1.xpose.msra.mxu0 0.0
    %7242 = vmatprep.subr.mxu0 0.0
    %7243 = vmatpush1.xpose.msra.mxu0 0.0
    %7244 = vmatprep.subr.mxu0 0.0
    %7245 = vmatpush1.xpose.msra.mxu0 0.0
    %7246 = vmatprep.subr.mxu0 0.0
    %7247 = vmatpush1.xpose.msra.mxu0 0.0
    %7248 = vmatprep.subr.mxu0 0.0
    %7249 = vmatpush1.xpose.msra.mxu0 0.0
    %7250 = vmatprep.subr.mxu0 0.0
    %7251 = vmatpush1.xpose.msra.mxu0 0.0
    %7252 = vmatprep.subr.mxu0 0.0
    %7253 = vmatpush1.xpose.msra.mxu0 0.0
    %7254 = vmatprep.subr.mxu0 0.0
    %7255 = vmatpush1.xpose.msra.mxu0 0.0
    %7256 = vmatprep.mubr.f32.mxu0 0.0
    %7257 = vmatmul.mubr.f32.gmra.mrb[0].mxu0 %v7188
    %v7258 = vpop.f32.mrb[0].mxu0
    %v7259 = vadd.f32 0.0, %v7258
    %v7260 = vpop.f32.mrb[0].mxu0
    %7261 = vdwg.mxu0
    %v7262 = vsel %vm414, %v7259, -inf
    %7263 = vmax.xlane.f32.xlu0 %v7262
    %v7264 = vpop.xlane.xlu0 %7263
    %v7265 = vsub.f32 %v7259, %v7264
    %v7266 = vmul.f32 %v7265, 1.442695
    %v7267 = vpow.pop %v7266
    %v7268 = vsel %vm414, %v7267, 0.0
    %7269 = vadd.xlane.f32.xlu0 %v7268
    %v7270 = vpop.xlane.xlu0 %7269
    %v7271 = vrcp.pop %v7270
    %v7272 = vmul.f32 %v7267, %v7271
    %v7274 = vsel %vm414, %v7272, 0
    %7276 = vmatprep.subr.mxu0 0.0
    %7277 = vmatpush1.msra.mxu0 %v7176
    %7278 = vmatprep.subr.mxu0 0.0
    %7279 = vmatpush1.msra.mxu0 0.0
    %7280 = vmatprep.subr.mxu0 0.0
    %7281 = vmatpush1.msra.mxu0 0.0
    %7282 = vmatprep.subr.mxu0 0.0
    %7283 = vmatpush1.msra.mxu0 0.0
    %7284 = vmatprep.subr.mxu0 0.0
    %7285 = vmatpush1.msra.mxu0 0.0
    %7286 = vmatprep.subr.mxu0 0.0
    %7287 = vmatpush1.msra.mxu0 0.0
    %7288 = vmatprep.subr.mxu0 0.0
    %7289 = vmatpush1.msra.mxu0 0.0
    %7290 = vmatprep.subr.mxu0 0.0
    %7291 = vmatpush1.msra.mxu0 0.0
    %7292 = vmatprep.subr.mxu0 0.0
    %7293 = vmatpush1.msra.mxu0 0.0
    %7294 = vmatprep.subr.mxu0 0.0
    %7295 = vmatpush1.msra.mxu0 0.0
    %7296 = vmatprep.subr.mxu0 0.0
    %7297 = vmatpush1.msra.mxu0 0.0
    %7298 = vmatprep.subr.mxu0 0.0
    %7299 = vmatpush1.msra.mxu0 0.0
    %7300 = vmatprep.subr.mxu0 0.0
    %7301 = vmatpush1.msra.mxu0 0.0
    %7302 = vmatprep.subr.mxu0 0.0
    %7303 = vmatpush1.msra.mxu0 0.0
    %7304 = vmatprep.subr.mxu0 0.0
    %7305 = vmatpush1.msra.mxu0 0.0
    %7306 = vmatprep.subr.mxu0 0.0
    %7307 = vmatpush1.msra.mxu0 0.0
    %7308 = vmatprep.subr.mxu0 0.0
    %7309 = vmatpush1.msra.mxu0 0.0
    %7310 = vmatprep.subr.mxu0 0.0
    %7311 = vmatpush1.msra.mxu0 0.0
    %7312 = vmatprep.subr.mxu0 0.0
    %7313 = vmatpush1.msra.mxu0 0.0
    %7314 = vmatprep.subr.mxu0 0.0
    %7315 = vmatpush1.msra.mxu0 0.0
    %7316 = vmatprep.subr.mxu0 0.0
    %7317 = vmatpush1.msra.mxu0 0.0
    %7318 = vmatprep.subr.mxu0 0.0
    %7319 = vmatpush1.msra.mxu0 0.0
    %7320 = vmatprep.subr.mxu0 0.0
    %7321 = vmatpush1.msra.mxu0 0.0
    %7322 = vmatprep.subr.mxu0 0.0
    %7323 = vmatpush1.msra.mxu0 0.0
    %7324 = vmatprep.subr.mxu0 0.0
    %7325 = vmatpush1.msra.mxu0 0.0
    %7326 = vmatprep.subr.mxu0 0.0
    %7327 = vmatpush1.msra.mxu0 0.0
    %7328 = vmatprep.subr.mxu0 0.0
    %7329 = vmatpush1.msra.mxu0 0.0
    %7330 = vmatprep.subr.mxu0 0.0
    %7331 = vmatpush1.msra.mxu0 0.0
    %7332 = vmatprep.subr.mxu0 0.0
    %7333 = vmatpush1.msra.mxu0 0.0
    %7334 = vmatprep.subr.mxu0 0.0
    %7335 = vmatpush1.msra.mxu0 0.0
    %7336 = vmatprep.subr.mxu0 0.0
    %7337 = vmatpush1.msra.mxu0 0.0
    %7338 = vmatprep.subr.mxu0 0.0
    %7339 = vmatpush1.msra.mxu0 0.0
    %7340 = vmatprep.mubr.f32.mxu0 0.0
    %7341 = vmatmul.mubr.f32.gmra.mrb[0].mxu0 %v7274
    %v7342 = vpop.f32.mrb[0].mxu0
    %v7343 = vadd.f32 0.0, %v7342
    %v7344 = vpop.f32.mrb[0].mxu0
    %7345 = vdwg.mxu0
    %7346 = vrot.lane.b32.xlu0 %v7094, 120
    %v7347 = vpop.permute.xlu0 %7346
    %7348 = vrot.lane.b32.xlu0 %v7091, 88
    %v7349 = vpop.permute.xlu0 %7348
    %v7350 = vsel %vm414, %v7347, 0
    %v7352 = vsel %vm414, %v7349, 0
    %7354 = vmatprep.subr.mxu0 0.0
    %7355 = vmatpush1.xpose.msra.mxu0 %v7352
    %7356 = vmatprep.subr.mxu0 0.0
    %7357 = vmatpush1.xpose.msra.mxu0 0.0
    %7358 = vmatprep.subr.mxu0 0.0
    %7359 = vmatpush1.xpose.msra.mxu0 0.0
    %7360 = vmatprep.subr.mxu0 0.0
    %7361 = vmatpush1.xpose.msra.mxu0 0.0
    %7362 = vmatprep.subr.mxu0 0.0
    %7363 = vmatpush1.xpose.msra.mxu0 0.0
    %7364 = vmatprep.subr.mxu0 0.0
    %7365 = vmatpush1.xpose.msra.mxu0 0.0
    %7366 = vmatprep.subr.mxu0 0.0
    %7367 = vmatpush1.xpose.msra.mxu0 0.0
    %7368 = vmatprep.subr.mxu0 0.0
    %7369 = vmatpush1.xpose.msra.mxu0 0.0
    %7370 = vmatprep.subr.mxu0 0.0
    %7371 = vmatpush1.xpose.msra.mxu0 0.0
    %7372 = vmatprep.subr.mxu0 0.0
    %7373 = vmatpush1.xpose.msra.mxu0 0.0
    %7374 = vmatprep.subr.mxu0 0.0
    %7375 = vmatpush1.xpose.msra.mxu0 0.0
    %7376 = vmatprep.subr.mxu0 0.0
    %7377 = vmatpush1.xpose.msra.mxu0 0.0
    %7378 = vmatprep.subr.mxu0 0.0
    %7379 = vmatpush1.xpose.msra.mxu0 0.0
    %7380 = vmatprep.subr.mxu0 0.0
    %7381 = vmatpush1.xpose.msra.mxu0 0.0
    %7382 = vmatprep.subr.mxu0 0.0
    %7383 = vmatpush1.xpose.msra.mxu0 0.0
    %7384 = vmatprep.subr.mxu0 0.0
    %7385 = vmatpush1.xpose.msra.mxu0 0.0
    %7386 = vmatprep.subr.mxu0 0.0
    %7387 = vmatpush1.xpose.msra.mxu0 0.0
    %7388 = vmatprep.subr.mxu0 0.0
    %7389 = vmatpush1.xpose.msra.mxu0 0.0
    %7390 = vmatprep.subr.mxu0 0.0
    %7391 = vmatpush1.xpose.msra.mxu0 0.0
    %7392 = vmatprep.subr.mxu0 0.0
    %7393 = vmatpush1.xpose.msra.mxu0 0.0
    %7394 = vmatprep.subr.mxu0 0.0
    %7395 = vmatpush1.xpose.msra.mxu0 0.0
    %7396 = vmatprep.subr.mxu0 0.0
    %7397 = vmatpush1.xpose.msra.mxu0 0.0
    %7398 = vmatprep.subr.mxu0 0.0
    %7399 = vmatpush1.xpose.msra.mxu0 0.0
    %7400 = vmatprep.subr.mxu0 0.0
    %7401 = vmatpush1.xpose.msra.mxu0 0.0
    %7402 = vmatprep.subr.mxu0 0.0
    %7403 = vmatpush1.xpose.msra.mxu0 0.0
    %7404 = vmatprep.subr.mxu0 0.0
    %7405 = vmatpush1.xpose.msra.mxu0 0.0
    %7406 = vmatprep.subr.mxu0 0.0
    %7407 = vmatpush1.xpose.msra.mxu0 0.0
    %7408 = vmatprep.subr.mxu0 0.0
    %7409 = vmatpush1.xpose.msra.mxu0 0.0
    %7410 = vmatprep.subr.mxu0 0.0
    %7411 = vmatpush1.xpose.msra.mxu0 0.0
    %7412 = vmatprep.subr.mxu0 0.0
    %7413 = vmatpush1.xpose.msra.mxu0 0.0
    %7414 = vmatprep.subr.mxu0 0.0
    %7415 = vmatpush1.xpose.msra.mxu0 0.0
    %7416 = vmatprep.subr.mxu0 0.0
    %7417 = vmatpush1.xpose.msra.mxu0 0.0
    %7418 = vmatprep.mubr.f32.mxu0 0.0
    %7419 = vmatmul.mubr.f32.gmra.mrb[0].mxu0 %v7350
    %v7420 = vpop.f32.mrb[0].mxu0
    %v7421 = vadd.f32 0.0, %v7420
    %v7422 = vpop.f32.mrb[0].mxu0
    %7423 = vdwg.mxu0
    %v7424 = vsel %vm414, %v7421, -inf
    %7425 = vmax.xlane.f32.xlu0 %v7424
    %v7426 = vpop.xlane.xlu0 %7425
    %v7427 = vsub.f32 %v7421, %v7426
    %v7428 = vmul.f32 %v7427, 1.442695
    %v7429 = vpow.pop %v7428
    %v7430 = vsel %vm414, %v7429, 0.0
    %7431 = vadd.xlane.f32.xlu0 %v7430
    %v7432 = vpop.xlane.xlu0 %7431
    %v7433 = vrcp.pop %v7432
    %v7434 = vmul.f32 %v7429, %v7433
    %7436 = vrot.lane.b32.xlu0 %v7176, 120
    %v7437 = vpop.permute.xlu0 %7436
    %v7440 = vsel %vm414, %v7434, 0
    %7442 = vmatprep.subr.mxu0 0.0
    %7443 = vmatpush1.msra.mxu0 %v7437
    %7444 = vmatprep.subr.mxu0 0.0
    %7445 = vmatpush1.msra.mxu0 0.0
    %7446 = vmatprep.subr.mxu0 0.0
    %7447 = vmatpush1.msra.mxu0 0.0
    %7448 = vmatprep.subr.mxu0 0.0
    %7449 = vmatpush1.msra.mxu0 0.0
    %7450 = vmatprep.subr.mxu0 0.0
    %7451 = vmatpush1.msra.mxu0 0.0
    %7452 = vmatprep.subr.mxu0 0.0
    %7453 = vmatpush1.msra.mxu0 0.0
    %7454 = vmatprep.subr.mxu0 0.0
    %7455 = vmatpush1.msra.mxu0 0.0
    %7456 = vmatprep.subr.mxu0 0.0
    %7457 = vmatpush1.msra.mxu0 0.0
    %7458 = vmatprep.subr.mxu0 0.0
    %7459 = vmatpush1.msra.mxu0 0.0
    %7460 = vmatprep.subr.mxu0 0.0
    %7461 = vmatpush1.msra.mxu0 0.0
    %7462 = vmatprep.subr.mxu0 0.0
    %7463 = vmatpush1.msra.mxu0 0.0
    %7464 = vmatprep.subr.mxu0 0.0
    %7465 = vmatpush1.msra.mxu0 0.0
    %7466 = vmatprep.subr.mxu0 0.0
    %7467 = vmatpush1.msra.mxu0 0.0
    %7468 = vmatprep.subr.mxu0 0.0
    %7469 = vmatpush1.msra.mxu0 0.0
    %7470 = vmatprep.subr.mxu0 0.0
    %7471 = vmatpush1.msra.mxu0 0.0
    %7472 = vmatprep.subr.mxu0 0.0
    %7473 = vmatpush1.msra.mxu0 0.0
    %7474 = vmatprep.subr.mxu0 0.0
    %7475 = vmatpush1.msra.mxu0 0.0
    %7476 = vmatprep.subr.mxu0 0.0
    %7477 = vmatpush1.msra.mxu0 0.0
    %7478 = vmatprep.subr.mxu0 0.0
    %7479 = vmatpush1.msra.mxu0 0.0
    %7480 = vmatprep.subr.mxu0 0.0
    %7481 = vmatpush1.msra.mxu0 0.0
    %7482 = vmatprep.subr.mxu0 0.0
    %7483 = vmatpush1.msra.mxu0 0.0
    %7484 = vmatprep.subr.mxu0 0.0
    %7485 = vmatpush1.msra.mxu0 0.0
    %7486 = vmatprep.subr.mxu0 0.0
    %7487 = vmatpush1.msra.mxu0 0.0
    %7488 = vmatprep.subr.mxu0 0.0
    %7489 = vmatpush1.msra.mxu0 0.0
    %7490 = vmatprep.subr.mxu0 0.0
    %7491 = vmatpush1.msra.mxu0 0.0
    %7492 = vmatprep.subr.mxu0 0.0
    %7493 = vmatpush1.msra.mxu0 0.0
    %7494 = vmatprep.subr.mxu0 0.0
    %7495 = vmatpush1.msra.mxu0 0.0
    %7496 = vmatprep.subr.mxu0 0.0
    %7497 = vmatpush1.msra.mxu0 0.0
    %7498 = vmatprep.subr.mxu0 0.0
    %7499 = vmatpush1.msra.mxu0 0.0
    %7500 = vmatprep.subr.mxu0 0.0
    %7501 = vmatpush1.msra.mxu0 0.0
    %7502 = vmatprep.subr.mxu0 0.0
    %7503 = vmatpush1.msra.mxu0 0.0
    %7504 = vmatprep.subr.mxu0 0.0
    %7505 = vmatpush1.msra.mxu0 0.0
    %7506 = vmatprep.mubr.f32.mxu0 0.0
    %7507 = vmatmul.mubr.f32.gmra.mrb[0].mxu0 %v7440
    %v7508 = vpop.f32.mrb[0].mxu0
    %v7509 = vadd.f32 0.0, %v7508
    %v7510 = vpop.f32.mrb[0].mxu0
    %7511 = vdwg.mxu0
    %7512 = vrot.lane.b32.xlu0 %v7094, 112
    %v7513 = vpop.permute.xlu0 %7512
    %7514 = vrot.lane.b32.xlu0 %v7091, 80
    %v7515 = vpop.permute.xlu0 %7514
    %v7516 = vsel %vm414, %v7513, 0
    %v7518 = vsel %vm414, %v7515, 0
    %7520 = vmatprep.subr.mxu0 0.0
    %7521 = vmatpush1.xpose.msra.mxu0 %v7518
    %7522 = vmatprep.subr.mxu0 0.0
    %7523 = vmatpush1.xpose.msra.mxu0 0.0
    %7524 = vmatprep.subr.mxu0 0.0
    %7525 = vmatpush1.xpose.msra.mxu0 0.0
    %7526 = vmatprep.subr.mxu0 0.0
    %7527 = vmatpush1.xpose.msra.mxu0 0.0
    %7528 = vmatprep.subr.mxu0 0.0
    %7529 = vmatpush1.xpose.msra.mxu0 0.0
    %7530 = vmatprep.subr.mxu0 0.0
    %7531 = vmatpush1.xpose.msra.mxu0 0.0
    %7532 = vmatprep.subr.mxu0 0.0
    %7533 = vmatpush1.xpose.msra.mxu0 0.0
    %7534 = vmatprep.subr.mxu0 0.0
    %7535 = vmatpush1.xpose.msra.mxu0 0.0
    %7536 = vmatprep.subr.mxu0 0.0
    %7537 = vmatpush1.xpose.msra.mxu0 0.0
    %7538 = vmatprep.subr.mxu0 0.0
    %7539 = vmatpush1.xpose.msra.mxu0 0.0
    %7540 = vmatprep.subr.mxu0 0.0
    %7541 = vmatpush1.xpose.msra.mxu0 0.0
    %7542 = vmatprep.subr.mxu0 0.0
    %7543 = vmatpush1.xpose.msra.mxu0 0.0
    %7544 = vmatprep.subr.mxu0 0.0
    %7545 = vmatpush1.xpose.msra.mxu0 0.0
    %7546 = vmatprep.subr.mxu0 0.0
    %7547 = vmatpush1.xpose.msra.mxu0 0.0
    %7548 = vmatprep.subr.mxu0 0.0
    %7549 = vmatpush1.xpose.msra.mxu0 0.0
    %7550 = vmatprep.subr.mxu0 0.0
    %7551 = vmatpush1.xpose.msra.mxu0 0.0
    %7552 = vmatprep.subr.mxu0 0.0
    %7553 = vmatpush1.xpose.msra.mxu0 0.0
    %7554 = vmatprep.subr.mxu0 0.0
    %7555 = vmatpush1.xpose.msra.mxu0 0.0
    %7556 = vmatprep.subr.mxu0 0.0
    %7557 = vmatpush1.xpose.msra.mxu0 0.0
    %7558 = vmatprep.subr.mxu0 0.0
    %7559 = vmatpush1.xpose.msra.mxu0 0.0
    %7560 = vmatprep.subr.mxu0 0.0
    %7561 = vmatpush1.xpose.msra.mxu0 0.0
    %7562 = vmatprep.subr.mxu0 0.0
    %7563 = vmatpush1.xpose.msra.mxu0 0.0
    %7564 = vmatprep.subr.mxu0 0.0
    %7565 = vmatpush1.xpose.msra.mxu0 0.0
    %7566 = vmatprep.subr.mxu0 0.0
    %7567 = vmatpush1.xpose.msra.mxu0 0.0
    %7568 = vmatprep.subr.mxu0 0.0
    %7569 = vmatpush1.xpose.msra.mxu0 0.0
    %7570 = vmatprep.subr.mxu0 0.0
    %7571 = vmatpush1.xpose.msra.mxu0 0.0
    %7572 = vmatprep.subr.mxu0 0.0
    %7573 = vmatpush1.xpose.msra.mxu0 0.0
    %7574 = vmatprep.subr.mxu0 0.0
    %7575 = vmatpush1.xpose.msra.mxu0 0.0
    %7576 = vmatprep.subr.mxu0 0.0
    %7577 = vmatpush1.xpose.msra.mxu0 0.0
    %7578 = vmatprep.subr.mxu0 0.0
    %7579 = vmatpush1.xpose.msra.mxu0 0.0
    %7580 = vmatprep.subr.mxu0 0.0
    %7581 = vmatpush1.xpose.msra.mxu0 0.0
    %7582 = vmatprep.subr.mxu0 0.0
    %7583 = vmatpush1.xpose.msra.mxu0 0.0
    %7584 = vmatprep.mubr.f32.mxu0 0.0
    %7585 = vmatmul.mubr.f32.gmra.mrb[0].mxu0 %v7516
    %v7586 = vpop.f32.mrb[0].mxu0
    %v7587 = vadd.f32 0.0, %v7586
    %v7588 = vpop.f32.mrb[0].mxu0
    %7589 = vdwg.mxu0
    %v7590 = vsel %vm414, %v7587, -inf
    %7591 = vmax.xlane.f32.xlu0 %v7590
    %v7592 = vpop.xlane.xlu0 %7591
    %v7593 = vsub.f32 %v7587, %v7592
    %v7594 = vmul.f32 %v7593, 1.442695
    %v7595 = vpow.pop %v7594
    %v7596 = vsel %vm414, %v7595, 0.0
    %7597 = vadd.xlane.f32.xlu0 %v7596
    %v7598 = vpop.xlane.xlu0 %7597
    %v7599 = vrcp.pop %v7598
    %v7600 = vmul.f32 %v7595, %v7599
    %7601 = vrot.lane.b32.xlu0 %v7176, 112
    %v7602 = vpop.permute.xlu0 %7601
    %v7605 = vsel %vm414, %v7600, 0
    %7607 = vmatprep.subr.mxu0 0.0
    %7608 = vmatpush1.msra.mxu0 %v7602
    %7609 = vmatprep.subr.mxu0 0.0
    %7610 = vmatpush1.msra.mxu0 0.0
    %7611 = vmatprep.subr.mxu0 0.0
    %7612 = vmatpush1.msra.mxu0 0.0
    %7613 = vmatprep.subr.mxu0 0.0
    %7614 = vmatpush1.msra.mxu0 0.0
    %7615 = vmatprep.subr.mxu0 0.0
    %7616 = vmatpush1.msra.mxu0 0.0
    %7617 = vmatprep.subr.mxu0 0.0
    %7618 = vmatpush1.msra.mxu0 0.0
    %7619 = vmatprep.subr.mxu0 0.0
    %7620 = vmatpush1.msra.mxu0 0.0
    %7621 = vmatprep.subr.mxu0 0.0
    %7622 = vmatpush1.msra.mxu0 0.0
    %7623 = vmatprep.subr.mxu0 0.0
    %7624 = vmatpush1.msra.mxu0 0.0
    %7625 = vmatprep.subr.mxu0 0.0
    %7626 = vmatpush1.msra.mxu0 0.0
    %7627 = vmatprep.subr.mxu0 0.0
    %7628 = vmatpush1.msra.mxu0 0.0
    %7629 = vmatprep.subr.mxu0 0.0
    %7630 = vmatpush1.msra.mxu0 0.0
    %7631 = vmatprep.subr.mxu0 0.0
    %7632 = vmatpush1.msra.mxu0 0.0
    %7633 = vmatprep.subr.mxu0 0.0
    %7634 = vmatpush1.msra.mxu0 0.0
    %7635 = vmatprep.subr.mxu0 0.0
    %7636 = vmatpush1.msra.mxu0 0.0
    %7637 = vmatprep.subr.mxu0 0.0
    %7638 = vmatpush1.msra.mxu0 0.0
    %7639 = vmatprep.subr.mxu0 0.0
    %7640 = vmatpush1.msra.mxu0 0.0
    %7641 = vmatprep.subr.mxu0 0.0
    %7642 = vmatpush1.msra.mxu0 0.0
    %7643 = vmatprep.subr.mxu0 0.0
    %7644 = vmatpush1.msra.mxu0 0.0
    %7645 = vmatprep.subr.mxu0 0.0
    %7646 = vmatpush1.msra.mxu0 0.0
    %7647 = vmatprep.subr.mxu0 0.0
    %7648 = vmatpush1.msra.mxu0 0.0
    %7649 = vmatprep.subr.mxu0 0.0
    %7650 = vmatpush1.msra.mxu0 0.0
    %7651 = vmatprep.subr.mxu0 0.0
    %7652 = vmatpush1.msra.mxu0 0.0
    %7653 = vmatprep.subr.mxu0 0.0
    %7654 = vmatpush1.msra.mxu0 0.0
    %7655 = vmatprep.subr.mxu0 0.0
    %7656 = vmatpush1.msra.mxu0 0.0
    %7657 = vmatprep.subr.mxu0 0.0
    %7658 = vmatpush1.msra.mxu0 0.0
    %7659 = vmatprep.subr.mxu0 0.0
    %7660 = vmatpush1.msra.mxu0 0.0
    %7661 = vmatprep.subr.mxu0 0.0
    %7662 = vmatpush1.msra.mxu0 0.0
    %7663 = vmatprep.subr.mxu0 0.0
    %7664 = vmatpush1.msra.mxu0 0.0
    %7665 = vmatprep.subr.mxu0 0.0
    %7666 = vmatpush1.msra.mxu0 0.0
    %7667 = vmatprep.subr.mxu0 0.0
    %7668 = vmatpush1.msra.mxu0 0.0
    %7669 = vmatprep.subr.mxu0 0.0
    %7670 = vmatpush1.msra.mxu0 0.0
    %7671 = vmatprep.mubr.f32.mxu0 0.0
    %7672 = vmatmul.mubr.f32.gmra.mrb[0].mxu0 %v7605
    %v7673 = vpop.f32.mrb[0].mxu0
    %v7674 = vadd.f32 0.0, %v7673
    %v7675 = vpop.f32.mrb[0].mxu0
    %7676 = vdwg.mxu0
    %7677 = vrot.lane.b32.xlu0 %v7094, 104
    %v7678 = vpop.permute.xlu0 %7677
    %7679 = vrot.lane.b32.xlu0 %v7091, 72
    %v7680 = vpop.permute.xlu0 %7679
    %v7681 = vsel %vm414, %v7678, 0
    %v7683 = vsel %vm414, %v7680, 0
    %7685 = vmatprep.subr.mxu0 0.0
    %7686 = vmatpush1.xpose.msra.mxu0 %v7683
    %7687 = vmatprep.subr.mxu0 0.0
    %7688 = vmatpush1.xpose.msra.mxu0 0.0
    %7689 = vmatprep.subr.mxu0 0.0
    %7690 = vmatpush1.xpose.msra.mxu0 0.0
    %7691 = vmatprep.subr.mxu0 0.0
    %7692 = vmatpush1.xpose.msra.mxu0 0.0
    %7693 = vmatprep.subr.mxu0 0.0
    %7694 = vmatpush1.xpose.msra.mxu0 0.0
    %7695 = vmatprep.subr.mxu0 0.0
    %7696 = vmatpush1.xpose.msra.mxu0 0.0
    %7697 = vmatprep.subr.mxu0 0.0
    %7698 = vmatpush1.xpose.msra.mxu0 0.0
    %7699 = vmatprep.subr.mxu0 0.0
    %7700 = vmatpush1.xpose.msra.mxu0 0.0
    %7701 = vmatprep.subr.mxu0 0.0
    %7702 = vmatpush1.xpose.msra.mxu0 0.0
    %7703 = vmatprep.subr.mxu0 0.0
    %7704 = vmatpush1.xpose.msra.mxu0 0.0
    %7705 = vmatprep.subr.mxu0 0.0
    %7706 = vmatpush1.xpose.msra.mxu0 0.0
    %7707 = vmatprep.subr.mxu0 0.0
    %7708 = vmatpush1.xpose.msra.mxu0 0.0
    %7709 = vmatprep.subr.mxu0 0.0
    %7710 = vmatpush1.xpose.msra.mxu0 0.0
    %7711 = vmatprep.subr.mxu0 0.0
    %7712 = vmatpush1.xpose.msra.mxu0 0.0
    %7713 = vmatprep.subr.mxu0 0.0
    %7714 = vmatpush1.xpose.msra.mxu0 0.0
    %7715 = vmatprep.subr.mxu0 0.0
    %7716 = vmatpush1.xpose.msra.mxu0 0.0
    %7717 = vmatprep.subr.mxu0 0.0
    %7718 = vmatpush1.xpose.msra.mxu0 0.0
    %7719 = vmatprep.subr.mxu0 0.0
    %7720 = vmatpush1.xpose.msra.mxu0 0.0
    %7721 = vmatprep.subr.mxu0 0.0
    %7722 = vmatpush1.xpose.msra.mxu0 0.0
    %7723 = vmatprep.subr.mxu0 0.0
    %7724 = vmatpush1.xpose.msra.mxu0 0.0
    %7725 = vmatprep.subr.mxu0 0.0
    %7726 = vmatpush1.xpose.msra.mxu0 0.0
    %7727 = vmatprep.subr.mxu0 0.0
    %7728 = vmatpush1.xpose.msra.mxu0 0.0
    %7729 = vmatprep.subr.mxu0 0.0
    %7730 = vmatpush1.xpose.msra.mxu0 0.0
    %7731 = vmatprep.subr.mxu0 0.0
    %7732 = vmatpush1.xpose.msra.mxu0 0.0
    %7733 = vmatprep.subr.mxu0 0.0
    %7734 = vmatpush1.xpose.msra.mxu0 0.0
    %7735 = vmatprep.subr.mxu0 0.0
    %7736 = vmatpush1.xpose.msra.mxu0 0.0
    %7737 = vmatprep.subr.mxu0 0.0
    %7738 = vmatpush1.xpose.msra.mxu0 0.0
    %7739 = vmatprep.subr.mxu0 0.0
    %7740 = vmatpush1.xpose.msra.mxu0 0.0
    %7741 = vmatprep.subr.mxu0 0.0
    %7742 = vmatpush1.xpose.msra.mxu0 0.0
    %7743 = vmatprep.subr.mxu0 0.0
    %7744 = vmatpush1.xpose.msra.mxu0 0.0
    %7745 = vmatprep.subr.mxu0 0.0
    %7746 = vmatpush1.xpose.msra.mxu0 0.0
    %7747 = vmatprep.subr.mxu0 0.0
    %7748 = vmatpush1.xpose.msra.mxu0 0.0
    %7749 = vmatprep.mubr.f32.mxu0 0.0
    %7750 = vmatmul.mubr.f32.gmra.mrb[0].mxu0 %v7681
    %v7751 = vpop.f32.mrb[0].mxu0
    %v7752 = vadd.f32 0.0, %v7751
    %v7753 = vpop.f32.mrb[0].mxu0
    %7754 = vdwg.mxu0
    %v7755 = vsel %vm414, %v7752, -inf
    %7756 = vmax.xlane.f32.xlu0 %v7755
    %v7757 = vpop.xlane.xlu0 %7756
    %v7758 = vsub.f32 %v7752, %v7757
    %v7759 = vmul.f32 %v7758, 1.442695
    %v7760 = vpow.pop %v7759
    %v7761 = vsel %vm414, %v7760, 0.0
    %7762 = vadd.xlane.f32.xlu0 %v7761
    %v7763 = vpop.xlane.xlu0 %7762
    %v7764 = vrcp.pop %v7763
    %v7765 = vmul.f32 %v7760, %v7764
    %7766 = vrot.lane.b32.xlu0 %v7176, 104
    %v7767 = vpop.permute.xlu0 %7766
    %v7770 = vsel %vm414, %v7765, 0
    %7772 = vmatprep.subr.mxu0 0.0
    %7773 = vmatpush1.msra.mxu0 %v7767
    %7774 = vmatprep.subr.mxu0 0.0
    %7775 = vmatpush1.msra.mxu0 0.0
    %7776 = vmatprep.subr.mxu0 0.0
    %7777 = vmatpush1.msra.mxu0 0.0
    %7778 = vmatprep.subr.mxu0 0.0
    %7779 = vmatpush1.msra.mxu0 0.0
    %7780 = vmatprep.subr.mxu0 0.0
    %7781 = vmatpush1.msra.mxu0 0.0
    %7782 = vmatprep.subr.mxu0 0.0
    %7783 = vmatpush1.msra.mxu0 0.0
    %7784 = vmatprep.subr.mxu0 0.0
    %7785 = vmatpush1.msra.mxu0 0.0
    %7786 = vmatprep.subr.mxu0 0.0
    %7787 = vmatpush1.msra.mxu0 0.0
    %7788 = vmatprep.subr.mxu0 0.0
    %7789 = vmatpush1.msra.mxu0 0.0
    %7790 = vmatprep.subr.mxu0 0.0
    %7791 = vmatpush1.msra.mxu0 0.0
    %7792 = vmatprep.subr.mxu0 0.0
    %7793 = vmatpush1.msra.mxu0 0.0
    %7794 = vmatprep.subr.mxu0 0.0
    %7795 = vmatpush1.msra.mxu0 0.0
    %7796 = vmatprep.subr.mxu0 0.0
    %7797 = vmatpush1.msra.mxu0 0.0
    %7798 = vmatprep.subr.mxu0 0.0
    %7799 = vmatpush1.msra.mxu0 0.0
    %7800 = vmatprep.subr.mxu0 0.0
    %7801 = vmatpush1.msra.mxu0 0.0
    %7802 = vmatprep.subr.mxu0 0.0
    %7803 = vmatpush1.msra.mxu0 0.0
    %7804 = vmatprep.subr.mxu0 0.0
    %7805 = vmatpush1.msra.mxu0 0.0
    %7806 = vmatprep.subr.mxu0 0.0
    %7807 = vmatpush1.msra.mxu0 0.0
    %7808 = vmatprep.subr.mxu0 0.0
    %7809 = vmatpush1.msra.mxu0 0.0
    %7810 = vmatprep.subr.mxu0 0.0
    %7811 = vmatpush1.msra.mxu0 0.0
    %7812 = vmatprep.subr.mxu0 0.0
    %7813 = vmatpush1.msra.mxu0 0.0
    %7814 = vmatprep.subr.mxu0 0.0
    %7815 = vmatpush1.msra.mxu0 0.0
    %7816 = vmatprep.subr.mxu0 0.0
    %7817 = vmatpush1.msra.mxu0 0.0
    %7818 = vmatprep.subr.mxu0 0.0
    %7819 = vmatpush1.msra.mxu0 0.0
    %7820 = vmatprep.subr.mxu0 0.0
    %7821 = vmatpush1.msra.mxu0 0.0
    %7822 = vmatprep.subr.mxu0 0.0
    %7823 = vmatpush1.msra.mxu0 0.0
    %7824 = vmatprep.subr.mxu0 0.0
    %7825 = vmatpush1.msra.mxu0 0.0
    %7826 = vmatprep.subr.mxu0 0.0
    %7827 = vmatpush1.msra.mxu0 0.0
    %7828 = vmatprep.subr.mxu0 0.0
    %7829 = vmatpush1.msra.mxu0 0.0
    %7830 = vmatprep.subr.mxu0 0.0
    %7831 = vmatpush1.msra.mxu0 0.0
    %7832 = vmatprep.subr.mxu0 0.0
    %7833 = vmatpush1.msra.mxu0 0.0
    %7834 = vmatprep.subr.mxu0 0.0
    %7835 = vmatpush1.msra.mxu0 0.0
    %7836 = vmatprep.mubr.f32.mxu0 0.0
    %7837 = vmatmul.mubr.f32.gmra.mrb[0].mxu0 %v7770
    %v7838 = vpop.f32.mrb[0].mxu0
    %v7839 = vadd.f32 0.0, %v7838
    %v7840 = vpop.f32.mrb[0].mxu0
    %7841 = vdwg.mxu0
    %7843 = vrot.lane.b32.xlu0 %v7509, 8
    %v7844 = vpop.permute.xlu0 %7843
    %7847 = vrot.lane.b32.xlu0 %v7674, 16
    %v7848 = vpop.permute.xlu0 %7847
    %7851 = vrot.lane.b32.xlu0 %v7839, 24
    %v7852 = vpop.permute.xlu0 %7851
    %v7854 = vsel %vm414, %v7343, %v7844
    %v7855 = vsel %vm1083, %v7854, %v7848
    %v7856 = vsel %vm1085, %v7855, %v7852
    %v7858 = vlaneseq
    %v7859 = vshrl.u32 %v7858, 7
    %v7860 = vsub.s32 0, %v7859
    %v7861 = vrot.slane %v7183, %v7860
    %v7864 = vsel %vm247, %v7856, 0
    %7866 = vmatprep.subr.mxu0 0.0
    %7867 = vmatpush1.msra.mxu0 %v7179
    %7868 = vmatprep.subr.mxu0 0.0
    %7869 = vmatpush1.msra.mxu0 %v7180
    %7870 = vmatprep.subr.mxu0 0.0
    %7871 = vmatpush1.msra.mxu0 %v7181
    %7872 = vmatprep.subr.mxu0 0.0
    %7873 = vmatpush1.msra.mxu0 %v7182
    %7874 = vmatprep.subr.mxu0 0.0
    %7875 = vmatpush1.msra.mxu0 0.0
    %7876 = vmatprep.subr.mxu0 0.0
    %7877 = vmatpush1.msra.mxu0 0.0
    %7878 = vmatprep.subr.mxu0 0.0
    %7879 = vmatpush1.msra.mxu0 0.0
    %7880 = vmatprep.subr.mxu0 0.0
    %7881 = vmatpush1.msra.mxu0 0.0
    %7882 = vmatprep.subr.mxu0 0.0
    %7883 = vmatpush1.msra.mxu0 0.0
    %7884 = vmatprep.subr.mxu0 0.0
    %7885 = vmatpush1.msra.mxu0 0.0
    %7886 = vmatprep.subr.mxu0 0.0
    %7887 = vmatpush1.msra.mxu0 0.0
    %7888 = vmatprep.subr.mxu0 0.0
    %7889 = vmatpush1.msra.mxu0 0.0
    %7890 = vmatprep.subr.mxu0 0.0
    %7891 = vmatpush1.msra.mxu0 0.0
    %7892 = vmatprep.subr.mxu0 0.0
    %7893 = vmatpush1.msra.mxu0 0.0
    %7894 = vmatprep.subr.mxu0 0.0
    %7895 = vmatpush1.msra.mxu0 0.0
    %7896 = vmatprep.subr.mxu0 0.0
    %7897 = vmatpush1.msra.mxu0 0.0
    %7898 = vmatprep.subr.mxu0 0.0
    %7899 = vmatpush1.msra.mxu0 0.0
    %7900 = vmatprep.subr.mxu0 0.0
    %7901 = vmatpush1.msra.mxu0 0.0
    %7902 = vmatprep.subr.mxu0 0.0
    %7903 = vmatpush1.msra.mxu0 0.0
    %7904 = vmatprep.subr.mxu0 0.0
    %7905 = vmatpush1.msra.mxu0 0.0
    %7906 = vmatprep.subr.mxu0 0.0
    %7907 = vmatpush1.msra.mxu0 0.0
    %7908 = vmatprep.subr.mxu0 0.0
    %7909 = vmatpush1.msra.mxu0 0.0
    %7910 = vmatprep.subr.mxu0 0.0
    %7911 = vmatpush1.msra.mxu0 0.0
    %7912 = vmatprep.subr.mxu0 0.0
    %7913 = vmatpush1.msra.mxu0 0.0
    %7914 = vmatprep.subr.mxu0 0.0
    %7915 = vmatpush1.msra.mxu0 0.0
    %7916 = vmatprep.subr.mxu0 0.0
    %7917 = vmatpush1.msra.mxu0 0.0
    %7918 = vmatprep.subr.mxu0 0.0
    %7919 = vmatpush1.msra.mxu0 0.0
    %7920 = vmatprep.subr.mxu0 0.0
    %7921 = vmatpush1.msra.mxu0 0.0
    %7922 = vmatprep.subr.mxu0 0.0
    %7923 = vmatpush1.msra.mxu0 0.0
    %7924 = vmatprep.subr.mxu0 0.0
    %7925 = vmatpush1.msra.mxu0 0.0
    %7926 = vmatprep.subr.mxu0 0.0
    %7927 = vmatpush1.msra.mxu0 0.0
    %7928 = vmatprep.subr.mxu0 0.0
    %7929 = vmatpush1.msra.mxu0 0.0
    %7930 = vmatprep.mubr.f32.mxu0 0.0
    %7931 = vmatmul.mubr.f32.gmra.mrb[0].mxu0 %v7864
    %v7932 = vpop.f32.mrb[0].mxu0
    %v7933 = vadd.f32 %v7861, %v7932
    %v7934 = vpop.f32.mrb[0].mxu0
    %7935 = vdwg.mxu0
    %v7936 = vadd.f32 %v7002, %v7933
    %v7937 = vsel %vm247, %v7936, 0.0
    %7938 = vadd.xlane.f32.xlu0 %v7937
    %v7939 = vpop.xlane.xlu0 %7938
    %v7940 = vmul.f32 %v7939, %v1170
    %v7941 = vsub.f32 %v7936, %v7940
    %v7942 = vmul.f32 %v7941, %v7941
    %v7943 = vsel %vm247, %v7942, 0.0
    %7944 = vadd.xlane.f32.xlu0 %v7943
    %v7945 = vpop.xlane.xlu0 %7944
    %v7946 = vmul.f32 %v7945, %v1170
    %v7947 = vadd.f32 %v7946, 1e-05
    %v7948 = vrsqrt.pop %v7947
    %v7949 = vmul.f32 %v7941, %v7948
    %v7951 = vlaneseq
    %v7952 = vshrl.u32 %v7951, 7
    %v7953 = vsub.s32 0, %v7952
    %v7954 = vrot.slane %v7003, %v7953
    %v7956 = vmul.f32 %v7949, %v7954
    %v7958 = vlaneseq
    %v7959 = vshrl.u32 %v7958, 7
    %v7960 = vsub.s32 0, %v7959
    %v7961 = vrot.slane %v7006, %v7960
    %v7963 = vadd.f32 %v7956, %v7961
    %v7964 = vadd.f32 %v7963, %v4754
    %v7965 = vld [vmem:[%s3445] sm:$0xff]
    %v7966 = vld [vmem:[%s3445 + $0x8] sm:$0xff]
    %v7967 = vld [vmem:[%s3445 + $0x10] sm:$0xff]
    %v7968 = vld [vmem:[%s3445 + $0x18] sm:$0xff]
    %v7969 = vld [vmem:[%s3450] sm:$0x1]
    %v7971 = vlaneseq
    %v7972 = vshrl.u32 %v7971, 7
    %v7973 = vsub.s32 0, %v7972
    %v7974 = vrot.slane %v7969, %v7973
    %v7977 = vsel %vm247, %v7964, 0
    %7979 = vmatprep.subr.mxu0 0.0
    %7980 = vmatpush1.msra.mxu0 %v7965
    %7981 = vmatprep.subr.mxu0 0.0
    %7982 = vmatpush1.msra.mxu0 %v7966
    %7983 = vmatprep.subr.mxu0 0.0
    %7984 = vmatpush1.msra.mxu0 %v7967
    %7985 = vmatprep.subr.mxu0 0.0
    %7986 = vmatpush1.msra.mxu0 %v7968
    %7987 = vmatprep.subr.mxu0 0.0
    %7988 = vmatpush1.msra.mxu0 0.0
    %7989 = vmatprep.subr.mxu0 0.0
    %7990 = vmatpush1.msra.mxu0 0.0
    %7991 = vmatprep.subr.mxu0 0.0
    %7992 = vmatpush1.msra.mxu0 0.0
    %7993 = vmatprep.subr.mxu0 0.0
    %7994 = vmatpush1.msra.mxu0 0.0
    %7995 = vmatprep.subr.mxu0 0.0
    %7996 = vmatpush1.msra.mxu0 0.0
    %7997 = vmatprep.subr.mxu0 0.0
    %7998 = vmatpush1.msra.mxu0 0.0
    %7999 = vmatprep.subr.mxu0 0.0
    %8000 = vmatpush1.msra.mxu0 0.0
    %8001 = vmatprep.subr.mxu0 0.0
    %8002 = vmatpush1.msra.mxu0 0.0
    %8003 = vmatprep.subr.mxu0 0.0
    %8004 = vmatpush1.msra.mxu0 0.0
    %8005 = vmatprep.subr.mxu0 0.0
    %8006 = vmatpush1.msra.mxu0 0.0
    %8007 = vmatprep.subr.mxu0 0.0
    %8008 = vmatpush1.msra.mxu0 0.0
    %8009 = vmatprep.subr.mxu0 0.0
    %8010 = vmatpush1.msra.mxu0 0.0
    %8011 = vmatprep.subr.mxu0 0.0
    %8012 = vmatpush1.msra.mxu0 0.0
    %8013 = vmatprep.subr.mxu0 0.0
    %8014 = vmatpush1.msra.mxu0 0.0
    %8015 = vmatprep.subr.mxu0 0.0
    %8016 = vmatpush1.msra.mxu0 0.0
    %8017 = vmatprep.subr.mxu0 0.0
    %8018 = vmatpush1.msra.mxu0 0.0
    %8019 = vmatprep.subr.mxu0 0.0
    %8020 = vmatpush1.msra.mxu0 0.0
    %8021 = vmatprep.subr.mxu0 0.0
    %8022 = vmatpush1.msra.mxu0 0.0
    %8023 = vmatprep.subr.mxu0 0.0
    %8024 = vmatpush1.msra.mxu0 0.0
    %8025 = vmatprep.subr.mxu0 0.0
    %8026 = vmatpush1.msra.mxu0 0.0
    %8027 = vmatprep.subr.mxu0 0.0
    %8028 = vmatpush1.msra.mxu0 0.0
    %8029 = vmatprep.subr.mxu0 0.0
    %8030 = vmatpush1.msra.mxu0 0.0
    %8031 = vmatprep.subr.mxu0 0.0
    %8032 = vmatpush1.msra.mxu0 0.0
    %8033 = vmatprep.subr.mxu0 0.0
    %8034 = vmatpush1.msra.mxu0 0.0
    %8035 = vmatprep.subr.mxu0 0.0
    %8036 = vmatpush1.msra.mxu0 0.0
    %8037 = vmatprep.subr.mxu0 0.0
    %8038 = vmatpush1.msra.mxu0 0.0
    %8039 = vmatprep.subr.mxu0 0.0
    %8040 = vmatpush1.msra.mxu0 0.0
    %8041 = vmatprep.subr.mxu0 0.0
    %8042 = vmatpush1.msra.mxu0 0.0
    %8043 = vmatprep.mubr.f32.mxu0 0.0
    %8044 = vmatmul.mubr.f32.gmra.mrb[0].mxu0 %v7977
    %v8045 = vpop.f32.mrb[0].mxu0
    %v8046 = vadd.f32 %v7974, %v8045
    %v8047 = vpop.f32.mrb[0].mxu0
    %8048 = vdwg.mxu0
    %v8049 = vmul.f32 %v8046, 0.35355338
    %v8050 = vld [vmem:[%s3532] sm:$0xff]
    %v8051 = vld [vmem:[%s3532 + $0x8] sm:$0xff]
    %v8052 = vld [vmem:[%s3532 + $0x10] sm:$0xff]
    %v8053 = vld [vmem:[%s3532 + $0x18] sm:$0xff]
    %v8054 = vld [vmem:[%s3537] sm:$0x1]
    %v8056 = vlaneseq
    %v8057 = vshrl.u32 %v8056, 7
    %v8058 = vsub.s32 0, %v8057
    %v8059 = vrot.slane %v8054, %v8058
    %8061 = vmatprep.subr.mxu0 0.0
    %8062 = vmatpush1.msra.mxu0 %v8050
    %8063 = vmatprep.subr.mxu0 0.0
    %8064 = vmatpush1.msra.mxu0 %v8051
    %8065 = vmatprep.subr.mxu0 0.0
    %8066 = vmatpush1.msra.mxu0 %v8052
    %8067 = vmatprep.subr.mxu0 0.0
    %8068 = vmatpush1.msra.mxu0 %v8053
    %8069 = vmatprep.subr.mxu0 0.0
    %8070 = vmatpush1.msra.mxu0 0.0
    %8071 = vmatprep.subr.mxu0 0.0
    %8072 = vmatpush1.msra.mxu0 0.0
    %8073 = vmatprep.subr.mxu0 0.0
    %8074 = vmatpush1.msra.mxu0 0.0
    %8075 = vmatprep.subr.mxu0 0.0
    %8076 = vmatpush1.msra.mxu0 0.0
    %8077 = vmatprep.subr.mxu0 0.0
    %8078 = vmatpush1.msra.mxu0 0.0
    %8079 = vmatprep.subr.mxu0 0.0
    %8080 = vmatpush1.msra.mxu0 0.0
    %8081 = vmatprep.subr.mxu0 0.0
    %8082 = vmatpush1.msra.mxu0 0.0
    %8083 = vmatprep.subr.mxu0 0.0
    %8084 = vmatpush1.msra.mxu0 0.0
    %8085 = vmatprep.subr.mxu0 0.0
    %8086 = vmatpush1.msra.mxu0 0.0
    %8087 = vmatprep.subr.mxu0 0.0
    %8088 = vmatpush1.msra.mxu0 0.0
    %8089 = vmatprep.subr.mxu0 0.0
    %8090 = vmatpush1.msra.mxu0 0.0
    %8091 = vmatprep.subr.mxu0 0.0
    %8092 = vmatpush1.msra.mxu0 0.0
    %8093 = vmatprep.subr.mxu0 0.0
    %8094 = vmatpush1.msra.mxu0 0.0
    %8095 = vmatprep.subr.mxu0 0.0
    %8096 = vmatpush1.msra.mxu0 0.0
    %8097 = vmatprep.subr.mxu0 0.0
    %8098 = vmatpush1.msra.mxu0 0.0
    %8099 = vmatprep.subr.mxu0 0.0
    %8100 = vmatpush1.msra.mxu0 0.0
    %8101 = vmatprep.subr.mxu0 0.0
    %8102 = vmatpush1.msra.mxu0 0.0
    %8103 = vmatprep.subr.mxu0 0.0
    %8104 = vmatpush1.msra.mxu0 0.0
    %8105 = vmatprep.subr.mxu0 0.0
    %8106 = vmatpush1.msra.mxu0 0.0
    %8107 = vmatprep.subr.mxu0 0.0
    %8108 = vmatpush1.msra.mxu0 0.0
    %8109 = vmatprep.subr.mxu0 0.0
    %8110 = vmatpush1.msra.mxu0 0.0
    %8111 = vmatprep.subr.mxu0 0.0
    %8112 = vmatpush1.msra.mxu0 0.0
    %8113 = vmatprep.subr.mxu0 0.0
    %8114 = vmatpush1.msra.mxu0 0.0
    %8115 = vmatprep.subr.mxu0 0.0
    %8116 = vmatpush1.msra.mxu0 0.0
    %8117 = vmatprep.subr.mxu0 0.0
    %8118 = vmatpush1.msra.mxu0 0.0
    %8119 = vmatprep.subr.mxu0 0.0
    %8120 = vmatpush1.msra.mxu0 0.0
    %8121 = vmatprep.subr.mxu0 0.0
    %8122 = vmatpush1.msra.mxu0 0.0
    %8123 = vmatprep.subr.mxu0 0.0
    %8124 = vmatpush1.msra.mxu0 0.0
    %8125 = vmatprep.mubr.f32.mxu0 0.0
    %8126 = vmatmul.mubr.f32.gmra.mrb[0].mxu0 %v5822
    %v8127 = vpop.f32.mrb[0].mxu0
    %v8128 = vadd.f32 %v8059, %v8127
    %v8129 = vpop.f32.mrb[0].mxu0
    %8130 = vmatprep.mubr.f32.mxu0 0.0
    %8131 = vmatmul.mubr.f32.gmra.mrb[0].mxu0 %v5825
    %v8132 = vpop.f32.mrb[0].mxu0
    %v8133 = vadd.f32 %v8059, %v8132
    %v8134 = vpop.f32.mrb[0].mxu0
    %8135 = vdwg.mxu0
    %v8136 = vld [vmem:[%s3620] sm:$0xff]
    %v8137 = vld [vmem:[%s3620 + $0x8] sm:$0xff]
    %v8138 = vld [vmem:[%s3620 + $0x10] sm:$0xff]
    %v8139 = vld [vmem:[%s3620 + $0x18] sm:$0xff]
    %v8140 = vld [vmem:[%s3625] sm:$0x1]
    %v8142 = vlaneseq
    %v8143 = vshrl.u32 %v8142, 7
    %v8144 = vsub.s32 0, %v8143
    %v8145 = vrot.slane %v8140, %v8144
    %8147 = vmatprep.subr.mxu0 0.0
    %8148 = vmatpush1.msra.mxu0 %v8136
    %8149 = vmatprep.subr.mxu0 0.0
    %8150 = vmatpush1.msra.mxu0 %v8137
    %8151 = vmatprep.subr.mxu0 0.0
    %8152 = vmatpush1.msra.mxu0 %v8138
    %8153 = vmatprep.subr.mxu0 0.0
    %8154 = vmatpush1.msra.mxu0 %v8139
    %8155 = vmatprep.subr.mxu0 0.0
    %8156 = vmatpush1.msra.mxu0 0.0
    %8157 = vmatprep.subr.mxu0 0.0
    %8158 = vmatpush1.msra.mxu0 0.0
    %8159 = vmatprep.subr.mxu0 0.0
    %8160 = vmatpush1.msra.mxu0 0.0
    %8161 = vmatprep.subr.mxu0 0.0
    %8162 = vmatpush1.msra.mxu0 0.0
    %8163 = vmatprep.subr.mxu0 0.0
    %8164 = vmatpush1.msra.mxu0 0.0
    %8165 = vmatprep.subr.mxu0 0.0
    %8166 = vmatpush1.msra.mxu0 0.0
    %8167 = vmatprep.subr.mxu0 0.0
    %8168 = vmatpush1.msra.mxu0 0.0
    %8169 = vmatprep.subr.mxu0 0.0
    %8170 = vmatpush1.msra.mxu0 0.0
    %8171 = vmatprep.subr.mxu0 0.0
    %8172 = vmatpush1.msra.mxu0 0.0
    %8173 = vmatprep.subr.mxu0 0.0
    %8174 = vmatpush1.msra.mxu0 0.0
    %8175 = vmatprep.subr.mxu0 0.0
    %8176 = vmatpush1.msra.mxu0 0.0
    %8177 = vmatprep.subr.mxu0 0.0
    %8178 = vmatpush1.msra.mxu0 0.0
    %8179 = vmatprep.subr.mxu0 0.0
    %8180 = vmatpush1.msra.mxu0 0.0
    %8181 = vmatprep.subr.mxu0 0.0
    %8182 = vmatpush1.msra.mxu0 0.0
    %8183 = vmatprep.subr.mxu0 0.0
    %8184 = vmatpush1.msra.mxu0 0.0
    %8185 = vmatprep.subr.mxu0 0.0
    %8186 = vmatpush1.msra.mxu0 0.0
    %8187 = vmatprep.subr.mxu0 0.0
    %8188 = vmatpush1.msra.mxu0 0.0
    %8189 = vmatprep.subr.mxu0 0.0
    %8190 = vmatpush1.msra.mxu0 0.0
    %8191 = vmatprep.subr.mxu0 0.0
    %8192 = vmatpush1.msra.mxu0 0.0
    %8193 = vmatprep.subr.mxu0 0.0
    %8194 = vmatpush1.msra.mxu0 0.0
    %8195 = vmatprep.subr.mxu0 0.0
    %8196 = vmatpush1.msra.mxu0 0.0
    %8197 = vmatprep.subr.mxu0 0.0
    %8198 = vmatpush1.msra.mxu0 0.0
    %8199 = vmatprep.subr.mxu0 0.0
    %8200 = vmatpush1.msra.mxu0 0.0
    %8201 = vmatprep.subr.mxu0 0.0
    %8202 = vmatpush1.msra.mxu0 0.0
    %8203 = vmatprep.subr.mxu0 0.0
    %8204 = vmatpush1.msra.mxu0 0.0
    %8205 = vmatprep.subr.mxu0 0.0
    %8206 = vmatpush1.msra.mxu0 0.0
    %8207 = vmatprep.subr.mxu0 0.0
    %8208 = vmatpush1.msra.mxu0 0.0
    %8209 = vmatprep.subr.mxu0 0.0
    %8210 = vmatpush1.msra.mxu0 0.0
    %8211 = vmatprep.mubr.f32.mxu0 0.0
    %8212 = vmatmul.mubr.f32.gmra.mrb[0].mxu0 %v5914
    %v8213 = vpop.f32.mrb[0].mxu0
    %v8214 = vadd.f32 %v8145, %v8213
    %v8215 = vpop.f32.mrb[0].mxu0
    %8216 = vmatprep.mubr.f32.mxu0 0.0
    %8217 = vmatmul.mubr.f32.gmra.mrb[0].mxu0 %v5917
    %v8218 = vpop.f32.mrb[0].mxu0
    %v8219 = vadd.f32 %v8145, %v8218
    %v8220 = vpop.f32.mrb[0].mxu0
    %8221 = vdwg.mxu0
    %v8222 = vld [vmem:[%s3708] sm:$0xff]
    %v8223 = vld [vmem:[%s3708 + $0x8] sm:$0xff]
    %v8224 = vld [vmem:[%s3708 + $0x10] sm:$0xff]
    %v8225 = vld [vmem:[%s3708 + $0x18] sm:$0xff]
    %v8226 = vld [vmem:[%s3713] sm:$0x1]
    %v8228 = vsel %vm414, %v8049, 0
    %v8231 = vsel %vm414, %v8128, 0
    %v8234 = vsel %vm414, %v8133, 0
    %8236 = vmatprep.subr.mxu0 0.0
    %8237 = vmatpush1.xpose.msra.mxu0 %v8231
    %8238 = vmatprep.subr.mxu0 0.0
    %8239 = vmatpush1.xpose.msra.mxu0 %v8234
    %8240 = vmatprep.subr.mxu0 0.0
    %8241 = vmatpush1.xpose.msra.mxu0 0.0
    %8242 = vmatprep.subr.mxu0 0.0
    %8243 = vmatpush1.xpose.msra.mxu0 0.0
    %8244 = vmatprep.subr.mxu0 0.0
    %8245 = vmatpush1.xpose.msra.mxu0 0.0
    %8246 = vmatprep.subr.mxu0 0.0
    %8247 = vmatpush1.xpose.msra.mxu0 0.0
    %8248 = vmatprep.subr.mxu0 0.0
    %8249 = vmatpush1.xpose.msra.mxu0 0.0
    %8250 = vmatprep.subr.mxu0 0.0
    %8251 = vmatpush1.xpose.msra.mxu0 0.0
    %8252 = vmatprep.subr.mxu0 0.0
    %8253 = vmatpush1.xpose.msra.mxu0 0.0
    %8254 = vmatprep.subr.mxu0 0.0
    %8255 = vmatpush1.xpose.msra.mxu0 0.0
    %8256 = vmatprep.subr.mxu0 0.0
    %8257 = vmatpush1.xpose.msra.mxu0 0.0
    %8258 = vmatprep.subr.mxu0 0.0
    %8259 = vmatpush1.xpose.msra.mxu0 0.0
    %8260 = vmatprep.subr.mxu0 0.0
    %8261 = vmatpush1.xpose.msra.mxu0 0.0
    %8262 = vmatprep.subr.mxu0 0.0
    %8263 = vmatpush1.xpose.msra.mxu0 0.0
    %8264 = vmatprep.subr.mxu0 0.0
    %8265 = vmatpush1.xpose.msra.mxu0 0.0
    %8266 = vmatprep.subr.mxu0 0.0
    %8267 = vmatpush1.xpose.msra.mxu0 0.0
    %8268 = vmatprep.subr.mxu0 0.0
    %8269 = vmatpush1.xpose.msra.mxu0 0.0
    %8270 = vmatprep.subr.mxu0 0.0
    %8271 = vmatpush1.xpose.msra.mxu0 0.0
    %8272 = vmatprep.subr.mxu0 0.0
    %8273 = vmatpush1.xpose.msra.mxu0 0.0
    %8274 = vmatprep.subr.mxu0 0.0
    %8275 = vmatpush1.xpose.msra.mxu0 0.0
    %8276 = vmatprep.subr.mxu0 0.0
    %8277 = vmatpush1.xpose.msra.mxu0 0.0
    %8278 = vmatprep.subr.mxu0 0.0
    %8279 = vmatpush1.xpose.msra.mxu0 0.0
    %8280 = vmatprep.subr.mxu0 0.0
    %8281 = vmatpush1.xpose.msra.mxu0 0.0
    %8282 = vmatprep.subr.mxu0 0.0
    %8283 = vmatpush1.xpose.msra.mxu0 0.0
    %8284 = vmatprep.subr.mxu0 0.0
    %8285 = vmatpush1.xpose.msra.mxu0 0.0
    %8286 = vmatprep.subr.mxu0 0.0
    %8287 = vmatpush1.xpose.msra.mxu0 0.0
    %8288 = vmatprep.subr.mxu0 0.0
    %8289 = vmatpush1.xpose.msra.mxu0 0.0
    %8290 = vmatprep.subr.mxu0 0.0
    %8291 = vmatpush1.xpose.msra.mxu0 0.0
    %8292 = vmatprep.subr.mxu0 0.0
    %8293 = vmatpush1.xpose.msra.mxu0 0.0
    %8294 = vmatprep.subr.mxu0 0.0
    %8295 = vmatpush1.xpose.msra.mxu0 0.0
    %8296 = vmatprep.subr.mxu0 0.0
    %8297 = vmatpush1.xpose.msra.mxu0 0.0
    %8298 = vmatprep.subr.mxu0 0.0
    %8299 = vmatpush1.xpose.msra.mxu0 0.0
    %8300 = vmatprep.mubr.f32.mxu0 0.0
    %8301 = vmatmul.mubr.f32.gmra.mrb[0].mxu0 %v8228
    %v8302 = vpop.f32.mrb[0].mxu0
    %v8303 = vadd.f32 0.0, %v8302
    %v8304 = vpop.f32.mrb[0].mxu0
    %8305 = vdwg.mxu0
    %v8306 = vsel %vm1083, %v8303, -inf
    %8307 = vmax.xlane.f32.xlu0 %v8306
    %v8308 = vpop.xlane.xlu0 %8307
    %v8309 = vsub.f32 %v8303, %v8308
    %v8310 = vmul.f32 %v8309, 1.442695
    %v8311 = vpow.pop %v8310
    %v8312 = vsel %vm1083, %v8311, 0.0
    %8313 = vadd.xlane.f32.xlu0 %v8312
    %v8314 = vpop.xlane.xlu0 %8313
    %v8315 = vrcp.pop %v8314
    %v8316 = vmul.f32 %v8311, %v8315
    %v8318 = vsel %vm1083, %v8316, 0
    %8320 = vmatprep.subr.mxu0 0.0
    %8321 = vmatpush1.msra.mxu0 %v8214
    %8322 = vmatprep.subr.mxu0 0.0
    %8323 = vmatpush1.msra.mxu0 %v8219
    %8324 = vmatprep.subr.mxu0 0.0
    %8325 = vmatpush1.msra.mxu0 0.0
    %8326 = vmatprep.subr.mxu0 0.0
    %8327 = vmatpush1.msra.mxu0 0.0
    %8328 = vmatprep.subr.mxu0 0.0
    %8329 = vmatpush1.msra.mxu0 0.0
    %8330 = vmatprep.subr.mxu0 0.0
    %8331 = vmatpush1.msra.mxu0 0.0
    %8332 = vmatprep.subr.mxu0 0.0
    %8333 = vmatpush1.msra.mxu0 0.0
    %8334 = vmatprep.subr.mxu0 0.0
    %8335 = vmatpush1.msra.mxu0 0.0
    %8336 = vmatprep.subr.mxu0 0.0
    %8337 = vmatpush1.msra.mxu0 0.0
    %8338 = vmatprep.subr.mxu0 0.0
    %8339 = vmatpush1.msra.mxu0 0.0
    %8340 = vmatprep.subr.mxu0 0.0
    %8341 = vmatpush1.msra.mxu0 0.0
    %8342 = vmatprep.subr.mxu0 0.0
    %8343 = vmatpush1.msra.mxu0 0.0
    %8344 = vmatprep.subr.mxu0 0.0
    %8345 = vmatpush1.msra.mxu0 0.0
    %8346 = vmatprep.subr.mxu0 0.0
    %8347 = vmatpush1.msra.mxu0 0.0
    %8348 = vmatprep.subr.mxu0 0.0
    %8349 = vmatpush1.msra.mxu0 0.0
    %8350 = vmatprep.subr.mxu0 0.0
    %8351 = vmatpush1.msra.mxu0 0.0
    %8352 = vmatprep.subr.mxu0 0.0
    %8353 = vmatpush1.msra.mxu0 0.0
    %8354 = vmatprep.subr.mxu0 0.0
    %8355 = vmatpush1.msra.mxu0 0.0
    %8356 = vmatprep.subr.mxu0 0.0
    %8357 = vmatpush1.msra.mxu0 0.0
    %8358 = vmatprep.subr.mxu0 0.0
    %8359 = vmatpush1.msra.mxu0 0.0
    %8360 = vmatprep.subr.mxu0 0.0
    %8361 = vmatpush1.msra.mxu0 0.0
    %8362 = vmatprep.subr.mxu0 0.0
    %8363 = vmatpush1.msra.mxu0 0.0
    %8364 = vmatprep.subr.mxu0 0.0
    %8365 = vmatpush1.msra.mxu0 0.0
    %8366 = vmatprep.subr.mxu0 0.0
    %8367 = vmatpush1.msra.mxu0 0.0
    %8368 = vmatprep.subr.mxu0 0.0
    %8369 = vmatpush1.msra.mxu0 0.0
    %8370 = vmatprep.subr.mxu0 0.0
    %8371 = vmatpush1.msra.mxu0 0.0
    %8372 = vmatprep.subr.mxu0 0.0
    %8373 = vmatpush1.msra.mxu0 0.0
    %8374 = vmatprep.subr.mxu0 0.0
    %8375 = vmatpush1.msra.mxu0 0.0
    %8376 = vmatprep.subr.mxu0 0.0
    %8377 = vmatpush1.msra.mxu0 0.0
    %8378 = vmatprep.subr.mxu0 0.0
    %8379 = vmatpush1.msra.mxu0 0.0
    %8380 = vmatprep.subr.mxu0 0.0
    %8381 = vmatpush1.msra.mxu0 0.0
    %8382 = vmatprep.subr.mxu0 0.0
    %8383 = vmatpush1.msra.mxu0 0.0
    %8384 = vmatprep.mubr.f32.mxu0 0.0
    %8385 = vmatmul.mubr.f32.gmra.mrb[0].mxu0 %v8318
    %v8386 = vpop.f32.mrb[0].mxu0
    %v8387 = vadd.f32 0.0, %v8386
    %v8388 = vpop.f32.mrb[0].mxu0
    %8389 = vdwg.mxu0
    %8390 = vrot.lane.b32.xlu0 %v8049, 120
    %v8391 = vpop.permute.xlu0 %8390
    %8392 = vrot.lane.b32.xlu0 %v8128, 120
    %v8393 = vpop.permute.xlu0 %8392
    %8394 = vrot.lane.b32.xlu0 %v8133, 120
    %v8395 = vpop.permute.xlu0 %8394
    %v8396 = vsel %vm414, %v8391, 0
    %v8398 = vsel %vm414, %v8393, 0
    %v8400 = vsel %vm414, %v8395, 0
    %8402 = vmatprep.subr.mxu0 0.0
    %8403 = vmatpush1.xpose.msra.mxu0 %v8398
    %8404 = vmatprep.subr.mxu0 0.0
    %8405 = vmatpush1.xpose.msra.mxu0 %v8400
    %8406 = vmatprep.subr.mxu0 0.0
    %8407 = vmatpush1.xpose.msra.mxu0 0.0
    %8408 = vmatprep.subr.mxu0 0.0
    %8409 = vmatpush1.xpose.msra.mxu0 0.0
    %8410 = vmatprep.subr.mxu0 0.0
    %8411 = vmatpush1.xpose.msra.mxu0 0.0
    %8412 = vmatprep.subr.mxu0 0.0
    %8413 = vmatpush1.xpose.msra.mxu0 0.0
    %8414 = vmatprep.subr.mxu0 0.0
    %8415 = vmatpush1.xpose.msra.mxu0 0.0
    %8416 = vmatprep.subr.mxu0 0.0
    %8417 = vmatpush1.xpose.msra.mxu0 0.0
    %8418 = vmatprep.subr.mxu0 0.0
    %8419 = vmatpush1.xpose.msra.mxu0 0.0
    %8420 = vmatprep.subr.mxu0 0.0
    %8421 = vmatpush1.xpose.msra.mxu0 0.0
    %8422 = vmatprep.subr.mxu0 0.0
    %8423 = vmatpush1.xpose.msra.mxu0 0.0
    %8424 = vmatprep.subr.mxu0 0.0
    %8425 = vmatpush1.xpose.msra.mxu0 0.0
    %8426 = vmatprep.subr.mxu0 0.0
    %8427 = vmatpush1.xpose.msra.mxu0 0.0
    %8428 = vmatprep.subr.mxu0 0.0
    %8429 = vmatpush1.xpose.msra.mxu0 0.0
    %8430 = vmatprep.subr.mxu0 0.0
    %8431 = vmatpush1.xpose.msra.mxu0 0.0
    %8432 = vmatprep.subr.mxu0 0.0
    %8433 = vmatpush1.xpose.msra.mxu0 0.0
    %8434 = vmatprep.subr.mxu0 0.0
    %8435 = vmatpush1.xpose.msra.mxu0 0.0
    %8436 = vmatprep.subr.mxu0 0.0
    %8437 = vmatpush1.xpose.msra.mxu0 0.0
    %8438 = vmatprep.subr.mxu0 0.0
    %8439 = vmatpush1.xpose.msra.mxu0 0.0
    %8440 = vmatprep.subr.mxu0 0.0
    %8441 = vmatpush1.xpose.msra.mxu0 0.0
    %8442 = vmatprep.subr.mxu0 0.0
    %8443 = vmatpush1.xpose.msra.mxu0 0.0
    %8444 = vmatprep.subr.mxu0 0.0
    %8445 = vmatpush1.xpose.msra.mxu0 0.0
    %8446 = vmatprep.subr.mxu0 0.0
    %8447 = vmatpush1.xpose.msra.mxu0 0.0
    %8448 = vmatprep.subr.mxu0 0.0
    %8449 = vmatpush1.xpose.msra.mxu0 0.0
    %8450 = vmatprep.subr.mxu0 0.0
    %8451 = vmatpush1.xpose.msra.mxu0 0.0
    %8452 = vmatprep.subr.mxu0 0.0
    %8453 = vmatpush1.xpose.msra.mxu0 0.0
    %8454 = vmatprep.subr.mxu0 0.0
    %8455 = vmatpush1.xpose.msra.mxu0 0.0
    %8456 = vmatprep.subr.mxu0 0.0
    %8457 = vmatpush1.xpose.msra.mxu0 0.0
    %8458 = vmatprep.subr.mxu0 0.0
    %8459 = vmatpush1.xpose.msra.mxu0 0.0
    %8460 = vmatprep.subr.mxu0 0.0
    %8461 = vmatpush1.xpose.msra.mxu0 0.0
    %8462 = vmatprep.subr.mxu0 0.0
    %8463 = vmatpush1.xpose.msra.mxu0 0.0
    %8464 = vmatprep.subr.mxu0 0.0
    %8465 = vmatpush1.xpose.msra.mxu0 0.0
    %8466 = vmatprep.mubr.f32.mxu0 0.0
    %8467 = vmatmul.mubr.f32.gmra.mrb[0].mxu0 %v8396
    %v8468 = vpop.f32.mrb[0].mxu0
    %v8469 = vadd.f32 0.0, %v8468
    %v8470 = vpop.f32.mrb[0].mxu0
    %8471 = vdwg.mxu0
    %v8472 = vsel %vm1083, %v8469, -inf
    %8473 = vmax.xlane.f32.xlu0 %v8472
    %v8474 = vpop.xlane.xlu0 %8473
    %v8475 = vsub.f32 %v8469, %v8474
    %v8476 = vmul.f32 %v8475, 1.442695
    %v8477 = vpow.pop %v8476
    %v8478 = vsel %vm1083, %v8477, 0.0
    %8479 = vadd.xlane.f32.xlu0 %v8478
    %v8480 = vpop.xlane.xlu0 %8479
    %v8481 = vrcp.pop %v8480
    %v8482 = vmul.f32 %v8477, %v8481
    %8485 = vrot.lane.b32.xlu0 %v8214, 120
    %v8486 = vpop.permute.xlu0 %8485
    %8487 = vrot.lane.b32.xlu0 %v8219, 120
    %v8488 = vpop.permute.xlu0 %8487
    %v8492 = vsel %vm1083, %v8482, 0
    %8494 = vmatprep.subr.mxu0 0.0
    %8495 = vmatpush1.msra.mxu0 %v8486
    %8496 = vmatprep.subr.mxu0 0.0
    %8497 = vmatpush1.msra.mxu0 %v8488
    %8498 = vmatprep.subr.mxu0 0.0
    %8499 = vmatpush1.msra.mxu0 0.0
    %8500 = vmatprep.subr.mxu0 0.0
    %8501 = vmatpush1.msra.mxu0 0.0
    %8502 = vmatprep.subr.mxu0 0.0
    %8503 = vmatpush1.msra.mxu0 0.0
    %8504 = vmatprep.subr.mxu0 0.0
    %8505 = vmatpush1.msra.mxu0 0.0
    %8506 = vmatprep.subr.mxu0 0.0
    %8507 = vmatpush1.msra.mxu0 0.0
    %8508 = vmatprep.subr.mxu0 0.0
    %8509 = vmatpush1.msra.mxu0 0.0
    %8510 = vmatprep.subr.mxu0 0.0
    %8511 = vmatpush1.msra.mxu0 0.0
    %8512 = vmatprep.subr.mxu0 0.0
    %8513 = vmatpush1.msra.mxu0 0.0
    %8514 = vmatprep.subr.mxu0 0.0
    %8515 = vmatpush1.msra.mxu0 0.0
    %8516 = vmatprep.subr.mxu0 0.0
    %8517 = vmatpush1.msra.mxu0 0.0
    %8518 = vmatprep.subr.mxu0 0.0
    %8519 = vmatpush1.msra.mxu0 0.0
    %8520 = vmatprep.subr.mxu0 0.0
    %8521 = vmatpush1.msra.mxu0 0.0
    %8522 = vmatprep.subr.mxu0 0.0
    %8523 = vmatpush1.msra.mxu0 0.0
    %8524 = vmatprep.subr.mxu0 0.0
    %8525 = vmatpush1.msra.mxu0 0.0
    %8526 = vmatprep.subr.mxu0 0.0
    %8527 = vmatpush1.msra.mxu0 0.0
    %8528 = vmatprep.subr.mxu0 0.0
    %8529 = vmatpush1.msra.mxu0 0.0
    %8530 = vmatprep.subr.mxu0 0.0
    %8531 = vmatpush1.msra.mxu0 0.0
    %8532 = vmatprep.subr.mxu0 0.0
    %8533 = vmatpush1.msra.mxu0 0.0
    %8534 = vmatprep.subr.mxu0 0.0
    %8535 = vmatpush1.msra.mxu0 0.0
    %8536 = vmatprep.subr.mxu0 0.0
    %8537 = vmatpush1.msra.mxu0 0.0
    %8538 = vmatprep.subr.mxu0 0.0
    %8539 = vmatpush1.msra.mxu0 0.0
    %8540 = vmatprep.subr.mxu0 0.0
    %8541 = vmatpush1.msra.mxu0 0.0
    %8542 = vmatprep.subr.mxu0 0.0
    %8543 = vmatpush1.msra.mxu0 0.0
    %8544 = vmatprep.subr.mxu0 0.0
    %8545 = vmatpush1.msra.mxu0 0.0
    %8546 = vmatprep.subr.mxu0 0.0
    %8547 = vmatpush1.msra.mxu0 0.0
    %8548 = vmatprep.subr.mxu0 0.0
    %8549 = vmatpush1.msra.mxu0 0.0
    %8550 = vmatprep.subr.mxu0 0.0
    %8551 = vmatpush1.msra.mxu0 0.0
    %8552 = vmatprep.subr.mxu0 0.0
    %8553 = vmatpush1.msra.mxu0 0.0
    %8554 = vmatprep.subr.mxu0 0.0
    %8555 = vmatpush1.msra.mxu0 0.0
    %8556 = vmatprep.subr.mxu0 0.0
    %8557 = vmatpush1.msra.mxu0 0.0
    %8558 = vmatprep.mubr.f32.mxu0 0.0
    %8559 = vmatmul.mubr.f32.gmra.mrb[0].mxu0 %v8492
    %v8560 = vpop.f32.mrb[0].mxu0
    %v8561 = vadd.f32 0.0, %v8560
    %v8562 = vpop.f32.mrb[0].mxu0
    %8563 = vdwg.mxu0
    %8564 = vrot.lane.b32.xlu0 %v8049, 112
    %v8565 = vpop.permute.xlu0 %8564
    %8566 = vrot.lane.b32.xlu0 %v8128, 112
    %v8567 = vpop.permute.xlu0 %8566
    %8568 = vrot.lane.b32.xlu0 %v8133, 112
    %v8569 = vpop.permute.xlu0 %8568
    %v8570 = vsel %vm414, %v8565, 0
    %v8572 = vsel %vm414, %v8567, 0
    %v8574 = vsel %vm414, %v8569, 0
    %8576 = vmatprep.subr.mxu0 0.0
    %8577 = vmatpush1.xpose.msra.mxu0 %v8572
    %8578 = vmatprep.subr.mxu0 0.0
    %8579 = vmatpush1.xpose.msra.mxu0 %v8574
    %8580 = vmatprep.subr.mxu0 0.0
    %8581 = vmatpush1.xpose.msra.mxu0 0.0
    %8582 = vmatprep.subr.mxu0 0.0
    %8583 = vmatpush1.xpose.msra.mxu0 0.0
    %8584 = vmatprep.subr.mxu0 0.0
    %8585 = vmatpush1.xpose.msra.mxu0 0.0
    %8586 = vmatprep.subr.mxu0 0.0
    %8587 = vmatpush1.xpose.msra.mxu0 0.0
    %8588 = vmatprep.subr.mxu0 0.0
    %8589 = vmatpush1.xpose.msra.mxu0 0.0
    %8590 = vmatprep.subr.mxu0 0.0
    %8591 = vmatpush1.xpose.msra.mxu0 0.0
    %8592 = vmatprep.subr.mxu0 0.0
    %8593 = vmatpush1.xpose.msra.mxu0 0.0
    %8594 = vmatprep.subr.mxu0 0.0
    %8595 = vmatpush1.xpose.msra.mxu0 0.0
    %8596 = vmatprep.subr.mxu0 0.0
    %8597 = vmatpush1.xpose.msra.mxu0 0.0
    %8598 = vmatprep.subr.mxu0 0.0
    %8599 = vmatpush1.xpose.msra.mxu0 0.0
    %8600 = vmatprep.subr.mxu0 0.0
    %8601 = vmatpush1.xpose.msra.mxu0 0.0
    %8602 = vmatprep.subr.mxu0 0.0
    %8603 = vmatpush1.xpose.msra.mxu0 0.0
    %8604 = vmatprep.subr.mxu0 0.0
    %8605 = vmatpush1.xpose.msra.mxu0 0.0
    %8606 = vmatprep.subr.mxu0 0.0
    %8607 = vmatpush1.xpose.msra.mxu0 0.0
    %8608 = vmatprep.subr.mxu0 0.0
    %8609 = vmatpush1.xpose.msra.mxu0 0.0
    %8610 = vmatprep.subr.mxu0 0.0
    %8611 = vmatpush1.xpose.msra.mxu0 0.0
    %8612 = vmatprep.subr.mxu0 0.0
    %8613 = vmatpush1.xpose.msra.mxu0 0.0
    %8614 = vmatprep.subr.mxu0 0.0
    %8615 = vmatpush1.xpose.msra.mxu0 0.0
    %8616 = vmatprep.subr.mxu0 0.0
    %8617 = vmatpush1.xpose.msra.mxu0 0.0
    %8618 = vmatprep.subr.mxu0 0.0
    %8619 = vmatpush1.xpose.msra.mxu0 0.0
    %8620 = vmatprep.subr.mxu0 0.0
    %8621 = vmatpush1.xpose.msra.mxu0 0.0
    %8622 = vmatprep.subr.mxu0 0.0
    %8623 = vmatpush1.xpose.msra.mxu0 0.0
    %8624 = vmatprep.subr.mxu0 0.0
    %8625 = vmatpush1.xpose.msra.mxu0 0.0
    %8626 = vmatprep.subr.mxu0 0.0
    %8627 = vmatpush1.xpose.msra.mxu0 0.0
    %8628 = vmatprep.subr.mxu0 0.0
    %8629 = vmatpush1.xpose.msra.mxu0 0.0
    %8630 = vmatprep.subr.mxu0 0.0
    %8631 = vmatpush1.xpose.msra.mxu0 0.0
    %8632 = vmatprep.subr.mxu0 0.0
    %8633 = vmatpush1.xpose.msra.mxu0 0.0
    %8634 = vmatprep.subr.mxu0 0.0
    %8635 = vmatpush1.xpose.msra.mxu0 0.0
    %8636 = vmatprep.subr.mxu0 0.0
    %8637 = vmatpush1.xpose.msra.mxu0 0.0
    %8638 = vmatprep.subr.mxu0 0.0
    %8639 = vmatpush1.xpose.msra.mxu0 0.0
    %8640 = vmatprep.mubr.f32.mxu0 0.0
    %8641 = vmatmul.mubr.f32.gmra.mrb[0].mxu0 %v8570
    %v8642 = vpop.f32.mrb[0].mxu0
    %v8643 = vadd.f32 0.0, %v8642
    %v8644 = vpop.f32.mrb[0].mxu0
    %8645 = vdwg.mxu0
    %v8646 = vsel %vm1083, %v8643, -inf
    %8647 = vmax.xlane.f32.xlu0 %v8646
    %v8648 = vpop.xlane.xlu0 %8647
    %v8649 = vsub.f32 %v8643, %v8648
    %v8650 = vmul.f32 %v8649, 1.442695
    %v8651 = vpow.pop %v8650
    %v8652 = vsel %vm1083, %v8651, 0.0
    %8653 = vadd.xlane.f32.xlu0 %v8652
    %v8654 = vpop.xlane.xlu0 %8653
    %v8655 = vrcp.pop %v8654
    %v8656 = vmul.f32 %v8651, %v8655
    %8657 = vrot.lane.b32.xlu0 %v8214, 112
    %v8658 = vpop.permute.xlu0 %8657
    %8659 = vrot.lane.b32.xlu0 %v8219, 112
    %v8660 = vpop.permute.xlu0 %8659
    %v8664 = vsel %vm1083, %v8656, 0
    %8666 = vmatprep.subr.mxu0 0.0
    %8667 = vmatpush1.msra.mxu0 %v8658
    %8668 = vmatprep.subr.mxu0 0.0
    %8669 = vmatpush1.msra.mxu0 %v8660
    %8670 = vmatprep.subr.mxu0 0.0
    %8671 = vmatpush1.msra.mxu0 0.0
    %8672 = vmatprep.subr.mxu0 0.0
    %8673 = vmatpush1.msra.mxu0 0.0
    %8674 = vmatprep.subr.mxu0 0.0
    %8675 = vmatpush1.msra.mxu0 0.0
    %8676 = vmatprep.subr.mxu0 0.0
    %8677 = vmatpush1.msra.mxu0 0.0
    %8678 = vmatprep.subr.mxu0 0.0
    %8679 = vmatpush1.msra.mxu0 0.0
    %8680 = vmatprep.subr.mxu0 0.0
    %8681 = vmatpush1.msra.mxu0 0.0
    %8682 = vmatprep.subr.mxu0 0.0
    %8683 = vmatpush1.msra.mxu0 0.0
    %8684 = vmatprep.subr.mxu0 0.0
    %8685 = vmatpush1.msra.mxu0 0.0
    %8686 = vmatprep.subr.mxu0 0.0
    %8687 = vmatpush1.msra.mxu0 0.0
    %8688 = vmatprep.subr.mxu0 0.0
    %8689 = vmatpush1.msra.mxu0 0.0
    %8690 = vmatprep.subr.mxu0 0.0
    %8691 = vmatpush1.msra.mxu0 0.0
    %8692 = vmatprep.subr.mxu0 0.0
    %8693 = vmatpush1.msra.mxu0 0.0
    %8694 = vmatprep.subr.mxu0 0.0
    %8695 = vmatpush1.msra.mxu0 0.0
    %8696 = vmatprep.subr.mxu0 0.0
    %8697 = vmatpush1.msra.mxu0 0.0
    %8698 = vmatprep.subr.mxu0 0.0
    %8699 = vmatpush1.msra.mxu0 0.0
    %8700 = vmatprep.subr.mxu0 0.0
    %8701 = vmatpush1.msra.mxu0 0.0
    %8702 = vmatprep.subr.mxu0 0.0
    %8703 = vmatpush1.msra.mxu0 0.0
    %8704 = vmatprep.subr.mxu0 0.0
    %8705 = vmatpush1.msra.mxu0 0.0
    %8706 = vmatprep.subr.mxu0 0.0
    %8707 = vmatpush1.msra.mxu0 0.0
    %8708 = vmatprep.subr.mxu0 0.0
    %8709 = vmatpush1.msra.mxu0 0.0
    %8710 = vmatprep.subr.mxu0 0.0
    %8711 = vmatpush1.msra.mxu0 0.0
    %8712 = vmatprep.subr.mxu0 0.0
    %8713 = vmatpush1.msra.mxu0 0.0
    %8714 = vmatprep.subr.mxu0 0.0
    %8715 = vmatpush1.msra.mxu0 0.0
    %8716 = vmatprep.subr.mxu0 0.0
    %8717 = vmatpush1.msra.mxu0 0.0
    %8718 = vmatprep.subr.mxu0 0.0
    %8719 = vmatpush1.msra.mxu0 0.0
    %8720 = vmatprep.subr.mxu0 0.0
    %8721 = vmatpush1.msra.mxu0 0.0
    %8722 = vmatprep.subr.mxu0 0.0
    %8723 = vmatpush1.msra.mxu0 0.0
    %8724 = vmatprep.subr.mxu0 0.0
    %8725 = vmatpush1.msra.mxu0 0.0
    %8726 = vmatprep.subr.mxu0 0.0
    %8727 = vmatpush1.msra.mxu0 0.0
    %8728 = vmatprep.subr.mxu0 0.0
    %8729 = vmatpush1.msra.mxu0 0.0
    %8730 = vmatprep.mubr.f32.mxu0 0.0
    %8731 = vmatmul.mubr.f32.gmra.mrb[0].mxu0 %v8664
    %v8732 = vpop.f32.mrb[0].mxu0
    %v8733 = vadd.f32 0.0, %v8732
    %v8734 = vpop.f32.mrb[0].mxu0
    %8735 = vdwg.mxu0
    %8736 = vrot.lane.b32.xlu0 %v8049, 104
    %v8737 = vpop.permute.xlu0 %8736
    %8738 = vrot.lane.b32.xlu0 %v8128, 104
    %v8739 = vpop.permute.xlu0 %8738
    %8740 = vrot.lane.b32.xlu0 %v8133, 104
    %v8741 = vpop.permute.xlu0 %8740
    %v8742 = vsel %vm414, %v8737, 0
    %v8744 = vsel %vm414, %v8739, 0
    %v8746 = vsel %vm414, %v8741, 0
    %8748 = vmatprep.subr.mxu0 0.0
    %8749 = vmatpush1.xpose.msra.mxu0 %v8744
    %8750 = vmatprep.subr.mxu0 0.0
    %8751 = vmatpush1.xpose.msra.mxu0 %v8746
    %8752 = vmatprep.subr.mxu0 0.0
    %8753 = vmatpush1.xpose.msra.mxu0 0.0
    %8754 = vmatprep.subr.mxu0 0.0
    %8755 = vmatpush1.xpose.msra.mxu0 0.0
    %8756 = vmatprep.subr.mxu0 0.0
    %8757 = vmatpush1.xpose.msra.mxu0 0.0
    %8758 = vmatprep.subr.mxu0 0.0
    %8759 = vmatpush1.xpose.msra.mxu0 0.0
    %8760 = vmatprep.subr.mxu0 0.0
    %8761 = vmatpush1.xpose.msra.mxu0 0.0
    %8762 = vmatprep.subr.mxu0 0.0
    %8763 = vmatpush1.xpose.msra.mxu0 0.0
    %8764 = vmatprep.subr.mxu0 0.0
    %8765 = vmatpush1.xpose.msra.mxu0 0.0
    %8766 = vmatprep.subr.mxu0 0.0
    %8767 = vmatpush1.xpose.msra.mxu0 0.0
    %8768 = vmatprep.subr.mxu0 0.0
    %8769 = vmatpush1.xpose.msra.mxu0 0.0
    %8770 = vmatprep.subr.mxu0 0.0
    %8771 = vmatpush1.xpose.msra.mxu0 0.0
    %8772 = vmatprep.subr.mxu0 0.0
    %8773 = vmatpush1.xpose.msra.mxu0 0.0
    %8774 = vmatprep.subr.mxu0 0.0
    %8775 = vmatpush1.xpose.msra.mxu0 0.0
    %8776 = vmatprep.subr.mxu0 0.0
    %8777 = vmatpush1.xpose.msra.mxu0 0.0
    %8778 = vmatprep.subr.mxu0 0.0
    %8779 = vmatpush1.xpose.msra.mxu0 0.0
    %8780 = vmatprep.subr.mxu0 0.0
    %8781 = vmatpush1.xpose.msra.mxu0 0.0
    %8782 = vmatprep.subr.mxu0 0.0
    %8783 = vmatpush1.xpose.msra.mxu0 0.0
    %8784 = vmatprep.subr.mxu0 0.0
    %8785 = vmatpush1.xpose.msra.mxu0 0.0
    %8786 = vmatprep.subr.mxu0 0.0
    %8787 = vmatpush1.xpose.msra.mxu0 0.0
    %8788 = vmatprep.subr.mxu0 0.0
    %8789 = vmatpush1.xpose.msra.mxu0 0.0
    %8790 = vmatprep.subr.mxu0 0.0
    %8791 = vmatpush1.xpose.msra.mxu0 0.0
    %8792 = vmatprep.subr.mxu0 0.0
    %8793 = vmatpush1.xpose.msra.mxu0 0.0
    %8794 = vmatprep.subr.mxu0 0.0
    %8795 = vmatpush1.xpose.msra.mxu0 0.0
    %8796 = vmatprep.subr.mxu0 0.0
    %8797 = vmatpush1.xpose.msra.mxu0 0.0
    %8798 = vmatprep.subr.mxu0 0.0
    %8799 = vmatpush1.xpose.msra.mxu0 0.0
    %8800 = vmatprep.subr.mxu0 0.0
    %8801 = vmatpush1.xpose.msra.mxu0 0.0
    %8802 = vmatprep.subr.mxu0 0.0
    %8803 = vmatpush1.xpose.msra.mxu0 0.0
    %8804 = vmatprep.subr.mxu0 0.0
    %8805 = vmatpush1.xpose.msra.mxu0 0.0
    %8806 = vmatprep.subr.mxu0 0.0
    %8807 = vmatpush1.xpose.msra.mxu0 0.0
    %8808 = vmatprep.subr.mxu0 0.0
    %8809 = vmatpush1.xpose.msra.mxu0 0.0
    %8810 = vmatprep.subr.mxu0 0.0
    %8811 = vmatpush1.xpose.msra.mxu0 0.0
    %8812 = vmatprep.mubr.f32.mxu0 0.0
    %8813 = vmatmul.mubr.f32.gmra.mrb[0].mxu0 %v8742
    %v8814 = vpop.f32.mrb[0].mxu0
    %v8815 = vadd.f32 0.0, %v8814
    %v8816 = vpop.f32.mrb[0].mxu0
    %8817 = vdwg.mxu0
    %v8818 = vsel %vm1083, %v8815, -inf
    %8819 = vmax.xlane.f32.xlu0 %v8818
    %v8820 = vpop.xlane.xlu0 %8819
    %v8821 = vsub.f32 %v8815, %v8820
    %v8822 = vmul.f32 %v8821, 1.442695
    %v8823 = vpow.pop %v8822
    %v8824 = vsel %vm1083, %v8823, 0.0
    %8825 = vadd.xlane.f32.xlu0 %v8824
    %v8826 = vpop.xlane.xlu0 %8825
    %v8827 = vrcp.pop %v8826
    %v8828 = vmul.f32 %v8823, %v8827
    %8829 = vrot.lane.b32.xlu0 %v8214, 104
    %v8830 = vpop.permute.xlu0 %8829
    %8831 = vrot.lane.b32.xlu0 %v8219, 104
    %v8832 = vpop.permute.xlu0 %8831
    %v8836 = vsel %vm1083, %v8828, 0
    %8838 = vmatprep.subr.mxu0 0.0
    %8839 = vmatpush1.msra.mxu0 %v8830
    %8840 = vmatprep.subr.mxu0 0.0
    %8841 = vmatpush1.msra.mxu0 %v8832
    %8842 = vmatprep.subr.mxu0 0.0
    %8843 = vmatpush1.msra.mxu0 0.0
    %8844 = vmatprep.subr.mxu0 0.0
    %8845 = vmatpush1.msra.mxu0 0.0
    %8846 = vmatprep.subr.mxu0 0.0
    %8847 = vmatpush1.msra.mxu0 0.0
    %8848 = vmatprep.subr.mxu0 0.0
    %8849 = vmatpush1.msra.mxu0 0.0
    %8850 = vmatprep.subr.mxu0 0.0
    %8851 = vmatpush1.msra.mxu0 0.0
    %8852 = vmatprep.subr.mxu0 0.0
    %8853 = vmatpush1.msra.mxu0 0.0
    %8854 = vmatprep.subr.mxu0 0.0
    %8855 = vmatpush1.msra.mxu0 0.0
    %8856 = vmatprep.subr.mxu0 0.0
    %8857 = vmatpush1.msra.mxu0 0.0
    %8858 = vmatprep.subr.mxu0 0.0
    %8859 = vmatpush1.msra.mxu0 0.0
    %8860 = vmatprep.subr.mxu0 0.0
    %8861 = vmatpush1.msra.mxu0 0.0
    %8862 = vmatprep.subr.mxu0 0.0
    %8863 = vmatpush1.msra.mxu0 0.0
    %8864 = vmatprep.subr.mxu0 0.0
    %8865 = vmatpush1.msra.mxu0 0.0
    %8866 = vmatprep.subr.mxu0 0.0
    %8867 = vmatpush1.msra.mxu0 0.0
    %8868 = vmatprep.subr.mxu0 0.0
    %8869 = vmatpush1.msra.mxu0 0.0
    %8870 = vmatprep.subr.mxu0 0.0
    %8871 = vmatpush1.msra.mxu0 0.0
    %8872 = vmatprep.subr.mxu0 0.0
    %8873 = vmatpush1.msra.mxu0 0.0
    %8874 = vmatprep.subr.mxu0 0.0
    %8875 = vmatpush1.msra.mxu0 0.0
    %8876 = vmatprep.subr.mxu0 0.0
    %8877 = vmatpush1.msra.mxu0 0.0
    %8878 = vmatprep.subr.mxu0 0.0
    %8879 = vmatpush1.msra.mxu0 0.0
    %8880 = vmatprep.subr.mxu0 0.0
    %8881 = vmatpush1.msra.mxu0 0.0
    %8882 = vmatprep.subr.mxu0 0.0
    %8883 = vmatpush1.msra.mxu0 0.0
    %8884 = vmatprep.subr.mxu0 0.0
    %8885 = vmatpush1.msra.mxu0 0.0
    %8886 = vmatprep.subr.mxu0 0.0
    %8887 = vmatpush1.msra.mxu0 0.0
    %8888 = vmatprep.subr.mxu0 0.0
    %8889 = vmatpush1.msra.mxu0 0.0
    %8890 = vmatprep.subr.mxu0 0.0
    %8891 = vmatpush1.msra.mxu0 0.0
    %8892 = vmatprep.subr.mxu0 0.0
    %8893 = vmatpush1.msra.mxu0 0.0
    %8894 = vmatprep.subr.mxu0 0.0
    %8895 = vmatpush1.msra.mxu0 0.0
    %8896 = vmatprep.subr.mxu0 0.0
    %8897 = vmatpush1.msra.mxu0 0.0
    %8898 = vmatprep.subr.mxu0 0.0
    %8899 = vmatpush1.msra.mxu0 0.0
    %8900 = vmatprep.subr.mxu0 0.0
    %8901 = vmatpush1.msra.mxu0 0.0
    %8902 = vmatprep.mubr.f32.mxu0 0.0
    %8903 = vmatmul.mubr.f32.gmra.mrb[0].mxu0 %v8836
    %v8904 = vpop.f32.mrb[0].mxu0
    %v8905 = vadd.f32 0.0, %v8904
    %v8906 = vpop.f32.mrb[0].mxu0
    %8907 = vdwg.mxu0
    %8909 = vrot.lane.b32.xlu0 %v8561, 8
    %v8910 = vpop.permute.xlu0 %8909
    %8913 = vrot.lane.b32.xlu0 %v8733, 16
    %v8914 = vpop.permute.xlu0 %8913
    %8917 = vrot.lane.b32.xlu0 %v8905, 24
    %v8918 = vpop.permute.xlu0 %8917
    %v8920 = vsel %vm414, %v8387, %v8910
    %v8921 = vsel %vm1083, %v8920, %v8914
    %v8922 = vsel %vm1085, %v8921, %v8918
    %v8924 = vlaneseq
    %v8925 = vshrl.u32 %v8924, 7
    %v8926 = vsub.s32 0, %v8925
    %v8927 = vrot.slane %v8226, %v8926
    %v8930 = vsel %vm247, %v8922, 0
    %8932 = vmatprep.subr.mxu0 0.0
    %8933 = vmatpush1.msra.mxu0 %v8222
    %8934 = vmatprep.subr.mxu0 0.0
    %8935 = vmatpush1.msra.mxu0 %v8223
    %8936 = vmatprep.subr.mxu0 0.0
    %8937 = vmatpush1.msra.mxu0 %v8224
    %8938 = vmatprep.subr.mxu0 0.0
    %8939 = vmatpush1.msra.mxu0 %v8225
    %8940 = vmatprep.subr.mxu0 0.0
    %8941 = vmatpush1.msra.mxu0 0.0
    %8942 = vmatprep.subr.mxu0 0.0
    %8943 = vmatpush1.msra.mxu0 0.0
    %8944 = vmatprep.subr.mxu0 0.0
    %8945 = vmatpush1.msra.mxu0 0.0
    %8946 = vmatprep.subr.mxu0 0.0
    %8947 = vmatpush1.msra.mxu0 0.0
    %8948 = vmatprep.subr.mxu0 0.0
    %8949 = vmatpush1.msra.mxu0 0.0
    %8950 = vmatprep.subr.mxu0 0.0
    %8951 = vmatpush1.msra.mxu0 0.0
    %8952 = vmatprep.subr.mxu0 0.0
    %8953 = vmatpush1.msra.mxu0 0.0
    %8954 = vmatprep.subr.mxu0 0.0
    %8955 = vmatpush1.msra.mxu0 0.0
    %8956 = vmatprep.subr.mxu0 0.0
    %8957 = vmatpush1.msra.mxu0 0.0
    %8958 = vmatprep.subr.mxu0 0.0
    %8959 = vmatpush1.msra.mxu0 0.0
    %8960 = vmatprep.subr.mxu0 0.0
    %8961 = vmatpush1.msra.mxu0 0.0
    %8962 = vmatprep.subr.mxu0 0.0
    %8963 = vmatpush1.msra.mxu0 0.0
    %8964 = vmatprep.subr.mxu0 0.0
    %8965 = vmatpush1.msra.mxu0 0.0
    %8966 = vmatprep.subr.mxu0 0.0
    %8967 = vmatpush1.msra.mxu0 0.0
    %8968 = vmatprep.subr.mxu0 0.0
    %8969 = vmatpush1.msra.mxu0 0.0
    %8970 = vmatprep.subr.mxu0 0.0
    %8971 = vmatpush1.msra.mxu0 0.0
    %8972 = vmatprep.subr.mxu0 0.0
    %8973 = vmatpush1.msra.mxu0 0.0
    %8974 = vmatprep.subr.mxu0 0.0
    %8975 = vmatpush1.msra.mxu0 0.0
    %8976 = vmatprep.subr.mxu0 0.0
    %8977 = vmatpush1.msra.mxu0 0.0
    %8978 = vmatprep.subr.mxu0 0.0
    %8979 = vmatpush1.msra.mxu0 0.0
    %8980 = vmatprep.subr.mxu0 0.0
    %8981 = vmatpush1.msra.mxu0 0.0
    %8982 = vmatprep.subr.mxu0 0.0
    %8983 = vmatpush1.msra.mxu0 0.0
    %8984 = vmatprep.subr.mxu0 0.0
    %8985 = vmatpush1.msra.mxu0 0.0
    %8986 = vmatprep.subr.mxu0 0.0
    %8987 = vmatpush1.msra.mxu0 0.0
    %8988 = vmatprep.subr.mxu0 0.0
    %8989 = vmatpush1.msra.mxu0 0.0
    %8990 = vmatprep.subr.mxu0 0.0
    %8991 = vmatpush1.msra.mxu0 0.0
    %8992 = vmatprep.subr.mxu0 0.0
    %8993 = vmatpush1.msra.mxu0 0.0
    %8994 = vmatprep.subr.mxu0 0.0
    %8995 = vmatpush1.msra.mxu0 0.0
    %8996 = vmatprep.mubr.f32.mxu0 0.0
    %8997 = vmatmul.mubr.f32.gmra.mrb[0].mxu0 %v8930
    %v8998 = vpop.f32.mrb[0].mxu0
    %v8999 = vadd.f32 %v8927, %v8998
    %v9000 = vpop.f32.mrb[0].mxu0
    %9001 = vdwg.mxu0
    %v9002 = vadd.f32 %v7963, %v8999
    %v9003 = vsel %vm247, %v9002, 0.0
    %9004 = vadd.xlane.f32.xlu0 %v9003
    %v9005 = vpop.xlane.xlu0 %9004
    %v9006 = vmul.f32 %v9005, %v1170
    %v9007 = vsub.f32 %v9002, %v9006
    %v9008 = vmul.f32 %v9007, %v9007
    %v9009 = vsel %vm247, %v9008, 0.0
    %9010 = vadd.xlane.f32.xlu0 %v9009
    %v9011 = vpop.xlane.xlu0 %9010
    %v9012 = vmul.f32 %v9011, %v1170
    %v9013 = vadd.f32 %v9012, 1e-05
    %v9014 = vrsqrt.pop %v9013
    %v9015 = vmul.f32 %v9007, %v9014
    %v9017 = vlaneseq
    %v9018 = vshrl.u32 %v9017, 7
    %v9019 = vsub.s32 0, %v9018
    %v9020 = vrot.slane %v7004, %v9019
    %v9022 = vmul.f32 %v9015, %v9020
    %v9024 = vlaneseq
    %v9025 = vshrl.u32 %v9024, 7
    %v9026 = vsub.s32 0, %v9025
    %v9027 = vrot.slane %v7007, %v9026
    %v9029 = vadd.f32 %v9022, %v9027
    %v9030 = vld [vmem:[%s4518] sm:$0xff]
    %v9031 = vld [vmem:[%s4518 + $0x8] sm:$0xff]
    %v9032 = vld [vmem:[%s4518 + $0x10] sm:$0xff]
    %v9033 = vld [vmem:[%s4518 + $0x18] sm:$0xff]
    %v9034 = vld [vmem:[%s4523] sm:$0x1]
    %v9036 = vlaneseq
    %v9037 = vshrl.u32 %v9036, 7
    %v9038 = vsub.s32 0, %v9037
    %v9039 = vrot.slane %v9034, %v9038
    %v9042 = vsel %vm247, %v9029, 0
    %9044 = vmatprep.subr.mxu0 0.0
    %9045 = vmatpush1.msra.mxu0 %v9030
    %9046 = vmatprep.subr.mxu0 0.0
    %9047 = vmatpush1.msra.mxu0 %v9031
    %9048 = vmatprep.subr.mxu0 0.0
    %9049 = vmatpush1.msra.mxu0 %v9032
    %9050 = vmatprep.subr.mxu0 0.0
    %9051 = vmatpush1.msra.mxu0 %v9033
    %9052 = vmatprep.subr.mxu0 0.0
    %9053 = vmatpush1.msra.mxu0 0.0
    %9054 = vmatprep.subr.mxu0 0.0
    %9055 = vmatpush1.msra.mxu0 0.0
    %9056 = vmatprep.subr.mxu0 0.0
    %9057 = vmatpush1.msra.mxu0 0.0
    %9058 = vmatprep.subr.mxu0 0.0
    %9059 = vmatpush1.msra.mxu0 0.0
    %9060 = vmatprep.subr.mxu0 0.0
    %9061 = vmatpush1.msra.mxu0 0.0
    %9062 = vmatprep.subr.mxu0 0.0
    %9063 = vmatpush1.msra.mxu0 0.0
    %9064 = vmatprep.subr.mxu0 0.0
    %9065 = vmatpush1.msra.mxu0 0.0
    %9066 = vmatprep.subr.mxu0 0.0
    %9067 = vmatpush1.msra.mxu0 0.0
    %9068 = vmatprep.subr.mxu0 0.0
    %9069 = vmatpush1.msra.mxu0 0.0
    %9070 = vmatprep.subr.mxu0 0.0
    %9071 = vmatpush1.msra.mxu0 0.0
    %9072 = vmatprep.subr.mxu0 0.0
    %9073 = vmatpush1.msra.mxu0 0.0
    %9074 = vmatprep.subr.mxu0 0.0
    %9075 = vmatpush1.msra.mxu0 0.0
    %9076 = vmatprep.subr.mxu0 0.0
    %9077 = vmatpush1.msra.mxu0 0.0
    %9078 = vmatprep.subr.mxu0 0.0
    %9079 = vmatpush1.msra.mxu0 0.0
    %9080 = vmatprep.subr.mxu0 0.0
    %9081 = vmatpush1.msra.mxu0 0.0
    %9082 = vmatprep.subr.mxu0 0.0
    %9083 = vmatpush1.msra.mxu0 0.0
    %9084 = vmatprep.subr.mxu0 0.0
    %9085 = vmatpush1.msra.mxu0 0.0
    %9086 = vmatprep.subr.mxu0 0.0
    %9087 = vmatpush1.msra.mxu0 0.0
    %9088 = vmatprep.subr.mxu0 0.0
    %9089 = vmatpush1.msra.mxu0 0.0
    %9090 = vmatprep.subr.mxu0 0.0
    %9091 = vmatpush1.msra.mxu0 0.0
    %9092 = vmatprep.subr.mxu0 0.0
    %9093 = vmatpush1.msra.mxu0 0.0
    %9094 = vmatprep.subr.mxu0 0.0
    %9095 = vmatpush1.msra.mxu0 0.0
    %9096 = vmatprep.subr.mxu0 0.0
    %9097 = vmatpush1.msra.mxu0 0.0
    %9098 = vmatprep.subr.mxu0 0.0
    %9099 = vmatpush1.msra.mxu0 0.0
    %9100 = vmatprep.subr.mxu0 0.0
    %9101 = vmatpush1.msra.mxu0 0.0
    %9102 = vmatprep.subr.mxu0 0.0
    %9103 = vmatpush1.msra.mxu0 0.0
    %9104 = vmatprep.subr.mxu0 0.0
    %9105 = vmatpush1.msra.mxu0 0.0
    %9106 = vmatprep.subr.mxu0 0.0
    %9107 = vmatpush1.msra.mxu0 0.0
    %9108 = vmatprep.mubr.f32.mxu0 0.0
    %9109 = vmatmul.mubr.f32.gmra.mrb[0].mxu0 %v9042
    %v9110 = vpop.f32.mrb[0].mxu0
    %v9111 = vadd.f32 %v9039, %v9110
    %v9112 = vpop.f32.mrb[0].mxu0
    %9113 = vdwg.mxu0
    %v9114 = vmax.f32 %v9111, 0.0
    %v9115 = vld [vmem:[%s4605] sm:$0xff]
    %v9116 = vld [vmem:[%s4605 + $0x8] sm:$0xff]
    %v9117 = vld [vmem:[%s4605 + $0x10] sm:$0xff]
    %v9118 = vld [vmem:[%s4605 + $0x18] sm:$0xff]
    %v9119 = vld [vmem:[%s4605 + $0x20] sm:$0xff]
    %v9120 = vld [vmem:[%s4605 + $0x28] sm:$0xff]
    %v9121 = vld [vmem:[%s4605 + $0x30] sm:$0xff]
    %v9122 = vld [vmem:[%s4605 + $0x38] sm:$0xff]
    %v9123 = vld [vmem:[%s4614] sm:$0x1]
    %v9125 = vlaneseq
    %v9126 = vshrl.u32 %v9125, 7
    %v9127 = vsub.s32 0, %v9126
    %v9128 = vrot.slane %v9123, %v9127
    %v9131 = vsel %vm2373, %v9114, 0
    %9133 = vmatprep.subr.mxu0 0.0
    %9134 = vmatpush1.msra.mxu0 %v9115
    %9135 = vmatprep.subr.mxu0 0.0
    %9136 = vmatpush1.msra.mxu0 %v9116
    %9137 = vmatprep.subr.mxu0 0.0
    %9138 = vmatpush1.msra.mxu0 %v9117
    %9139 = vmatprep.subr.mxu0 0.0
    %9140 = vmatpush1.msra.mxu0 %v9118
    %9141 = vmatprep.subr.mxu0 0.0
    %9142 = vmatpush1.msra.mxu0 %v9119
    %9143 = vmatprep.subr.mxu0 0.0
    %9144 = vmatpush1.msra.mxu0 %v9120
    %9145 = vmatprep.subr.mxu0 0.0
    %9146 = vmatpush1.msra.mxu0 %v9121
    %9147 = vmatprep.subr.mxu0 0.0
    %9148 = vmatpush1.msra.mxu0 %v9122
    %9149 = vmatprep.subr.mxu0 0.0
    %9150 = vmatpush1.msra.mxu0 0.0
    %9151 = vmatprep.subr.mxu0 0.0
    %9152 = vmatpush1.msra.mxu0 0.0
    %9153 = vmatprep.subr.mxu0 0.0
    %9154 = vmatpush1.msra.mxu0 0.0
    %9155 = vmatprep.subr.mxu0 0.0
    %9156 = vmatpush1.msra.mxu0 0.0
    %9157 = vmatprep.subr.mxu0 0.0
    %9158 = vmatpush1.msra.mxu0 0.0
    %9159 = vmatprep.subr.mxu0 0.0
    %9160 = vmatpush1.msra.mxu0 0.0
    %9161 = vmatprep.subr.mxu0 0.0
    %9162 = vmatpush1.msra.mxu0 0.0
    %9163 = vmatprep.subr.mxu0 0.0
    %9164 = vmatpush1.msra.mxu0 0.0
    %9165 = vmatprep.subr.mxu0 0.0
    %9166 = vmatpush1.msra.mxu0 0.0
    %9167 = vmatprep.subr.mxu0 0.0
    %9168 = vmatpush1.msra.mxu0 0.0
    %9169 = vmatprep.subr.mxu0 0.0
    %9170 = vmatpush1.msra.mxu0 0.0
    %9171 = vmatprep.subr.mxu0 0.0
    %9172 = vmatpush1.msra.mxu0 0.0
    %9173 = vmatprep.subr.mxu0 0.0
    %9174 = vmatpush1.msra.mxu0 0.0
    %9175 = vmatprep.subr.mxu0 0.0
    %9176 = vmatpush1.msra.mxu0 0.0
    %9177 = vmatprep.subr.mxu0 0.0
    %9178 = vmatpush1.msra.mxu0 0.0
    %9179 = vmatprep.subr.mxu0 0.0
    %9180 = vmatpush1.msra.mxu0 0.0
    %9181 = vmatprep.subr.mxu0 0.0
    %9182 = vmatpush1.msra.mxu0 0.0
    %9183 = vmatprep.subr.mxu0 0.0
    %9184 = vmatpush1.msra.mxu0 0.0
    %9185 = vmatprep.subr.mxu0 0.0
    %9186 = vmatpush1.msra.mxu0 0.0
    %9187 = vmatprep.subr.mxu0 0.0
    %9188 = vmatpush1.msra.mxu0 0.0
    %9189 = vmatprep.subr.mxu0 0.0
    %9190 = vmatpush1.msra.mxu0 0.0
    %9191 = vmatprep.subr.mxu0 0.0
    %9192 = vmatpush1.msra.mxu0 0.0
    %9193 = vmatprep.subr.mxu0 0.0
    %9194 = vmatpush1.msra.mxu0 0.0
    %9195 = vmatprep.subr.mxu0 0.0
    %9196 = vmatpush1.msra.mxu0 0.0
    %9197 = vmatprep.mubr.f32.mxu0 0.0
    %9198 = vmatmul.mubr.f32.gmra.mrb[0].mxu0 %v9131
    %v9199 = vpop.f32.mrb[0].mxu0
    %v9200 = vadd.f32 %v9128, %v9199
    %v9201 = vpop.f32.mrb[0].mxu0
    %9202 = vdwg.mxu0
    %v9203 = vadd.f32 %v9029, %v9200
    %v9204 = vsel %vm247, %v9203, 0.0
    %9205 = vadd.xlane.f32.xlu0 %v9204
    %v9206 = vpop.xlane.xlu0 %9205
    %v9207 = vmul.f32 %v9206, %v1170
    %v9208 = vsub.f32 %v9203, %v9207
    %v9209 = vmul.f32 %v9208, %v9208
    %v9210 = vsel %vm247, %v9209, 0.0
    %9211 = vadd.xlane.f32.xlu0 %v9210
    %v9212 = vpop.xlane.xlu0 %9211
    %v9213 = vmul.f32 %v9212, %v1170
    %v9214 = vadd.f32 %v9213, 1e-05
    %v9215 = vrsqrt.pop %v9214
    %v9216 = vmul.f32 %v9208, %v9215
    %v9218 = vlaneseq
    %v9219 = vshrl.u32 %v9218, 7
    %v9220 = vsub.s32 0, %v9219
    %v9221 = vrot.slane %v7005, %v9220
    %v9223 = vmul.f32 %v9216, %v9221
    %v9225 = vlaneseq
    %v9226 = vshrl.u32 %v9225, 7
    %v9227 = vsub.s32 0, %v9226
    %v9228 = vrot.slane %v7008, %v9227
    %v9230 = vadd.f32 %v9223, %v9228
    %v9231 = vsel %vm247, %v9230, 0.0
    %9232 = vadd.xlane.f32.xlu0 %v9231
    %v9233 = vpop.xlane.xlu0 %9232
    %v9234 = vmul.f32 %v9233, %v1170
    %v9235 = vsub.f32 %v9230, %v9234
    %v9236 = vmul.f32 %v9235, %v9235
    %v9237 = vsel %vm247, %v9236, 0.0
    %9238 = vadd.xlane.f32.xlu0 %v9237
    %v9239 = vpop.xlane.xlu0 %9238
    %v9240 = vmul.f32 %v9239, %v1170
    %v9241 = vadd.f32 %v9240, 1e-05
    %v9242 = vrsqrt.pop %v9241
    %v9243 = vmul.f32 %v9235, %v9242
    %v9244 = vmul.f32 %v9243, %v4740
    %v9245 = vadd.f32 %v9244, %v4747
    %s9246 = scalar_lea.vmem %s26, 8
    %9247 = vst.msk [vmem:[%s9246] sm:$0xff] %vm247, %v9245
    // Predicated region
    $region146: #{transformer_decoder.1} parent=1 // pred_check
      _
    $region147: #{transformer_decoder.1} parent=1 // pred_check_branch
      %9249 = sbr.rel (0) target = $region149
    $region148: #{transformer_decoder.1} parent=1 // pred_region
      _
    $region149: #{transformer_decoder.1} parent=1 // pred_fallthru
      _
    // Predicated region
    $region150: #{transformer_decoder.1} parent=1 // pred_check
      _
    $region151: #{transformer_decoder.1} parent=1 // pred_check_branch
      %9251 = sbr.rel (0) target = $region153
    $region152: #{transformer_decoder.1} parent=1 // pred_region
      _
    $region153: #{transformer_decoder.1} parent=1 // pred_fallthru
      _
    %9252 = vsyncpa [#allocation3], 1
    %9253 = vsyncpa [#allocation5], 1
    %9254 = vsyncpa [#allocation8], 1
    %9255 = vsyncpa [#allocation11], 1
    %9256 = vsyncpa [#allocation14], 1
    %9257 = vsyncpa [#allocation17], 1

</llo_original>
